<compile_context>
chip_gen: v7x
topology: tpu7x:2x2x1
jax: 0.10.0
libtpu: 0.0.40
codegen_flags: <defaults>
</compile_context>

<pallas_src>
import functools

import jax
import jax.numpy as jnp
from jax.experimental import pallas as pl
from jax.experimental.pallas import tpu as pltpu


def _round_up(x, m):
    return (x + m - 1) // m * m


# --------------------------------------------------------------------------------------
# Kernel A: 3x3 conv (+bias) per image, plus per-image channel moments of the conv output.
# --------------------------------------------------------------------------------------
def _conv_in_kernel(x_ref, w_ref, b_ref, y_ref, stat_ref, pad_ref,
                    *, W, HW, Cin, halo):
    """x_ref:(1,HW,Cin)  w_ref:(9*Cin,Cout)  b_ref:(1,Cout)
       y_ref:(1,HW,Cout) stat_ref:(1,2,Cout) pad_ref:(2*halo+HW,Cin) scratch."""
    cdt = pad_ref.dtype

    # Zero only the halo rows.  Done every grid step: scratch is per-core, and the batch
    # axis is "parallel", so each TensorCore must initialise its own halo.
    pad_ref[0:halo, :] = jnp.zeros((halo, Cin), cdt)
    pad_ref[halo + HW:2 * halo + HW, :] = jnp.zeros((halo, Cin), cdt)

    # Column-validity masks for the dx = +/-1 taps (row wrap of the flattened index).
    col = jax.lax.broadcasted_iota(jnp.int32, (HW, Cin), 0) % W
    ok_left = col > 0            # valid positions for a dx = -1 tap
    ok_right = col < (W - 1)     # valid positions for a dx = +1 tap

    # Write the image once into the haloed buffer; read the 9 shifted views as plain
    # sublane-offset loads (same (HW, Cin) shape, no relayout), build the im2col slab,
    # and do a single MXU matmul.
    pad_ref[halo:halo + HW, :] = x_ref[0].astype(cdt)
    taps = []
    for oy in (-1, 0, 1):
        for ox in (-1, 0, 1):
            k = halo + oy * W + ox
            t = pad_ref[k:k + HW, :]
            if ox == 1:
                t = jnp.where(ok_right, t, jnp.zeros_like(t))
            elif ox == -1:
                t = jnp.where(ok_left, t, jnp.zeros_like(t))
            taps.append(t)
    patches = jnp.concatenate(taps, axis=1)                      # (HW, 9*Cin)

    y = jnp.dot(patches, w_ref[...], preferred_element_type=jnp.float32)
    y = y + b_ref[...]                                           # conv bias (f32)
    y_ref[0] = y.astype(y_ref.dtype)

    stat_ref[0] = jnp.concatenate(
        [jnp.sum(y, axis=0, keepdims=True),
         jnp.sum(y * y, axis=0, keepdims=True)], axis=0)         # (2, Cout)


# --------------------------------------------------------------------------------------
# Kernel B: per-image channel moments of z = PReLU(bn_mid#1(y)); z stays in VMEM.
# --------------------------------------------------------------------------------------
def _bn_prelu_stats_kernel(y_ref, s1_ref, t1_ref, a_ref, stat_ref):
    z = y_ref[0] * s1_ref[...] + t1_ref[...]                     # folded bn_mid #1
    z = jnp.where(z >= 0.0, z, a_ref[...] * z)                   # PReLU
    stat_ref[0] = jnp.concatenate(
        [jnp.sum(z, axis=0, keepdims=True),
         jnp.sum(z * z, axis=0, keepdims=True)], axis=0)


# --------------------------------------------------------------------------------------
# Kernel C: fused bn_mid#1 -> PReLU -> bn_mid#2 -> fc (K-blocked) -> BatchNorm1d epilogue.
# --------------------------------------------------------------------------------------
def _fc_bn_end_kernel(y_ref, s1_ref, t1_ref, a_ref, s2_ref, t2_ref,
                      w_ref, bfc_ref, ge_ref, be_ref, o_ref, acc_ref, *, eps):
    k = pl.program_id(0)

    @pl.when(k == 0)
    def _():
        acc_ref[...] = jnp.zeros_like(acc_ref)

    z = y_ref[...] * s1_ref[...] + t1_ref[...]                   # bn_mid #1 (folded)
    z = jnp.where(z >= 0.0, z, a_ref[...] * z)                   # PReLU
    z = z * s2_ref[...] + t2_ref[...]                            # bn_mid #2 (folded)
    acc_ref[...] += jnp.dot(z.astype(w_ref.dtype), w_ref[...],
                            preferred_element_type=jnp.float32)

    @pl.when(k == pl.num_programs(0) - 1)
    def _():
        r = acc_ref[...] + bfc_ref[...]                          # fc bias
        inv_n = 1.0 / r.shape[0]
        mean = jnp.sum(r, axis=0, keepdims=True) * inv_n
        var = jnp.sum(r * r, axis=0, keepdims=True) * inv_n - mean * mean
        o_ref[...] = ((r - mean) * jax.lax.rsqrt(var + eps) * ge_ref[...]
                      + be_ref[...]).astype(o_ref.dtype)


# --------------------------------------------------------------------------------------
# Wrapper: PyTorch-layout parameters in, (N, 512) Discriminator output out.
# --------------------------------------------------------------------------------------
def discriminator_forward_pallas(x_nchw, conv_w_oihw, conv_b, gamma_mid, beta_mid,
                                 prelu_a, fc_w, fc_b, gamma_end, beta_end, *,
                                 eps=1e-5, conv_dtype=jnp.bfloat16, fc_block=2048):
    N, Cin, H, W = x_nchw.shape
    Cout = conv_w_oihw.shape[0]
    HW = H * W
    F = Cout * HW
    O = fc_w.shape[0]
    assert conv_w_oihw.shape == (Cout, Cin, 3, 3)
    assert fc_w.shape == (O, F), (fc_w.shape, (O, F))
    f32 = jnp.float32

    # ---- host-side layout prep (one-time) ----
    x_nhwc = jnp.transpose(x_nchw, (0, 2, 3, 1)).reshape(N, HW, Cin)
    w_2d = jnp.transpose(conv_w_oihw, (2, 3, 1, 0)).reshape(9 * Cin, Cout).astype(conv_dtype)
    b_2d = conv_b.reshape(1, Cout).astype(f32)
    # torch's .view(N, -1) flattens channel-major (c, h, w); re-order the fc weight rows to
    # the NHWC flatten order (hw*C + c) used by the kernel -> exact fc semantics preserved.
    fc_w_nhwc = (fc_w.reshape(O, Cout, HW).transpose(2, 1, 0)
                 .reshape(F, O).astype(conv_dtype))
    fc_b_2d = fc_b.reshape(1, O).astype(f32)
    a_1c = prelu_a.reshape(1, Cout).astype(f32)
    gamma_mid = gamma_mid.astype(f32)
    beta_mid = beta_mid.astype(f32)

    halo = _round_up(W + 1, 8)

    # ---- stage A: conv_input (+bias) and per-image channel moments of y ----
    conv_kernel = functools.partial(_conv_in_kernel, W=W, HW=HW, Cin=Cin, halo=halo)
    y, stats1 = pl.pallas_call(
        conv_kernel,
        out_shape=(jax.ShapeDtypeStruct((N, HW, Cout), f32),
                   jax.ShapeDtypeStruct((N, 2, Cout), f32)),
        grid_spec=pltpu.PrefetchScalarGridSpec(
            num_scalar_prefetch=0,
            grid=(N,),
            in_specs=[pl.BlockSpec((1, HW, Cin), lambda n: (n, 0, 0)),
                      pl.BlockSpec((9 * Cin, Cout), lambda n: (0, 0)),
                      pl.BlockSpec((1, Cout), lambda n: (0, 0))],
            out_specs=(pl.BlockSpec((1, HW, Cout), lambda n: (n, 0, 0)),
                       pl.BlockSpec((1, 2, Cout), lambda n: (n, 0, 0))),
            scratch_shapes=[pltpu.VMEM((2 * halo + HW, Cin), conv_dtype)]),
        compiler_params=pltpu.CompilerParams(dimension_semantics=("parallel",)),
    )(x_nhwc, w_2d, b_2d)

    # bn_mid #1 batch statistics (training mode: biased var over N*H*W), folded affine.
    nhw = float(N * HW)
    mean1 = jnp.sum(stats1[:, 0, :], axis=0) / nhw
    var1 = jnp.sum(stats1[:, 1, :], axis=0) / nhw - mean1 * mean1
    scale1 = gamma_mid * jax.lax.rsqrt(var1 + eps)
    shift1 = beta_mid - mean1 * scale1

    # ---- stage B: moments of z = PReLU(bn_mid#1(y)) for bn_mid #2 ----
    stats2 = pl.pallas_call(
        _bn_prelu_stats_kernel,
        out_shape=jax.ShapeDtypeStruct((N, 2, Cout), f32),
        grid_spec=pltpu.PrefetchScalarGridSpec(
            num_scalar_prefetch=0,
            grid=(N,),
            in_specs=[pl.BlockSpec((1, HW, Cout), lambda n: (n, 0, 0)),
                      pl.BlockSpec((1, Cout), lambda n: (0, 0)),
                      pl.BlockSpec((1, Cout), lambda n: (0, 0)),
                      pl.BlockSpec((1, Cout), lambda n: (0, 0))],
            out_specs=pl.BlockSpec((1, 2, Cout), lambda n: (n, 0, 0))),
        compiler_params=pltpu.CompilerParams(dimension_semantics=("parallel",)),
    )(y, scale1.reshape(1, Cout), shift1.reshape(1, Cout), a_1c)

    mean2 = jnp.sum(stats2[:, 0, :], axis=0) / nhw
    var2 = jnp.sum(stats2[:, 1, :], axis=0) / nhw - mean2 * mean2
    scale2 = gamma_mid * jax.lax.rsqrt(var2 + eps)
    shift2 = beta_mid - mean2 * scale2

    # Per-feature (NHWC-flattened, f = hw*C + c) scale/shift vectors for stage C.
    s1_rep = jnp.tile(scale1, HW).reshape(1, F)
    t1_rep = jnp.tile(shift1, HW).reshape(1, F)
    a_rep = jnp.tile(prelu_a.astype(f32), HW).reshape(1, F)
    s2_rep = jnp.tile(scale2, HW).reshape(1, F)
    t2_rep = jnp.tile(shift2, HW).reshape(1, F)

    # ---- stage C: fc (K-blocked over the flattened features) + fused BatchNorm1d ----
    y_flat = y.reshape(N, F)
    kb = min(fc_block, F)
    if F % kb:
        kb = F
        for cand in (8192, 4096, 2048, 1024, 512, 256, 128):
            if cand < F and F % cand == 0:
                kb = cand
                break
    nk = F // kb

    fc_kernel = functools.partial(_fc_bn_end_kernel, eps=eps)
    out = pl.pallas_call(
        fc_kernel,
        out_shape=jax.ShapeDtypeStruct((N, O), f32),
        grid_spec=pltpu.PrefetchScalarGridSpec(
            num_scalar_prefetch=0,
            grid=(nk,),
            in_specs=[pl.BlockSpec((N, kb), lambda k: (0, k)),
                      pl.BlockSpec((1, kb), lambda k: (0, k)),
                      pl.BlockSpec((1, kb), lambda k: (0, k)),
                      pl.BlockSpec((1, kb), lambda k: (0, k)),
                      pl.BlockSpec((1, kb), lambda k: (0, k)),
                      pl.BlockSpec((1, kb), lambda k: (0, k)),
                      pl.BlockSpec((kb, O), lambda k: (k, 0)),
                      pl.BlockSpec((1, O), lambda k: (0, 0)),
                      pl.BlockSpec((1, O), lambda k: (0, 0)),
                      pl.BlockSpec((1, O), lambda k: (0, 0))],
            out_specs=pl.BlockSpec((N, O), lambda k: (0, 0)),
            scratch_shapes=[pltpu.VMEM((N, O), f32)]),
        compiler_params=pltpu.CompilerParams(dimension_semantics=("arbitrary",)),
    )(y_flat, s1_rep, t1_rep, a_rep, s2_rep, t2_rep, fc_w_nhwc, fc_b_2d,
      gamma_end.reshape(1, O).astype(f32), beta_end.reshape(1, O).astype(f32))
    return out


# --------------------------------------------------------------------------------------
# Pure-JAX reference mirroring the PyTorch module (training-mode batch norms).
# --------------------------------------------------------------------------------------
def discriminator_forward_ref(x_nchw, conv_w_oihw, conv_b, gamma_mid, beta_mid,
                              prelu_a, fc_w, fc_b, gamma_end, beta_end, *,
                              eps=1e-5, conv_dtype=None):
    N = x_nchw.shape[0]
    Cout = conv_w_oihw.shape[0]
    x = jnp.transpose(x_nchw, (0, 2, 3, 1))                      # NHWC
    w = jnp.transpose(conv_w_oihw, (2, 3, 1, 0))                 # HWIO
    if conv_dtype is not None:
        x, w = x.astype(conv_dtype), w.astype(conv_dtype)
    y = jax.lax.conv_general_dilated(
        x, w, window_strides=(1, 1), padding="SAME",
        dimension_numbers=("NHWC", "HWIO", "NHWC"),
        preferred_element_type=jnp.float32,
        precision=jax.lax.Precision.HIGHEST)
    y = y + conv_b.reshape(1, 1, 1, Cout)

    def bn2d(t, g, b):
        m = jnp.mean(t, axis=(0, 1, 2), keepdims=True)
        v = jnp.mean((t - m) ** 2, axis=(0, 1, 2), keepdims=True)
        return (t - m) * jax.lax.rsqrt(v + eps) * g.reshape(1, 1, 1, -1) + b.reshape(1, 1, 1, -1)

    z = bn2d(y, gamma_mid, beta_mid)
    z = jnp.where(z >= 0, z, prelu_a.reshape(1, 1, 1, -1) * z)
    z = bn2d(z, gamma_mid, beta_mid)
    z_flat = jnp.transpose(z, (0, 3, 1, 2)).reshape(N, -1)       # torch .view(N, -1) order
    if conv_dtype is not None:
        fc_out = jnp.dot(z_flat.astype(conv_dtype), fc_w.T.astype(conv_dtype),
                         preferred_element_type=jnp.float32)
    else:
        fc_out = jnp.dot(z_flat, fc_w.T, preferred_element_type=jnp.float32,
                         precision=jax.lax.Precision.HIGHEST)
    fc_out = fc_out + fc_b.reshape(1, -1)
    m = jnp.mean(fc_out, axis=0, keepdims=True)
    v = jnp.mean((fc_out - m) ** 2, axis=0, keepdims=True)
    return (fc_out - m) * jax.lax.rsqrt(v + eps) * gamma_end.reshape(1, -1) + beta_end.reshape(1, -1)


if __name__ == "__main__":
    # Small demo shapes consistent with the module: 192 input channels, 64 mid channels,
    # fc output 512; spatial reduced 56 -> 16 (fc in_features = 64*H*W accordingly).
    N, Cin, H, W, Cmid, FCO = 4, 192, 16, 16, 64, 512

    key = jax.random.PRNGKey(0)
    ks = jax.random.split(key, 9)
    x = jax.random.normal(ks[0], (N, Cin, H, W), jnp.float32)
    conv_w = 0.05 * jax.random.normal(ks[1], (Cmid, Cin, 3, 3), jnp.float32)   # OIHW (torch)
    conv_b = 0.1 * jax.random.normal(ks[2], (Cmid,), jnp.float32)
    gamma_mid = 1.0 + 0.1 * jax.random.normal(ks[3], (Cmid,), jnp.float32)
    beta_mid = 0.1 * jax.random.normal(ks[4], (Cmid,), jnp.float32)
    prelu_a = jnp.full((Cmid,), 0.25, jnp.float32)                             # PReLU default
    fc_w = 0.02 * jax.random.normal(ks[5], (FCO, Cmid * H * W), jnp.float32)   # torch Linear layout
    fc_b = 0.1 * jax.random.normal(ks[6], (FCO,), jnp.float32)
    gamma_end = 1.0 + 0.1 * jax.random.normal(ks[7], (FCO,), jnp.float32)
    beta_end = 0.1 * jax.random.normal(ks[8], (FCO,), jnp.float32)

    args = (x, conv_w, conv_b, gamma_mid, beta_mid, prelu_a, fc_w, fc_b, gamma_end, beta_end)

    # 1) Exact-precision mode: f32 MXU inputs, tight check against the pure-f32 reference.
    fwd_f32 = jax.jit(functools.partial(discriminator_forward_pallas, conv_dtype=jnp.float32))
    out_f32 = jax.block_until_ready(fwd_f32(*args))
    ref_f32 = discriminator_forward_ref(*args)
    err_f32 = float(jnp.max(jnp.abs(out_f32 - ref_f32)))
    assert jnp.allclose(out_f32, ref_f32, atol=1e-3, rtol=1e-3), err_f32

    # 2) Mixed-precision mode (recommended on v6e/v7x): bf16 MXU inputs, f32 accum / norms.
    fwd_bf16 = jax.jit(functools.partial(discriminator_forward_pallas, conv_dtype=jnp.bfloat16))
    out_bf16 = jax.block_until_ready(fwd_bf16(*args))
    ref_bf16 = discriminator_forward_ref(*args, conv_dtype=jnp.bfloat16)
    err_bf16 = float(jnp.max(jnp.abs(out_bf16 - ref_bf16)))
    assert jnp.allclose(out_bf16, ref_bf16, atol=5e-2, rtol=5e-2), err_bf16

    print("KERNEL_OK")
</pallas_src>

<mosaic_0001>
module attributes {stable_mosaic.version = 11 : i64} {
  func.func private @main(%arg0: i32) attributes {dimension_semantics = [#tpu.dimension_semantics<core_parallel>], iteration_bounds = array<i64: 2>, tpu.core_type = #tpu.core_type<sc_scalar_subcore>, window_params = []} {
    return
  }
}

module attributes {stable_mosaic.version = 11 : i64} {
  func.func private @main(%arg0: i32) attributes {dimension_semantics = [#tpu.dimension_semantics<core_parallel>], iteration_bounds = array<i64: 2>, tpu.core_type = #tpu.core_type<sc_scalar_subcore>, window_params = []} {
    return
  }
}

module attributes {stable_mosaic.version = 11 : i64} {
  func.func @_conv_in_kernel(%arg0: i32, %arg1: memref<1x256x192xf32, #tpu.memory_space<vmem>>, %arg2: memref<1728x64xf32, #tpu.memory_space<vmem>>, %arg3: memref<1x64xf32, #tpu.memory_space<vmem>>, %arg4: memref<1x256x64xf32, #tpu.memory_space<vmem>>, %arg5: memref<1x2x64xf32, #tpu.memory_space<vmem>>, %arg6: memref<304x192xf32, #tpu.memory_space<vmem>>) attributes {dimension_semantics = [#tpu.dimension_semantics<parallel>], iteration_bounds = array<i64: 4>, scalar_prefetch = 0 : i64, scratch_operands = 1 : i64, tpu.core_type = #tpu.core_type<tc>, window_params = [{transform_indices = @transform_0, window_bounds = array<i64: 1, 256, 192>}, {pipeline_mode = #tpu.pipeline_mode<synchronous>, transform_indices = @transform_1, window_bounds = array<i64: 1728, 64>}, {pipeline_mode = #tpu.pipeline_mode<synchronous>, transform_indices = @transform_2, window_bounds = array<i64: 1, 64>}, {transform_indices = @transform_3, window_bounds = array<i64: 1, 256, 64>}, {transform_indices = @transform_4, window_bounds = array<i64: 1, 2, 64>}]} {
    %cst = arith.constant 0.000000e+00 : f32
    %0 = vector.broadcast %cst : f32 to vector<24x192xf32>
    %c0 = arith.constant 0 : index
    %c0_0 = arith.constant 0 : index
    %1 = vector.load %arg6[%c0, %c0_0] : memref<304x192xf32, #tpu.memory_space<vmem>>, vector<24x192xf32>
    tpu.vector_store %arg6[%c0, %c0_0], %0 {strides = array<i32>} : memref<304x192xf32, #tpu.memory_space<vmem>>, vector<24x192xf32>,
    %cst_1 = arith.constant 0.000000e+00 : f32
    %2 = vector.broadcast %cst_1 : f32 to vector<24x192xf32>
    %c280 = arith.constant 280 : index
    %c0_2 = arith.constant 0 : index
    %3 = vector.load %arg6[%c280, %c0_2] : memref<304x192xf32, #tpu.memory_space<vmem>>, vector<24x192xf32>
    tpu.vector_store %arg6[%c280, %c0_2], %2 {strides = array<i32>} : memref<304x192xf32, #tpu.memory_space<vmem>>, vector<24x192xf32>,
    %4 = tpu.iota {dimensions = array<i32: 0>} : vector<256x192xi32>
    %c16_i32 = arith.constant 16 : i32
    %c0_i32 = arith.constant 0 : i32
    %5 = arith.cmpi eq, %c16_i32, %c0_i32 : i32
    %c1_i32 = arith.constant 1 : i32
    %6 = arith.select %5, %c1_i32, %c16_i32 : i32
    %7 = vector.broadcast %6 : i32 to vector<256x192xi32>
    %8 = arith.remsi %4, %7 : vector<256x192xi32>
    %c0_i32_3 = arith.constant 0 : i32
    %9 = vector.broadcast %c0_i32_3 : i32 to vector<256x192xi32>
    %10 = arith.cmpi ne, %8, %9 : vector<256x192xi32>
    %c0_i32_4 = arith.constant 0 : i32
    %11 = vector.broadcast %c0_i32_4 : i32 to vector<256x192xi32>
    %12 = arith.cmpi slt, %8, %11 : vector<256x192xi32>
    %c0_i32_5 = arith.constant 0 : i32
    %13 = arith.cmpi slt, %6, %c0_i32_5 : i32
    %14 = vector.broadcast %13 : i1 to vector<256x192xi1>
    %15 = vector.broadcast %14 : vector<256x192xi1> to vector<256x192xi1>
    %16 = arith.xori %12, %15 : vector<256x192xi1>
    %17 = arith.andi %16, %10 : vector<256x192xi1>
    %18 = vector.broadcast %6 : i32 to vector<256x192xi32>
    %19 = arith.addi %8, %18 : vector<256x192xi32>
    %20 = arith.select %17, %19, %8 : vector<256x192xi1>, vector<256x192xi32>
    %c0_i32_6 = arith.constant 0 : i32
    %21 = vector.broadcast %c0_i32_6 : i32 to vector<256x192xi32>
    %22 = arith.cmpi sgt, %20, %21 : vector<256x192xi32>
    %c15_i32 = arith.constant 15 : i32
    %23 = vector.broadcast %c15_i32 : i32 to vector<256x192xi32>
    %24 = arith.cmpi slt, %20, %23 : vector<256x192xi32>
    %c0_7 = arith.constant 0 : index
    %c0_8 = arith.constant 0 : index
    %c0_9 = arith.constant 0 : index
    %25 = vector.load %arg1[%c0_7, %c0_8, %c0_9] : memref<1x256x192xf32, #tpu.memory_space<vmem>>, vector<1x256x192xf32>
    %26 = vector.shape_cast %25 : vector<1x256x192xf32> to vector<256x192xf32>
    %c24 = arith.constant 24 : index
    %c0_10 = arith.constant 0 : index
    %27 = vector.load %arg6[%c24, %c0_10] : memref<304x192xf32, #tpu.memory_space<vmem>>, vector<256x192xf32>
    tpu.vector_store %arg6[%c24, %c0_10], %26 {strides = array<i32>} : memref<304x192xf32, #tpu.memory_space<vmem>>, vector<256x192xf32>,
    %c7 = arith.constant 7 : index
    %c0_11 = arith.constant 0 : index
    %28 = vector.load %arg6[%c7, %c0_11] : memref<304x192xf32, #tpu.memory_space<vmem>>, vector<256x192xf32>
    %cst_12 = arith.constant 0.000000e+00 : f32
    %29 = vector.broadcast %cst_12 : f32 to vector<256x192xf32>
    %30 = arith.select %22, %28, %29 : vector<256x192xi1>, vector<256x192xf32>
    %c8 = arith.constant 8 : index
    %c0_13 = arith.constant 0 : index
    %31 = vector.load %arg6[%c8, %c0_13] : memref<304x192xf32, #tpu.memory_space<vmem>>, vector<256x192xf32>
    %c9 = arith.constant 9 : index
    %c0_14 = arith.constant 0 : index
    %32 = vector.load %arg6[%c9, %c0_14] : memref<304x192xf32, #tpu.memory_space<vmem>>, vector<256x192xf32>
    %cst_15 = arith.constant 0.000000e+00 : f32
    %33 = vector.broadcast %cst_15 : f32 to vector<256x192xf32>
    %34 = arith.select %24, %32, %33 : vector<256x192xi1>, vector<256x192xf32>
    %c23 = arith.constant 23 : index
    %c0_16 = arith.constant 0 : index
    %35 = vector.load %arg6[%c23, %c0_16] : memref<304x192xf32, #tpu.memory_space<vmem>>, vector<256x192xf32>
    %cst_17 = arith.constant 0.000000e+00 : f32
    %36 = vector.broadcast %cst_17 : f32 to vector<256x192xf32>
    %37 = arith.select %22, %35, %36 : vector<256x192xi1>, vector<256x192xf32>
    %c24_18 = arith.constant 24 : index
    %c0_19 = arith.constant 0 : index
    %38 = vector.load %arg6[%c24_18, %c0_19] : memref<304x192xf32, #tpu.memory_space<vmem>>, vector<256x192xf32>
    %c25 = arith.constant 25 : index
    %c0_20 = arith.constant 0 : index
    %39 = vector.load %arg6[%c25, %c0_20] : memref<304x192xf32, #tpu.memory_space<vmem>>, vector<256x192xf32>
    %cst_21 = arith.constant 0.000000e+00 : f32
    %40 = vector.broadcast %cst_21 : f32 to vector<256x192xf32>
    %41 = arith.select %24, %39, %40 : vector<256x192xi1>, vector<256x192xf32>
    %c39 = arith.constant 39 : index
    %c0_22 = arith.constant 0 : index
    %42 = vector.load %arg6[%c39, %c0_22] : memref<304x192xf32, #tpu.memory_space<vmem>>, vector<256x192xf32>
    %cst_23 = arith.constant 0.000000e+00 : f32
    %43 = vector.broadcast %cst_23 : f32 to vector<256x192xf32>
    %44 = arith.select %22, %42, %43 : vector<256x192xi1>, vector<256x192xf32>
    %c40 = arith.constant 40 : index
    %c0_24 = arith.constant 0 : index
    %45 = vector.load %arg6[%c40, %c0_24] : memref<304x192xf32, #tpu.memory_space<vmem>>, vector<256x192xf32>
    %c41 = arith.constant 41 : index
    %c0_25 = arith.constant 0 : index
    %46 = vector.load %arg6[%c41, %c0_25] : memref<304x192xf32, #tpu.memory_space<vmem>>, vector<256x192xf32>
    %cst_26 = arith.constant 0.000000e+00 : f32
    %47 = vector.broadcast %cst_26 : f32 to vector<256x192xf32>
    %48 = arith.select %24, %46, %47 : vector<256x192xi1>, vector<256x192xf32>
    %49 = tpu.concatenate %30, %31, %34, %37, %38, %41, %44, %45, %48 in 1 : vector<256x192xf32>, vector<256x192xf32>, vector<256x192xf32>, vector<256x192xf32>, vector<256x192xf32>, vector<256x192xf32>, vector<256x192xf32>, vector<256x192xf32>, vector<256x192xf32> -> vector<256x1728xf32>
    %c0_27 = arith.constant 0 : index
    %c0_28 = arith.constant 0 : index
    %50 = vector.load %arg2[%c0_27, %c0_28] : memref<1728x64xf32, #tpu.memory_space<vmem>>, vector<1728x64xf32>
    %cst_29 = arith.constant dense<0.000000e+00> : vector<256x64xf32>
    %51 = tpu.matmul %49, %50, %cst_29 {dimension_numbers = #tpu.dot_dimension_numbers<[1], [0], [0], [1], [0, 0, 1, 1], [], []>} : vector<256x1728xf32>, vector<1728x64xf32>, vector<256x64xf32> -> vector<256x64xf32>
    %c0_30 = arith.constant 0 : index
    %c0_31 = arith.constant 0 : index
    %52 = vector.load %arg3[%c0_30, %c0_31] : memref<1x64xf32, #tpu.memory_space<vmem>>, vector<1x64xf32>
    %53 = vector.broadcast %52 : vector<1x64xf32> to vector<256x64xf32>
    %54 = arith.addf %51, %53 : vector<256x64xf32>
    %c0_32 = arith.constant 0 : index
    %c0_33 = arith.constant 0 : index
    %c0_34 = arith.constant 0 : index
    %55 = vector.load %arg4[%c0_32, %c0_33, %c0_34] : memref<1x256x64xf32, #tpu.memory_space<vmem>>, vector<1x256x64xf32>
    %56 = vector.shape_cast %55 : vector<1x256x64xf32> to vector<256x64xf32>
    %57 = vector.shape_cast %54 : vector<256x64xf32> to vector<1x256x64xf32>
    tpu.vector_store %arg4[%c0_32, %c0_33, %c0_34], %57 {strides = array<i32>} : memref<1x256x64xf32, #tpu.memory_space<vmem>>, vector<1x256x64xf32>,
    %cst_35 = arith.constant dense<0.000000e+00> : vector<64xf32>
    %58 = vector.multi_reduction <add>, %54, %cst_35 [0] : vector<256x64xf32> to vector<64xf32>
    %59 = vector.shape_cast %58 : vector<64xf32> to vector<1x64xf32>
    %60 = arith.mulf %54, %54 : vector<256x64xf32>
    %cst_36 = arith.constant dense<0.000000e+00> : vector<64xf32>
    %61 = vector.multi_reduction <add>, %60, %cst_36 [0] : vector<256x64xf32> to vector<64xf32>
    %62 = vector.shape_cast %61 : vector<64xf32> to vector<1x64xf32>
    %63 = tpu.concatenate %59, %62 in 0 : vector<1x64xf32>, vector<1x64xf32> -> vector<2x64xf32>
    %c0_37 = arith.constant 0 : index
    %c0_38 = arith.constant 0 : index
    %c0_39 = arith.constant 0 : index
    %64 = vector.load %arg5[%c0_37, %c0_38, %c0_39] : memref<1x2x64xf32, #tpu.memory_space<vmem>>, vector<1x2x64xf32>
    %65 = vector.shape_cast %64 : vector<1x2x64xf32> to vector<2x64xf32>
    %66 = vector.shape_cast %63 : vector<2x64xf32> to vector<1x2x64xf32>
    tpu.vector_store %arg5[%c0_37, %c0_38, %c0_39], %66 {strides = array<i32>} : memref<1x2x64xf32, #tpu.memory_space<vmem>>, vector<1x2x64xf32>,
    return
  }
  func.func @transform_0(%arg0: i32) -> (i32, i32, i32) {
    %c0_i32 = arith.constant 0 : i32
    %c0_i32_0 = arith.constant 0 : i32
    %c0_i32_1 = arith.constant 0 : i32
    return %arg0, %c0_i32, %c0_i32_0 : i32, i32, i32
  }
  func.func @transform_1(%arg0: i32) -> (i32, i32) {
    %c0_i32 = arith.constant 0 : i32
    %c0_i32_0 = arith.constant 0 : i32
    %c0_i32_1 = arith.constant 0 : i32
    return %c0_i32, %c0_i32_0 : i32, i32
  }
  func.func @transform_2(%arg0: i32) -> (i32, i32) {
    %c0_i32 = arith.constant 0 : i32
    %c0_i32_0 = arith.constant 0 : i32
    %c0_i32_1 = arith.constant 0 : i32
    return %c0_i32, %c0_i32_0 : i32, i32
  }
  func.func @transform_3(%arg0: i32) -> (i32, i32, i32) {
    %c0_i32 = arith.constant 0 : i32
    %c0_i32_0 = arith.constant 0 : i32
    %c0_i32_1 = arith.constant 0 : i32
    return %arg0, %c0_i32, %c0_i32_0 : i32, i32, i32
  }
  func.func @transform_4(%arg0: i32) -> (i32, i32, i32) {
    %c0_i32 = arith.constant 0 : i32
    %c0_i32_0 = arith.constant 0 : i32
    %c0_i32_1 = arith.constant 0 : i32
    return %arg0, %c0_i32, %c0_i32_0 : i32, i32, i32
  }
}

module attributes {stable_mosaic.version = 11 : i64} {
  func.func @_bn_prelu_stats_kernel(%arg0: i32, %arg1: memref<1x256x64xf32, #tpu.memory_space<vmem>>, %arg2: memref<1x64xf32, #tpu.memory_space<vmem>>, %arg3: memref<1x64xf32, #tpu.memory_space<vmem>>, %arg4: memref<1x64xf32, #tpu.memory_space<vmem>>, %arg5: memref<1x2x64xf32, #tpu.memory_space<vmem>>) attributes {dimension_semantics = [#tpu.dimension_semantics<parallel>], iteration_bounds = array<i64: 4>, scalar_prefetch = 0 : i64, scratch_operands = 0 : i64, tpu.core_type = #tpu.core_type<tc>, window_params = [{transform_indices = @transform_0, window_bounds = array<i64: 1, 256, 64>}, {pipeline_mode = #tpu.pipeline_mode<synchronous>, transform_indices = @transform_1, window_bounds = array<i64: 1, 64>}, {pipeline_mode = #tpu.pipeline_mode<synchronous>, transform_indices = @transform_2, window_bounds = array<i64: 1, 64>}, {pipeline_mode = #tpu.pipeline_mode<synchronous>, transform_indices = @transform_3, window_bounds = array<i64: 1, 64>}, {transform_indices = @transform_4, window_bounds = array<i64: 1, 2, 64>}]} {
    %c0 = arith.constant 0 : index
    %c0_0 = arith.constant 0 : index
    %c0_1 = arith.constant 0 : index
    %0 = vector.load %arg1[%c0, %c0_0, %c0_1] : memref<1x256x64xf32, #tpu.memory_space<vmem>>, vector<1x256x64xf32>
    %1 = vector.shape_cast %0 : vector<1x256x64xf32> to vector<256x64xf32>
    %c0_2 = arith.constant 0 : index
    %c0_3 = arith.constant 0 : index
    %2 = vector.load %arg2[%c0_2, %c0_3] : memref<1x64xf32, #tpu.memory_space<vmem>>, vector<1x64xf32>
    %3 = vector.broadcast %2 : vector<1x64xf32> to vector<256x64xf32>
    %4 = arith.mulf %1, %3 : vector<256x64xf32>
    %c0_4 = arith.constant 0 : index
    %c0_5 = arith.constant 0 : index
    %5 = vector.load %arg3[%c0_4, %c0_5] : memref<1x64xf32, #tpu.memory_space<vmem>>, vector<1x64xf32>
    %6 = vector.broadcast %5 : vector<1x64xf32> to vector<256x64xf32>
    %7 = arith.addf %4, %6 : vector<256x64xf32>
    %cst = arith.constant 0.000000e+00 : f32
    %8 = vector.broadcast %cst : f32 to vector<256x64xf32>
    %9 = arith.cmpf oge, %7, %8 : vector<256x64xf32>
    %c0_6 = arith.constant 0 : index
    %c0_7 = arith.constant 0 : index
    %10 = vector.load %arg4[%c0_6, %c0_7] : memref<1x64xf32, #tpu.memory_space<vmem>>, vector<1x64xf32>
    %11 = vector.broadcast %10 : vector<1x64xf32> to vector<256x64xf32>
    %12 = arith.mulf %11, %7 : vector<256x64xf32>
    %13 = arith.select %9, %7, %12 : vector<256x64xi1>, vector<256x64xf32>
    %cst_8 = arith.constant dense<0.000000e+00> : vector<64xf32>
    %14 = vector.multi_reduction <add>, %13, %cst_8 [0] : vector<256x64xf32> to vector<64xf32>
    %15 = vector.shape_cast %14 : vector<64xf32> to vector<1x64xf32>
    %16 = arith.mulf %13, %13 : vector<256x64xf32>
    %cst_9 = arith.constant dense<0.000000e+00> : vector<64xf32>
    %17 = vector.multi_reduction <add>, %16, %cst_9 [0] : vector<256x64xf32> to vector<64xf32>
    %18 = vector.shape_cast %17 : vector<64xf32> to vector<1x64xf32>
    %19 = tpu.concatenate %15, %18 in 0 : vector<1x64xf32>, vector<1x64xf32> -> vector<2x64xf32>
    %c0_10 = arith.constant 0 : index
    %c0_11 = arith.constant 0 : index
    %c0_12 = arith.constant 0 : index
    %20 = vector.load %arg5[%c0_10, %c0_11, %c0_12] : memref<1x2x64xf32, #tpu.memory_space<vmem>>, vector<1x2x64xf32>
    %21 = vector.shape_cast %20 : vector<1x2x64xf32> to vector<2x64xf32>
    %22 = vector.shape_cast %19 : vector<2x64xf32> to vector<1x2x64xf32>
    tpu.vector_store %arg5[%c0_10, %c0_11, %c0_12], %22 {strides = array<i32>} : memref<1x2x64xf32, #tpu.memory_space<vmem>>, vector<1x2x64xf32>,
    return
  }
  func.func @transform_0(%arg0: i32) -> (i32, i32, i32) {
    %c0_i32 = arith.constant 0 : i32
    %c0_i32_0 = arith.constant 0 : i32
    %c0_i32_1 = arith.constant 0 : i32
    return %arg0, %c0_i32, %c0_i32_0 : i32, i32, i32
  }
  func.func @transform_1(%arg0: i32) -> (i32, i32) {
    %c0_i32 = arith.constant 0 : i32
    %c0_i32_0 = arith.constant 0 : i32
    %c0_i32_1 = arith.constant 0 : i32
    return %c0_i32, %c0_i32_0 : i32, i32
  }
  func.func @transform_2(%arg0: i32) -> (i32, i32) {
    %c0_i32 = arith.constant 0 : i32
    %c0_i32_0 = arith.constant 0 : i32
    %c0_i32_1 = arith.constant 0 : i32
    return %c0_i32, %c0_i32_0 : i32, i32
  }
  func.func @transform_3(%arg0: i32) -> (i32, i32) {
    %c0_i32 = arith.constant 0 : i32
    %c0_i32_0 = arith.constant 0 : i32
    %c0_i32_1 = arith.constant 0 : i32
    return %c0_i32, %c0_i32_0 : i32, i32
  }
  func.func @transform_4(%arg0: i32) -> (i32, i32, i32) {
    %c0_i32 = arith.constant 0 : i32
    %c0_i32_0 = arith.constant 0 : i32
    %c0_i32_1 = arith.constant 0 : i32
    return %arg0, %c0_i32, %c0_i32_0 : i32, i32, i32
  }
}

module attributes {stable_mosaic.version = 11 : i64} {
  func.func @_fc_bn_end_kernel(%arg0: i32, %arg1: memref<4x2048xf32, #tpu.memory_space<vmem>>, %arg2: memref<1x2048xf32, #tpu.memory_space<vmem>>, %arg3: memref<1x2048xf32, #tpu.memory_space<vmem>>, %arg4: memref<1x2048xf32, #tpu.memory_space<vmem>>, %arg5: memref<1x2048xf32, #tpu.memory_space<vmem>>, %arg6: memref<1x2048xf32, #tpu.memory_space<vmem>>, %arg7: memref<2048x512xf32, #tpu.memory_space<vmem>>, %arg8: memref<1x512xf32, #tpu.memory_space<vmem>>, %arg9: memref<1x512xf32, #tpu.memory_space<vmem>>, %arg10: memref<1x512xf32, #tpu.memory_space<vmem>>, %arg11: memref<4x512xf32, #tpu.memory_space<vmem>>, %arg12: memref<4x512xf32, #tpu.memory_space<vmem>>) attributes {dimension_semantics = [#tpu.dimension_semantics<arbitrary>], iteration_bounds = array<i64: 8>, scalar_prefetch = 0 : i64, scratch_operands = 1 : i64, tpu.core_type = #tpu.core_type<tc>, window_params = [{transform_indices = @transform_0, window_bounds = array<i64: 4, 2048>}, {transform_indices = @transform_1, window_bounds = array<i64: 1, 2048>}, {transform_indices = @transform_2, window_bounds = array<i64: 1, 2048>}, {transform_indices = @transform_3, window_bounds = array<i64: 1, 2048>}, {transform_indices = @transform_4, window_bounds = array<i64: 1, 2048>}, {transform_indices = @transform_5, window_bounds = array<i64: 1, 2048>}, {transform_indices = @transform_6, window_bounds = array<i64: 2048, 512>}, {pipeline_mode = #tpu.pipeline_mode<synchronous>, transform_indices = @transform_7, window_bounds = array<i64: 1, 512>}, {pipeline_mode = #tpu.pipeline_mode<synchronous>, transform_indices = @transform_8, window_bounds = array<i64: 1, 512>}, {pipeline_mode = #tpu.pipeline_mode<synchronous>, transform_indices = @transform_9, window_bounds = array<i64: 1, 512>}, {pipeline_mode = #tpu.pipeline_mode<synchronous>, transform_indices = @transform_10, window_bounds = array<i64: 4, 512>}]} {
    %c0_i32 = arith.constant 0 : i32
    %0 = arith.cmpi eq, %arg0, %c0_i32 : i32
    %1 = arith.extui %0 : i1 to i32
    %c0_i32_0 = arith.constant 0 : i32
    %2 = arith.cmpi ne, %1, %c0_i32_0 : i32
    scf.if %2 {
      %cst_20 = arith.constant 0.000000e+00 : f32
      %30 = vector.broadcast %cst_20 : f32 to vector<4x512xf32>
      %c0_21 = arith.constant 0 : index
      %c0_22 = arith.constant 0 : index
      %31 = vector.load %arg12[%c0_21, %c0_22] : memref<4x512xf32, #tpu.memory_space<vmem>>, vector<4x512xf32>
      tpu.vector_store %arg12[%c0_21, %c0_22], %30 {strides = array<i32>} : memref<4x512xf32, #tpu.memory_space<vmem>>, vector<4x512xf32>,
    } else {
    }
    %c0 = arith.constant 0 : index
    %c0_1 = arith.constant 0 : index
    %3 = vector.load %arg1[%c0, %c0_1] : memref<4x2048xf32, #tpu.memory_space<vmem>>, vector<4x2048xf32>
    %c0_2 = arith.constant 0 : index
    %c0_3 = arith.constant 0 : index
    %4 = vector.load %arg2[%c0_2, %c0_3] : memref<1x2048xf32, #tpu.memory_space<vmem>>, vector<1x2048xf32>
    %5 = vector.broadcast %4 : vector<1x2048xf32> to vector<4x2048xf32>
    %6 = arith.mulf %3, %5 : vector<4x2048xf32>
    %c0_4 = arith.constant 0 : index
    %c0_5 = arith.constant 0 : index
    %7 = vector.load %arg3[%c0_4, %c0_5] : memref<1x2048xf32, #tpu.memory_space<vmem>>, vector<1x2048xf32>
    %8 = vector.broadcast %7 : vector<1x2048xf32> to vector<4x2048xf32>
    %9 = arith.addf %6, %8 : vector<4x2048xf32>
    %cst = arith.constant 0.000000e+00 : f32
    %10 = vector.broadcast %cst : f32 to vector<4x2048xf32>
    %11 = arith.cmpf oge, %9, %10 : vector<4x2048xf32>
    %c0_6 = arith.constant 0 : index
    %c0_7 = arith.constant 0 : index
    %12 = vector.load %arg4[%c0_6, %c0_7] : memref<1x2048xf32, #tpu.memory_space<vmem>>, vector<1x2048xf32>
    %13 = vector.broadcast %12 : vector<1x2048xf32> to vector<4x2048xf32>
    %14 = arith.mulf %13, %9 : vector<4x2048xf32>
    %15 = arith.select %11, %9, %14 : vector<4x2048xi1>, vector<4x2048xf32>
    %c0_8 = arith.constant 0 : index
    %c0_9 = arith.constant 0 : index
    %16 = vector.load %arg5[%c0_8, %c0_9] : memref<1x2048xf32, #tpu.memory_space<vmem>>, vector<1x2048xf32>
    %17 = vector.broadcast %16 : vector<1x2048xf32> to vector<4x2048xf32>
    %18 = arith.mulf %15, %17 : vector<4x2048xf32>
    %c0_10 = arith.constant 0 : index
    %c0_11 = arith.constant 0 : index
    %19 = vector.load %arg6[%c0_10, %c0_11] : memref<1x2048xf32, #tpu.memory_space<vmem>>, vector<1x2048xf32>
    %20 = vector.broadcast %19 : vector<1x2048xf32> to vector<4x2048xf32>
    %21 = arith.addf %18, %20 : vector<4x2048xf32>
    %c0_12 = arith.constant 0 : index
    %c0_13 = arith.constant 0 : index
    %22 = vector.load %arg12[%c0_12, %c0_13] : memref<4x512xf32, #tpu.memory_space<vmem>>, vector<4x512xf32>
    %c0_14 = arith.constant 0 : index
    %c0_15 = arith.constant 0 : index
    %23 = vector.load %arg7[%c0_14, %c0_15] : memref<2048x512xf32, #tpu.memory_space<vmem>>, vector<2048x512xf32>
    %cst_16 = arith.constant dense<0.000000e+00> : vector<4x512xf32>
    %24 = tpu.matmul %21, %23, %cst_16 {dimension_numbers = #tpu.dot_dimension_numbers<[1], [0], [0], [1], [0, 0, 1, 1], [], []>} : vector<4x2048xf32>, vector<2048x512xf32>, vector<4x512xf32> -> vector<4x512xf32>
    %25 = arith.addf %22, %24 : vector<4x512xf32>
    %c0_17 = arith.constant 0 : index
    %c0_18 = arith.constant 0 : index
    %26 = vector.load %arg12[%c0_17, %c0_18] : memref<4x512xf32, #tpu.memory_space<vmem>>, vector<4x512xf32>
    tpu.vector_store %arg12[%c0_17, %c0_18], %25 {strides = array<i32>} : memref<4x512xf32, #tpu.memory_space<vmem>>, vector<4x512xf32>,
    %c7_i32 = arith.constant 7 : i32
    %27 = arith.cmpi eq, %arg0, %c7_i32 : i32
    %28 = arith.extui %27 : i1 to i32
    %c0_i32_19 = arith.constant 0 : i32
    %29 = arith.cmpi ne, %28, %c0_i32_19 : i32
    scf.if %29 {
      %c0_20 = arith.constant 0 : index
      %c0_21 = arith.constant 0 : index
      %30 = vector.load %arg12[%c0_20, %c0_21] : memref<4x512xf32, #tpu.memory_space<vmem>>, vector<4x512xf32>
      %c0_22 = arith.constant 0 : index
      %c0_23 = arith.constant 0 : index
      %31 = vector.load %arg8[%c0_22, %c0_23] : memref<1x512xf32, #tpu.memory_space<vmem>>, vector<1x512xf32>
      %32 = vector.broadcast %31 : vector<1x512xf32> to vector<4x512xf32>
      %33 = arith.addf %30, %32 : vector<4x512xf32>
      %cst_24 = arith.constant dense<0.000000e+00> : vector<512xf32>
      %34 = vector.multi_reduction <add>, %33, %cst_24 [0] : vector<4x512xf32> to vector<512xf32>
      %35 = vector.shape_cast %34 : vector<512xf32> to vector<1x512xf32>
      %cst_25 = arith.constant 2.500000e-01 : f32
      %36 = vector.broadcast %cst_25 : f32 to vector<1x512xf32>
      %37 = arith.mulf %35, %36 : vector<1x512xf32>
      %38 = arith.mulf %33, %33 : vector<4x512xf32>
      %cst_26 = arith.constant dense<0.000000e+00> : vector<512xf32>
      %39 = vector.multi_reduction <add>, %38, %cst_26 [0] : vector<4x512xf32> to vector<512xf32>
      %40 = vector.shape_cast %39 : vector<512xf32> to vector<1x512xf32>
      %cst_27 = arith.constant 2.500000e-01 : f32
      %41 = vector.broadcast %cst_27 : f32 to vector<1x512xf32>
      %42 = arith.mulf %40, %41 : vector<1x512xf32>
      %43 = arith.mulf %37, %37 : vector<1x512xf32>
      %44 = arith.subf %42, %43 : vector<1x512xf32>
      %45 = vector.broadcast %37 : vector<1x512xf32> to vector<4x512xf32>
      %46 = arith.subf %33, %45 : vector<4x512xf32>
      %cst_28 = arith.constant 9.99999974E-6 : f32
      %47 = vector.broadcast %cst_28 : f32 to vector<1x512xf32>
      %48 = arith.addf %44, %47 : vector<1x512xf32>
      %49 = math.rsqrt %48 : vector<1x512xf32>
      %50 = vector.broadcast %49 : vector<1x512xf32> to vector<4x512xf32>
      %51 = arith.mulf %46, %50 : vector<4x512xf32>
      %c0_29 = arith.constant 0 : index
      %c0_30 = arith.constant 0 : index
      %52 = vector.load %arg9[%c0_29, %c0_30] : memref<1x512xf32, #tpu.memory_space<vmem>>, vector<1x512xf32>
      %53 = vector.broadcast %52 : vector<1x512xf32> to vector<4x512xf32>
      %54 = arith.mulf %51, %53 : vector<4x512xf32>
      %c0_31 = arith.constant 0 : index
      %c0_32 = arith.constant 0 : index
      %55 = vector.load %arg10[%c0_31, %c0_32] : memref<1x512xf32, #tpu.memory_space<vmem>>, vector<1x512xf32>
      %56 = vector.broadcast %55 : vector<1x512xf32> to vector<4x512xf32>
      %57 = arith.addf %54, %56 : vector<4x512xf32>
      %c0_33 = arith.constant 0 : index
      %c0_34 = arith.constant 0 : index
      %58 = vector.load %arg11[%c0_33, %c0_34] : memref<4x512xf32, #tpu.memory_space<vmem>>, vector<4x512xf32>
      tpu.vector_store %arg11[%c0_33, %c0_34], %57 {strides = array<i32>} : memref<4x512xf32, #tpu.memory_space<vmem>>, vector<4x512xf32>,
    } else {
    }
    return
  }
  func.func @transform_0(%arg0: i32) -> (i32, i32) {
    %c0_i32 = arith.constant 0 : i32
    %c0_i32_0 = arith.constant 0 : i32
    return %c0_i32, %arg0 : i32, i32
  }
  func.func @transform_1(%arg0: i32) -> (i32, i32) {
    %c0_i32 = arith.constant 0 : i32
    %c0_i32_0 = arith.constant 0 : i32
    return %c0_i32, %arg0 : i32, i32
  }
  func.func @transform_2(%arg0: i32) -> (i32, i32) {
    %c0_i32 = arith.constant 0 : i32
    %c0_i32_0 = arith.constant 0 : i32
    return %c0_i32, %arg0 : i32, i32
  }
  func.func @transform_3(%arg0: i32) -> (i32, i32) {
    %c0_i32 = arith.constant 0 : i32
    %c0_i32_0 = arith.constant 0 : i32
    return %c0_i32, %arg0 : i32, i32
  }
  func.func @transform_4(%arg0: i32) -> (i32, i32) {
    %c0_i32 = arith.constant 0 : i32
    %c0_i32_0 = arith.constant 0 : i32
    return %c0_i32, %arg0 : i32, i32
  }
  func.func @transform_5(%arg0: i32) -> (i32, i32) {
    %c0_i32 = arith.constant 0 : i32
    %c0_i32_0 = arith.constant 0 : i32
    return %c0_i32, %arg0 : i32, i32
  }
  func.func @transform_6(%arg0: i32) -> (i32, i32) {
    %c0_i32 = arith.constant 0 : i32
    %c0_i32_0 = arith.constant 0 : i32
    return %arg0, %c0_i32 : i32, i32
  }
  func.func @transform_7(%arg0: i32) -> (i32, i32) {
    %c0_i32 = arith.constant 0 : i32
    %c0_i32_0 = arith.constant 0 : i32
    %c0_i32_1 = arith.constant 0 : i32
    return %c0_i32, %c0_i32_0 : i32, i32
  }
  func.func @transform_8(%arg0: i32) -> (i32, i32) {
    %c0_i32 = arith.constant 0 : i32
    %c0_i32_0 = arith.constant 0 : i32
    %c0_i32_1 = arith.constant 0 : i32
    return %c0_i32, %c0_i32_0 : i32, i32
  }
  func.func @transform_9(%arg0: i32) -> (i32, i32) {
    %c0_i32 = arith.constant 0 : i32
    %c0_i32_0 = arith.constant 0 : i32
    %c0_i32_1 = arith.constant 0 : i32
    return %c0_i32, %c0_i32_0 : i32, i32
  }
  func.func @transform_10(%arg0: i32) -> (i32, i32) {
    %c0_i32 = arith.constant 0 : i32
    %c0_i32_0 = arith.constant 0 : i32
    %c0_i32_1 = arith.constant 0 : i32
    return %c0_i32, %c0_i32_0 : i32, i32
  }
}

</mosaic_0001>

<llo_original>
// kernel: tile.38
$region0: #{tile.38}
  #allocation0 [shape = 's32[1]{0}', space=sflag, size = 0x4, scoped, tag = 'scoped memory for tile.38']
  %s0 = inlined_call_operand.vmem [shape: f32[64], index: 0, kind: input, shape index: {}]
  %s1 = inlined_call_operand.vmem [shape: f32[256,64], index: 1, kind: output, shape index: {}]
  // Predicated region
  $region2: #{tile.38} parent=0 // pred_check
    _
  $region3: #{tile.38} parent=0 // pred_check_branch
    %3 = sbr.rel (0) target = $region5
  $region4: #{tile.38} parent=0 // pred_region
    _
  $region5: #{tile.38} parent=0 // pred_fallthru
    _
  %v4 = vld [vmem:[%s0] ss:$0 sm:$0xff]
  %5 = vst [vmem:[%s1] sm:$0xff] %v4
  %s6 = scalar_lea.vmem %s1, 8
  %7 = vst [vmem:[%s6] sm:$0xff] %v4
  %s8 = scalar_lea.vmem %s1, 16
  %9 = vst [vmem:[%s8] sm:$0xff] %v4
  %s10 = scalar_lea.vmem %s1, 24
  %11 = vst [vmem:[%s10] sm:$0xff] %v4
  %s12 = scalar_lea.vmem %s1, 32
  %13 = vst [vmem:[%s12] sm:$0xff] %v4
  %s14 = scalar_lea.vmem %s1, 40
  %15 = vst [vmem:[%s14] sm:$0xff] %v4
  %s16 = scalar_lea.vmem %s1, 48
  %17 = vst [vmem:[%s16] sm:$0xff] %v4
  %s18 = scalar_lea.vmem %s1, 56
  %19 = vst [vmem:[%s18] sm:$0xff] %v4
  %s20 = scalar_lea.vmem %s1, 64
  %21 = vst [vmem:[%s20] sm:$0xff] %v4
  %s22 = scalar_lea.vmem %s1, 72
  %23 = vst [vmem:[%s22] sm:$0xff] %v4
  %s24 = scalar_lea.vmem %s1, 80
  %25 = vst [vmem:[%s24] sm:$0xff] %v4
  %s26 = scalar_lea.vmem %s1, 88
  %27 = vst [vmem:[%s26] sm:$0xff] %v4
  %s28 = scalar_lea.vmem %s1, 96
  %29 = vst [vmem:[%s28] sm:$0xff] %v4
  %s30 = scalar_lea.vmem %s1, 104
  %31 = vst [vmem:[%s30] sm:$0xff] %v4
  %s32 = scalar_lea.vmem %s1, 112
  %33 = vst [vmem:[%s32] sm:$0xff] %v4
  %s34 = scalar_lea.vmem %s1, 120
  %35 = vst [vmem:[%s34] sm:$0xff] %v4
  %s36 = scalar_lea.vmem %s1, 128
  %37 = vst [vmem:[%s36] sm:$0xff] %v4
  %s38 = scalar_lea.vmem %s1, 136
  %39 = vst [vmem:[%s38] sm:$0xff] %v4
  %s40 = scalar_lea.vmem %s1, 144
  %41 = vst [vmem:[%s40] sm:$0xff] %v4
  %s42 = scalar_lea.vmem %s1, 152
  %43 = vst [vmem:[%s42] sm:$0xff] %v4
  %s44 = scalar_lea.vmem %s1, 160
  %45 = vst [vmem:[%s44] sm:$0xff] %v4
  %s46 = scalar_lea.vmem %s1, 168
  %47 = vst [vmem:[%s46] sm:$0xff] %v4
  %s48 = scalar_lea.vmem %s1, 176
  %49 = vst [vmem:[%s48] sm:$0xff] %v4
  %s50 = scalar_lea.vmem %s1, 184
  %51 = vst [vmem:[%s50] sm:$0xff] %v4
  %s52 = scalar_lea.vmem %s1, 192
  %53 = vst [vmem:[%s52] sm:$0xff] %v4
  %s54 = scalar_lea.vmem %s1, 200
  %55 = vst [vmem:[%s54] sm:$0xff] %v4
  %s56 = scalar_lea.vmem %s1, 208
  %57 = vst [vmem:[%s56] sm:$0xff] %v4
  %s58 = scalar_lea.vmem %s1, 216
  %59 = vst [vmem:[%s58] sm:$0xff] %v4
  %s60 = scalar_lea.vmem %s1, 224
  %61 = vst [vmem:[%s60] sm:$0xff] %v4
  %s62 = scalar_lea.vmem %s1, 232
  %63 = vst [vmem:[%s62] sm:$0xff] %v4
  %s64 = scalar_lea.vmem %s1, 240
  %65 = vst [vmem:[%s64] sm:$0xff] %v4
  %s66 = scalar_lea.vmem %s1, 248
  %67 = vst [vmem:[%s66] sm:$0xff] %v4

// kernel: tile.39
$region0: #{tile.39}
  %s0 = inlined_call_operand.vmem [shape: f32[256,64], index: 0, kind: input, shape index: {}]
  %s1 = inlined_call_operand.vmem [shape: f32[1,16384], index: 1, kind: output, shape index: {}]
  $region1: #{tile.39} parent=0
    #allocation0 [shape = 'u8[524288]{0}', space=vmem, size = 0x80000, scoped, tag = 'scoped mem for output reshape']
    %v2 = vld [vmem:[%s0] ss:$2 sm:$0xff]
    %vm3 = vcmask 523264
    %4 = vst.msk [vmem:[#allocation0] ss:$8 sm:$0xf] %vm3, %v2
    %5 = vst.msk [vmem:[#allocation0] ss:$8 sm:$0xf0] %vm3, %v2
    %s6 = scalar_lea.vmem %s0, 16
    %v7 = vld [vmem:[%s6] ss:$2 sm:$0xff]
    %vm8 = vcmask 523264
    %s9 = scalar_lea.vmem [#allocation0], 64
    %10 = vst.msk [vmem:[%s9] ss:$8 sm:$0xf] %vm8, %v7
    %s11 = scalar_lea.vmem [#allocation0], 64
    %12 = vst.msk [vmem:[%s11] ss:$8 sm:$0xf0] %vm8, %v7
    %s13 = scalar_lea.vmem %s0, 32
    %v14 = vld [vmem:[%s13] ss:$2 sm:$0xff]
    %vm15 = vcmask 523264
    %s16 = scalar_lea.vmem [#allocation0], 128
    %17 = vst.msk [vmem:[%s16] ss:$8 sm:$0xf] %vm15, %v14
    %s18 = scalar_lea.vmem [#allocation0], 128
    %19 = vst.msk [vmem:[%s18] ss:$8 sm:$0xf0] %vm15, %v14
    %s20 = scalar_lea.vmem %s0, 48
    %v21 = vld [vmem:[%s20] ss:$2 sm:$0xff]
    %vm22 = vcmask 523264
    %s23 = scalar_lea.vmem [#allocation0], 192
    %24 = vst.msk [vmem:[%s23] ss:$8 sm:$0xf] %vm22, %v21
    %s25 = scalar_lea.vmem [#allocation0], 192
    %26 = vst.msk [vmem:[%s25] ss:$8 sm:$0xf0] %vm22, %v21
    %s27 = scalar_lea.vmem %s0, 64
    %v28 = vld [vmem:[%s27] ss:$2 sm:$0xff]
    %vm29 = vcmask 523264
    %s30 = scalar_lea.vmem [#allocation0], 256
    %31 = vst.msk [vmem:[%s30] ss:$8 sm:$0xf] %vm29, %v28
    %s32 = scalar_lea.vmem [#allocation0], 256
    %33 = vst.msk [vmem:[%s32] ss:$8 sm:$0xf0] %vm29, %v28
    %s34 = scalar_lea.vmem %s0, 80
    %v35 = vld [vmem:[%s34] ss:$2 sm:$0xff]
    %vm36 = vcmask 523264
    %s37 = scalar_lea.vmem [#allocation0], 320
    %38 = vst.msk [vmem:[%s37] ss:$8 sm:$0xf] %vm36, %v35
    %s39 = scalar_lea.vmem [#allocation0], 320
    %40 = vst.msk [vmem:[%s39] ss:$8 sm:$0xf0] %vm36, %v35
    %s41 = scalar_lea.vmem %s0, 96
    %v42 = vld [vmem:[%s41] ss:$2 sm:$0xff]
    %vm43 = vcmask 523264
    %s44 = scalar_lea.vmem [#allocation0], 384
    %45 = vst.msk [vmem:[%s44] ss:$8 sm:$0xf] %vm43, %v42
    %s46 = scalar_lea.vmem [#allocation0], 384
    %47 = vst.msk [vmem:[%s46] ss:$8 sm:$0xf0] %vm43, %v42
    %s48 = scalar_lea.vmem %s0, 112
    %v49 = vld [vmem:[%s48] ss:$2 sm:$0xff]
    %vm50 = vcmask 523264
    %s51 = scalar_lea.vmem [#allocation0], 448
    %52 = vst.msk [vmem:[%s51] ss:$8 sm:$0xf] %vm50, %v49
    %s53 = scalar_lea.vmem [#allocation0], 448
    %54 = vst.msk [vmem:[%s53] ss:$8 sm:$0xf0] %vm50, %v49
    %s55 = scalar_lea.vmem %s0, 128
    %v56 = vld [vmem:[%s55] ss:$2 sm:$0xff]
    %vm57 = vcmask 523264
    %s58 = scalar_lea.vmem [#allocation0], 512
    %59 = vst.msk [vmem:[%s58] ss:$8 sm:$0xf] %vm57, %v56
    %s60 = scalar_lea.vmem [#allocation0], 512
    %61 = vst.msk [vmem:[%s60] ss:$8 sm:$0xf0] %vm57, %v56
    %s62 = scalar_lea.vmem %s0, 144
    %v63 = vld [vmem:[%s62] ss:$2 sm:$0xff]
    %vm64 = vcmask 523264
    %s65 = scalar_lea.vmem [#allocation0], 576
    %66 = vst.msk [vmem:[%s65] ss:$8 sm:$0xf] %vm64, %v63
    %s67 = scalar_lea.vmem [#allocation0], 576
    %68 = vst.msk [vmem:[%s67] ss:$8 sm:$0xf0] %vm64, %v63
    %s69 = scalar_lea.vmem %s0, 160
    %v70 = vld [vmem:[%s69] ss:$2 sm:$0xff]
    %vm71 = vcmask 523264
    %s72 = scalar_lea.vmem [#allocation0], 640
    %73 = vst.msk [vmem:[%s72] ss:$8 sm:$0xf] %vm71, %v70
    %s74 = scalar_lea.vmem [#allocation0], 640
    %75 = vst.msk [vmem:[%s74] ss:$8 sm:$0xf0] %vm71, %v70
    %s76 = scalar_lea.vmem %s0, 176
    %v77 = vld [vmem:[%s76] ss:$2 sm:$0xff]
    %vm78 = vcmask 523264
    %s79 = scalar_lea.vmem [#allocation0], 704
    %80 = vst.msk [vmem:[%s79] ss:$8 sm:$0xf] %vm78, %v77
    %s81 = scalar_lea.vmem [#allocation0], 704
    %82 = vst.msk [vmem:[%s81] ss:$8 sm:$0xf0] %vm78, %v77
    %s83 = scalar_lea.vmem %s0, 192
    %v84 = vld [vmem:[%s83] ss:$2 sm:$0xff]
    %vm85 = vcmask 523264
    %s86 = scalar_lea.vmem [#allocation0], 768
    %87 = vst.msk [vmem:[%s86] ss:$8 sm:$0xf] %vm85, %v84
    %s88 = scalar_lea.vmem [#allocation0], 768
    %89 = vst.msk [vmem:[%s88] ss:$8 sm:$0xf0] %vm85, %v84
    %s90 = scalar_lea.vmem %s0, 208
    %v91 = vld [vmem:[%s90] ss:$2 sm:$0xff]
    %vm92 = vcmask 523264
    %s93 = scalar_lea.vmem [#allocation0], 832
    %94 = vst.msk [vmem:[%s93] ss:$8 sm:$0xf] %vm92, %v91
    %s95 = scalar_lea.vmem [#allocation0], 832
    %96 = vst.msk [vmem:[%s95] ss:$8 sm:$0xf0] %vm92, %v91
    %s97 = scalar_lea.vmem %s0, 224
    %v98 = vld [vmem:[%s97] ss:$2 sm:$0xff]
    %vm99 = vcmask 523264
    %s100 = scalar_lea.vmem [#allocation0], 896
    %101 = vst.msk [vmem:[%s100] ss:$8 sm:$0xf] %vm99, %v98
    %s102 = scalar_lea.vmem [#allocation0], 896
    %103 = vst.msk [vmem:[%s102] ss:$8 sm:$0xf0] %vm99, %v98
    %s104 = scalar_lea.vmem %s0, 240
    %v105 = vld [vmem:[%s104] ss:$2 sm:$0xff]
    %vm106 = vcmask 523264
    %s107 = scalar_lea.vmem [#allocation0], 960
    %108 = vst.msk [vmem:[%s107] ss:$8 sm:$0xf] %vm106, %v105
    %s109 = scalar_lea.vmem [#allocation0], 960
    %110 = vst.msk [vmem:[%s109] ss:$8 sm:$0xf0] %vm106, %v105
    %s111 = scalar_lea.vmem %s0, 1
    %v112 = vld [vmem:[%s111] ss:$2 sm:$0xff]
    %113 = vrot.lane.b32.xlu0 %v112, 64
    %v114 = vpop.permute.xlu0 %113
    %vm115 = vcmask 1048064
    %116 = vst.msk [vmem:[#allocation0] ss:$8 sm:$0xf] %vm115, %v114
    %117 = vst.msk [vmem:[#allocation0] ss:$8 sm:$0xf0] %vm115, %v114
    %s118 = scalar_lea.vmem %s0, 17
    %v119 = vld [vmem:[%s118] ss:$2 sm:$0xff]
    %120 = vrot.lane.b32.xlu0 %v119, 64
    %v121 = vpop.permute.xlu0 %120
    %vm122 = vcmask 1048064
    %s123 = scalar_lea.vmem [#allocation0], 64
    %124 = vst.msk [vmem:[%s123] ss:$8 sm:$0xf] %vm122, %v121
    %s125 = scalar_lea.vmem [#allocation0], 64
    %126 = vst.msk [vmem:[%s125] ss:$8 sm:$0xf0] %vm122, %v121
    %s127 = scalar_lea.vmem %s0, 33
    %v128 = vld [vmem:[%s127] ss:$2 sm:$0xff]
    %129 = vrot.lane.b32.xlu0 %v128, 64
    %v130 = vpop.permute.xlu0 %129
    %vm131 = vcmask 1048064
    %s132 = scalar_lea.vmem [#allocation0], 128
    %133 = vst.msk [vmem:[%s132] ss:$8 sm:$0xf] %vm131, %v130
    %s134 = scalar_lea.vmem [#allocation0], 128
    %135 = vst.msk [vmem:[%s134] ss:$8 sm:$0xf0] %vm131, %v130
    %s136 = scalar_lea.vmem %s0, 49
    %v137 = vld [vmem:[%s136] ss:$2 sm:$0xff]
    %138 = vrot.lane.b32.xlu0 %v137, 64
    %v139 = vpop.permute.xlu0 %138
    %vm140 = vcmask 1048064
    %s141 = scalar_lea.vmem [#allocation0], 192
    %142 = vst.msk [vmem:[%s141] ss:$8 sm:$0xf] %vm140, %v139
    %s143 = scalar_lea.vmem [#allocation0], 192
    %144 = vst.msk [vmem:[%s143] ss:$8 sm:$0xf0] %vm140, %v139
    %s145 = scalar_lea.vmem %s0, 65
    %v146 = vld [vmem:[%s145] ss:$2 sm:$0xff]
    %147 = vrot.lane.b32.xlu0 %v146, 64
    %v148 = vpop.permute.xlu0 %147
    %vm149 = vcmask 1048064
    %s150 = scalar_lea.vmem [#allocation0], 256
    %151 = vst.msk [vmem:[%s150] ss:$8 sm:$0xf] %vm149, %v148
    %s152 = scalar_lea.vmem [#allocation0], 256
    %153 = vst.msk [vmem:[%s152] ss:$8 sm:$0xf0] %vm149, %v148
    %s154 = scalar_lea.vmem %s0, 81
    %v155 = vld [vmem:[%s154] ss:$2 sm:$0xff]
    %156 = vrot.lane.b32.xlu0 %v155, 64
    %v157 = vpop.permute.xlu0 %156
    %vm158 = vcmask 1048064
    %s159 = scalar_lea.vmem [#allocation0], 320
    %160 = vst.msk [vmem:[%s159] ss:$8 sm:$0xf] %vm158, %v157
    %s161 = scalar_lea.vmem [#allocation0], 320
    %162 = vst.msk [vmem:[%s161] ss:$8 sm:$0xf0] %vm158, %v157
    %s163 = scalar_lea.vmem %s0, 97
    %v164 = vld [vmem:[%s163] ss:$2 sm:$0xff]
    %165 = vrot.lane.b32.xlu0 %v164, 64
    %v166 = vpop.permute.xlu0 %165
    %vm167 = vcmask 1048064
    %s168 = scalar_lea.vmem [#allocation0], 384
    %169 = vst.msk [vmem:[%s168] ss:$8 sm:$0xf] %vm167, %v166
    %s170 = scalar_lea.vmem [#allocation0], 384
    %171 = vst.msk [vmem:[%s170] ss:$8 sm:$0xf0] %vm167, %v166
    %s172 = scalar_lea.vmem %s0, 113
    %v173 = vld [vmem:[%s172] ss:$2 sm:$0xff]
    %174 = vrot.lane.b32.xlu0 %v173, 64
    %v175 = vpop.permute.xlu0 %174
    %vm176 = vcmask 1048064
    %s177 = scalar_lea.vmem [#allocation0], 448
    %178 = vst.msk [vmem:[%s177] ss:$8 sm:$0xf] %vm176, %v175
    %s179 = scalar_lea.vmem [#allocation0], 448
    %180 = vst.msk [vmem:[%s179] ss:$8 sm:$0xf0] %vm176, %v175
    %s181 = scalar_lea.vmem %s0, 129
    %v182 = vld [vmem:[%s181] ss:$2 sm:$0xff]
    %183 = vrot.lane.b32.xlu0 %v182, 64
    %v184 = vpop.permute.xlu0 %183
    %vm185 = vcmask 1048064
    %s186 = scalar_lea.vmem [#allocation0], 512
    %187 = vst.msk [vmem:[%s186] ss:$8 sm:$0xf] %vm185, %v184
    %s188 = scalar_lea.vmem [#allocation0], 512
    %189 = vst.msk [vmem:[%s188] ss:$8 sm:$0xf0] %vm185, %v184
    %s190 = scalar_lea.vmem %s0, 145
    %v191 = vld [vmem:[%s190] ss:$2 sm:$0xff]
    %192 = vrot.lane.b32.xlu0 %v191, 64
    %v193 = vpop.permute.xlu0 %192
    %vm194 = vcmask 1048064
    %s195 = scalar_lea.vmem [#allocation0], 576
    %196 = vst.msk [vmem:[%s195] ss:$8 sm:$0xf] %vm194, %v193
    %s197 = scalar_lea.vmem [#allocation0], 576
    %198 = vst.msk [vmem:[%s197] ss:$8 sm:$0xf0] %vm194, %v193
    %s199 = scalar_lea.vmem %s0, 161
    %v200 = vld [vmem:[%s199] ss:$2 sm:$0xff]
    %201 = vrot.lane.b32.xlu0 %v200, 64
    %v202 = vpop.permute.xlu0 %201
    %vm203 = vcmask 1048064
    %s204 = scalar_lea.vmem [#allocation0], 640
    %205 = vst.msk [vmem:[%s204] ss:$8 sm:$0xf] %vm203, %v202
    %s206 = scalar_lea.vmem [#allocation0], 640
    %207 = vst.msk [vmem:[%s206] ss:$8 sm:$0xf0] %vm203, %v202
    %s208 = scalar_lea.vmem %s0, 177
    %v209 = vld [vmem:[%s208] ss:$2 sm:$0xff]
    %210 = vrot.lane.b32.xlu0 %v209, 64
    %v211 = vpop.permute.xlu0 %210
    %vm212 = vcmask 1048064
    %s213 = scalar_lea.vmem [#allocation0], 704
    %214 = vst.msk [vmem:[%s213] ss:$8 sm:$0xf] %vm212, %v211
    %s215 = scalar_lea.vmem [#allocation0], 704
    %216 = vst.msk [vmem:[%s215] ss:$8 sm:$0xf0] %vm212, %v211
    %s217 = scalar_lea.vmem %s0, 193
    %v218 = vld [vmem:[%s217] ss:$2 sm:$0xff]
    %219 = vrot.lane.b32.xlu0 %v218, 64
    %v220 = vpop.permute.xlu0 %219
    %vm221 = vcmask 1048064
    %s222 = scalar_lea.vmem [#allocation0], 768
    %223 = vst.msk [vmem:[%s222] ss:$8 sm:$0xf] %vm221, %v220
    %s224 = scalar_lea.vmem [#allocation0], 768
    %225 = vst.msk [vmem:[%s224] ss:$8 sm:$0xf0] %vm221, %v220
    %s226 = scalar_lea.vmem %s0, 209
    %v227 = vld [vmem:[%s226] ss:$2 sm:$0xff]
    %228 = vrot.lane.b32.xlu0 %v227, 64
    %v229 = vpop.permute.xlu0 %228
    %vm230 = vcmask 1048064
    %s231 = scalar_lea.vmem [#allocation0], 832
    %232 = vst.msk [vmem:[%s231] ss:$8 sm:$0xf] %vm230, %v229
    %s233 = scalar_lea.vmem [#allocation0], 832
    %234 = vst.msk [vmem:[%s233] ss:$8 sm:$0xf0] %vm230, %v229
    %s235 = scalar_lea.vmem %s0, 225
    %v236 = vld [vmem:[%s235] ss:$2 sm:$0xff]
    %237 = vrot.lane.b32.xlu0 %v236, 64
    %v238 = vpop.permute.xlu0 %237
    %vm239 = vcmask 1048064
    %s240 = scalar_lea.vmem [#allocation0], 896
    %241 = vst.msk [vmem:[%s240] ss:$8 sm:$0xf] %vm239, %v238
    %s242 = scalar_lea.vmem [#allocation0], 896
    %243 = vst.msk [vmem:[%s242] ss:$8 sm:$0xf0] %vm239, %v238
    %s244 = scalar_lea.vmem %s0, 241
    %v245 = vld [vmem:[%s244] ss:$2 sm:$0xff]
    %246 = vrot.lane.b32.xlu0 %v245, 64
    %v247 = vpop.permute.xlu0 %246
    %vm248 = vcmask 1048064
    %s249 = scalar_lea.vmem [#allocation0], 960
    %250 = vst.msk [vmem:[%s249] ss:$8 sm:$0xf] %vm248, %v247
    %s251 = scalar_lea.vmem [#allocation0], 960
    %252 = vst.msk [vmem:[%s251] ss:$8 sm:$0xf0] %vm248, %v247
    %s254 = sshllo.u32 0, 1
    %v256 = vld [vmem:[#allocation0] sm:%s254]
    %s257 = sshllo.u32 0, 1
    %258 = vst [vmem:[%s1] sm:%s257] %v256
    %s259 = scalar_lea.vmem [#allocation0], 8
    %v260 = vld [vmem:[%s259] sm:%s254]
    %s261 = sshllo.u32 0, 1
    %s262 = scalar_lea.vmem %s1, 1
    %263 = vst [vmem:[%s262] sm:%s261] %v260
    %s264 = scalar_lea.vmem [#allocation0], 16
    %v265 = vld [vmem:[%s264] sm:%s254]
    %s266 = sshllo.u32 0, 1
    %s267 = smul.addr 1, 2
    %s268 = scalar_lea.vmem %s1, %s267
    %269 = vst [vmem:[%s268] sm:%s266] %v265
    %s270 = scalar_lea.vmem [#allocation0], 24
    %v271 = vld [vmem:[%s270] sm:%s254]
    %s272 = sshllo.u32 0, 1
    %s273 = smul.addr 1, 3
    %s274 = scalar_lea.vmem %s1, %s273
    %275 = vst [vmem:[%s274] sm:%s272] %v271
    %s276 = scalar_lea.vmem [#allocation0], 32
    %v277 = vld [vmem:[%s276] sm:%s254]
    %s278 = sshllo.u32 0, 1
    %s279 = smul.addr 1, 4
    %s280 = scalar_lea.vmem %s1, %s279
    %281 = vst [vmem:[%s280] sm:%s278] %v277
    %s282 = scalar_lea.vmem [#allocation0], 40
    %v283 = vld [vmem:[%s282] sm:%s254]
    %s284 = sshllo.u32 0, 1
    %s285 = smul.addr 1, 5
    %s286 = scalar_lea.vmem %s1, %s285
    %287 = vst [vmem:[%s286] sm:%s284] %v283
    %s288 = scalar_lea.vmem [#allocation0], 48
    %v289 = vld [vmem:[%s288] sm:%s254]
    %s290 = sshllo.u32 0, 1
    %s291 = smul.addr 1, 6
    %s292 = scalar_lea.vmem %s1, %s291
    %293 = vst [vmem:[%s292] sm:%s290] %v289
    %s294 = scalar_lea.vmem [#allocation0], 56
    %v295 = vld [vmem:[%s294] sm:%s254]
    %s296 = sshllo.u32 0, 1
    %s297 = smul.addr 1, 7
    %s298 = scalar_lea.vmem %s1, %s297
    %299 = vst [vmem:[%s298] sm:%s296] %v295
    %s300 = scalar_lea.vmem [#allocation0], 64
    %v301 = vld [vmem:[%s300] sm:%s254]
    %s302 = sshllo.u32 0, 1
    %s303 = smul.addr 1, 8
    %s304 = scalar_lea.vmem %s1, %s303
    %305 = vst [vmem:[%s304] sm:%s302] %v301
    %s306 = scalar_lea.vmem [#allocation0], 72
    %v307 = vld [vmem:[%s306] sm:%s254]
    %s308 = sshllo.u32 0, 1
    %s309 = smul.addr 1, 9
    %s310 = scalar_lea.vmem %s1, %s309
    %311 = vst [vmem:[%s310] sm:%s308] %v307
    %s312 = scalar_lea.vmem [#allocation0], 80
    %v313 = vld [vmem:[%s312] sm:%s254]
    %s314 = sshllo.u32 0, 1
    %s315 = smul.addr 1, 10
    %s316 = scalar_lea.vmem %s1, %s315
    %317 = vst [vmem:[%s316] sm:%s314] %v313
    %s318 = scalar_lea.vmem [#allocation0], 88
    %v319 = vld [vmem:[%s318] sm:%s254]
    %s320 = sshllo.u32 0, 1
    %s321 = smul.addr 1, 11
    %s322 = scalar_lea.vmem %s1, %s321
    %323 = vst [vmem:[%s322] sm:%s320] %v319
    %s324 = scalar_lea.vmem [#allocation0], 96
    %v325 = vld [vmem:[%s324] sm:%s254]
    %s326 = sshllo.u32 0, 1
    %s327 = smul.addr 1, 12
    %s328 = scalar_lea.vmem %s1, %s327
    %329 = vst [vmem:[%s328] sm:%s326] %v325
    %s330 = scalar_lea.vmem [#allocation0], 104
    %v331 = vld [vmem:[%s330] sm:%s254]
    %s332 = sshllo.u32 0, 1
    %s333 = smul.addr 1, 13
    %s334 = scalar_lea.vmem %s1, %s333
    %335 = vst [vmem:[%s334] sm:%s332] %v331
    %s336 = scalar_lea.vmem [#allocation0], 112
    %v337 = vld [vmem:[%s336] sm:%s254]
    %s338 = sshllo.u32 0, 1
    %s339 = smul.addr 1, 14
    %s340 = scalar_lea.vmem %s1, %s339
    %341 = vst [vmem:[%s340] sm:%s338] %v337
    %s342 = scalar_lea.vmem [#allocation0], 120
    %v343 = vld [vmem:[%s342] sm:%s254]
    %s344 = sshllo.u32 0, 1
    %s345 = smul.addr 1, 15
    %s346 = scalar_lea.vmem %s1, %s345
    %347 = vst [vmem:[%s346] sm:%s344] %v343
    %s348 = scalar_lea.vmem [#allocation0], 128
    %v349 = vld [vmem:[%s348] sm:%s254]
    %s350 = sshllo.u32 0, 1
    %s351 = smul.addr 1, 16
    %s352 = scalar_lea.vmem %s1, %s351
    %353 = vst [vmem:[%s352] sm:%s350] %v349
    %s354 = scalar_lea.vmem [#allocation0], 136
    %v355 = vld [vmem:[%s354] sm:%s254]
    %s356 = sshllo.u32 0, 1
    %s357 = smul.addr 1, 17
    %s358 = scalar_lea.vmem %s1, %s357
    %359 = vst [vmem:[%s358] sm:%s356] %v355
    %s360 = scalar_lea.vmem [#allocation0], 144
    %v361 = vld [vmem:[%s360] sm:%s254]
    %s362 = sshllo.u32 0, 1
    %s363 = smul.addr 1, 18
    %s364 = scalar_lea.vmem %s1, %s363
    %365 = vst [vmem:[%s364] sm:%s362] %v361
    %s366 = scalar_lea.vmem [#allocation0], 152
    %v367 = vld [vmem:[%s366] sm:%s254]
    %s368 = sshllo.u32 0, 1
    %s369 = smul.addr 1, 19
    %s370 = scalar_lea.vmem %s1, %s369
    %371 = vst [vmem:[%s370] sm:%s368] %v367
    %s372 = scalar_lea.vmem [#allocation0], 160
    %v373 = vld [vmem:[%s372] sm:%s254]
    %s374 = sshllo.u32 0, 1
    %s375 = smul.addr 1, 20
    %s376 = scalar_lea.vmem %s1, %s375
    %377 = vst [vmem:[%s376] sm:%s374] %v373
    %s378 = scalar_lea.vmem [#allocation0], 168
    %v379 = vld [vmem:[%s378] sm:%s254]
    %s380 = sshllo.u32 0, 1
    %s381 = smul.addr 1, 21
    %s382 = scalar_lea.vmem %s1, %s381
    %383 = vst [vmem:[%s382] sm:%s380] %v379
    %s384 = scalar_lea.vmem [#allocation0], 176
    %v385 = vld [vmem:[%s384] sm:%s254]
    %s386 = sshllo.u32 0, 1
    %s387 = smul.addr 1, 22
    %s388 = scalar_lea.vmem %s1, %s387
    %389 = vst [vmem:[%s388] sm:%s386] %v385
    %s390 = scalar_lea.vmem [#allocation0], 184
    %v391 = vld [vmem:[%s390] sm:%s254]
    %s392 = sshllo.u32 0, 1
    %s393 = smul.addr 1, 23
    %s394 = scalar_lea.vmem %s1, %s393
    %395 = vst [vmem:[%s394] sm:%s392] %v391
    %s396 = scalar_lea.vmem [#allocation0], 192
    %v397 = vld [vmem:[%s396] sm:%s254]
    %s398 = sshllo.u32 0, 1
    %s399 = smul.addr 1, 24
    %s400 = scalar_lea.vmem %s1, %s399
    %401 = vst [vmem:[%s400] sm:%s398] %v397
    %s402 = scalar_lea.vmem [#allocation0], 200
    %v403 = vld [vmem:[%s402] sm:%s254]
    %s404 = sshllo.u32 0, 1
    %s405 = smul.addr 1, 25
    %s406 = scalar_lea.vmem %s1, %s405
    %407 = vst [vmem:[%s406] sm:%s404] %v403
    %s408 = scalar_lea.vmem [#allocation0], 208
    %v409 = vld [vmem:[%s408] sm:%s254]
    %s410 = sshllo.u32 0, 1
    %s411 = smul.addr 1, 26
    %s412 = scalar_lea.vmem %s1, %s411
    %413 = vst [vmem:[%s412] sm:%s410] %v409
    %s414 = scalar_lea.vmem [#allocation0], 216
    %v415 = vld [vmem:[%s414] sm:%s254]
    %s416 = sshllo.u32 0, 1
    %s417 = smul.addr 1, 27
    %s418 = scalar_lea.vmem %s1, %s417
    %419 = vst [vmem:[%s418] sm:%s416] %v415
    %s420 = scalar_lea.vmem [#allocation0], 224
    %v421 = vld [vmem:[%s420] sm:%s254]
    %s422 = sshllo.u32 0, 1
    %s423 = smul.addr 1, 28
    %s424 = scalar_lea.vmem %s1, %s423
    %425 = vst [vmem:[%s424] sm:%s422] %v421
    %s426 = scalar_lea.vmem [#allocation0], 232
    %v427 = vld [vmem:[%s426] sm:%s254]
    %s428 = sshllo.u32 0, 1
    %s429 = smul.addr 1, 29
    %s430 = scalar_lea.vmem %s1, %s429
    %431 = vst [vmem:[%s430] sm:%s428] %v427
    %s432 = scalar_lea.vmem [#allocation0], 240
    %v433 = vld [vmem:[%s432] sm:%s254]
    %s434 = sshllo.u32 0, 1
    %s435 = smul.addr 1, 30
    %s436 = scalar_lea.vmem %s1, %s435
    %437 = vst [vmem:[%s436] sm:%s434] %v433
    %s438 = scalar_lea.vmem [#allocation0], 248
    %v439 = vld [vmem:[%s438] sm:%s254]
    %s440 = sshllo.u32 0, 1
    %s441 = smul.addr 1, 31
    %s442 = scalar_lea.vmem %s1, %s441
    %443 = vst [vmem:[%s442] sm:%s440] %v439
    %s444 = scalar_lea.vmem [#allocation0], 256
    %v445 = vld [vmem:[%s444] sm:%s254]
    %s446 = sshllo.u32 0, 1
    %s447 = smul.addr 1, 32
    %s448 = scalar_lea.vmem %s1, %s447
    %449 = vst [vmem:[%s448] sm:%s446] %v445
    %s450 = scalar_lea.vmem [#allocation0], 264
    %v451 = vld [vmem:[%s450] sm:%s254]
    %s452 = sshllo.u32 0, 1
    %s453 = smul.addr 1, 33
    %s454 = scalar_lea.vmem %s1, %s453
    %455 = vst [vmem:[%s454] sm:%s452] %v451
    %s456 = scalar_lea.vmem [#allocation0], 272
    %v457 = vld [vmem:[%s456] sm:%s254]
    %s458 = sshllo.u32 0, 1
    %s459 = smul.addr 1, 34
    %s460 = scalar_lea.vmem %s1, %s459
    %461 = vst [vmem:[%s460] sm:%s458] %v457
    %s462 = scalar_lea.vmem [#allocation0], 280
    %v463 = vld [vmem:[%s462] sm:%s254]
    %s464 = sshllo.u32 0, 1
    %s465 = smul.addr 1, 35
    %s466 = scalar_lea.vmem %s1, %s465
    %467 = vst [vmem:[%s466] sm:%s464] %v463
    %s468 = scalar_lea.vmem [#allocation0], 288
    %v469 = vld [vmem:[%s468] sm:%s254]
    %s470 = sshllo.u32 0, 1
    %s471 = smul.addr 1, 36
    %s472 = scalar_lea.vmem %s1, %s471
    %473 = vst [vmem:[%s472] sm:%s470] %v469
    %s474 = scalar_lea.vmem [#allocation0], 296
    %v475 = vld [vmem:[%s474] sm:%s254]
    %s476 = sshllo.u32 0, 1
    %s477 = smul.addr 1, 37
    %s478 = scalar_lea.vmem %s1, %s477
    %479 = vst [vmem:[%s478] sm:%s476] %v475
    %s480 = scalar_lea.vmem [#allocation0], 304
    %v481 = vld [vmem:[%s480] sm:%s254]
    %s482 = sshllo.u32 0, 1
    %s483 = smul.addr 1, 38
    %s484 = scalar_lea.vmem %s1, %s483
    %485 = vst [vmem:[%s484] sm:%s482] %v481
    %s486 = scalar_lea.vmem [#allocation0], 312
    %v487 = vld [vmem:[%s486] sm:%s254]
    %s488 = sshllo.u32 0, 1
    %s489 = smul.addr 1, 39
    %s490 = scalar_lea.vmem %s1, %s489
    %491 = vst [vmem:[%s490] sm:%s488] %v487
    %s492 = scalar_lea.vmem [#allocation0], 320
    %v493 = vld [vmem:[%s492] sm:%s254]
    %s494 = sshllo.u32 0, 1
    %s495 = smul.addr 1, 40
    %s496 = scalar_lea.vmem %s1, %s495
    %497 = vst [vmem:[%s496] sm:%s494] %v493
    %s498 = scalar_lea.vmem [#allocation0], 328
    %v499 = vld [vmem:[%s498] sm:%s254]
    %s500 = sshllo.u32 0, 1
    %s501 = smul.addr 1, 41
    %s502 = scalar_lea.vmem %s1, %s501
    %503 = vst [vmem:[%s502] sm:%s500] %v499
    %s504 = scalar_lea.vmem [#allocation0], 336
    %v505 = vld [vmem:[%s504] sm:%s254]
    %s506 = sshllo.u32 0, 1
    %s507 = smul.addr 1, 42
    %s508 = scalar_lea.vmem %s1, %s507
    %509 = vst [vmem:[%s508] sm:%s506] %v505
    %s510 = scalar_lea.vmem [#allocation0], 344
    %v511 = vld [vmem:[%s510] sm:%s254]
    %s512 = sshllo.u32 0, 1
    %s513 = smul.addr 1, 43
    %s514 = scalar_lea.vmem %s1, %s513
    %515 = vst [vmem:[%s514] sm:%s512] %v511
    %s516 = scalar_lea.vmem [#allocation0], 352
    %v517 = vld [vmem:[%s516] sm:%s254]
    %s518 = sshllo.u32 0, 1
    %s519 = smul.addr 1, 44
    %s520 = scalar_lea.vmem %s1, %s519
    %521 = vst [vmem:[%s520] sm:%s518] %v517
    %s522 = scalar_lea.vmem [#allocation0], 360
    %v523 = vld [vmem:[%s522] sm:%s254]
    %s524 = sshllo.u32 0, 1
    %s525 = smul.addr 1, 45
    %s526 = scalar_lea.vmem %s1, %s525
    %527 = vst [vmem:[%s526] sm:%s524] %v523
    %s528 = scalar_lea.vmem [#allocation0], 368
    %v529 = vld [vmem:[%s528] sm:%s254]
    %s530 = sshllo.u32 0, 1
    %s531 = smul.addr 1, 46
    %s532 = scalar_lea.vmem %s1, %s531
    %533 = vst [vmem:[%s532] sm:%s530] %v529
    %s534 = scalar_lea.vmem [#allocation0], 376
    %v535 = vld [vmem:[%s534] sm:%s254]
    %s536 = sshllo.u32 0, 1
    %s537 = smul.addr 1, 47
    %s538 = scalar_lea.vmem %s1, %s537
    %539 = vst [vmem:[%s538] sm:%s536] %v535
    %s540 = scalar_lea.vmem [#allocation0], 384
    %v541 = vld [vmem:[%s540] sm:%s254]
    %s542 = sshllo.u32 0, 1
    %s543 = smul.addr 1, 48
    %s544 = scalar_lea.vmem %s1, %s543
    %545 = vst [vmem:[%s544] sm:%s542] %v541
    %s546 = scalar_lea.vmem [#allocation0], 392
    %v547 = vld [vmem:[%s546] sm:%s254]
    %s548 = sshllo.u32 0, 1
    %s549 = smul.addr 1, 49
    %s550 = scalar_lea.vmem %s1, %s549
    %551 = vst [vmem:[%s550] sm:%s548] %v547
    %s552 = scalar_lea.vmem [#allocation0], 400
    %v553 = vld [vmem:[%s552] sm:%s254]
    %s554 = sshllo.u32 0, 1
    %s555 = smul.addr 1, 50
    %s556 = scalar_lea.vmem %s1, %s555
    %557 = vst [vmem:[%s556] sm:%s554] %v553
    %s558 = scalar_lea.vmem [#allocation0], 408
    %v559 = vld [vmem:[%s558] sm:%s254]
    %s560 = sshllo.u32 0, 1
    %s561 = smul.addr 1, 51
    %s562 = scalar_lea.vmem %s1, %s561
    %563 = vst [vmem:[%s562] sm:%s560] %v559
    %s564 = scalar_lea.vmem [#allocation0], 416
    %v565 = vld [vmem:[%s564] sm:%s254]
    %s566 = sshllo.u32 0, 1
    %s567 = smul.addr 1, 52
    %s568 = scalar_lea.vmem %s1, %s567
    %569 = vst [vmem:[%s568] sm:%s566] %v565
    %s570 = scalar_lea.vmem [#allocation0], 424
    %v571 = vld [vmem:[%s570] sm:%s254]
    %s572 = sshllo.u32 0, 1
    %s573 = smul.addr 1, 53
    %s574 = scalar_lea.vmem %s1, %s573
    %575 = vst [vmem:[%s574] sm:%s572] %v571
    %s576 = scalar_lea.vmem [#allocation0], 432
    %v577 = vld [vmem:[%s576] sm:%s254]
    %s578 = sshllo.u32 0, 1
    %s579 = smul.addr 1, 54
    %s580 = scalar_lea.vmem %s1, %s579
    %581 = vst [vmem:[%s580] sm:%s578] %v577
    %s582 = scalar_lea.vmem [#allocation0], 440
    %v583 = vld [vmem:[%s582] sm:%s254]
    %s584 = sshllo.u32 0, 1
    %s585 = smul.addr 1, 55
    %s586 = scalar_lea.vmem %s1, %s585
    %587 = vst [vmem:[%s586] sm:%s584] %v583
    %s588 = scalar_lea.vmem [#allocation0], 448
    %v589 = vld [vmem:[%s588] sm:%s254]
    %s590 = sshllo.u32 0, 1
    %s591 = smul.addr 1, 56
    %s592 = scalar_lea.vmem %s1, %s591
    %593 = vst [vmem:[%s592] sm:%s590] %v589
    %s594 = scalar_lea.vmem [#allocation0], 456
    %v595 = vld [vmem:[%s594] sm:%s254]
    %s596 = sshllo.u32 0, 1
    %s597 = smul.addr 1, 57
    %s598 = scalar_lea.vmem %s1, %s597
    %599 = vst [vmem:[%s598] sm:%s596] %v595
    %s600 = scalar_lea.vmem [#allocation0], 464
    %v601 = vld [vmem:[%s600] sm:%s254]
    %s602 = sshllo.u32 0, 1
    %s603 = smul.addr 1, 58
    %s604 = scalar_lea.vmem %s1, %s603
    %605 = vst [vmem:[%s604] sm:%s602] %v601
    %s606 = scalar_lea.vmem [#allocation0], 472
    %v607 = vld [vmem:[%s606] sm:%s254]
    %s608 = sshllo.u32 0, 1
    %s609 = smul.addr 1, 59
    %s610 = scalar_lea.vmem %s1, %s609
    %611 = vst [vmem:[%s610] sm:%s608] %v607
    %s612 = scalar_lea.vmem [#allocation0], 480
    %v613 = vld [vmem:[%s612] sm:%s254]
    %s614 = sshllo.u32 0, 1
    %s615 = smul.addr 1, 60
    %s616 = scalar_lea.vmem %s1, %s615
    %617 = vst [vmem:[%s616] sm:%s614] %v613
    %s618 = scalar_lea.vmem [#allocation0], 488
    %v619 = vld [vmem:[%s618] sm:%s254]
    %s620 = sshllo.u32 0, 1
    %s621 = smul.addr 1, 61
    %s622 = scalar_lea.vmem %s1, %s621
    %623 = vst [vmem:[%s622] sm:%s620] %v619
    %s624 = scalar_lea.vmem [#allocation0], 496
    %v625 = vld [vmem:[%s624] sm:%s254]
    %s626 = sshllo.u32 0, 1
    %s627 = smul.addr 1, 62
    %s628 = scalar_lea.vmem %s1, %s627
    %629 = vst [vmem:[%s628] sm:%s626] %v625
    %s630 = scalar_lea.vmem [#allocation0], 504
    %v631 = vld [vmem:[%s630] sm:%s254]
    %s632 = sshllo.u32 0, 1
    %s633 = smul.addr 1, 63
    %s634 = scalar_lea.vmem %s1, %s633
    %635 = vst [vmem:[%s634] sm:%s632] %v631
    %s636 = scalar_lea.vmem [#allocation0], 512
    %v637 = vld [vmem:[%s636] sm:%s254]
    %s638 = sshllo.u32 0, 1
    %s639 = smul.addr 1, 64
    %s640 = scalar_lea.vmem %s1, %s639
    %641 = vst [vmem:[%s640] sm:%s638] %v637
    %s642 = scalar_lea.vmem [#allocation0], 520
    %v643 = vld [vmem:[%s642] sm:%s254]
    %s644 = sshllo.u32 0, 1
    %s645 = smul.addr 1, 65
    %s646 = scalar_lea.vmem %s1, %s645
    %647 = vst [vmem:[%s646] sm:%s644] %v643
    %s648 = scalar_lea.vmem [#allocation0], 528
    %v649 = vld [vmem:[%s648] sm:%s254]
    %s650 = sshllo.u32 0, 1
    %s651 = smul.addr 1, 66
    %s652 = scalar_lea.vmem %s1, %s651
    %653 = vst [vmem:[%s652] sm:%s650] %v649
    %s654 = scalar_lea.vmem [#allocation0], 536
    %v655 = vld [vmem:[%s654] sm:%s254]
    %s656 = sshllo.u32 0, 1
    %s657 = smul.addr 1, 67
    %s658 = scalar_lea.vmem %s1, %s657
    %659 = vst [vmem:[%s658] sm:%s656] %v655
    %s660 = scalar_lea.vmem [#allocation0], 544
    %v661 = vld [vmem:[%s660] sm:%s254]
    %s662 = sshllo.u32 0, 1
    %s663 = smul.addr 1, 68
    %s664 = scalar_lea.vmem %s1, %s663
    %665 = vst [vmem:[%s664] sm:%s662] %v661
    %s666 = scalar_lea.vmem [#allocation0], 552
    %v667 = vld [vmem:[%s666] sm:%s254]
    %s668 = sshllo.u32 0, 1
    %s669 = smul.addr 1, 69
    %s670 = scalar_lea.vmem %s1, %s669
    %671 = vst [vmem:[%s670] sm:%s668] %v667
    %s672 = scalar_lea.vmem [#allocation0], 560
    %v673 = vld [vmem:[%s672] sm:%s254]
    %s674 = sshllo.u32 0, 1
    %s675 = smul.addr 1, 70
    %s676 = scalar_lea.vmem %s1, %s675
    %677 = vst [vmem:[%s676] sm:%s674] %v673
    %s678 = scalar_lea.vmem [#allocation0], 568
    %v679 = vld [vmem:[%s678] sm:%s254]
    %s680 = sshllo.u32 0, 1
    %s681 = smul.addr 1, 71
    %s682 = scalar_lea.vmem %s1, %s681
    %683 = vst [vmem:[%s682] sm:%s680] %v679
    %s684 = scalar_lea.vmem [#allocation0], 576
    %v685 = vld [vmem:[%s684] sm:%s254]
    %s686 = sshllo.u32 0, 1
    %s687 = smul.addr 1, 72
    %s688 = scalar_lea.vmem %s1, %s687
    %689 = vst [vmem:[%s688] sm:%s686] %v685
    %s690 = scalar_lea.vmem [#allocation0], 584
    %v691 = vld [vmem:[%s690] sm:%s254]
    %s692 = sshllo.u32 0, 1
    %s693 = smul.addr 1, 73
    %s694 = scalar_lea.vmem %s1, %s693
    %695 = vst [vmem:[%s694] sm:%s692] %v691
    %s696 = scalar_lea.vmem [#allocation0], 592
    %v697 = vld [vmem:[%s696] sm:%s254]
    %s698 = sshllo.u32 0, 1
    %s699 = smul.addr 1, 74
    %s700 = scalar_lea.vmem %s1, %s699
    %701 = vst [vmem:[%s700] sm:%s698] %v697
    %s702 = scalar_lea.vmem [#allocation0], 600
    %v703 = vld [vmem:[%s702] sm:%s254]
    %s704 = sshllo.u32 0, 1
    %s705 = smul.addr 1, 75
    %s706 = scalar_lea.vmem %s1, %s705
    %707 = vst [vmem:[%s706] sm:%s704] %v703
    %s708 = scalar_lea.vmem [#allocation0], 608
    %v709 = vld [vmem:[%s708] sm:%s254]
    %s710 = sshllo.u32 0, 1
    %s711 = smul.addr 1, 76
    %s712 = scalar_lea.vmem %s1, %s711
    %713 = vst [vmem:[%s712] sm:%s710] %v709
    %s714 = scalar_lea.vmem [#allocation0], 616
    %v715 = vld [vmem:[%s714] sm:%s254]
    %s716 = sshllo.u32 0, 1
    %s717 = smul.addr 1, 77
    %s718 = scalar_lea.vmem %s1, %s717
    %719 = vst [vmem:[%s718] sm:%s716] %v715
    %s720 = scalar_lea.vmem [#allocation0], 624
    %v721 = vld [vmem:[%s720] sm:%s254]
    %s722 = sshllo.u32 0, 1
    %s723 = smul.addr 1, 78
    %s724 = scalar_lea.vmem %s1, %s723
    %725 = vst [vmem:[%s724] sm:%s722] %v721
    %s726 = scalar_lea.vmem [#allocation0], 632
    %v727 = vld [vmem:[%s726] sm:%s254]
    %s728 = sshllo.u32 0, 1
    %s729 = smul.addr 1, 79
    %s730 = scalar_lea.vmem %s1, %s729
    %731 = vst [vmem:[%s730] sm:%s728] %v727
    %s732 = scalar_lea.vmem [#allocation0], 640
    %v733 = vld [vmem:[%s732] sm:%s254]
    %s734 = sshllo.u32 0, 1
    %s735 = smul.addr 1, 80
    %s736 = scalar_lea.vmem %s1, %s735
    %737 = vst [vmem:[%s736] sm:%s734] %v733
    %s738 = scalar_lea.vmem [#allocation0], 648
    %v739 = vld [vmem:[%s738] sm:%s254]
    %s740 = sshllo.u32 0, 1
    %s741 = smul.addr 1, 81
    %s742 = scalar_lea.vmem %s1, %s741
    %743 = vst [vmem:[%s742] sm:%s740] %v739
    %s744 = scalar_lea.vmem [#allocation0], 656
    %v745 = vld [vmem:[%s744] sm:%s254]
    %s746 = sshllo.u32 0, 1
    %s747 = smul.addr 1, 82
    %s748 = scalar_lea.vmem %s1, %s747
    %749 = vst [vmem:[%s748] sm:%s746] %v745
    %s750 = scalar_lea.vmem [#allocation0], 664
    %v751 = vld [vmem:[%s750] sm:%s254]
    %s752 = sshllo.u32 0, 1
    %s753 = smul.addr 1, 83
    %s754 = scalar_lea.vmem %s1, %s753
    %755 = vst [vmem:[%s754] sm:%s752] %v751
    %s756 = scalar_lea.vmem [#allocation0], 672
    %v757 = vld [vmem:[%s756] sm:%s254]
    %s758 = sshllo.u32 0, 1
    %s759 = smul.addr 1, 84
    %s760 = scalar_lea.vmem %s1, %s759
    %761 = vst [vmem:[%s760] sm:%s758] %v757
    %s762 = scalar_lea.vmem [#allocation0], 680
    %v763 = vld [vmem:[%s762] sm:%s254]
    %s764 = sshllo.u32 0, 1
    %s765 = smul.addr 1, 85
    %s766 = scalar_lea.vmem %s1, %s765
    %767 = vst [vmem:[%s766] sm:%s764] %v763
    %s768 = scalar_lea.vmem [#allocation0], 688
    %v769 = vld [vmem:[%s768] sm:%s254]
    %s770 = sshllo.u32 0, 1
    %s771 = smul.addr 1, 86
    %s772 = scalar_lea.vmem %s1, %s771
    %773 = vst [vmem:[%s772] sm:%s770] %v769
    %s774 = scalar_lea.vmem [#allocation0], 696
    %v775 = vld [vmem:[%s774] sm:%s254]
    %s776 = sshllo.u32 0, 1
    %s777 = smul.addr 1, 87
    %s778 = scalar_lea.vmem %s1, %s777
    %779 = vst [vmem:[%s778] sm:%s776] %v775
    %s780 = scalar_lea.vmem [#allocation0], 704
    %v781 = vld [vmem:[%s780] sm:%s254]
    %s782 = sshllo.u32 0, 1
    %s783 = smul.addr 1, 88
    %s784 = scalar_lea.vmem %s1, %s783
    %785 = vst [vmem:[%s784] sm:%s782] %v781
    %s786 = scalar_lea.vmem [#allocation0], 712
    %v787 = vld [vmem:[%s786] sm:%s254]
    %s788 = sshllo.u32 0, 1
    %s789 = smul.addr 1, 89
    %s790 = scalar_lea.vmem %s1, %s789
    %791 = vst [vmem:[%s790] sm:%s788] %v787
    %s792 = scalar_lea.vmem [#allocation0], 720
    %v793 = vld [vmem:[%s792] sm:%s254]
    %s794 = sshllo.u32 0, 1
    %s795 = smul.addr 1, 90
    %s796 = scalar_lea.vmem %s1, %s795
    %797 = vst [vmem:[%s796] sm:%s794] %v793
    %s798 = scalar_lea.vmem [#allocation0], 728
    %v799 = vld [vmem:[%s798] sm:%s254]
    %s800 = sshllo.u32 0, 1
    %s801 = smul.addr 1, 91
    %s802 = scalar_lea.vmem %s1, %s801
    %803 = vst [vmem:[%s802] sm:%s800] %v799
    %s804 = scalar_lea.vmem [#allocation0], 736
    %v805 = vld [vmem:[%s804] sm:%s254]
    %s806 = sshllo.u32 0, 1
    %s807 = smul.addr 1, 92
    %s808 = scalar_lea.vmem %s1, %s807
    %809 = vst [vmem:[%s808] sm:%s806] %v805
    %s810 = scalar_lea.vmem [#allocation0], 744
    %v811 = vld [vmem:[%s810] sm:%s254]
    %s812 = sshllo.u32 0, 1
    %s813 = smul.addr 1, 93
    %s814 = scalar_lea.vmem %s1, %s813
    %815 = vst [vmem:[%s814] sm:%s812] %v811
    %s816 = scalar_lea.vmem [#allocation0], 752
    %v817 = vld [vmem:[%s816] sm:%s254]
    %s818 = sshllo.u32 0, 1
    %s819 = smul.addr 1, 94
    %s820 = scalar_lea.vmem %s1, %s819
    %821 = vst [vmem:[%s820] sm:%s818] %v817
    %s822 = scalar_lea.vmem [#allocation0], 760
    %v823 = vld [vmem:[%s822] sm:%s254]
    %s824 = sshllo.u32 0, 1
    %s825 = smul.addr 1, 95
    %s826 = scalar_lea.vmem %s1, %s825
    %827 = vst [vmem:[%s826] sm:%s824] %v823
    %s828 = scalar_lea.vmem [#allocation0], 768
    %v829 = vld [vmem:[%s828] sm:%s254]
    %s830 = sshllo.u32 0, 1
    %s831 = smul.addr 1, 96
    %s832 = scalar_lea.vmem %s1, %s831
    %833 = vst [vmem:[%s832] sm:%s830] %v829
    %s834 = scalar_lea.vmem [#allocation0], 776
    %v835 = vld [vmem:[%s834] sm:%s254]
    %s836 = sshllo.u32 0, 1
    %s837 = smul.addr 1, 97
    %s838 = scalar_lea.vmem %s1, %s837
    %839 = vst [vmem:[%s838] sm:%s836] %v835
    %s840 = scalar_lea.vmem [#allocation0], 784
    %v841 = vld [vmem:[%s840] sm:%s254]
    %s842 = sshllo.u32 0, 1
    %s843 = smul.addr 1, 98
    %s844 = scalar_lea.vmem %s1, %s843
    %845 = vst [vmem:[%s844] sm:%s842] %v841
    %s846 = scalar_lea.vmem [#allocation0], 792
    %v847 = vld [vmem:[%s846] sm:%s254]
    %s848 = sshllo.u32 0, 1
    %s849 = smul.addr 1, 99
    %s850 = scalar_lea.vmem %s1, %s849
    %851 = vst [vmem:[%s850] sm:%s848] %v847
    %s852 = scalar_lea.vmem [#allocation0], 800
    %v853 = vld [vmem:[%s852] sm:%s254]
    %s854 = sshllo.u32 0, 1
    %s855 = smul.addr 1, 100
    %s856 = scalar_lea.vmem %s1, %s855
    %857 = vst [vmem:[%s856] sm:%s854] %v853
    %s858 = scalar_lea.vmem [#allocation0], 808
    %v859 = vld [vmem:[%s858] sm:%s254]
    %s860 = sshllo.u32 0, 1
    %s861 = smul.addr 1, 101
    %s862 = scalar_lea.vmem %s1, %s861
    %863 = vst [vmem:[%s862] sm:%s860] %v859
    %s864 = scalar_lea.vmem [#allocation0], 816
    %v865 = vld [vmem:[%s864] sm:%s254]
    %s866 = sshllo.u32 0, 1
    %s867 = smul.addr 1, 102
    %s868 = scalar_lea.vmem %s1, %s867
    %869 = vst [vmem:[%s868] sm:%s866] %v865
    %s870 = scalar_lea.vmem [#allocation0], 824
    %v871 = vld [vmem:[%s870] sm:%s254]
    %s872 = sshllo.u32 0, 1
    %s873 = smul.addr 1, 103
    %s874 = scalar_lea.vmem %s1, %s873
    %875 = vst [vmem:[%s874] sm:%s872] %v871
    %s876 = scalar_lea.vmem [#allocation0], 832
    %v877 = vld [vmem:[%s876] sm:%s254]
    %s878 = sshllo.u32 0, 1
    %s879 = smul.addr 1, 104
    %s880 = scalar_lea.vmem %s1, %s879
    %881 = vst [vmem:[%s880] sm:%s878] %v877
    %s882 = scalar_lea.vmem [#allocation0], 840
    %v883 = vld [vmem:[%s882] sm:%s254]
    %s884 = sshllo.u32 0, 1
    %s885 = smul.addr 1, 105
    %s886 = scalar_lea.vmem %s1, %s885
    %887 = vst [vmem:[%s886] sm:%s884] %v883
    %s888 = scalar_lea.vmem [#allocation0], 848
    %v889 = vld [vmem:[%s888] sm:%s254]
    %s890 = sshllo.u32 0, 1
    %s891 = smul.addr 1, 106
    %s892 = scalar_lea.vmem %s1, %s891
    %893 = vst [vmem:[%s892] sm:%s890] %v889
    %s894 = scalar_lea.vmem [#allocation0], 856
    %v895 = vld [vmem:[%s894] sm:%s254]
    %s896 = sshllo.u32 0, 1
    %s897 = smul.addr 1, 107
    %s898 = scalar_lea.vmem %s1, %s897
    %899 = vst [vmem:[%s898] sm:%s896] %v895
    %s900 = scalar_lea.vmem [#allocation0], 864
    %v901 = vld [vmem:[%s900] sm:%s254]
    %s902 = sshllo.u32 0, 1
    %s903 = smul.addr 1, 108
    %s904 = scalar_lea.vmem %s1, %s903
    %905 = vst [vmem:[%s904] sm:%s902] %v901
    %s906 = scalar_lea.vmem [#allocation0], 872
    %v907 = vld [vmem:[%s906] sm:%s254]
    %s908 = sshllo.u32 0, 1
    %s909 = smul.addr 1, 109
    %s910 = scalar_lea.vmem %s1, %s909
    %911 = vst [vmem:[%s910] sm:%s908] %v907
    %s912 = scalar_lea.vmem [#allocation0], 880
    %v913 = vld [vmem:[%s912] sm:%s254]
    %s914 = sshllo.u32 0, 1
    %s915 = smul.addr 1, 110
    %s916 = scalar_lea.vmem %s1, %s915
    %917 = vst [vmem:[%s916] sm:%s914] %v913
    %s918 = scalar_lea.vmem [#allocation0], 888
    %v919 = vld [vmem:[%s918] sm:%s254]
    %s920 = sshllo.u32 0, 1
    %s921 = smul.addr 1, 111
    %s922 = scalar_lea.vmem %s1, %s921
    %923 = vst [vmem:[%s922] sm:%s920] %v919
    %s924 = scalar_lea.vmem [#allocation0], 896
    %v925 = vld [vmem:[%s924] sm:%s254]
    %s926 = sshllo.u32 0, 1
    %s927 = smul.addr 1, 112
    %s928 = scalar_lea.vmem %s1, %s927
    %929 = vst [vmem:[%s928] sm:%s926] %v925
    %s930 = scalar_lea.vmem [#allocation0], 904
    %v931 = vld [vmem:[%s930] sm:%s254]
    %s932 = sshllo.u32 0, 1
    %s933 = smul.addr 1, 113
    %s934 = scalar_lea.vmem %s1, %s933
    %935 = vst [vmem:[%s934] sm:%s932] %v931
    %s936 = scalar_lea.vmem [#allocation0], 912
    %v937 = vld [vmem:[%s936] sm:%s254]
    %s938 = sshllo.u32 0, 1
    %s939 = smul.addr 1, 114
    %s940 = scalar_lea.vmem %s1, %s939
    %941 = vst [vmem:[%s940] sm:%s938] %v937
    %s942 = scalar_lea.vmem [#allocation0], 920
    %v943 = vld [vmem:[%s942] sm:%s254]
    %s944 = sshllo.u32 0, 1
    %s945 = smul.addr 1, 115
    %s946 = scalar_lea.vmem %s1, %s945
    %947 = vst [vmem:[%s946] sm:%s944] %v943
    %s948 = scalar_lea.vmem [#allocation0], 928
    %v949 = vld [vmem:[%s948] sm:%s254]
    %s950 = sshllo.u32 0, 1
    %s951 = smul.addr 1, 116
    %s952 = scalar_lea.vmem %s1, %s951
    %953 = vst [vmem:[%s952] sm:%s950] %v949
    %s954 = scalar_lea.vmem [#allocation0], 936
    %v955 = vld [vmem:[%s954] sm:%s254]
    %s956 = sshllo.u32 0, 1
    %s957 = smul.addr 1, 117
    %s958 = scalar_lea.vmem %s1, %s957
    %959 = vst [vmem:[%s958] sm:%s956] %v955
    %s960 = scalar_lea.vmem [#allocation0], 944
    %v961 = vld [vmem:[%s960] sm:%s254]
    %s962 = sshllo.u32 0, 1
    %s963 = smul.addr 1, 118
    %s964 = scalar_lea.vmem %s1, %s963
    %965 = vst [vmem:[%s964] sm:%s962] %v961
    %s966 = scalar_lea.vmem [#allocation0], 952
    %v967 = vld [vmem:[%s966] sm:%s254]
    %s968 = sshllo.u32 0, 1
    %s969 = smul.addr 1, 119
    %s970 = scalar_lea.vmem %s1, %s969
    %971 = vst [vmem:[%s970] sm:%s968] %v967
    %s972 = scalar_lea.vmem [#allocation0], 960
    %v973 = vld [vmem:[%s972] sm:%s254]
    %s974 = sshllo.u32 0, 1
    %s975 = smul.addr 1, 120
    %s976 = scalar_lea.vmem %s1, %s975
    %977 = vst [vmem:[%s976] sm:%s974] %v973
    %s978 = scalar_lea.vmem [#allocation0], 968
    %v979 = vld [vmem:[%s978] sm:%s254]
    %s980 = sshllo.u32 0, 1
    %s981 = smul.addr 1, 121
    %s982 = scalar_lea.vmem %s1, %s981
    %983 = vst [vmem:[%s982] sm:%s980] %v979
    %s984 = scalar_lea.vmem [#allocation0], 976
    %v985 = vld [vmem:[%s984] sm:%s254]
    %s986 = sshllo.u32 0, 1
    %s987 = smul.addr 1, 122
    %s988 = scalar_lea.vmem %s1, %s987
    %989 = vst [vmem:[%s988] sm:%s986] %v985
    %s990 = scalar_lea.vmem [#allocation0], 984
    %v991 = vld [vmem:[%s990] sm:%s254]
    %s992 = sshllo.u32 0, 1
    %s993 = smul.addr 1, 123
    %s994 = scalar_lea.vmem %s1, %s993
    %995 = vst [vmem:[%s994] sm:%s992] %v991
    %s996 = scalar_lea.vmem [#allocation0], 992
    %v997 = vld [vmem:[%s996] sm:%s254]
    %s998 = sshllo.u32 0, 1
    %s999 = smul.addr 1, 124
    %s1000 = scalar_lea.vmem %s1, %s999
    %1001 = vst [vmem:[%s1000] sm:%s998] %v997
    %s1002 = scalar_lea.vmem [#allocation0], 1000
    %v1003 = vld [vmem:[%s1002] sm:%s254]
    %s1004 = sshllo.u32 0, 1
    %s1005 = smul.addr 1, 125
    %s1006 = scalar_lea.vmem %s1, %s1005
    %1007 = vst [vmem:[%s1006] sm:%s1004] %v1003
    %s1008 = scalar_lea.vmem [#allocation0], 1008
    %v1009 = vld [vmem:[%s1008] sm:%s254]
    %s1010 = sshllo.u32 0, 1
    %s1011 = smul.addr 1, 126
    %s1012 = scalar_lea.vmem %s1, %s1011
    %1013 = vst [vmem:[%s1012] sm:%s1010] %v1009
    %s1014 = scalar_lea.vmem [#allocation0], 1016
    %v1015 = vld [vmem:[%s1014] sm:%s254]
    %s1016 = sshllo.u32 0, 1
    %s1017 = smul.addr 1, 127
    %s1018 = scalar_lea.vmem %s1, %s1017
    %1019 = vst [vmem:[%s1018] sm:%s1016] %v1015

// kernel: discriminator_forward_pallas.4
$region0: #{discriminator_forward_pallas.4}
  #allocation0 [shape = 'u32[]', space=smem, size = 0x4, offset = 0x4, fixed_abs, tag = 'smem constant byte address 0x4 - core index']
  #allocation1 [shape = 'u32[144,128]{1,0:T(1,128)}', space=vmem, size = 0x12000, scoped, tag = 'internal scratch']
  %s0 = inlined_call_operand.vmem [shape: f32[4,256,64], index: 0, kind: input, shape index: {}]
  %s1 = inlined_call_operand.vmem [shape: f32[1,64], index: 1, kind: input, shape index: {}]
  %s2 = inlined_call_operand.vmem [shape: f32[1,64], index: 2, kind: input, shape index: {}]
  %s3 = inlined_call_operand.vmem [shape: f32[1,64], index: 3, kind: input, shape index: {}]
  %s4 = inlined_call_operand.vmem [shape: f32[4,2,64], index: 4, kind: output, shape index: {}]
  %s5 = sld [smem:[#allocation0]]
  $region49: #{discriminator_forward_pallas.4} parent=0
    _
  %s7 = ssub.s32 1, %s5
  %s8 = scalar_select 0, %s7, %s5
  loop: start=0, step=1, limit=6
  $region2: #{discriminator_forward_pallas.4} parent=0 // loop_pre_header
    _
  $region3: #{discriminator_forward_pallas.4} parent=0 // loop_header
    %s10 = sphi 0, %s14
    %p11 = scmp.ge.s32.totalorder %s10, 6
    %s20 = sphi 0, %s22
    %s23 = sphi 0, %s20
    %s24 = sphi 0, %s23
    %s40 = sphi 0, %s24
    %s44 = sphi 0, %s44
    %s46 = sphi 0, %s44
    %s47 = sphi 0, %s46
    %s61 = sphi 0, %s47
    %s65 = sphi 0, %s65
    %s67 = sphi 0, %s65
    %s68 = sphi 0, %s67
    %s82 = sphi 0, %s68
    %s86 = sphi 0, %s86
    %s88 = sphi 0, %s86
    %s89 = sphi 0, %s88
    %s103 = sphi 0, %s89
    %s109 = sphi 0, %s111
    %s112 = sphi 0, %s109
    %s113 = sphi 0, %s112
    %s129 = sphi 0, %s113
  $region4: #{discriminator_forward_pallas.4} parent=0 // loop_header_branch
    %13 = sbr.rel (%p11) target = $region8
  $region5: #{discriminator_forward_pallas.4} parent=0 // loop_body
    %s15 = ssub.s32 %s10, 1
    %s16 = ssub.s32 %s10, 2
    %s17 = sadd.s32 %s10, 1
    %s18 = ssub.s32 %s10, %s17
    %p19 = scmp.eq.s32.totalorder %s18, 0
    %s21 = sadd.s32 %s20, 1
    %s22 = scalar_select %p19, %s20, %s21
    %p25 = pneg %p19
    %p26 = scmp.eq.s32.totalorder %s10, 3
    %p27 = por %p25, %p26
    %p28 = scmp.ne.s32.totalorder %s20, %s23
    %p29 = scmp.eq.s32.totalorder %s10, 0
    %p30 = por %p28, %p29
    %p31 = scmp.ne.s32.totalorder %s20, %s23
    %p32 = scmp.eq.s32.totalorder %s15, 3
    %p33 = por %p31, %p32
    %p34 = scmp.ne.s32.totalorder %s23, %s24
    %p35 = scmp.eq.s32.totalorder %s15, 0
    %p36 = por %p34, %p35
    %p37 = scmp.ne.s32.totalorder %s23, %s24
    %p38 = scmp.eq.s32.totalorder %s16, 3
    %p39 = por %p37, %p38
    %p41 = scmp.ne.s32.totalorder %s24, %s40
    %p42 = scmp.eq.s32.totalorder %s16, 0
    %p43 = por %p41, %p42
    %s45 = sadd.s32 %s44, 1
    %p48 = scmp.eq.s32.totalorder %s10, 3
    %p49 = scmp.ne.s32.totalorder %s44, %s46
    %p50 = scmp.eq.s32.totalorder %s10, 0
    %p51 = por %p49, %p50
    %p52 = scmp.ne.s32.totalorder %s44, %s46
    %p53 = scmp.eq.s32.totalorder %s15, 3
    %p54 = por %p52, %p53
    %p55 = scmp.ne.s32.totalorder %s46, %s47
    %p56 = scmp.eq.s32.totalorder %s15, 0
    %p57 = por %p55, %p56
    %p58 = scmp.ne.s32.totalorder %s46, %s47
    %p59 = scmp.eq.s32.totalorder %s16, 3
    %p60 = por %p58, %p59
    %p62 = scmp.ne.s32.totalorder %s47, %s61
    %p63 = scmp.eq.s32.totalorder %s16, 0
    %p64 = por %p62, %p63
    %s66 = sadd.s32 %s65, 1
    %p69 = scmp.eq.s32.totalorder %s10, 3
    %p70 = scmp.ne.s32.totalorder %s65, %s67
    %p71 = scmp.eq.s32.totalorder %s10, 0
    %p72 = por %p70, %p71
    %p73 = scmp.ne.s32.totalorder %s65, %s67
    %p74 = scmp.eq.s32.totalorder %s15, 3
    %p75 = por %p73, %p74
    %p76 = scmp.ne.s32.totalorder %s67, %s68
    %p77 = scmp.eq.s32.totalorder %s15, 0
    %p78 = por %p76, %p77
    %p79 = scmp.ne.s32.totalorder %s67, %s68
    %p80 = scmp.eq.s32.totalorder %s16, 3
    %p81 = por %p79, %p80
    %p83 = scmp.ne.s32.totalorder %s68, %s82
    %p84 = scmp.eq.s32.totalorder %s16, 0
    %p85 = por %p83, %p84
    %s87 = sadd.s32 %s86, 1
    %p90 = scmp.eq.s32.totalorder %s10, 3
    %p91 = scmp.ne.s32.totalorder %s86, %s88
    %p92 = scmp.eq.s32.totalorder %s10, 0
    %p93 = por %p91, %p92
    %p94 = scmp.ne.s32.totalorder %s86, %s88
    %p95 = scmp.eq.s32.totalorder %s15, 3
    %p96 = por %p94, %p95
    %p97 = scmp.ne.s32.totalorder %s88, %s89
    %p98 = scmp.eq.s32.totalorder %s15, 0
    %p99 = por %p97, %p98
    %p100 = scmp.ne.s32.totalorder %s88, %s89
    %p101 = scmp.eq.s32.totalorder %s16, 3
    %p102 = por %p100, %p101
    %p104 = scmp.ne.s32.totalorder %s89, %s103
    %p105 = scmp.eq.s32.totalorder %s16, 0
    %p106 = por %p104, %p105
    %s107 = ssub.s32 %s10, %s17
    %p108 = scmp.eq.s32.totalorder %s107, 0
    %s110 = sadd.s32 %s109, 1
    %s111 = scalar_select %p108, %s109, %s110
    %p114 = pneg %p108
    %p115 = scmp.eq.s32.totalorder %s10, 3
    %p116 = por %p114, %p115
    %p117 = scmp.ne.s32.totalorder %s109, %s112
    %p118 = scmp.eq.s32.totalorder %s10, 0
    %p119 = por %p117, %p118
    %p120 = scmp.ne.s32.totalorder %s109, %s112
    %p121 = scmp.eq.s32.totalorder %s15, 3
    %p122 = por %p120, %p121
    %p123 = scmp.ne.s32.totalorder %s112, %s113
    %p124 = scmp.eq.s32.totalorder %s15, 0
    %p125 = por %p123, %p124
    %p126 = scmp.ne.s32.totalorder %s112, %s113
    %p127 = scmp.eq.s32.totalorder %s16, 3
    %p128 = por %p126, %p127
    %p130 = scmp.ne.s32.totalorder %s113, %s129
    %p131 = scmp.eq.s32.totalorder %s16, 0
    %p132 = por %p130, %p131
    %p133 = scmp.le.s32.totalorder 1, %s10
    %p134 = scmp.lt.s32.totalorder %s10, 5
    %p135 = pnand %p133, %p134
    %p136 = pneg %p135
    // Predicated region
    $region9: #{discriminator_forward_pallas.4} parent=5 // pred_check
      _
    $region10: #{discriminator_forward_pallas.4} parent=5 // pred_check_branch
      %138 = sbr.rel (%p135) target = $region12
    $region11: #{discriminator_forward_pallas.4} parent=5 // pred_region
      %s139 = ssub.s32 %s10, 1
      // Predicated region
      $region13: #{discriminator_forward_pallas.4} parent=11 // pred_check
        %p140 = pneg %p57
      $region14: #{discriminator_forward_pallas.4} parent=11 // pred_check_branch
        %142 = sbr.rel (%p140) target = $region16
      $region15: #{discriminator_forward_pallas.4} parent=11 // pred_region
        _
      $region16: #{discriminator_forward_pallas.4} parent=11 // pred_fallthru
        _
      // Predicated region
      $region17: #{discriminator_forward_pallas.4} parent=11 // pred_check
        %p143 = pneg %p78
      $region18: #{discriminator_forward_pallas.4} parent=11 // pred_check_branch
        %145 = sbr.rel (%p143) target = $region20
      $region19: #{discriminator_forward_pallas.4} parent=11 // pred_region
        _
      $region20: #{discriminator_forward_pallas.4} parent=11 // pred_fallthru
        _
      // Predicated region
      $region21: #{discriminator_forward_pallas.4} parent=11 // pred_check
        %p146 = pneg %p99
      $region22: #{discriminator_forward_pallas.4} parent=11 // pred_check_branch
        %148 = sbr.rel (%p146) target = $region24
      $region23: #{discriminator_forward_pallas.4} parent=11 // pred_region
        _
      $region24: #{discriminator_forward_pallas.4} parent=11 // pred_fallthru
        _
    $region12: #{discriminator_forward_pallas.4} parent=5 // pred_fallthru
      _
    %p149 = scmp.lt.s32.totalorder %s10, 4
    // Predicated region
    $region25: #{discriminator_forward_pallas.4} parent=5 // pred_check
      %p150 = pneg %p149
    $region26: #{discriminator_forward_pallas.4} parent=5 // pred_check_branch
      %152 = sbr.rel (%p150) target = $region28
    $region27: #{discriminator_forward_pallas.4} parent=5 // pred_region
      // Predicated region
      $region29: #{discriminator_forward_pallas.4} parent=27 // pred_check
        %p153 = pneg %p30
      $region30: #{discriminator_forward_pallas.4} parent=27 // pred_check_branch
        %155 = sbr.rel (%p153) target = $region32
      $region31: #{discriminator_forward_pallas.4} parent=27 // pred_region
        %p156 = scmp.lt.s32.totalorder %s10, 3
        %s157 = scalar_select %p156, %s10, 3
        %s158 = smul.addr %s157, 32
        %s159 = smul.addr %s158, 8
        %s160 = scalar_lea.vmem %s0, %s159
      $region32: #{discriminator_forward_pallas.4} parent=27 // pred_fallthru
        _
    $region28: #{discriminator_forward_pallas.4} parent=5 // pred_fallthru
      _
    %p161 = scmp.le.s32.totalorder 1, %s10
    %p162 = scmp.lt.s32.totalorder %s10, 5
    %p163 = pnand %p161, %p162
    %p164 = pneg %p163
    // Predicated region
    $region33: #{discriminator_forward_pallas.4} parent=5 // pred_check
      _
    $region34: #{discriminator_forward_pallas.4} parent=5 // pred_check_branch
      %166 = sbr.rel (%p163) target = $region36
    $region35: #{discriminator_forward_pallas.4} parent=5 // pred_region
      %s167 = ssub.s32 %s10, 1
      %p168 = scmp.lt.s32.totalorder %s15, 3
      %s169 = scalar_select %p168, %s15, 3
      %s170 = smul.addr %s169, 32
      %s171 = smul.addr %s170, 8
      %s172 = scalar_lea.vmem %s0, %s171
      %p173 = pneg %p36
      %p174 = pneg %p33
      %p175 = pneg %p57
      %p176 = pneg %p54
      %p177 = pneg %p78
      %p178 = pneg %p75
      %p179 = pneg %p99
      %p180 = pneg %p96
      %p181 = pneg %p125
      %p182 = pneg %p122
      %p183 = scmp.lt.s32.totalorder %s15, 3
      %s184 = scalar_select %p183, %s15, 3
      %s185 = smul.addr %s184, 2
      %s186 = scalar_lea.vmem %s4, %s185
      %p187 = scmp.lt.s32.totalorder %s15, 3
      %s188 = scalar_select %p187, %s15, 3
      %s189 = smul.addr %s188, 32
      %s190 = smul.addr %s189, 8
      %s191 = scalar_lea.vmem %s0, %s190
      %p192 = scmp.lt.s32.totalorder %s15, 3
      %s193 = scalar_select %p192, %s15, 3
      %s194 = smul.addr %s193, 2
      %s195 = scalar_lea.vmem %s4, %s194
      %v196 = vld [vmem:[%s191] sm:$0xff]
      %v197 = vld [vmem:[%s191 + $0x8] sm:$0xff]
      %v198 = vld [vmem:[%s191 + $0x10] sm:$0xff]
      %v199 = vld [vmem:[%s191 + $0x18] sm:$0xff]
      %v200 = vld [vmem:[%s191 + $0x20] sm:$0xff]
      %v201 = vld [vmem:[%s191 + $0x28] sm:$0xff]
      %v202 = vld [vmem:[%s191 + $0x30] sm:$0xff]
      %v203 = vld [vmem:[%s191 + $0x38] sm:$0xff]
      %v204 = vld [vmem:[%s191 + $0x40] sm:$0xff]
      %v205 = vld [vmem:[%s191 + $0x48] sm:$0xff]
      %v206 = vld [vmem:[%s191 + $0x50] sm:$0xff]
      %v207 = vld [vmem:[%s191 + $0x58] sm:$0xff]
      %v208 = vld [vmem:[%s191 + $0x60] sm:$0xff]
      %v209 = vld [vmem:[%s191 + $0x68] sm:$0xff]
      %v210 = vld [vmem:[%s191 + $0x70] sm:$0xff]
      %v211 = vld [vmem:[%s191 + $0x78] sm:$0xff]
      %v212 = vld [vmem:[%s191 + $0x80] sm:$0xff]
      %v213 = vld [vmem:[%s191 + $0x88] sm:$0xff]
      %v214 = vld [vmem:[%s191 + $0x90] sm:$0xff]
      %v215 = vld [vmem:[%s191 + $0x98] sm:$0xff]
      %v216 = vld [vmem:[%s191 + $0xa0] sm:$0xff]
      %v217 = vld [vmem:[%s191 + $0xa8] sm:$0xff]
      %v218 = vld [vmem:[%s191 + $0xb0] sm:$0xff]
      %v219 = vld [vmem:[%s191 + $0xb8] sm:$0xff]
      %v220 = vld [vmem:[%s191 + $0xc0] sm:$0xff]
      %v221 = vld [vmem:[%s191 + $0xc8] sm:$0xff]
      %v222 = vld [vmem:[%s191 + $0xd0] sm:$0xff]
      %v223 = vld [vmem:[%s191 + $0xd8] sm:$0xff]
      %v224 = vld [vmem:[%s191 + $0xe0] sm:$0xff]
      %v225 = vld [vmem:[%s191 + $0xe8] sm:$0xff]
      %v226 = vld [vmem:[%s191 + $0xf0] sm:$0xff]
      %v227 = vld [vmem:[%s191 + $0xf8] sm:$0xff]
      %v228 = vld [vmem:[%s1] sm:$0x1]
      %v230 = vlaneseq
      %v231 = vshrl.u32 %v230, 7
      %v232 = vsub.s32 0, %v231
      %v233 = vrot.slane %v228, %v232
      %v235 = vmul.f32 %v196, %v233
      %v236 = vmul.f32 %v197, %v233
      %v237 = vmul.f32 %v198, %v233
      %v238 = vmul.f32 %v199, %v233
      %v239 = vmul.f32 %v200, %v233
      %v240 = vmul.f32 %v201, %v233
      %v241 = vmul.f32 %v202, %v233
      %v242 = vmul.f32 %v203, %v233
      %v243 = vmul.f32 %v204, %v233
      %v244 = vmul.f32 %v205, %v233
      %v245 = vmul.f32 %v206, %v233
      %v246 = vmul.f32 %v207, %v233
      %v247 = vmul.f32 %v208, %v233
      %v248 = vmul.f32 %v209, %v233
      %v249 = vmul.f32 %v210, %v233
      %v250 = vmul.f32 %v211, %v233
      %v251 = vmul.f32 %v212, %v233
      %v252 = vmul.f32 %v213, %v233
      %v253 = vmul.f32 %v214, %v233
      %v254 = vmul.f32 %v215, %v233
      %v255 = vmul.f32 %v216, %v233
      %v256 = vmul.f32 %v217, %v233
      %v257 = vmul.f32 %v218, %v233
      %v258 = vmul.f32 %v219, %v233
      %v259 = vmul.f32 %v220, %v233
      %v260 = vmul.f32 %v221, %v233
      %v261 = vmul.f32 %v222, %v233
      %v262 = vmul.f32 %v223, %v233
      %v263 = vmul.f32 %v224, %v233
      %v264 = vmul.f32 %v225, %v233
      %v265 = vmul.f32 %v226, %v233
      %v266 = vmul.f32 %v227, %v233
      %v267 = vld [vmem:[%s2] sm:$0x1]
      %v269 = vlaneseq
      %v270 = vshrl.u32 %v269, 7
      %v271 = vsub.s32 0, %v270
      %v272 = vrot.slane %v267, %v271
      %v274 = vadd.f32 %v235, %v272
      %v275 = vadd.f32 %v236, %v272
      %v276 = vadd.f32 %v237, %v272
      %v277 = vadd.f32 %v238, %v272
      %v278 = vadd.f32 %v239, %v272
      %v279 = vadd.f32 %v240, %v272
      %v280 = vadd.f32 %v241, %v272
      %v281 = vadd.f32 %v242, %v272
      %v282 = vadd.f32 %v243, %v272
      %v283 = vadd.f32 %v244, %v272
      %v284 = vadd.f32 %v245, %v272
      %v285 = vadd.f32 %v246, %v272
      %v286 = vadd.f32 %v247, %v272
      %v287 = vadd.f32 %v248, %v272
      %v288 = vadd.f32 %v249, %v272
      %v289 = vadd.f32 %v250, %v272
      %v290 = vadd.f32 %v251, %v272
      %v291 = vadd.f32 %v252, %v272
      %v292 = vadd.f32 %v253, %v272
      %v293 = vadd.f32 %v254, %v272
      %v294 = vadd.f32 %v255, %v272
      %v295 = vadd.f32 %v256, %v272
      %v296 = vadd.f32 %v257, %v272
      %v297 = vadd.f32 %v258, %v272
      %v298 = vadd.f32 %v259, %v272
      %v299 = vadd.f32 %v260, %v272
      %v300 = vadd.f32 %v261, %v272
      %v301 = vadd.f32 %v262, %v272
      %v302 = vadd.f32 %v263, %v272
      %v303 = vadd.f32 %v264, %v272
      %v304 = vadd.f32 %v265, %v272
      %v305 = vadd.f32 %v266, %v272
      %vm306 = vcmp.ge.f32.partialorder %v274, 0.0
      %vm307 = vcmp.ge.f32.partialorder %v275, 0.0
      %vm308 = vcmp.ge.f32.partialorder %v276, 0.0
      %vm309 = vcmp.ge.f32.partialorder %v277, 0.0
      %vm310 = vcmp.ge.f32.partialorder %v278, 0.0
      %vm311 = vcmp.ge.f32.partialorder %v279, 0.0
      %vm312 = vcmp.ge.f32.partialorder %v280, 0.0
      %vm313 = vcmp.ge.f32.partialorder %v281, 0.0
      %vm314 = vcmp.ge.f32.partialorder %v282, 0.0
      %vm315 = vcmp.ge.f32.partialorder %v283, 0.0
      %vm316 = vcmp.ge.f32.partialorder %v284, 0.0
      %vm317 = vcmp.ge.f32.partialorder %v285, 0.0
      %vm318 = vcmp.ge.f32.partialorder %v286, 0.0
      %vm319 = vcmp.ge.f32.partialorder %v287, 0.0
      %vm320 = vcmp.ge.f32.partialorder %v288, 0.0
      %vm321 = vcmp.ge.f32.partialorder %v289, 0.0
      %vm322 = vcmp.ge.f32.partialorder %v290, 0.0
      %vm323 = vcmp.ge.f32.partialorder %v291, 0.0
      %vm324 = vcmp.ge.f32.partialorder %v292, 0.0
      %vm325 = vcmp.ge.f32.partialorder %v293, 0.0
      %vm326 = vcmp.ge.f32.partialorder %v294, 0.0
      %vm327 = vcmp.ge.f32.partialorder %v295, 0.0
      %vm328 = vcmp.ge.f32.partialorder %v296, 0.0
      %vm329 = vcmp.ge.f32.partialorder %v297, 0.0
      %vm330 = vcmp.ge.f32.partialorder %v298, 0.0
      %vm331 = vcmp.ge.f32.partialorder %v299, 0.0
      %vm332 = vcmp.ge.f32.partialorder %v300, 0.0
      %vm333 = vcmp.ge.f32.partialorder %v301, 0.0
      %vm334 = vcmp.ge.f32.partialorder %v302, 0.0
      %vm335 = vcmp.ge.f32.partialorder %v303, 0.0
      %vm336 = vcmp.ge.f32.partialorder %v304, 0.0
      %vm337 = vcmp.ge.f32.partialorder %v305, 0.0
      %v338 = vld [vmem:[%s3] sm:$0x1]
      %v340 = vlaneseq
      %v341 = vshrl.u32 %v340, 7
      %v342 = vsub.s32 0, %v341
      %v343 = vrot.slane %v338, %v342
      %v345 = vmul.f32 %v343, %v274
      %v346 = vmul.f32 %v343, %v275
      %v347 = vmul.f32 %v343, %v276
      %v348 = vmul.f32 %v343, %v277
      %v349 = vmul.f32 %v343, %v278
      %v350 = vmul.f32 %v343, %v279
      %v351 = vmul.f32 %v343, %v280
      %v352 = vmul.f32 %v343, %v281
      %v353 = vmul.f32 %v343, %v282
      %v354 = vmul.f32 %v343, %v283
      %v355 = vmul.f32 %v343, %v284
      %v356 = vmul.f32 %v343, %v285
      %v357 = vmul.f32 %v343, %v286
      %v358 = vmul.f32 %v343, %v287
      %v359 = vmul.f32 %v343, %v288
      %v360 = vmul.f32 %v343, %v289
      %v361 = vmul.f32 %v343, %v290
      %v362 = vmul.f32 %v343, %v291
      %v363 = vmul.f32 %v343, %v292
      %v364 = vmul.f32 %v343, %v293
      %v365 = vmul.f32 %v343, %v294
      %v366 = vmul.f32 %v343, %v295
      %v367 = vmul.f32 %v343, %v296
      %v368 = vmul.f32 %v343, %v297
      %v369 = vmul.f32 %v343, %v298
      %v370 = vmul.f32 %v343, %v299
      %v371 = vmul.f32 %v343, %v300
      %v372 = vmul.f32 %v343, %v301
      %v373 = vmul.f32 %v343, %v302
      %v374 = vmul.f32 %v343, %v303
      %v375 = vmul.f32 %v343, %v304
      %v376 = vmul.f32 %v343, %v305
      %v377 = vsel %vm306, %v274, %v345
      %v378 = vsel %vm307, %v275, %v346
      %v379 = vsel %vm308, %v276, %v347
      %v380 = vsel %vm309, %v277, %v348
      %v381 = vsel %vm310, %v278, %v349
      %v382 = vsel %vm311, %v279, %v350
      %v383 = vsel %vm312, %v280, %v351
      %v384 = vsel %vm313, %v281, %v352
      %v385 = vsel %vm314, %v282, %v353
      %v386 = vsel %vm315, %v283, %v354
      %v387 = vsel %vm316, %v284, %v355
      %v388 = vsel %vm317, %v285, %v356
      %v389 = vsel %vm318, %v286, %v357
      %v390 = vsel %vm319, %v287, %v358
      %v391 = vsel %vm320, %v288, %v359
      %v392 = vsel %vm321, %v289, %v360
      %v393 = vsel %vm322, %v290, %v361
      %v394 = vsel %vm323, %v291, %v362
      %v395 = vsel %vm324, %v292, %v363
      %v396 = vsel %vm325, %v293, %v364
      %v397 = vsel %vm326, %v294, %v365
      %v398 = vsel %vm327, %v295, %v366
      %v399 = vsel %vm328, %v296, %v367
      %v400 = vsel %vm329, %v297, %v368
      %v401 = vsel %vm330, %v298, %v369
      %v402 = vsel %vm331, %v299, %v370
      %v403 = vsel %vm332, %v300, %v371
      %v404 = vsel %vm333, %v301, %v372
      %v405 = vsel %vm334, %v302, %v373
      %v406 = vsel %vm335, %v303, %v374
      %v407 = vsel %vm336, %v304, %v375
      %v408 = vsel %vm337, %v305, %v376
      %vm409 = vcmask 523264
      %v410 = vsel %vm409, %v377, 0.0
      %v411 = vsel %vm409, %v378, 0.0
      %v412 = vadd.f32 %v410, %v411
      %v413 = vsel %vm409, %v379, 0.0
      %v414 = vadd.f32 %v412, %v413
      %v415 = vsel %vm409, %v380, 0.0
      %v416 = vadd.f32 %v414, %v415
      %v417 = vsel %vm409, %v381, 0.0
      %v418 = vadd.f32 %v416, %v417
      %v419 = vsel %vm409, %v382, 0.0
      %v420 = vadd.f32 %v418, %v419
      %v421 = vsel %vm409, %v383, 0.0
      %v422 = vadd.f32 %v420, %v421
      %v423 = vsel %vm409, %v384, 0.0
      %v424 = vadd.f32 %v422, %v423
      %v425 = vsel %vm409, %v385, 0.0
      %v426 = vadd.f32 %v424, %v425
      %v427 = vsel %vm409, %v386, 0.0
      %v428 = vadd.f32 %v426, %v427
      %v429 = vsel %vm409, %v387, 0.0
      %v430 = vadd.f32 %v428, %v429
      %v431 = vsel %vm409, %v388, 0.0
      %v432 = vadd.f32 %v430, %v431
      %v433 = vsel %vm409, %v389, 0.0
      %v434 = vadd.f32 %v432, %v433
      %v435 = vsel %vm409, %v390, 0.0
      %v436 = vadd.f32 %v434, %v435
      %v437 = vsel %vm409, %v391, 0.0
      %v438 = vadd.f32 %v436, %v437
      %v439 = vsel %vm409, %v392, 0.0
      %v440 = vadd.f32 %v438, %v439
      %v441 = vsel %vm409, %v393, 0.0
      %v442 = vadd.f32 %v440, %v441
      %v443 = vsel %vm409, %v394, 0.0
      %v444 = vadd.f32 %v442, %v443
      %v445 = vsel %vm409, %v395, 0.0
      %v446 = vadd.f32 %v444, %v445
      %v447 = vsel %vm409, %v396, 0.0
      %v448 = vadd.f32 %v446, %v447
      %v449 = vsel %vm409, %v397, 0.0
      %v450 = vadd.f32 %v448, %v449
      %v451 = vsel %vm409, %v398, 0.0
      %v452 = vadd.f32 %v450, %v451
      %v453 = vsel %vm409, %v399, 0.0
      %v454 = vadd.f32 %v452, %v453
      %v455 = vsel %vm409, %v400, 0.0
      %v456 = vadd.f32 %v454, %v455
      %v457 = vsel %vm409, %v401, 0.0
      %v458 = vadd.f32 %v456, %v457
      %v459 = vsel %vm409, %v402, 0.0
      %v460 = vadd.f32 %v458, %v459
      %v461 = vsel %vm409, %v403, 0.0
      %v462 = vadd.f32 %v460, %v461
      %v463 = vsel %vm409, %v404, 0.0
      %v464 = vadd.f32 %v462, %v463
      %v465 = vsel %vm409, %v405, 0.0
      %v466 = vadd.f32 %v464, %v465
      %v467 = vsel %vm409, %v406, 0.0
      %v468 = vadd.f32 %v466, %v467
      %v469 = vsel %vm409, %v407, 0.0
      %v470 = vadd.f32 %v468, %v469
      %v471 = vsel %vm409, %v408, 0.0
      %v472 = vadd.f32 %v470, %v471
      %v473 = vrot.slane %v472, 4
      %v474 = vadd.f32 %v472, %v473
      %v475 = vrot.slane %v474, 2
      %v476 = vadd.f32 %v474, %v475
      %v477 = vrot.slane %v476, 1
      %v478 = vadd.f32 %v476, %v477
      %v479 = vmul.f32 %v377, %v377
      %v480 = vmul.f32 %v378, %v378
      %v481 = vmul.f32 %v379, %v379
      %v482 = vmul.f32 %v380, %v380
      %v483 = vmul.f32 %v381, %v381
      %v484 = vmul.f32 %v382, %v382
      %v485 = vmul.f32 %v383, %v383
      %v486 = vmul.f32 %v384, %v384
      %v487 = vmul.f32 %v385, %v385
      %v488 = vmul.f32 %v386, %v386
      %v489 = vmul.f32 %v387, %v387
      %v490 = vmul.f32 %v388, %v388
      %v491 = vmul.f32 %v389, %v389
      %v492 = vmul.f32 %v390, %v390
      %v493 = vmul.f32 %v391, %v391
      %v494 = vmul.f32 %v392, %v392
      %v495 = vmul.f32 %v393, %v393
      %v496 = vmul.f32 %v394, %v394
      %v497 = vmul.f32 %v395, %v395
      %v498 = vmul.f32 %v396, %v396
      %v499 = vmul.f32 %v397, %v397
      %v500 = vmul.f32 %v398, %v398
      %v501 = vmul.f32 %v399, %v399
      %v502 = vmul.f32 %v400, %v400
      %v503 = vmul.f32 %v401, %v401
      %v504 = vmul.f32 %v402, %v402
      %v505 = vmul.f32 %v403, %v403
      %v506 = vmul.f32 %v404, %v404
      %v507 = vmul.f32 %v405, %v405
      %v508 = vmul.f32 %v406, %v406
      %v509 = vmul.f32 %v407, %v407
      %v510 = vmul.f32 %v408, %v408
      %v511 = vsel %vm409, %v479, 0.0
      %v512 = vsel %vm409, %v480, 0.0
      %v513 = vadd.f32 %v511, %v512
      %v514 = vsel %vm409, %v481, 0.0
      %v515 = vadd.f32 %v513, %v514
      %v516 = vsel %vm409, %v482, 0.0
      %v517 = vadd.f32 %v515, %v516
      %v518 = vsel %vm409, %v483, 0.0
      %v519 = vadd.f32 %v517, %v518
      %v520 = vsel %vm409, %v484, 0.0
      %v521 = vadd.f32 %v519, %v520
      %v522 = vsel %vm409, %v485, 0.0
      %v523 = vadd.f32 %v521, %v522
      %v524 = vsel %vm409, %v486, 0.0
      %v525 = vadd.f32 %v523, %v524
      %v526 = vsel %vm409, %v487, 0.0
      %v527 = vadd.f32 %v525, %v526
      %v528 = vsel %vm409, %v488, 0.0
      %v529 = vadd.f32 %v527, %v528
      %v530 = vsel %vm409, %v489, 0.0
      %v531 = vadd.f32 %v529, %v530
      %v532 = vsel %vm409, %v490, 0.0
      %v533 = vadd.f32 %v531, %v532
      %v534 = vsel %vm409, %v491, 0.0
      %v535 = vadd.f32 %v533, %v534
      %v536 = vsel %vm409, %v492, 0.0
      %v537 = vadd.f32 %v535, %v536
      %v538 = vsel %vm409, %v493, 0.0
      %v539 = vadd.f32 %v537, %v538
      %v540 = vsel %vm409, %v494, 0.0
      %v541 = vadd.f32 %v539, %v540
      %v542 = vsel %vm409, %v495, 0.0
      %v543 = vadd.f32 %v541, %v542
      %v544 = vsel %vm409, %v496, 0.0
      %v545 = vadd.f32 %v543, %v544
      %v546 = vsel %vm409, %v497, 0.0
      %v547 = vadd.f32 %v545, %v546
      %v548 = vsel %vm409, %v498, 0.0
      %v549 = vadd.f32 %v547, %v548
      %v550 = vsel %vm409, %v499, 0.0
      %v551 = vadd.f32 %v549, %v550
      %v552 = vsel %vm409, %v500, 0.0
      %v553 = vadd.f32 %v551, %v552
      %v554 = vsel %vm409, %v501, 0.0
      %v555 = vadd.f32 %v553, %v554
      %v556 = vsel %vm409, %v502, 0.0
      %v557 = vadd.f32 %v555, %v556
      %v558 = vsel %vm409, %v503, 0.0
      %v559 = vadd.f32 %v557, %v558
      %v560 = vsel %vm409, %v504, 0.0
      %v561 = vadd.f32 %v559, %v560
      %v562 = vsel %vm409, %v505, 0.0
      %v563 = vadd.f32 %v561, %v562
      %v564 = vsel %vm409, %v506, 0.0
      %v565 = vadd.f32 %v563, %v564
      %v566 = vsel %vm409, %v507, 0.0
      %v567 = vadd.f32 %v565, %v566
      %v568 = vsel %vm409, %v508, 0.0
      %v569 = vadd.f32 %v567, %v568
      %v570 = vsel %vm409, %v509, 0.0
      %v571 = vadd.f32 %v569, %v570
      %v572 = vsel %vm409, %v510, 0.0
      %v573 = vadd.f32 %v571, %v572
      %v574 = vrot.slane %v573, 4
      %v575 = vadd.f32 %v573, %v574
      %v576 = vrot.slane %v575, 2
      %v577 = vadd.f32 %v575, %v576
      %v578 = vrot.slane %v577, 1
      %v579 = vadd.f32 %v577, %v578
      %vm580 = vcmask 1040384
      %v581 = vsel %vm580, %v478, %v579
      %vm582 = vcmask 517120
      %583 = vst.msk [vmem:[%s195] sm:$0x3] %vm582, %v581
      %p584 = scmp.lt.s32.totalorder %s15, 3
      %s585 = scalar_select %p584, %s15, 3
      %s586 = smul.addr %s585, 2
      %s587 = scalar_lea.vmem %s4, %s586
      // Predicated region
      $region37: #{discriminator_forward_pallas.4} parent=35 // pred_check
        %p588 = pneg %p122
      $region38: #{discriminator_forward_pallas.4} parent=35 // pred_check_branch
        %590 = sbr.rel (%p588) target = $region40
      $region39: #{discriminator_forward_pallas.4} parent=35 // pred_region
        _
      $region40: #{discriminator_forward_pallas.4} parent=35 // pred_fallthru
        _
    $region36: #{discriminator_forward_pallas.4} parent=5 // pred_fallthru
      _
    %p591 = scmp.le.s32.totalorder 2, %s10
    // Predicated region
    $region41: #{discriminator_forward_pallas.4} parent=5 // pred_check
      %p592 = pneg %p591
    $region42: #{discriminator_forward_pallas.4} parent=5 // pred_check_branch
      %594 = sbr.rel (%p592) target = $region44
    $region43: #{discriminator_forward_pallas.4} parent=5 // pred_region
      %s595 = ssub.s32 %s10, 2
      // Predicated region
      $region45: #{discriminator_forward_pallas.4} parent=43 // pred_check
        %p596 = pneg %p128
      $region46: #{discriminator_forward_pallas.4} parent=43 // pred_check_branch
        %598 = sbr.rel (%p596) target = $region48
      $region47: #{discriminator_forward_pallas.4} parent=43 // pred_region
        %p599 = scmp.lt.s32.totalorder %s16, 3
        %s600 = scalar_select %p599, %s16, 3
        %s601 = smul.addr %s600, 2
        %s602 = scalar_lea.vmem %s4, %s601
      $region48: #{discriminator_forward_pallas.4} parent=43 // pred_fallthru
        _
    $region44: #{discriminator_forward_pallas.4} parent=5 // pred_fallthru
      _
  $region6: #{discriminator_forward_pallas.4} parent=0 // loop_footer
    %s14 = sadd.s32 1, %s10
  $region7: #{discriminator_forward_pallas.4} parent=0 // loop_footer_branch
    %9 = sbr.rel target = $region3
  $region8: #{discriminator_forward_pallas.4} parent=0 // loop_exit
    _

// kernel: discriminator_forward_pallas.5
$region0: #{discriminator_forward_pallas.5}
  #allocation0 [shape = 'u32[]', space=smem, size = 0x4, offset = 0x4, fixed_abs, tag = 'smem constant byte address 0x4 - core index']
  #allocation1 [shape = 'u32[144,128]{1,0:T(1,128)}', space=vmem, size = 0x12000, scoped, tag = 'internal scratch']
  #allocation2 [shape = 'f32[4,512]{1,0:T(4,128)}', space=vmem, size = 0x2000, scoped, tag = 'scratch operand']
  %s0 = inlined_call_operand.vmem [shape: f32[4,16384], index: 0, kind: input, shape index: {}]
  %s1 = inlined_call_operand.vmem [shape: f32[1,16384], index: 1, kind: input, shape index: {}]
  %s2 = inlined_call_operand.vmem [shape: f32[1,16384], index: 2, kind: input, shape index: {}]
  %s3 = inlined_call_operand.vmem [shape: f32[1,16384], index: 3, kind: input, shape index: {}]
  %s4 = inlined_call_operand.vmem [shape: f32[1,16384], index: 4, kind: input, shape index: {}]
  %s5 = inlined_call_operand.vmem [shape: f32[1,16384], index: 5, kind: input, shape index: {}]
  %s6 = inlined_call_operand.hbm [shape: f32[16384,512], index: 6, kind: input, shape index: {}]
  %s7 = inlined_call_operand.vmem [shape: f32[1,512], index: 7, kind: input, shape index: {}]
  %s8 = inlined_call_operand.vmem [shape: f32[1,512], index: 8, kind: input, shape index: {}]
  %s9 = inlined_call_operand.vmem [shape: f32[1,512], index: 9, kind: input, shape index: {}]
  %s10 = inlined_call_operand.hbm [shape: f32[4,512], index: 10, kind: output, shape index: {}]
  %s11 = sld [smem:[#allocation0]]
  $region85: #{discriminator_forward_pallas.5} parent=0
    _
  %s13 = ssub.s32 1, %s11
  %s14 = scalar_select 0, %s13, %s11
  $region1: #{discriminator_forward_pallas.5} parent=0
    #allocation3 [shape = 'u8[8388608]{0}', space=vmem, size = 0x800000, scoped, tag = 'input window, operand 6']
    #allocation4 [shape = 's32[2]{0}', space=sflag, size = 0x8, scoped, tag = 'scoped memory for discriminator_forward_pallas.5']
    #allocation5 [shape = 's32[2]{0}', space=sflag, size = 0x8, scoped, tag = 'scoped memory for discriminator_forward_pallas.5']
    #allocation6 [shape = 'u8[8192]{0}', space=vmem, size = 0x2000, scoped, tag = 'output window, operand 0, single buffered']
    %15 = vsyncpa [#allocation4], 0
    %s16 = scalar_lea.sflag [#allocation4], 1
    %17 = vsyncpa %s16, 0
    %18 = vsyncpa [#allocation5], 0
    loop: start=0, step=1, limit=10
    $region2: #{discriminator_forward_pallas.5} parent=1 // loop_pre_header
      _
    $region3: #{discriminator_forward_pallas.5} parent=1 // loop_header
      %s20 = sphi 0, %s24
      %p21 = scmp.ge.s32.totalorder %s20, 10
      %s30 = sphi 0, %s32
      %s33 = sphi 0, %s30
      %s34 = sphi 0, %s33
      %s50 = sphi 0, %s34
      %s56 = sphi 0, %s58
      %s59 = sphi 0, %s56
      %s60 = sphi 0, %s59
      %s76 = sphi 0, %s60
      %s82 = sphi 0, %s84
      %s85 = sphi 0, %s82
      %s86 = sphi 0, %s85
      %s102 = sphi 0, %s86
      %s108 = sphi 0, %s110
      %s111 = sphi 0, %s108
      %s112 = sphi 0, %s111
      %s128 = sphi 0, %s112
      %s134 = sphi 0, %s136
      %s137 = sphi 0, %s134
      %s138 = sphi 0, %s137
      %s154 = sphi 0, %s138
      %s160 = sphi 0, %s162
      %s163 = sphi 0, %s160
      %s164 = sphi 0, %s163
      %s180 = sphi 0, %s164
      %s186 = sphi 0, %s188
      %s189 = sphi 0, %s186
      %s190 = sphi 0, %s189
      %s206 = sphi 0, %s190
      %s210 = sphi 0, %s210
      %s212 = sphi 0, %s210
      %s213 = sphi 0, %s212
      %s227 = sphi 0, %s213
      %s231 = sphi 0, %s231
      %s233 = sphi 0, %s231
      %s234 = sphi 0, %s233
      %s248 = sphi 0, %s234
      %s252 = sphi 0, %s252
      %s254 = sphi 0, %s252
      %s255 = sphi 0, %s254
      %s269 = sphi 0, %s255
      %s273 = sphi 0, %s273
      %s275 = sphi 0, %s273
      %s276 = sphi 0, %s275
      %s290 = sphi 0, %s276
    $region4: #{discriminator_forward_pallas.5} parent=1 // loop_header_branch
      %23 = sbr.rel (%p21) target = $region8
    $region5: #{discriminator_forward_pallas.5} parent=1 // loop_body
      %s25 = ssub.s32 %s20, 1
      %s26 = ssub.s32 %s20, 2
      %s27 = sadd.s32 %s20, 1
      %s28 = ssub.s32 %s20, %s27
      %p29 = scmp.eq.s32.totalorder %s28, 0
      %s31 = sadd.s32 %s30, 1
      %s32 = scalar_select %p29, %s30, %s31
      %p35 = pneg %p29
      %p36 = scmp.eq.s32.totalorder %s20, 7
      %p37 = por %p35, %p36
      %p38 = scmp.ne.s32.totalorder %s30, %s33
      %p39 = scmp.eq.s32.totalorder %s20, 0
      %p40 = por %p38, %p39
      %p41 = scmp.ne.s32.totalorder %s30, %s33
      %p42 = scmp.eq.s32.totalorder %s25, 7
      %p43 = por %p41, %p42
      %p44 = scmp.ne.s32.totalorder %s33, %s34
      %p45 = scmp.eq.s32.totalorder %s25, 0
      %p46 = por %p44, %p45
      %p47 = scmp.ne.s32.totalorder %s33, %s34
      %p48 = scmp.eq.s32.totalorder %s26, 7
      %p49 = por %p47, %p48
      %p51 = scmp.ne.s32.totalorder %s34, %s50
      %p52 = scmp.eq.s32.totalorder %s26, 0
      %p53 = por %p51, %p52
      %s54 = ssub.s32 %s20, %s27
      %p55 = scmp.eq.s32.totalorder %s54, 0
      %s57 = sadd.s32 %s56, 1
      %s58 = scalar_select %p55, %s56, %s57
      %p61 = pneg %p55
      %p62 = scmp.eq.s32.totalorder %s20, 7
      %p63 = por %p61, %p62
      %p64 = scmp.ne.s32.totalorder %s56, %s59
      %p65 = scmp.eq.s32.totalorder %s20, 0
      %p66 = por %p64, %p65
      %p67 = scmp.ne.s32.totalorder %s56, %s59
      %p68 = scmp.eq.s32.totalorder %s25, 7
      %p69 = por %p67, %p68
      %p70 = scmp.ne.s32.totalorder %s59, %s60
      %p71 = scmp.eq.s32.totalorder %s25, 0
      %p72 = por %p70, %p71
      %p73 = scmp.ne.s32.totalorder %s59, %s60
      %p74 = scmp.eq.s32.totalorder %s26, 7
      %p75 = por %p73, %p74
      %p77 = scmp.ne.s32.totalorder %s60, %s76
      %p78 = scmp.eq.s32.totalorder %s26, 0
      %p79 = por %p77, %p78
      %s80 = ssub.s32 %s20, %s27
      %p81 = scmp.eq.s32.totalorder %s80, 0
      %s83 = sadd.s32 %s82, 1
      %s84 = scalar_select %p81, %s82, %s83
      %p87 = pneg %p81
      %p88 = scmp.eq.s32.totalorder %s20, 7
      %p89 = por %p87, %p88
      %p90 = scmp.ne.s32.totalorder %s82, %s85
      %p91 = scmp.eq.s32.totalorder %s20, 0
      %p92 = por %p90, %p91
      %p93 = scmp.ne.s32.totalorder %s82, %s85
      %p94 = scmp.eq.s32.totalorder %s25, 7
      %p95 = por %p93, %p94
      %p96 = scmp.ne.s32.totalorder %s85, %s86
      %p97 = scmp.eq.s32.totalorder %s25, 0
      %p98 = por %p96, %p97
      %p99 = scmp.ne.s32.totalorder %s85, %s86
      %p100 = scmp.eq.s32.totalorder %s26, 7
      %p101 = por %p99, %p100
      %p103 = scmp.ne.s32.totalorder %s86, %s102
      %p104 = scmp.eq.s32.totalorder %s26, 0
      %p105 = por %p103, %p104
      %s106 = ssub.s32 %s20, %s27
      %p107 = scmp.eq.s32.totalorder %s106, 0
      %s109 = sadd.s32 %s108, 1
      %s110 = scalar_select %p107, %s108, %s109
      %p113 = pneg %p107
      %p114 = scmp.eq.s32.totalorder %s20, 7
      %p115 = por %p113, %p114
      %p116 = scmp.ne.s32.totalorder %s108, %s111
      %p117 = scmp.eq.s32.totalorder %s20, 0
      %p118 = por %p116, %p117
      %p119 = scmp.ne.s32.totalorder %s108, %s111
      %p120 = scmp.eq.s32.totalorder %s25, 7
      %p121 = por %p119, %p120
      %p122 = scmp.ne.s32.totalorder %s111, %s112
      %p123 = scmp.eq.s32.totalorder %s25, 0
      %p124 = por %p122, %p123
      %p125 = scmp.ne.s32.totalorder %s111, %s112
      %p126 = scmp.eq.s32.totalorder %s26, 7
      %p127 = por %p125, %p126
      %p129 = scmp.ne.s32.totalorder %s112, %s128
      %p130 = scmp.eq.s32.totalorder %s26, 0
      %p131 = por %p129, %p130
      %s132 = ssub.s32 %s20, %s27
      %p133 = scmp.eq.s32.totalorder %s132, 0
      %s135 = sadd.s32 %s134, 1
      %s136 = scalar_select %p133, %s134, %s135
      %p139 = pneg %p133
      %p140 = scmp.eq.s32.totalorder %s20, 7
      %p141 = por %p139, %p140
      %p142 = scmp.ne.s32.totalorder %s134, %s137
      %p143 = scmp.eq.s32.totalorder %s20, 0
      %p144 = por %p142, %p143
      %p145 = scmp.ne.s32.totalorder %s134, %s137
      %p146 = scmp.eq.s32.totalorder %s25, 7
      %p147 = por %p145, %p146
      %p148 = scmp.ne.s32.totalorder %s137, %s138
      %p149 = scmp.eq.s32.totalorder %s25, 0
      %p150 = por %p148, %p149
      %p151 = scmp.ne.s32.totalorder %s137, %s138
      %p152 = scmp.eq.s32.totalorder %s26, 7
      %p153 = por %p151, %p152
      %p155 = scmp.ne.s32.totalorder %s138, %s154
      %p156 = scmp.eq.s32.totalorder %s26, 0
      %p157 = por %p155, %p156
      %s158 = ssub.s32 %s20, %s27
      %p159 = scmp.eq.s32.totalorder %s158, 0
      %s161 = sadd.s32 %s160, 1
      %s162 = scalar_select %p159, %s160, %s161
      %p165 = pneg %p159
      %p166 = scmp.eq.s32.totalorder %s20, 7
      %p167 = por %p165, %p166
      %p168 = scmp.ne.s32.totalorder %s160, %s163
      %p169 = scmp.eq.s32.totalorder %s20, 0
      %p170 = por %p168, %p169
      %p171 = scmp.ne.s32.totalorder %s160, %s163
      %p172 = scmp.eq.s32.totalorder %s25, 7
      %p173 = por %p171, %p172
      %p174 = scmp.ne.s32.totalorder %s163, %s164
      %p175 = scmp.eq.s32.totalorder %s25, 0
      %p176 = por %p174, %p175
      %p177 = scmp.ne.s32.totalorder %s163, %s164
      %p178 = scmp.eq.s32.totalorder %s26, 7
      %p179 = por %p177, %p178
      %p181 = scmp.ne.s32.totalorder %s164, %s180
      %p182 = scmp.eq.s32.totalorder %s26, 0
      %p183 = por %p181, %p182
      %s184 = ssub.s32 %s20, %s27
      %p185 = scmp.eq.s32.totalorder %s184, 0
      %s187 = sadd.s32 %s186, 1
      %s188 = scalar_select %p185, %s186, %s187
      %p191 = pneg %p185
      %p192 = scmp.eq.s32.totalorder %s20, 7
      %p193 = por %p191, %p192
      %p194 = scmp.ne.s32.totalorder %s186, %s189
      %p195 = scmp.eq.s32.totalorder %s20, 0
      %p196 = por %p194, %p195
      %p197 = scmp.ne.s32.totalorder %s186, %s189
      %p198 = scmp.eq.s32.totalorder %s25, 7
      %p199 = por %p197, %p198
      %p200 = scmp.ne.s32.totalorder %s189, %s190
      %p201 = scmp.eq.s32.totalorder %s25, 0
      %p202 = por %p200, %p201
      %p203 = scmp.ne.s32.totalorder %s189, %s190
      %p204 = scmp.eq.s32.totalorder %s26, 7
      %p205 = por %p203, %p204
      %p207 = scmp.ne.s32.totalorder %s190, %s206
      %p208 = scmp.eq.s32.totalorder %s26, 0
      %p209 = por %p207, %p208
      %s211 = sadd.s32 %s210, 1
      %p214 = scmp.eq.s32.totalorder %s20, 7
      %p215 = scmp.ne.s32.totalorder %s210, %s212
      %p216 = scmp.eq.s32.totalorder %s20, 0
      %p217 = por %p215, %p216
      %p218 = scmp.ne.s32.totalorder %s210, %s212
      %p219 = scmp.eq.s32.totalorder %s25, 7
      %p220 = por %p218, %p219
      %p221 = scmp.ne.s32.totalorder %s212, %s213
      %p222 = scmp.eq.s32.totalorder %s25, 0
      %p223 = por %p221, %p222
      %p224 = scmp.ne.s32.totalorder %s212, %s213
      %p225 = scmp.eq.s32.totalorder %s26, 7
      %p226 = por %p224, %p225
      %p228 = scmp.ne.s32.totalorder %s213, %s227
      %p229 = scmp.eq.s32.totalorder %s26, 0
      %p230 = por %p228, %p229
      %s232 = sadd.s32 %s231, 1
      %p235 = scmp.eq.s32.totalorder %s20, 7
      %p236 = scmp.ne.s32.totalorder %s231, %s233
      %p237 = scmp.eq.s32.totalorder %s20, 0
      %p238 = por %p236, %p237
      %p239 = scmp.ne.s32.totalorder %s231, %s233
      %p240 = scmp.eq.s32.totalorder %s25, 7
      %p241 = por %p239, %p240
      %p242 = scmp.ne.s32.totalorder %s233, %s234
      %p243 = scmp.eq.s32.totalorder %s25, 0
      %p244 = por %p242, %p243
      %p245 = scmp.ne.s32.totalorder %s233, %s234
      %p246 = scmp.eq.s32.totalorder %s26, 7
      %p247 = por %p245, %p246
      %p249 = scmp.ne.s32.totalorder %s234, %s248
      %p250 = scmp.eq.s32.totalorder %s26, 0
      %p251 = por %p249, %p250
      %s253 = sadd.s32 %s252, 1
      %p256 = scmp.eq.s32.totalorder %s20, 7
      %p257 = scmp.ne.s32.totalorder %s252, %s254
      %p258 = scmp.eq.s32.totalorder %s20, 0
      %p259 = por %p257, %p258
      %p260 = scmp.ne.s32.totalorder %s252, %s254
      %p261 = scmp.eq.s32.totalorder %s25, 7
      %p262 = por %p260, %p261
      %p263 = scmp.ne.s32.totalorder %s254, %s255
      %p264 = scmp.eq.s32.totalorder %s25, 0
      %p265 = por %p263, %p264
      %p266 = scmp.ne.s32.totalorder %s254, %s255
      %p267 = scmp.eq.s32.totalorder %s26, 7
      %p268 = por %p266, %p267
      %p270 = scmp.ne.s32.totalorder %s255, %s269
      %p271 = scmp.eq.s32.totalorder %s26, 0
      %p272 = por %p270, %p271
      %s274 = sadd.s32 %s273, 1
      %p277 = scmp.eq.s32.totalorder %s20, 7
      %p278 = scmp.ne.s32.totalorder %s273, %s275
      %p279 = scmp.eq.s32.totalorder %s20, 0
      %p280 = por %p278, %p279
      %p281 = scmp.ne.s32.totalorder %s273, %s275
      %p282 = scmp.eq.s32.totalorder %s25, 7
      %p283 = por %p281, %p282
      %p284 = scmp.ne.s32.totalorder %s275, %s276
      %p285 = scmp.eq.s32.totalorder %s25, 0
      %p286 = por %p284, %p285
      %p287 = scmp.ne.s32.totalorder %s275, %s276
      %p288 = scmp.eq.s32.totalorder %s26, 7
      %p289 = por %p287, %p288
      %p291 = scmp.ne.s32.totalorder %s276, %s290
      %p292 = scmp.eq.s32.totalorder %s26, 0
      %p293 = por %p291, %p292
      %p294 = scmp.le.s32.totalorder 1, %s20
      %p295 = scmp.lt.s32.totalorder %s20, 9
      %p296 = pnand %p294, %p295
      %p297 = pneg %p296
      // Predicated region
      $region9: #{discriminator_forward_pallas.5} parent=5 // pred_check
        _
      $region10: #{discriminator_forward_pallas.5} parent=5 // pred_check_branch
        %299 = sbr.rel (%p296) target = $region12
      $region11: #{discriminator_forward_pallas.5} parent=5 // pred_region
        %s300 = ssub.s32 %s20, 1
        // Predicated region
        $region13: #{discriminator_forward_pallas.5} parent=11 // pred_check
          %p301 = pneg %p223
        $region14: #{discriminator_forward_pallas.5} parent=11 // pred_check_branch
          %303 = sbr.rel (%p301) target = $region16
        $region15: #{discriminator_forward_pallas.5} parent=11 // pred_region
          _
        $region16: #{discriminator_forward_pallas.5} parent=11 // pred_fallthru
          _
        // Predicated region
        $region17: #{discriminator_forward_pallas.5} parent=11 // pred_check
          %p304 = pneg %p244
        $region18: #{discriminator_forward_pallas.5} parent=11 // pred_check_branch
          %306 = sbr.rel (%p304) target = $region20
        $region19: #{discriminator_forward_pallas.5} parent=11 // pred_region
          _
        $region20: #{discriminator_forward_pallas.5} parent=11 // pred_fallthru
          _
        // Predicated region
        $region21: #{discriminator_forward_pallas.5} parent=11 // pred_check
          %p307 = pneg %p265
        $region22: #{discriminator_forward_pallas.5} parent=11 // pred_check_branch
          %309 = sbr.rel (%p307) target = $region24
        $region23: #{discriminator_forward_pallas.5} parent=11 // pred_region
          _
        $region24: #{discriminator_forward_pallas.5} parent=11 // pred_fallthru
          _
      $region12: #{discriminator_forward_pallas.5} parent=5 // pred_fallthru
        _
      %p310 = scmp.lt.s32.totalorder %s20, 8
      // Predicated region
      $region25: #{discriminator_forward_pallas.5} parent=5 // pred_check
        %p311 = pneg %p310
      $region26: #{discriminator_forward_pallas.5} parent=5 // pred_check_branch
        %313 = sbr.rel (%p311) target = $region28
      $region27: #{discriminator_forward_pallas.5} parent=5 // pred_region
        // Predicated region
        $region29: #{discriminator_forward_pallas.5} parent=27 // pred_check
          %p314 = pneg %p40
        $region30: #{discriminator_forward_pallas.5} parent=27 // pred_check_branch
          %316 = sbr.rel (%p314) target = $region32
        $region31: #{discriminator_forward_pallas.5} parent=27 // pred_region
          %s317 = smul.u32 16, %s20
          %p318 = scmp.lt.s32.totalorder %s317, 127
          %s319 = scalar_select %p318, %s317, 127
          %s320 = smul.addr %s319, 4
          %s321 = scalar_lea.vmem %s0, %s320
          %s322 = smul.u32 16, %s20
        $region32: #{discriminator_forward_pallas.5} parent=27 // pred_fallthru
          _
        // Predicated region
        $region33: #{discriminator_forward_pallas.5} parent=27 // pred_check
          %p323 = pneg %p66
        $region34: #{discriminator_forward_pallas.5} parent=27 // pred_check_branch
          %325 = sbr.rel (%p323) target = $region36
        $region35: #{discriminator_forward_pallas.5} parent=27 // pred_region
          %s326 = smul.u32 16, %s20
          %p327 = scmp.lt.s32.totalorder %s326, 127
          %s328 = scalar_select %p327, %s326, 127
          %s329 = scalar_lea.vmem %s1, %s328
          %s330 = smul.u32 16, %s20
        $region36: #{discriminator_forward_pallas.5} parent=27 // pred_fallthru
          _
        // Predicated region
        $region37: #{discriminator_forward_pallas.5} parent=27 // pred_check
          %p331 = pneg %p92
        $region38: #{discriminator_forward_pallas.5} parent=27 // pred_check_branch
          %333 = sbr.rel (%p331) target = $region40
        $region39: #{discriminator_forward_pallas.5} parent=27 // pred_region
          %s334 = smul.u32 16, %s20
          %p335 = scmp.lt.s32.totalorder %s334, 127
          %s336 = scalar_select %p335, %s334, 127
          %s337 = scalar_lea.vmem %s2, %s336
          %s338 = smul.u32 16, %s20
        $region40: #{discriminator_forward_pallas.5} parent=27 // pred_fallthru
          _
        // Predicated region
        $region41: #{discriminator_forward_pallas.5} parent=27 // pred_check
          %p339 = pneg %p118
        $region42: #{discriminator_forward_pallas.5} parent=27 // pred_check_branch
          %341 = sbr.rel (%p339) target = $region44
        $region43: #{discriminator_forward_pallas.5} parent=27 // pred_region
          %s342 = smul.u32 16, %s20
          %p343 = scmp.lt.s32.totalorder %s342, 127
          %s344 = scalar_select %p343, %s342, 127
          %s345 = scalar_lea.vmem %s3, %s344
          %s346 = smul.u32 16, %s20
        $region44: #{discriminator_forward_pallas.5} parent=27 // pred_fallthru
          _
        // Predicated region
        $region45: #{discriminator_forward_pallas.5} parent=27 // pred_check
          %p347 = pneg %p144
        $region46: #{discriminator_forward_pallas.5} parent=27 // pred_check_branch
          %349 = sbr.rel (%p347) target = $region48
        $region47: #{discriminator_forward_pallas.5} parent=27 // pred_region
          %s350 = smul.u32 16, %s20
          %p351 = scmp.lt.s32.totalorder %s350, 127
          %s352 = scalar_select %p351, %s350, 127
          %s353 = scalar_lea.vmem %s4, %s352
          %s354 = smul.u32 16, %s20
        $region48: #{discriminator_forward_pallas.5} parent=27 // pred_fallthru
          _
        // Predicated region
        $region49: #{discriminator_forward_pallas.5} parent=27 // pred_check
          %p355 = pneg %p170
        $region50: #{discriminator_forward_pallas.5} parent=27 // pred_check_branch
          %357 = sbr.rel (%p355) target = $region52
        $region51: #{discriminator_forward_pallas.5} parent=27 // pred_region
          %s358 = smul.u32 16, %s20
          %p359 = scmp.lt.s32.totalorder %s358, 127
          %s360 = scalar_select %p359, %s358, 127
          %s361 = scalar_lea.vmem %s5, %s360
          %s362 = smul.u32 16, %s20
        $region52: #{discriminator_forward_pallas.5} parent=27 // pred_fallthru
          _
        // Predicated region
        $region53: #{discriminator_forward_pallas.5} parent=27 // pred_check
          %p363 = pneg %p196
        $region54: #{discriminator_forward_pallas.5} parent=27 // pred_check_branch
          %365 = sbr.rel (%p363) target = $region56
        $region55: #{discriminator_forward_pallas.5} parent=27 // pred_region
          %s366 = sand.u32 %s186, 1
          %s367 = scalar_lea.sflag [#allocation4], %s366
          %s368 = sand.u32 %s186, 1
          %s369 = smul.addr %s368, 8192
          %s370 = scalar_lea.vmem [#allocation3], %s369
          %s371 = smul.u32 256, %s20
          %s373 = ssub.s32 131072, 131072
          %374 = vsyncadd %s367, %s373
          %s375 = smul.addr %s371, 4
          %s376 = smul.addr %s375, 128
          %s377 = scalar_lea.hbm %s6, %s376
          %s378 = sshll.u32 %s370, 4
          %s379 = int_to_ptr.vmem [resolvable:$true] %s378
          %384 = dma.hbm_to_vmem [thread:$0]  %s377, 131072, %s379, %s367, 512, 512, 32
        $region56: #{discriminator_forward_pallas.5} parent=27 // pred_fallthru
          _
      $region28: #{discriminator_forward_pallas.5} parent=5 // pred_fallthru
        _
      %p385 = scmp.le.s32.totalorder 1, %s20
      %p386 = scmp.lt.s32.totalorder %s20, 9
      %p387 = pnand %p385, %p386
      %p388 = pneg %p387
      // Predicated region
      $region57: #{discriminator_forward_pallas.5} parent=5 // pred_check
        _
      $region58: #{discriminator_forward_pallas.5} parent=5 // pred_check_branch
        %390 = sbr.rel (%p387) target = $region60
      $region59: #{discriminator_forward_pallas.5} parent=5 // pred_region
        %s391 = ssub.s32 %s20, 1
        %s392 = sand.u32 %s189, 1
        %s393 = scalar_lea.sflag [#allocation4], %s392
        %s394 = sand.u32 %s189, 1
        %s395 = smul.addr %s394, 8192
        %s396 = scalar_lea.vmem [#allocation3], %s395
        // Predicated region
        $region61: #{discriminator_forward_pallas.5} parent=59 // pred_check
          %p397 = pneg %p202
        $region62: #{discriminator_forward_pallas.5} parent=59 // pred_check_branch
          %399 = sbr.rel (%p397) target = $region64
        $region63: #{discriminator_forward_pallas.5} parent=59 // pred_region
          %400 = dma.done %s393, 131072
        $region64: #{discriminator_forward_pallas.5} parent=59 // pred_fallthru
          _
        %s401 = smul.u32 16, %s25
        %p402 = scmp.lt.s32.totalorder %s401, 127
        %s403 = scalar_select %p402, %s401, 127
        %s404 = smul.addr %s403, 4
        %s405 = scalar_lea.vmem %s0, %s404
        %p406 = pneg %p46
        %p407 = pneg %p43
        %s408 = smul.u32 16, %s25
        %p409 = scmp.lt.s32.totalorder %s408, 127
        %s410 = scalar_select %p409, %s408, 127
        %s411 = scalar_lea.vmem %s1, %s410
        %p412 = pneg %p72
        %p413 = pneg %p69
        %s414 = smul.u32 16, %s25
        %p415 = scmp.lt.s32.totalorder %s414, 127
        %s416 = scalar_select %p415, %s414, 127
        %s417 = scalar_lea.vmem %s2, %s416
        %p418 = pneg %p98
        %p419 = pneg %p95
        %s420 = smul.u32 16, %s25
        %p421 = scmp.lt.s32.totalorder %s420, 127
        %s422 = scalar_select %p421, %s420, 127
        %s423 = scalar_lea.vmem %s3, %s422
        %p424 = pneg %p124
        %p425 = pneg %p121
        %s426 = smul.u32 16, %s25
        %p427 = scmp.lt.s32.totalorder %s426, 127
        %s428 = scalar_select %p427, %s426, 127
        %s429 = scalar_lea.vmem %s4, %s428
        %p430 = pneg %p150
        %p431 = pneg %p147
        %s432 = smul.u32 16, %s25
        %p433 = scmp.lt.s32.totalorder %s432, 127
        %s434 = scalar_select %p433, %s432, 127
        %s435 = scalar_lea.vmem %s5, %s434
        %p436 = pneg %p176
        %p437 = pneg %p173
        %s438 = sand.u32 %s189, 1
        %s439 = scalar_lea.sflag [#allocation4], %s438
        %s440 = sand.u32 %s189, 1
        %s441 = smul.addr %s440, 8192
        %s442 = scalar_lea.vmem [#allocation3], %s441
        %p443 = pneg %p202
        %p444 = pneg %p199
        %p445 = pneg %p223
        %p446 = pneg %p220
        %p447 = pneg %p244
        %p448 = pneg %p241
        %p449 = pneg %p265
        %p450 = pneg %p262
        %p451 = pneg %p286
        %p452 = pneg %p283
        %s453 = smul.u32 16, %s25
        %p454 = scmp.lt.s32.totalorder %s453, 127
        %s455 = scalar_select %p454, %s453, 127
        %s456 = smul.addr %s455, 4
        %s457 = scalar_lea.vmem %s0, %s456
        %s458 = smul.u32 16, %s25
        %s459 = smul.u32 16, %s25
        %p460 = scmp.lt.s32.totalorder %s459, 127
        %s461 = scalar_select %p460, %s459, 127
        %s462 = scalar_lea.vmem %s1, %s461
        %s463 = smul.u32 16, %s25
        %s464 = smul.u32 16, %s25
        %p465 = scmp.lt.s32.totalorder %s464, 127
        %s466 = scalar_select %p465, %s464, 127
        %s467 = scalar_lea.vmem %s2, %s466
        %s468 = smul.u32 16, %s25
        %s469 = smul.u32 16, %s25
        %p470 = scmp.lt.s32.totalorder %s469, 127
        %s471 = scalar_select %p470, %s469, 127
        %s472 = scalar_lea.vmem %s3, %s471
        %s473 = smul.u32 16, %s25
        %s474 = smul.u32 16, %s25
        %p475 = scmp.lt.s32.totalorder %s474, 127
        %s476 = scalar_select %p475, %s474, 127
        %s477 = scalar_lea.vmem %s4, %s476
        %s478 = smul.u32 16, %s25
        %s479 = smul.u32 16, %s25
        %p480 = scmp.lt.s32.totalorder %s479, 127
        %s481 = scalar_select %p480, %s479, 127
        %s482 = scalar_lea.vmem %s5, %s481
        %s483 = smul.u32 16, %s25
        %s484 = smul.u32 256, %s25
        %p485 = scmp.eq.s32.totalorder %s25, 0
        // Predicated region
        $region65: #{discriminator_forward_pallas.5} parent=59 // pred_check
          %p486 = pneg %p485
        $region66: #{discriminator_forward_pallas.5} parent=59 // pred_check_branch
          %488 = sbr.rel (%p486) target = $region68
        $region67: #{discriminator_forward_pallas.5} parent=59 // pred_region
          %489 = vst [vmem:[#allocation2] sm:$0xff] 0.0
          %490 = vst [vmem:[#allocation2 + $0x8] sm:$0xff] 0.0
        $region68: #{discriminator_forward_pallas.5} parent=59 // pred_fallthru
          _
        %v491 = vld [vmem:[%s457] sm:$0xff]
        %v492 = vld [vmem:[%s457 + $0x8] sm:$0xff]
        %v493 = vld [vmem:[%s457 + $0x10] sm:$0xff]
        %v494 = vld [vmem:[%s457 + $0x18] sm:$0xff]
        %v495 = vld [vmem:[%s457 + $0x20] sm:$0xff]
        %v496 = vld [vmem:[%s457 + $0x28] sm:$0xff]
        %v497 = vld [vmem:[%s457 + $0x30] sm:$0xff]
        %v498 = vld [vmem:[%s457 + $0x38] sm:$0xff]
        %v499 = vld [vmem:[%s462] sm:$0xff]
        %v500 = vld [vmem:[%s462 + $0x8] sm:$0xff]
        %v503 = vlaneseq
        %v504 = vshrl.u32 %v503, 7
        %v505 = vsub.s32 0, %v504
        %v506 = vrot.slane %v499, %v505
        %v507 = vlaneseq
        %v508 = vshrl.u32 %v507, 7
        %v509 = vsub.s32 1, %v508
        %v510 = vrot.slane %v499, %v509
        %v511 = vlaneseq
        %v512 = vshrl.u32 %v511, 7
        %v513 = vsub.s32 2, %v512
        %v514 = vrot.slane %v499, %v513
        %v515 = vlaneseq
        %v516 = vshrl.u32 %v515, 7
        %v517 = vsub.s32 3, %v516
        %v518 = vrot.slane %v499, %v517
        %v519 = vlaneseq
        %v520 = vshrl.u32 %v519, 7
        %v521 = vsub.s32 4, %v520
        %v522 = vrot.slane %v499, %v521
        %v523 = vlaneseq
        %v524 = vshrl.u32 %v523, 7
        %v525 = vsub.s32 5, %v524
        %v526 = vrot.slane %v499, %v525
        %v527 = vlaneseq
        %v528 = vshrl.u32 %v527, 7
        %v529 = vsub.s32 6, %v528
        %v530 = vrot.slane %v499, %v529
        %v531 = vlaneseq
        %v532 = vshrl.u32 %v531, 7
        %v533 = vsub.s32 7, %v532
        %v534 = vrot.slane %v499, %v533
        %v535 = vlaneseq
        %v536 = vshrl.u32 %v535, 7
        %v537 = vsub.s32 0, %v536
        %v538 = vrot.slane %v500, %v537
        %v539 = vlaneseq
        %v540 = vshrl.u32 %v539, 7
        %v541 = vsub.s32 1, %v540
        %v542 = vrot.slane %v500, %v541
        %v543 = vlaneseq
        %v544 = vshrl.u32 %v543, 7
        %v545 = vsub.s32 2, %v544
        %v546 = vrot.slane %v500, %v545
        %v547 = vlaneseq
        %v548 = vshrl.u32 %v547, 7
        %v549 = vsub.s32 3, %v548
        %v550 = vrot.slane %v500, %v549
        %v551 = vlaneseq
        %v552 = vshrl.u32 %v551, 7
        %v553 = vsub.s32 4, %v552
        %v554 = vrot.slane %v500, %v553
        %v555 = vlaneseq
        %v556 = vshrl.u32 %v555, 7
        %v557 = vsub.s32 5, %v556
        %v558 = vrot.slane %v500, %v557
        %v559 = vlaneseq
        %v560 = vshrl.u32 %v559, 7
        %v561 = vsub.s32 6, %v560
        %v562 = vrot.slane %v500, %v561
        %v563 = vlaneseq
        %v564 = vshrl.u32 %v563, 7
        %v565 = vsub.s32 7, %v564
        %v566 = vrot.slane %v500, %v565
        %v567 = vcombine.low %v506, %v510
        %v568 = vcombine.low %v514, %v518
        %v569 = vcombine.low %v522, %v526
        %v570 = vcombine.low %v530, %v534
        %v571 = vcombine.low %v538, %v542
        %v572 = vcombine.low %v546, %v550
        %v573 = vcombine.low %v554, %v558
        %v574 = vcombine.low %v562, %v566
        %v583 = vmul.f32 %v491, %v567
        %v584 = vmul.f32 %v492, %v568
        %v585 = vmul.f32 %v493, %v569
        %v586 = vmul.f32 %v494, %v570
        %v587 = vmul.f32 %v495, %v571
        %v588 = vmul.f32 %v496, %v572
        %v589 = vmul.f32 %v497, %v573
        %v590 = vmul.f32 %v498, %v574
        %v591 = vld [vmem:[%s467] sm:$0xff]
        %v592 = vld [vmem:[%s467 + $0x8] sm:$0xff]
        %v595 = vlaneseq
        %v596 = vshrl.u32 %v595, 7
        %v597 = vsub.s32 0, %v596
        %v598 = vrot.slane %v591, %v597
        %v599 = vlaneseq
        %v600 = vshrl.u32 %v599, 7
        %v601 = vsub.s32 1, %v600
        %v602 = vrot.slane %v591, %v601
        %v603 = vlaneseq
        %v604 = vshrl.u32 %v603, 7
        %v605 = vsub.s32 2, %v604
        %v606 = vrot.slane %v591, %v605
        %v607 = vlaneseq
        %v608 = vshrl.u32 %v607, 7
        %v609 = vsub.s32 3, %v608
        %v610 = vrot.slane %v591, %v609
        %v611 = vlaneseq
        %v612 = vshrl.u32 %v611, 7
        %v613 = vsub.s32 4, %v612
        %v614 = vrot.slane %v591, %v613
        %v615 = vlaneseq
        %v616 = vshrl.u32 %v615, 7
        %v617 = vsub.s32 5, %v616
        %v618 = vrot.slane %v591, %v617
        %v619 = vlaneseq
        %v620 = vshrl.u32 %v619, 7
        %v621 = vsub.s32 6, %v620
        %v622 = vrot.slane %v591, %v621
        %v623 = vlaneseq
        %v624 = vshrl.u32 %v623, 7
        %v625 = vsub.s32 7, %v624
        %v626 = vrot.slane %v591, %v625
        %v627 = vlaneseq
        %v628 = vshrl.u32 %v627, 7
        %v629 = vsub.s32 0, %v628
        %v630 = vrot.slane %v592, %v629
        %v631 = vlaneseq
        %v632 = vshrl.u32 %v631, 7
        %v633 = vsub.s32 1, %v632
        %v634 = vrot.slane %v592, %v633
        %v635 = vlaneseq
        %v636 = vshrl.u32 %v635, 7
        %v637 = vsub.s32 2, %v636
        %v638 = vrot.slane %v592, %v637
        %v639 = vlaneseq
        %v640 = vshrl.u32 %v639, 7
        %v641 = vsub.s32 3, %v640
        %v642 = vrot.slane %v592, %v641
        %v643 = vlaneseq
        %v644 = vshrl.u32 %v643, 7
        %v645 = vsub.s32 4, %v644
        %v646 = vrot.slane %v592, %v645
        %v647 = vlaneseq
        %v648 = vshrl.u32 %v647, 7
        %v649 = vsub.s32 5, %v648
        %v650 = vrot.slane %v592, %v649
        %v651 = vlaneseq
        %v652 = vshrl.u32 %v651, 7
        %v653 = vsub.s32 6, %v652
        %v654 = vrot.slane %v592, %v653
        %v655 = vlaneseq
        %v656 = vshrl.u32 %v655, 7
        %v657 = vsub.s32 7, %v656
        %v658 = vrot.slane %v592, %v657
        %v659 = vcombine.low %v598, %v602
        %v660 = vcombine.low %v606, %v610
        %v661 = vcombine.low %v614, %v618
        %v662 = vcombine.low %v622, %v626
        %v663 = vcombine.low %v630, %v634
        %v664 = vcombine.low %v638, %v642
        %v665 = vcombine.low %v646, %v650
        %v666 = vcombine.low %v654, %v658
        %v675 = vadd.f32 %v583, %v659
        %v676 = vadd.f32 %v584, %v660
        %v677 = vadd.f32 %v585, %v661
        %v678 = vadd.f32 %v586, %v662
        %v679 = vadd.f32 %v587, %v663
        %v680 = vadd.f32 %v588, %v664
        %v681 = vadd.f32 %v589, %v665
        %v682 = vadd.f32 %v590, %v666
        %vm683 = vcmp.ge.f32.partialorder %v675, 0.0
        %vm684 = vcmp.ge.f32.partialorder %v676, 0.0
        %vm685 = vcmp.ge.f32.partialorder %v677, 0.0
        %vm686 = vcmp.ge.f32.partialorder %v678, 0.0
        %vm687 = vcmp.ge.f32.partialorder %v679, 0.0
        %vm688 = vcmp.ge.f32.partialorder %v680, 0.0
        %vm689 = vcmp.ge.f32.partialorder %v681, 0.0
        %vm690 = vcmp.ge.f32.partialorder %v682, 0.0
        %v691 = vld [vmem:[%s472] sm:$0xff]
        %v692 = vld [vmem:[%s472 + $0x8] sm:$0xff]
        %v695 = vlaneseq
        %v696 = vshrl.u32 %v695, 7
        %v697 = vsub.s32 0, %v696
        %v698 = vrot.slane %v691, %v697
        %v699 = vlaneseq
        %v700 = vshrl.u32 %v699, 7
        %v701 = vsub.s32 1, %v700
        %v702 = vrot.slane %v691, %v701
        %v703 = vlaneseq
        %v704 = vshrl.u32 %v703, 7
        %v705 = vsub.s32 2, %v704
        %v706 = vrot.slane %v691, %v705
        %v707 = vlaneseq
        %v708 = vshrl.u32 %v707, 7
        %v709 = vsub.s32 3, %v708
        %v710 = vrot.slane %v691, %v709
        %v711 = vlaneseq
        %v712 = vshrl.u32 %v711, 7
        %v713 = vsub.s32 4, %v712
        %v714 = vrot.slane %v691, %v713
        %v715 = vlaneseq
        %v716 = vshrl.u32 %v715, 7
        %v717 = vsub.s32 5, %v716
        %v718 = vrot.slane %v691, %v717
        %v719 = vlaneseq
        %v720 = vshrl.u32 %v719, 7
        %v721 = vsub.s32 6, %v720
        %v722 = vrot.slane %v691, %v721
        %v723 = vlaneseq
        %v724 = vshrl.u32 %v723, 7
        %v725 = vsub.s32 7, %v724
        %v726 = vrot.slane %v691, %v725
        %v727 = vlaneseq
        %v728 = vshrl.u32 %v727, 7
        %v729 = vsub.s32 0, %v728
        %v730 = vrot.slane %v692, %v729
        %v731 = vlaneseq
        %v732 = vshrl.u32 %v731, 7
        %v733 = vsub.s32 1, %v732
        %v734 = vrot.slane %v692, %v733
        %v735 = vlaneseq
        %v736 = vshrl.u32 %v735, 7
        %v737 = vsub.s32 2, %v736
        %v738 = vrot.slane %v692, %v737
        %v739 = vlaneseq
        %v740 = vshrl.u32 %v739, 7
        %v741 = vsub.s32 3, %v740
        %v742 = vrot.slane %v692, %v741
        %v743 = vlaneseq
        %v744 = vshrl.u32 %v743, 7
        %v745 = vsub.s32 4, %v744
        %v746 = vrot.slane %v692, %v745
        %v747 = vlaneseq
        %v748 = vshrl.u32 %v747, 7
        %v749 = vsub.s32 5, %v748
        %v750 = vrot.slane %v692, %v749
        %v751 = vlaneseq
        %v752 = vshrl.u32 %v751, 7
        %v753 = vsub.s32 6, %v752
        %v754 = vrot.slane %v692, %v753
        %v755 = vlaneseq
        %v756 = vshrl.u32 %v755, 7
        %v757 = vsub.s32 7, %v756
        %v758 = vrot.slane %v692, %v757
        %v783 = vcombine.high %v675, %v675
        %v784 = vcombine.high %v676, %v676
        %v785 = vcombine.high %v677, %v677
        %v786 = vcombine.high %v678, %v678
        %v787 = vcombine.high %v679, %v679
        %v788 = vcombine.high %v680, %v680
        %v789 = vcombine.high %v681, %v681
        %v790 = vcombine.high %v682, %v682
        %v799 = vmul.f32 %v698, %v675
        %v800 = vmul.f32 %v702, %v783
        %v801 = vmul.f32 %v706, %v676
        %v802 = vmul.f32 %v710, %v784
        %v803 = vmul.f32 %v714, %v677
        %v804 = vmul.f32 %v718, %v785
        %v805 = vmul.f32 %v722, %v678
        %v806 = vmul.f32 %v726, %v786
        %v807 = vmul.f32 %v730, %v679
        %v808 = vmul.f32 %v734, %v787
        %v809 = vmul.f32 %v738, %v680
        %v810 = vmul.f32 %v742, %v788
        %v811 = vmul.f32 %v746, %v681
        %v812 = vmul.f32 %v750, %v789
        %v813 = vmul.f32 %v754, %v682
        %v814 = vmul.f32 %v758, %v790
        %v831 = vcombine.low %v799, %v800
        %v832 = vcombine.low %v801, %v802
        %v833 = vcombine.low %v803, %v804
        %v834 = vcombine.low %v805, %v806
        %v835 = vcombine.low %v807, %v808
        %v836 = vcombine.low %v809, %v810
        %v837 = vcombine.low %v811, %v812
        %v838 = vcombine.low %v813, %v814
        %v847 = vsel %vm683, %v675, %v831
        %v848 = vsel %vm684, %v676, %v832
        %v849 = vsel %vm685, %v677, %v833
        %v850 = vsel %vm686, %v678, %v834
        %v851 = vsel %vm687, %v679, %v835
        %v852 = vsel %vm688, %v680, %v836
        %v853 = vsel %vm689, %v681, %v837
        %v854 = vsel %vm690, %v682, %v838
        %v855 = vld [vmem:[%s477] sm:$0xff]
        %v856 = vld [vmem:[%s477 + $0x8] sm:$0xff]
        %v859 = vlaneseq
        %v860 = vshrl.u32 %v859, 7
        %v861 = vsub.s32 0, %v860
        %v862 = vrot.slane %v855, %v861
        %v863 = vlaneseq
        %v864 = vshrl.u32 %v863, 7
        %v865 = vsub.s32 1, %v864
        %v866 = vrot.slane %v855, %v865
        %v867 = vlaneseq
        %v868 = vshrl.u32 %v867, 7
        %v869 = vsub.s32 2, %v868
        %v870 = vrot.slane %v855, %v869
        %v871 = vlaneseq
        %v872 = vshrl.u32 %v871, 7
        %v873 = vsub.s32 3, %v872
        %v874 = vrot.slane %v855, %v873
        %v875 = vlaneseq
        %v876 = vshrl.u32 %v875, 7
        %v877 = vsub.s32 4, %v876
        %v878 = vrot.slane %v855, %v877
        %v879 = vlaneseq
        %v880 = vshrl.u32 %v879, 7
        %v881 = vsub.s32 5, %v880
        %v882 = vrot.slane %v855, %v881
        %v883 = vlaneseq
        %v884 = vshrl.u32 %v883, 7
        %v885 = vsub.s32 6, %v884
        %v886 = vrot.slane %v855, %v885
        %v887 = vlaneseq
        %v888 = vshrl.u32 %v887, 7
        %v889 = vsub.s32 7, %v888
        %v890 = vrot.slane %v855, %v889
        %v891 = vlaneseq
        %v892 = vshrl.u32 %v891, 7
        %v893 = vsub.s32 0, %v892
        %v894 = vrot.slane %v856, %v893
        %v895 = vlaneseq
        %v896 = vshrl.u32 %v895, 7
        %v897 = vsub.s32 1, %v896
        %v898 = vrot.slane %v856, %v897
        %v899 = vlaneseq
        %v900 = vshrl.u32 %v899, 7
        %v901 = vsub.s32 2, %v900
        %v902 = vrot.slane %v856, %v901
        %v903 = vlaneseq
        %v904 = vshrl.u32 %v903, 7
        %v905 = vsub.s32 3, %v904
        %v906 = vrot.slane %v856, %v905
        %v907 = vlaneseq
        %v908 = vshrl.u32 %v907, 7
        %v909 = vsub.s32 4, %v908
        %v910 = vrot.slane %v856, %v909
        %v911 = vlaneseq
        %v912 = vshrl.u32 %v911, 7
        %v913 = vsub.s32 5, %v912
        %v914 = vrot.slane %v856, %v913
        %v915 = vlaneseq
        %v916 = vshrl.u32 %v915, 7
        %v917 = vsub.s32 6, %v916
        %v918 = vrot.slane %v856, %v917
        %v919 = vlaneseq
        %v920 = vshrl.u32 %v919, 7
        %v921 = vsub.s32 7, %v920
        %v922 = vrot.slane %v856, %v921
        %v923 = vcombine.low %v862, %v866
        %v924 = vcombine.low %v870, %v874
        %v925 = vcombine.low %v878, %v882
        %v926 = vcombine.low %v886, %v890
        %v927 = vcombine.low %v894, %v898
        %v928 = vcombine.low %v902, %v906
        %v929 = vcombine.low %v910, %v914
        %v930 = vcombine.low %v918, %v922
        %v939 = vmul.f32 %v847, %v923
        %v940 = vmul.f32 %v848, %v924
        %v941 = vmul.f32 %v849, %v925
        %v942 = vmul.f32 %v850, %v926
        %v943 = vmul.f32 %v851, %v927
        %v944 = vmul.f32 %v852, %v928
        %v945 = vmul.f32 %v853, %v929
        %v946 = vmul.f32 %v854, %v930
        %v947 = vld [vmem:[%s482] sm:$0xff]
        %v948 = vld [vmem:[%s482 + $0x8] sm:$0xff]
        %v951 = vlaneseq
        %v952 = vshrl.u32 %v951, 7
        %v953 = vsub.s32 0, %v952
        %v954 = vrot.slane %v947, %v953
        %v955 = vlaneseq
        %v956 = vshrl.u32 %v955, 7
        %v957 = vsub.s32 1, %v956
        %v958 = vrot.slane %v947, %v957
        %v959 = vlaneseq
        %v960 = vshrl.u32 %v959, 7
        %v961 = vsub.s32 2, %v960
        %v962 = vrot.slane %v947, %v961
        %v963 = vlaneseq
        %v964 = vshrl.u32 %v963, 7
        %v965 = vsub.s32 3, %v964
        %v966 = vrot.slane %v947, %v965
        %v967 = vlaneseq
        %v968 = vshrl.u32 %v967, 7
        %v969 = vsub.s32 4, %v968
        %v970 = vrot.slane %v947, %v969
        %v971 = vlaneseq
        %v972 = vshrl.u32 %v971, 7
        %v973 = vsub.s32 5, %v972
        %v974 = vrot.slane %v947, %v973
        %v975 = vlaneseq
        %v976 = vshrl.u32 %v975, 7
        %v977 = vsub.s32 6, %v976
        %v978 = vrot.slane %v947, %v977
        %v979 = vlaneseq
        %v980 = vshrl.u32 %v979, 7
        %v981 = vsub.s32 7, %v980
        %v982 = vrot.slane %v947, %v981
        %v983 = vlaneseq
        %v984 = vshrl.u32 %v983, 7
        %v985 = vsub.s32 0, %v984
        %v986 = vrot.slane %v948, %v985
        %v987 = vlaneseq
        %v988 = vshrl.u32 %v987, 7
        %v989 = vsub.s32 1, %v988
        %v990 = vrot.slane %v948, %v989
        %v991 = vlaneseq
        %v992 = vshrl.u32 %v991, 7
        %v993 = vsub.s32 2, %v992
        %v994 = vrot.slane %v948, %v993
        %v995 = vlaneseq
        %v996 = vshrl.u32 %v995, 7
        %v997 = vsub.s32 3, %v996
        %v998 = vrot.slane %v948, %v997
        %v999 = vlaneseq
        %v1000 = vshrl.u32 %v999, 7
        %v1001 = vsub.s32 4, %v1000
        %v1002 = vrot.slane %v948, %v1001
        %v1003 = vlaneseq
        %v1004 = vshrl.u32 %v1003, 7
        %v1005 = vsub.s32 5, %v1004
        %v1006 = vrot.slane %v948, %v1005
        %v1007 = vlaneseq
        %v1008 = vshrl.u32 %v1007, 7
        %v1009 = vsub.s32 6, %v1008
        %v1010 = vrot.slane %v948, %v1009
        %v1011 = vlaneseq
        %v1012 = vshrl.u32 %v1011, 7
        %v1013 = vsub.s32 7, %v1012
        %v1014 = vrot.slane %v948, %v1013
        %v1015 = vcombine.low %v954, %v958
        %v1016 = vcombine.low %v962, %v966
        %v1017 = vcombine.low %v970, %v974
        %v1018 = vcombine.low %v978, %v982
        %v1019 = vcombine.low %v986, %v990
        %v1020 = vcombine.low %v994, %v998
        %v1021 = vcombine.low %v1002, %v1006
        %v1022 = vcombine.low %v1010, %v1014
        %v1031 = vadd.f32 %v939, %v1015
        %v1032 = vadd.f32 %v940, %v1016
        %v1033 = vadd.f32 %v941, %v1017
        %v1034 = vadd.f32 %v942, %v1018
        %v1035 = vadd.f32 %v943, %v1019
        %v1036 = vadd.f32 %v944, %v1020
        %v1037 = vadd.f32 %v945, %v1021
        %v1038 = vadd.f32 %v946, %v1022
        %v1039 = vld [vmem:[#allocation2] sm:$0xff]
        %v1040 = vld [vmem:[#allocation2 + $0x8] sm:$0xff]
        %v1041 = vld [vmem:[%s396] sm:$0xff]
        %v1042 = vld [vmem:[%s396 + $0x8] sm:$0xff]
        %v1043 = vld [vmem:[%s396 + $0x10] sm:$0xff]
        %v1044 = vld [vmem:[%s396 + $0x18] sm:$0xff]
        %v1045 = vld [vmem:[%s396 + $0x20] sm:$0xff]
        %v1046 = vld [vmem:[%s396 + $0x28] sm:$0xff]
        %v1047 = vld [vmem:[%s396 + $0x30] sm:$0xff]
        %v1048 = vld [vmem:[%s396 + $0x38] sm:$0xff]
        %v1049 = vld [vmem:[%s396 + $0x40] sm:$0xff]
        %v1050 = vld [vmem:[%s396 + $0x48] sm:$0xff]
        %v1051 = vld [vmem:[%s396 + $0x50] sm:$0xff]
        %v1052 = vld [vmem:[%s396 + $0x58] sm:$0xff]
        %v1053 = vld [vmem:[%s396 + $0x60] sm:$0xff]
        %v1054 = vld [vmem:[%s396 + $0x68] sm:$0xff]
        %v1055 = vld [vmem:[%s396 + $0x70] sm:$0xff]
        %v1056 = vld [vmem:[%s396 + $0x78] sm:$0xff]
        %v1057 = vld [vmem:[%s396 + $0x80] sm:$0xff]
        %v1058 = vld [vmem:[%s396 + $0x88] sm:$0xff]
        %v1059 = vld [vmem:[%s396 + $0x90] sm:$0xff]
        %v1060 = vld [vmem:[%s396 + $0x98] sm:$0xff]
        %v1061 = vld [vmem:[%s396 + $0xa0] sm:$0xff]
        %v1062 = vld [vmem:[%s396 + $0xa8] sm:$0xff]
        %v1063 = vld [vmem:[%s396 + $0xb0] sm:$0xff]
        %v1064 = vld [vmem:[%s396 + $0xb8] sm:$0xff]
        %v1065 = vld [vmem:[%s396 + $0xc0] sm:$0xff]
        %v1066 = vld [vmem:[%s396 + $0xc8] sm:$0xff]
        %v1067 = vld [vmem:[%s396 + $0xd0] sm:$0xff]
        %v1068 = vld [vmem:[%s396 + $0xd8] sm:$0xff]
        %v1069 = vld [vmem:[%s396 + $0xe0] sm:$0xff]
        %v1070 = vld [vmem:[%s396 + $0xe8] sm:$0xff]
        %v1071 = vld [vmem:[%s396 + $0xf0] sm:$0xff]
        %v1072 = vld [vmem:[%s396 + $0xf8] sm:$0xff]
        %v1073 = vld [vmem:[%s396 + $0x100] sm:$0xff]
        %v1074 = vld [vmem:[%s396 + $0x108] sm:$0xff]
        %v1075 = vld [vmem:[%s396 + $0x110] sm:$0xff]
        %v1076 = vld [vmem:[%s396 + $0x118] sm:$0xff]
        %v1077 = vld [vmem:[%s396 + $0x120] sm:$0xff]
        %v1078 = vld [vmem:[%s396 + $0x128] sm:$0xff]
        %v1079 = vld [vmem:[%s396 + $0x130] sm:$0xff]
        %v1080 = vld [vmem:[%s396 + $0x138] sm:$0xff]
        %v1081 = vld [vmem:[%s396 + $0x140] sm:$0xff]
        %v1082 = vld [vmem:[%s396 + $0x148] sm:$0xff]
        %v1083 = vld [vmem:[%s396 + $0x150] sm:$0xff]
        %v1084 = vld [vmem:[%s396 + $0x158] sm:$0xff]
        %v1085 = vld [vmem:[%s396 + $0x160] sm:$0xff]
        %v1086 = vld [vmem:[%s396 + $0x168] sm:$0xff]
        %v1087 = vld [vmem:[%s396 + $0x170] sm:$0xff]
        %v1088 = vld [vmem:[%s396 + $0x178] sm:$0xff]
        %v1089 = vld [vmem:[%s396 + $0x180] sm:$0xff]
        %v1090 = vld [vmem:[%s396 + $0x188] sm:$0xff]
        %v1091 = vld [vmem:[%s396 + $0x190] sm:$0xff]
        %v1092 = vld [vmem:[%s396 + $0x198] sm:$0xff]
        %v1093 = vld [vmem:[%s396 + $0x1a0] sm:$0xff]
        %v1094 = vld [vmem:[%s396 + $0x1a8] sm:$0xff]
        %v1095 = vld [vmem:[%s396 + $0x1b0] sm:$0xff]
        %v1096 = vld [vmem:[%s396 + $0x1b8] sm:$0xff]
        %v1097 = vld [vmem:[%s396 + $0x1c0] sm:$0xff]
        %v1098 = vld [vmem:[%s396 + $0x1c8] sm:$0xff]
        %v1099 = vld [vmem:[%s396 + $0x1d0] sm:$0xff]
        %v1100 = vld [vmem:[%s396 + $0x1d8] sm:$0xff]
        %v1101 = vld [vmem:[%s396 + $0x1e0] sm:$0xff]
        %v1102 = vld [vmem:[%s396 + $0x1e8] sm:$0xff]
        %v1103 = vld [vmem:[%s396 + $0x1f0] sm:$0xff]
        %v1104 = vld [vmem:[%s396 + $0x1f8] sm:$0xff]
        %v1105 = vld [vmem:[%s396 + $0x200] sm:$0xff]
        %v1106 = vld [vmem:[%s396 + $0x208] sm:$0xff]
        %v1107 = vld [vmem:[%s396 + $0x210] sm:$0xff]
        %v1108 = vld [vmem:[%s396 + $0x218] sm:$0xff]
        %v1109 = vld [vmem:[%s396 + $0x220] sm:$0xff]
        %v1110 = vld [vmem:[%s396 + $0x228] sm:$0xff]
        %v1111 = vld [vmem:[%s396 + $0x230] sm:$0xff]
        %v1112 = vld [vmem:[%s396 + $0x238] sm:$0xff]
        %v1113 = vld [vmem:[%s396 + $0x240] sm:$0xff]
        %v1114 = vld [vmem:[%s396 + $0x248] sm:$0xff]
        %v1115 = vld [vmem:[%s396 + $0x250] sm:$0xff]
        %v1116 = vld [vmem:[%s396 + $0x258] sm:$0xff]
        %v1117 = vld [vmem:[%s396 + $0x260] sm:$0xff]
        %v1118 = vld [vmem:[%s396 + $0x268] sm:$0xff]
        %v1119 = vld [vmem:[%s396 + $0x270] sm:$0xff]
        %v1120 = vld [vmem:[%s396 + $0x278] sm:$0xff]
        %v1121 = vld [vmem:[%s396 + $0x280] sm:$0xff]
        %v1122 = vld [vmem:[%s396 + $0x288] sm:$0xff]
        %v1123 = vld [vmem:[%s396 + $0x290] sm:$0xff]
        %v1124 = vld [vmem:[%s396 + $0x298] sm:$0xff]
        %v1125 = vld [vmem:[%s396 + $0x2a0] sm:$0xff]
        %v1126 = vld [vmem:[%s396 + $0x2a8] sm:$0xff]
        %v1127 = vld [vmem:[%s396 + $0x2b0] sm:$0xff]
        %v1128 = vld [vmem:[%s396 + $0x2b8] sm:$0xff]
        %v1129 = vld [vmem:[%s396 + $0x2c0] sm:$0xff]
        %v1130 = vld [vmem:[%s396 + $0x2c8] sm:$0xff]
        %v1131 = vld [vmem:[%s396 + $0x2d0] sm:$0xff]
        %v1132 = vld [vmem:[%s396 + $0x2d8] sm:$0xff]
        %v1133 = vld [vmem:[%s396 + $0x2e0] sm:$0xff]
        %v1134 = vld [vmem:[%s396 + $0x2e8] sm:$0xff]
        %v1135 = vld [vmem:[%s396 + $0x2f0] sm:$0xff]
        %v1136 = vld [vmem:[%s396 + $0x2f8] sm:$0xff]
        %v1137 = vld [vmem:[%s396 + $0x300] sm:$0xff]
        %v1138 = vld [vmem:[%s396 + $0x308] sm:$0xff]
        %v1139 = vld [vmem:[%s396 + $0x310] sm:$0xff]
        %v1140 = vld [vmem:[%s396 + $0x318] sm:$0xff]
        %v1141 = vld [vmem:[%s396 + $0x320] sm:$0xff]
        %v1142 = vld [vmem:[%s396 + $0x328] sm:$0xff]
        %v1143 = vld [vmem:[%s396 + $0x330] sm:$0xff]
        %v1144 = vld [vmem:[%s396 + $0x338] sm:$0xff]
        %v1145 = vld [vmem:[%s396 + $0x340] sm:$0xff]
        %v1146 = vld [vmem:[%s396 + $0x348] sm:$0xff]
        %v1147 = vld [vmem:[%s396 + $0x350] sm:$0xff]
        %v1148 = vld [vmem:[%s396 + $0x358] sm:$0xff]
        %v1149 = vld [vmem:[%s396 + $0x360] sm:$0xff]
        %v1150 = vld [vmem:[%s396 + $0x368] sm:$0xff]
        %v1151 = vld [vmem:[%s396 + $0x370] sm:$0xff]
        %v1152 = vld [vmem:[%s396 + $0x378] sm:$0xff]
        %v1153 = vld [vmem:[%s396 + $0x380] sm:$0xff]
        %v1154 = vld [vmem:[%s396 + $0x388] sm:$0xff]
        %v1155 = vld [vmem:[%s396 + $0x390] sm:$0xff]
        %v1156 = vld [vmem:[%s396 + $0x398] sm:$0xff]
        %v1157 = vld [vmem:[%s396 + $0x3a0] sm:$0xff]
        %v1158 = vld [vmem:[%s396 + $0x3a8] sm:$0xff]
        %v1159 = vld [vmem:[%s396 + $0x3b0] sm:$0xff]
        %v1160 = vld [vmem:[%s396 + $0x3b8] sm:$0xff]
        %v1161 = vld [vmem:[%s396 + $0x3c0] sm:$0xff]
        %v1162 = vld [vmem:[%s396 + $0x3c8] sm:$0xff]
        %v1163 = vld [vmem:[%s396 + $0x3d0] sm:$0xff]
        %v1164 = vld [vmem:[%s396 + $0x3d8] sm:$0xff]
        %v1165 = vld [vmem:[%s396 + $0x3e0] sm:$0xff]
        %v1166 = vld [vmem:[%s396 + $0x3e8] sm:$0xff]
        %v1167 = vld [vmem:[%s396 + $0x3f0] sm:$0xff]
        %v1168 = vld [vmem:[%s396 + $0x3f8] sm:$0xff]
        %v1169 = vld [vmem:[%s396 + $0x400] sm:$0xff]
        %v1170 = vld [vmem:[%s396 + $0x408] sm:$0xff]
        %v1171 = vld [vmem:[%s396 + $0x410] sm:$0xff]
        %v1172 = vld [vmem:[%s396 + $0x418] sm:$0xff]
        %v1173 = vld [vmem:[%s396 + $0x420] sm:$0xff]
        %v1174 = vld [vmem:[%s396 + $0x428] sm:$0xff]
        %v1175 = vld [vmem:[%s396 + $0x430] sm:$0xff]
        %v1176 = vld [vmem:[%s396 + $0x438] sm:$0xff]
        %v1177 = vld [vmem:[%s396 + $0x440] sm:$0xff]
        %v1178 = vld [vmem:[%s396 + $0x448] sm:$0xff]
        %v1179 = vld [vmem:[%s396 + $0x450] sm:$0xff]
        %v1180 = vld [vmem:[%s396 + $0x458] sm:$0xff]
        %v1181 = vld [vmem:[%s396 + $0x460] sm:$0xff]
        %v1182 = vld [vmem:[%s396 + $0x468] sm:$0xff]
        %v1183 = vld [vmem:[%s396 + $0x470] sm:$0xff]
        %v1184 = vld [vmem:[%s396 + $0x478] sm:$0xff]
        %v1185 = vld [vmem:[%s396 + $0x480] sm:$0xff]
        %v1186 = vld [vmem:[%s396 + $0x488] sm:$0xff]
        %v1187 = vld [vmem:[%s396 + $0x490] sm:$0xff]
        %v1188 = vld [vmem:[%s396 + $0x498] sm:$0xff]
        %v1189 = vld [vmem:[%s396 + $0x4a0] sm:$0xff]
        %v1190 = vld [vmem:[%s396 + $0x4a8] sm:$0xff]
        %v1191 = vld [vmem:[%s396 + $0x4b0] sm:$0xff]
        %v1192 = vld [vmem:[%s396 + $0x4b8] sm:$0xff]
        %v1193 = vld [vmem:[%s396 + $0x4c0] sm:$0xff]
        %v1194 = vld [vmem:[%s396 + $0x4c8] sm:$0xff]
        %v1195 = vld [vmem:[%s396 + $0x4d0] sm:$0xff]
        %v1196 = vld [vmem:[%s396 + $0x4d8] sm:$0xff]
        %v1197 = vld [vmem:[%s396 + $0x4e0] sm:$0xff]
        %v1198 = vld [vmem:[%s396 + $0x4e8] sm:$0xff]
        %v1199 = vld [vmem:[%s396 + $0x4f0] sm:$0xff]
        %v1200 = vld [vmem:[%s396 + $0x4f8] sm:$0xff]
        %v1201 = vld [vmem:[%s396 + $0x500] sm:$0xff]
        %v1202 = vld [vmem:[%s396 + $0x508] sm:$0xff]
        %v1203 = vld [vmem:[%s396 + $0x510] sm:$0xff]
        %v1204 = vld [vmem:[%s396 + $0x518] sm:$0xff]
        %v1205 = vld [vmem:[%s396 + $0x520] sm:$0xff]
        %v1206 = vld [vmem:[%s396 + $0x528] sm:$0xff]
        %v1207 = vld [vmem:[%s396 + $0x530] sm:$0xff]
        %v1208 = vld [vmem:[%s396 + $0x538] sm:$0xff]
        %v1209 = vld [vmem:[%s396 + $0x540] sm:$0xff]
        %v1210 = vld [vmem:[%s396 + $0x548] sm:$0xff]
        %v1211 = vld [vmem:[%s396 + $0x550] sm:$0xff]
        %v1212 = vld [vmem:[%s396 + $0x558] sm:$0xff]
        %v1213 = vld [vmem:[%s396 + $0x560] sm:$0xff]
        %v1214 = vld [vmem:[%s396 + $0x568] sm:$0xff]
        %v1215 = vld [vmem:[%s396 + $0x570] sm:$0xff]
        %v1216 = vld [vmem:[%s396 + $0x578] sm:$0xff]
        %v1217 = vld [vmem:[%s396 + $0x580] sm:$0xff]
        %v1218 = vld [vmem:[%s396 + $0x588] sm:$0xff]
        %v1219 = vld [vmem:[%s396 + $0x590] sm:$0xff]
        %v1220 = vld [vmem:[%s396 + $0x598] sm:$0xff]
        %v1221 = vld [vmem:[%s396 + $0x5a0] sm:$0xff]
        %v1222 = vld [vmem:[%s396 + $0x5a8] sm:$0xff]
        %v1223 = vld [vmem:[%s396 + $0x5b0] sm:$0xff]
        %v1224 = vld [vmem:[%s396 + $0x5b8] sm:$0xff]
        %v1225 = vld [vmem:[%s396 + $0x5c0] sm:$0xff]
        %v1226 = vld [vmem:[%s396 + $0x5c8] sm:$0xff]
        %v1227 = vld [vmem:[%s396 + $0x5d0] sm:$0xff]
        %v1228 = vld [vmem:[%s396 + $0x5d8] sm:$0xff]
        %v1229 = vld [vmem:[%s396 + $0x5e0] sm:$0xff]
        %v1230 = vld [vmem:[%s396 + $0x5e8] sm:$0xff]
        %v1231 = vld [vmem:[%s396 + $0x5f0] sm:$0xff]
        %v1232 = vld [vmem:[%s396 + $0x5f8] sm:$0xff]
        %v1233 = vld [vmem:[%s396 + $0x600] sm:$0xff]
        %v1234 = vld [vmem:[%s396 + $0x608] sm:$0xff]
        %v1235 = vld [vmem:[%s396 + $0x610] sm:$0xff]
        %v1236 = vld [vmem:[%s396 + $0x618] sm:$0xff]
        %v1237 = vld [vmem:[%s396 + $0x620] sm:$0xff]
        %v1238 = vld [vmem:[%s396 + $0x628] sm:$0xff]
        %v1239 = vld [vmem:[%s396 + $0x630] sm:$0xff]
        %v1240 = vld [vmem:[%s396 + $0x638] sm:$0xff]
        %v1241 = vld [vmem:[%s396 + $0x640] sm:$0xff]
        %v1242 = vld [vmem:[%s396 + $0x648] sm:$0xff]
        %v1243 = vld [vmem:[%s396 + $0x650] sm:$0xff]
        %v1244 = vld [vmem:[%s396 + $0x658] sm:$0xff]
        %v1245 = vld [vmem:[%s396 + $0x660] sm:$0xff]
        %v1246 = vld [vmem:[%s396 + $0x668] sm:$0xff]
        %v1247 = vld [vmem:[%s396 + $0x670] sm:$0xff]
        %v1248 = vld [vmem:[%s396 + $0x678] sm:$0xff]
        %v1249 = vld [vmem:[%s396 + $0x680] sm:$0xff]
        %v1250 = vld [vmem:[%s396 + $0x688] sm:$0xff]
        %v1251 = vld [vmem:[%s396 + $0x690] sm:$0xff]
        %v1252 = vld [vmem:[%s396 + $0x698] sm:$0xff]
        %v1253 = vld [vmem:[%s396 + $0x6a0] sm:$0xff]
        %v1254 = vld [vmem:[%s396 + $0x6a8] sm:$0xff]
        %v1255 = vld [vmem:[%s396 + $0x6b0] sm:$0xff]
        %v1256 = vld [vmem:[%s396 + $0x6b8] sm:$0xff]
        %v1257 = vld [vmem:[%s396 + $0x6c0] sm:$0xff]
        %v1258 = vld [vmem:[%s396 + $0x6c8] sm:$0xff]
        %v1259 = vld [vmem:[%s396 + $0x6d0] sm:$0xff]
        %v1260 = vld [vmem:[%s396 + $0x6d8] sm:$0xff]
        %v1261 = vld [vmem:[%s396 + $0x6e0] sm:$0xff]
        %v1262 = vld [vmem:[%s396 + $0x6e8] sm:$0xff]
        %v1263 = vld [vmem:[%s396 + $0x6f0] sm:$0xff]
        %v1264 = vld [vmem:[%s396 + $0x6f8] sm:$0xff]
        %v1265 = vld [vmem:[%s396 + $0x700] sm:$0xff]
        %v1266 = vld [vmem:[%s396 + $0x708] sm:$0xff]
        %v1267 = vld [vmem:[%s396 + $0x710] sm:$0xff]
        %v1268 = vld [vmem:[%s396 + $0x718] sm:$0xff]
        %v1269 = vld [vmem:[%s396 + $0x720] sm:$0xff]
        %v1270 = vld [vmem:[%s396 + $0x728] sm:$0xff]
        %v1271 = vld [vmem:[%s396 + $0x730] sm:$0xff]
        %v1272 = vld [vmem:[%s396 + $0x738] sm:$0xff]
        %v1273 = vld [vmem:[%s396 + $0x740] sm:$0xff]
        %v1274 = vld [vmem:[%s396 + $0x748] sm:$0xff]
        %v1275 = vld [vmem:[%s396 + $0x750] sm:$0xff]
        %v1276 = vld [vmem:[%s396 + $0x758] sm:$0xff]
        %v1277 = vld [vmem:[%s396 + $0x760] sm:$0xff]
        %v1278 = vld [vmem:[%s396 + $0x768] sm:$0xff]
        %v1279 = vld [vmem:[%s396 + $0x770] sm:$0xff]
        %v1280 = vld [vmem:[%s396 + $0x778] sm:$0xff]
        %v1281 = vld [vmem:[%s396 + $0x780] sm:$0xff]
        %v1282 = vld [vmem:[%s396 + $0x788] sm:$0xff]
        %v1283 = vld [vmem:[%s396 + $0x790] sm:$0xff]
        %v1284 = vld [vmem:[%s396 + $0x798] sm:$0xff]
        %v1285 = vld [vmem:[%s396 + $0x7a0] sm:$0xff]
        %v1286 = vld [vmem:[%s396 + $0x7a8] sm:$0xff]
        %v1287 = vld [vmem:[%s396 + $0x7b0] sm:$0xff]
        %v1288 = vld [vmem:[%s396 + $0x7b8] sm:$0xff]
        %v1289 = vld [vmem:[%s396 + $0x7c0] sm:$0xff]
        %v1290 = vld [vmem:[%s396 + $0x7c8] sm:$0xff]
        %v1291 = vld [vmem:[%s396 + $0x7d0] sm:$0xff]
        %v1292 = vld [vmem:[%s396 + $0x7d8] sm:$0xff]
        %v1293 = vld [vmem:[%s396 + $0x7e0] sm:$0xff]
        %v1294 = vld [vmem:[%s396 + $0x7e8] sm:$0xff]
        %v1295 = vld [vmem:[%s396 + $0x7f0] sm:$0xff]
        %v1296 = vld [vmem:[%s396 + $0x7f8] sm:$0xff]
        %v1297 = vld [vmem:[%s396 + $0x800] sm:$0xff]
        %v1298 = vld [vmem:[%s396 + $0x808] sm:$0xff]
        %v1299 = vld [vmem:[%s396 + $0x810] sm:$0xff]
        %v1300 = vld [vmem:[%s396 + $0x818] sm:$0xff]
        %v1301 = vld [vmem:[%s396 + $0x820] sm:$0xff]
        %v1302 = vld [vmem:[%s396 + $0x828] sm:$0xff]
        %v1303 = vld [vmem:[%s396 + $0x830] sm:$0xff]
        %v1304 = vld [vmem:[%s396 + $0x838] sm:$0xff]
        %v1305 = vld [vmem:[%s396 + $0x840] sm:$0xff]
        %v1306 = vld [vmem:[%s396 + $0x848] sm:$0xff]
        %v1307 = vld [vmem:[%s396 + $0x850] sm:$0xff]
        %v1308 = vld [vmem:[%s396 + $0x858] sm:$0xff]
        %v1309 = vld [vmem:[%s396 + $0x860] sm:$0xff]
        %v1310 = vld [vmem:[%s396 + $0x868] sm:$0xff]
        %v1311 = vld [vmem:[%s396 + $0x870] sm:$0xff]
        %v1312 = vld [vmem:[%s396 + $0x878] sm:$0xff]
        %v1313 = vld [vmem:[%s396 + $0x880] sm:$0xff]
        %v1314 = vld [vmem:[%s396 + $0x888] sm:$0xff]
        %v1315 = vld [vmem:[%s396 + $0x890] sm:$0xff]
        %v1316 = vld [vmem:[%s396 + $0x898] sm:$0xff]
        %v1317 = vld [vmem:[%s396 + $0x8a0] sm:$0xff]
        %v1318 = vld [vmem:[%s396 + $0x8a8] sm:$0xff]
        %v1319 = vld [vmem:[%s396 + $0x8b0] sm:$0xff]
        %v1320 = vld [vmem:[%s396 + $0x8b8] sm:$0xff]
        %v1321 = vld [vmem:[%s396 + $0x8c0] sm:$0xff]
        %v1322 = vld [vmem:[%s396 + $0x8c8] sm:$0xff]
        %v1323 = vld [vmem:[%s396 + $0x8d0] sm:$0xff]
        %v1324 = vld [vmem:[%s396 + $0x8d8] sm:$0xff]
        %v1325 = vld [vmem:[%s396 + $0x8e0] sm:$0xff]
        %v1326 = vld [vmem:[%s396 + $0x8e8] sm:$0xff]
        %v1327 = vld [vmem:[%s396 + $0x8f0] sm:$0xff]
        %v1328 = vld [vmem:[%s396 + $0x8f8] sm:$0xff]
        %v1329 = vld [vmem:[%s396 + $0x900] sm:$0xff]
        %v1330 = vld [vmem:[%s396 + $0x908] sm:$0xff]
        %v1331 = vld [vmem:[%s396 + $0x910] sm:$0xff]
        %v1332 = vld [vmem:[%s396 + $0x918] sm:$0xff]
        %v1333 = vld [vmem:[%s396 + $0x920] sm:$0xff]
        %v1334 = vld [vmem:[%s396 + $0x928] sm:$0xff]
        %v1335 = vld [vmem:[%s396 + $0x930] sm:$0xff]
        %v1336 = vld [vmem:[%s396 + $0x938] sm:$0xff]
        %v1337 = vld [vmem:[%s396 + $0x940] sm:$0xff]
        %v1338 = vld [vmem:[%s396 + $0x948] sm:$0xff]
        %v1339 = vld [vmem:[%s396 + $0x950] sm:$0xff]
        %v1340 = vld [vmem:[%s396 + $0x958] sm:$0xff]
        %v1341 = vld [vmem:[%s396 + $0x960] sm:$0xff]
        %v1342 = vld [vmem:[%s396 + $0x968] sm:$0xff]
        %v1343 = vld [vmem:[%s396 + $0x970] sm:$0xff]
        %v1344 = vld [vmem:[%s396 + $0x978] sm:$0xff]
        %v1345 = vld [vmem:[%s396 + $0x980] sm:$0xff]
        %v1346 = vld [vmem:[%s396 + $0x988] sm:$0xff]
        %v1347 = vld [vmem:[%s396 + $0x990] sm:$0xff]
        %v1348 = vld [vmem:[%s396 + $0x998] sm:$0xff]
        %v1349 = vld [vmem:[%s396 + $0x9a0] sm:$0xff]
        %v1350 = vld [vmem:[%s396 + $0x9a8] sm:$0xff]
        %v1351 = vld [vmem:[%s396 + $0x9b0] sm:$0xff]
        %v1352 = vld [vmem:[%s396 + $0x9b8] sm:$0xff]
        %v1353 = vld [vmem:[%s396 + $0x9c0] sm:$0xff]
        %v1354 = vld [vmem:[%s396 + $0x9c8] sm:$0xff]
        %v1355 = vld [vmem:[%s396 + $0x9d0] sm:$0xff]
        %v1356 = vld [vmem:[%s396 + $0x9d8] sm:$0xff]
        %v1357 = vld [vmem:[%s396 + $0x9e0] sm:$0xff]
        %v1358 = vld [vmem:[%s396 + $0x9e8] sm:$0xff]
        %v1359 = vld [vmem:[%s396 + $0x9f0] sm:$0xff]
        %v1360 = vld [vmem:[%s396 + $0x9f8] sm:$0xff]
        %v1361 = vld [vmem:[%s396 + $0xa00] sm:$0xff]
        %v1362 = vld [vmem:[%s396 + $0xa08] sm:$0xff]
        %v1363 = vld [vmem:[%s396 + $0xa10] sm:$0xff]
        %v1364 = vld [vmem:[%s396 + $0xa18] sm:$0xff]
        %v1365 = vld [vmem:[%s396 + $0xa20] sm:$0xff]
        %v1366 = vld [vmem:[%s396 + $0xa28] sm:$0xff]
        %v1367 = vld [vmem:[%s396 + $0xa30] sm:$0xff]
        %v1368 = vld [vmem:[%s396 + $0xa38] sm:$0xff]
        %v1369 = vld [vmem:[%s396 + $0xa40] sm:$0xff]
        %v1370 = vld [vmem:[%s396 + $0xa48] sm:$0xff]
        %v1371 = vld [vmem:[%s396 + $0xa50] sm:$0xff]
        %v1372 = vld [vmem:[%s396 + $0xa58] sm:$0xff]
        %v1373 = vld [vmem:[%s396 + $0xa60] sm:$0xff]
        %v1374 = vld [vmem:[%s396 + $0xa68] sm:$0xff]
        %v1375 = vld [vmem:[%s396 + $0xa70] sm:$0xff]
        %v1376 = vld [vmem:[%s396 + $0xa78] sm:$0xff]
        %v1377 = vld [vmem:[%s396 + $0xa80] sm:$0xff]
        %v1378 = vld [vmem:[%s396 + $0xa88] sm:$0xff]
        %v1379 = vld [vmem:[%s396 + $0xa90] sm:$0xff]
        %v1380 = vld [vmem:[%s396 + $0xa98] sm:$0xff]
        %v1381 = vld [vmem:[%s396 + $0xaa0] sm:$0xff]
        %v1382 = vld [vmem:[%s396 + $0xaa8] sm:$0xff]
        %v1383 = vld [vmem:[%s396 + $0xab0] sm:$0xff]
        %v1384 = vld [vmem:[%s396 + $0xab8] sm:$0xff]
        %v1385 = vld [vmem:[%s396 + $0xac0] sm:$0xff]
        %v1386 = vld [vmem:[%s396 + $0xac8] sm:$0xff]
        %v1387 = vld [vmem:[%s396 + $0xad0] sm:$0xff]
        %v1388 = vld [vmem:[%s396 + $0xad8] sm:$0xff]
        %v1389 = vld [vmem:[%s396 + $0xae0] sm:$0xff]
        %v1390 = vld [vmem:[%s396 + $0xae8] sm:$0xff]
        %v1391 = vld [vmem:[%s396 + $0xaf0] sm:$0xff]
        %v1392 = vld [vmem:[%s396 + $0xaf8] sm:$0xff]
        %v1393 = vld [vmem:[%s396 + $0xb00] sm:$0xff]
        %v1394 = vld [vmem:[%s396 + $0xb08] sm:$0xff]
        %v1395 = vld [vmem:[%s396 + $0xb10] sm:$0xff]
        %v1396 = vld [vmem:[%s396 + $0xb18] sm:$0xff]
        %v1397 = vld [vmem:[%s396 + $0xb20] sm:$0xff]
        %v1398 = vld [vmem:[%s396 + $0xb28] sm:$0xff]
        %v1399 = vld [vmem:[%s396 + $0xb30] sm:$0xff]
        %v1400 = vld [vmem:[%s396 + $0xb38] sm:$0xff]
        %v1401 = vld [vmem:[%s396 + $0xb40] sm:$0xff]
        %v1402 = vld [vmem:[%s396 + $0xb48] sm:$0xff]
        %v1403 = vld [vmem:[%s396 + $0xb50] sm:$0xff]
        %v1404 = vld [vmem:[%s396 + $0xb58] sm:$0xff]
        %v1405 = vld [vmem:[%s396 + $0xb60] sm:$0xff]
        %v1406 = vld [vmem:[%s396 + $0xb68] sm:$0xff]
        %v1407 = vld [vmem:[%s396 + $0xb70] sm:$0xff]
        %v1408 = vld [vmem:[%s396 + $0xb78] sm:$0xff]
        %v1409 = vld [vmem:[%s396 + $0xb80] sm:$0xff]
        %v1410 = vld [vmem:[%s396 + $0xb88] sm:$0xff]
        %v1411 = vld [vmem:[%s396 + $0xb90] sm:$0xff]
        %v1412 = vld [vmem:[%s396 + $0xb98] sm:$0xff]
        %v1413 = vld [vmem:[%s396 + $0xba0] sm:$0xff]
        %v1414 = vld [vmem:[%s396 + $0xba8] sm:$0xff]
        %v1415 = vld [vmem:[%s396 + $0xbb0] sm:$0xff]
        %v1416 = vld [vmem:[%s396 + $0xbb8] sm:$0xff]
        %v1417 = vld [vmem:[%s396 + $0xbc0] sm:$0xff]
        %v1418 = vld [vmem:[%s396 + $0xbc8] sm:$0xff]
        %v1419 = vld [vmem:[%s396 + $0xbd0] sm:$0xff]
        %v1420 = vld [vmem:[%s396 + $0xbd8] sm:$0xff]
        %v1421 = vld [vmem:[%s396 + $0xbe0] sm:$0xff]
        %v1422 = vld [vmem:[%s396 + $0xbe8] sm:$0xff]
        %v1423 = vld [vmem:[%s396 + $0xbf0] sm:$0xff]
        %v1424 = vld [vmem:[%s396 + $0xbf8] sm:$0xff]
        %v1425 = vld [vmem:[%s396 + $0xc00] sm:$0xff]
        %v1426 = vld [vmem:[%s396 + $0xc08] sm:$0xff]
        %v1427 = vld [vmem:[%s396 + $0xc10] sm:$0xff]
        %v1428 = vld [vmem:[%s396 + $0xc18] sm:$0xff]
        %v1429 = vld [vmem:[%s396 + $0xc20] sm:$0xff]
        %v1430 = vld [vmem:[%s396 + $0xc28] sm:$0xff]
        %v1431 = vld [vmem:[%s396 + $0xc30] sm:$0xff]
        %v1432 = vld [vmem:[%s396 + $0xc38] sm:$0xff]
        %v1433 = vld [vmem:[%s396 + $0xc40] sm:$0xff]
        %v1434 = vld [vmem:[%s396 + $0xc48] sm:$0xff]
        %v1435 = vld [vmem:[%s396 + $0xc50] sm:$0xff]
        %v1436 = vld [vmem:[%s396 + $0xc58] sm:$0xff]
        %v1437 = vld [vmem:[%s396 + $0xc60] sm:$0xff]
        %v1438 = vld [vmem:[%s396 + $0xc68] sm:$0xff]
        %v1439 = vld [vmem:[%s396 + $0xc70] sm:$0xff]
        %v1440 = vld [vmem:[%s396 + $0xc78] sm:$0xff]
        %v1441 = vld [vmem:[%s396 + $0xc80] sm:$0xff]
        %v1442 = vld [vmem:[%s396 + $0xc88] sm:$0xff]
        %v1443 = vld [vmem:[%s396 + $0xc90] sm:$0xff]
        %v1444 = vld [vmem:[%s396 + $0xc98] sm:$0xff]
        %v1445 = vld [vmem:[%s396 + $0xca0] sm:$0xff]
        %v1446 = vld [vmem:[%s396 + $0xca8] sm:$0xff]
        %v1447 = vld [vmem:[%s396 + $0xcb0] sm:$0xff]
        %v1448 = vld [vmem:[%s396 + $0xcb8] sm:$0xff]
        %v1449 = vld [vmem:[%s396 + $0xcc0] sm:$0xff]
        %v1450 = vld [vmem:[%s396 + $0xcc8] sm:$0xff]
        %v1451 = vld [vmem:[%s396 + $0xcd0] sm:$0xff]
        %v1452 = vld [vmem:[%s396 + $0xcd8] sm:$0xff]
        %v1453 = vld [vmem:[%s396 + $0xce0] sm:$0xff]
        %v1454 = vld [vmem:[%s396 + $0xce8] sm:$0xff]
        %v1455 = vld [vmem:[%s396 + $0xcf0] sm:$0xff]
        %v1456 = vld [vmem:[%s396 + $0xcf8] sm:$0xff]
        %v1457 = vld [vmem:[%s396 + $0xd00] sm:$0xff]
        %v1458 = vld [vmem:[%s396 + $0xd08] sm:$0xff]
        %v1459 = vld [vmem:[%s396 + $0xd10] sm:$0xff]
        %v1460 = vld [vmem:[%s396 + $0xd18] sm:$0xff]
        %v1461 = vld [vmem:[%s396 + $0xd20] sm:$0xff]
        %v1462 = vld [vmem:[%s396 + $0xd28] sm:$0xff]
        %v1463 = vld [vmem:[%s396 + $0xd30] sm:$0xff]
        %v1464 = vld [vmem:[%s396 + $0xd38] sm:$0xff]
        %v1465 = vld [vmem:[%s396 + $0xd40] sm:$0xff]
        %v1466 = vld [vmem:[%s396 + $0xd48] sm:$0xff]
        %v1467 = vld [vmem:[%s396 + $0xd50] sm:$0xff]
        %v1468 = vld [vmem:[%s396 + $0xd58] sm:$0xff]
        %v1469 = vld [vmem:[%s396 + $0xd60] sm:$0xff]
        %v1470 = vld [vmem:[%s396 + $0xd68] sm:$0xff]
        %v1471 = vld [vmem:[%s396 + $0xd70] sm:$0xff]
        %v1472 = vld [vmem:[%s396 + $0xd78] sm:$0xff]
        %v1473 = vld [vmem:[%s396 + $0xd80] sm:$0xff]
        %v1474 = vld [vmem:[%s396 + $0xd88] sm:$0xff]
        %v1475 = vld [vmem:[%s396 + $0xd90] sm:$0xff]
        %v1476 = vld [vmem:[%s396 + $0xd98] sm:$0xff]
        %v1477 = vld [vmem:[%s396 + $0xda0] sm:$0xff]
        %v1478 = vld [vmem:[%s396 + $0xda8] sm:$0xff]
        %v1479 = vld [vmem:[%s396 + $0xdb0] sm:$0xff]
        %v1480 = vld [vmem:[%s396 + $0xdb8] sm:$0xff]
        %v1481 = vld [vmem:[%s396 + $0xdc0] sm:$0xff]
        %v1482 = vld [vmem:[%s396 + $0xdc8] sm:$0xff]
        %v1483 = vld [vmem:[%s396 + $0xdd0] sm:$0xff]
        %v1484 = vld [vmem:[%s396 + $0xdd8] sm:$0xff]
        %v1485 = vld [vmem:[%s396 + $0xde0] sm:$0xff]
        %v1486 = vld [vmem:[%s396 + $0xde8] sm:$0xff]
        %v1487 = vld [vmem:[%s396 + $0xdf0] sm:$0xff]
        %v1488 = vld [vmem:[%s396 + $0xdf8] sm:$0xff]
        %v1489 = vld [vmem:[%s396 + $0xe00] sm:$0xff]
        %v1490 = vld [vmem:[%s396 + $0xe08] sm:$0xff]
        %v1491 = vld [vmem:[%s396 + $0xe10] sm:$0xff]
        %v1492 = vld [vmem:[%s396 + $0xe18] sm:$0xff]
        %v1493 = vld [vmem:[%s396 + $0xe20] sm:$0xff]
        %v1494 = vld [vmem:[%s396 + $0xe28] sm:$0xff]
        %v1495 = vld [vmem:[%s396 + $0xe30] sm:$0xff]
        %v1496 = vld [vmem:[%s396 + $0xe38] sm:$0xff]
        %v1497 = vld [vmem:[%s396 + $0xe40] sm:$0xff]
        %v1498 = vld [vmem:[%s396 + $0xe48] sm:$0xff]
        %v1499 = vld [vmem:[%s396 + $0xe50] sm:$0xff]
        %v1500 = vld [vmem:[%s396 + $0xe58] sm:$0xff]
        %v1501 = vld [vmem:[%s396 + $0xe60] sm:$0xff]
        %v1502 = vld [vmem:[%s396 + $0xe68] sm:$0xff]
        %v1503 = vld [vmem:[%s396 + $0xe70] sm:$0xff]
        %v1504 = vld [vmem:[%s396 + $0xe78] sm:$0xff]
        %v1505 = vld [vmem:[%s396 + $0xe80] sm:$0xff]
        %v1506 = vld [vmem:[%s396 + $0xe88] sm:$0xff]
        %v1507 = vld [vmem:[%s396 + $0xe90] sm:$0xff]
        %v1508 = vld [vmem:[%s396 + $0xe98] sm:$0xff]
        %v1509 = vld [vmem:[%s396 + $0xea0] sm:$0xff]
        %v1510 = vld [vmem:[%s396 + $0xea8] sm:$0xff]
        %v1511 = vld [vmem:[%s396 + $0xeb0] sm:$0xff]
        %v1512 = vld [vmem:[%s396 + $0xeb8] sm:$0xff]
        %v1513 = vld [vmem:[%s396 + $0xec0] sm:$0xff]
        %v1514 = vld [vmem:[%s396 + $0xec8] sm:$0xff]
        %v1515 = vld [vmem:[%s396 + $0xed0] sm:$0xff]
        %v1516 = vld [vmem:[%s396 + $0xed8] sm:$0xff]
        %v1517 = vld [vmem:[%s396 + $0xee0] sm:$0xff]
        %v1518 = vld [vmem:[%s396 + $0xee8] sm:$0xff]
        %v1519 = vld [vmem:[%s396 + $0xef0] sm:$0xff]
        %v1520 = vld [vmem:[%s396 + $0xef8] sm:$0xff]
        %v1521 = vld [vmem:[%s396 + $0xf00] sm:$0xff]
        %v1522 = vld [vmem:[%s396 + $0xf08] sm:$0xff]
        %v1523 = vld [vmem:[%s396 + $0xf10] sm:$0xff]
        %v1524 = vld [vmem:[%s396 + $0xf18] sm:$0xff]
        %v1525 = vld [vmem:[%s396 + $0xf20] sm:$0xff]
        %v1526 = vld [vmem:[%s396 + $0xf28] sm:$0xff]
        %v1527 = vld [vmem:[%s396 + $0xf30] sm:$0xff]
        %v1528 = vld [vmem:[%s396 + $0xf38] sm:$0xff]
        %v1529 = vld [vmem:[%s396 + $0xf40] sm:$0xff]
        %v1530 = vld [vmem:[%s396 + $0xf48] sm:$0xff]
        %v1531 = vld [vmem:[%s396 + $0xf50] sm:$0xff]
        %v1532 = vld [vmem:[%s396 + $0xf58] sm:$0xff]
        %v1533 = vld [vmem:[%s396 + $0xf60] sm:$0xff]
        %v1534 = vld [vmem:[%s396 + $0xf68] sm:$0xff]
        %v1535 = vld [vmem:[%s396 + $0xf70] sm:$0xff]
        %v1536 = vld [vmem:[%s396 + $0xf78] sm:$0xff]
        %v1537 = vld [vmem:[%s396 + $0xf80] sm:$0xff]
        %v1538 = vld [vmem:[%s396 + $0xf88] sm:$0xff]
        %v1539 = vld [vmem:[%s396 + $0xf90] sm:$0xff]
        %v1540 = vld [vmem:[%s396 + $0xf98] sm:$0xff]
        %v1541 = vld [vmem:[%s396 + $0xfa0] sm:$0xff]
        %v1542 = vld [vmem:[%s396 + $0xfa8] sm:$0xff]
        %v1543 = vld [vmem:[%s396 + $0xfb0] sm:$0xff]
        %v1544 = vld [vmem:[%s396 + $0xfb8] sm:$0xff]
        %v1545 = vld [vmem:[%s396 + $0xfc0] sm:$0xff]
        %v1546 = vld [vmem:[%s396 + $0xfc8] sm:$0xff]
        %v1547 = vld [vmem:[%s396 + $0xfd0] sm:$0xff]
        %v1548 = vld [vmem:[%s396 + $0xfd8] sm:$0xff]
        %v1549 = vld [vmem:[%s396 + $0xfe0] sm:$0xff]
        %v1550 = vld [vmem:[%s396 + $0xfe8] sm:$0xff]
        %v1551 = vld [vmem:[%s396 + $0xff0] sm:$0xff]
        %v1552 = vld [vmem:[%s396 + $0xff8] sm:$0xff]
        %v1553 = vld [vmem:[%s396 + $0x1000] sm:$0xff]
        %v1554 = vld [vmem:[%s396 + $0x1008] sm:$0xff]
        %v1555 = vld [vmem:[%s396 + $0x1010] sm:$0xff]
        %v1556 = vld [vmem:[%s396 + $0x1018] sm:$0xff]
        %v1557 = vld [vmem:[%s396 + $0x1020] sm:$0xff]
        %v1558 = vld [vmem:[%s396 + $0x1028] sm:$0xff]
        %v1559 = vld [vmem:[%s396 + $0x1030] sm:$0xff]
        %v1560 = vld [vmem:[%s396 + $0x1038] sm:$0xff]
        %v1561 = vld [vmem:[%s396 + $0x1040] sm:$0xff]
        %v1562 = vld [vmem:[%s396 + $0x1048] sm:$0xff]
        %v1563 = vld [vmem:[%s396 + $0x1050] sm:$0xff]
        %v1564 = vld [vmem:[%s396 + $0x1058] sm:$0xff]
        %v1565 = vld [vmem:[%s396 + $0x1060] sm:$0xff]
        %v1566 = vld [vmem:[%s396 + $0x1068] sm:$0xff]
        %v1567 = vld [vmem:[%s396 + $0x1070] sm:$0xff]
        %v1568 = vld [vmem:[%s396 + $0x1078] sm:$0xff]
        %v1569 = vld [vmem:[%s396 + $0x1080] sm:$0xff]
        %v1570 = vld [vmem:[%s396 + $0x1088] sm:$0xff]
        %v1571 = vld [vmem:[%s396 + $0x1090] sm:$0xff]
        %v1572 = vld [vmem:[%s396 + $0x1098] sm:$0xff]
        %v1573 = vld [vmem:[%s396 + $0x10a0] sm:$0xff]
        %v1574 = vld [vmem:[%s396 + $0x10a8] sm:$0xff]
        %v1575 = vld [vmem:[%s396 + $0x10b0] sm:$0xff]
        %v1576 = vld [vmem:[%s396 + $0x10b8] sm:$0xff]
        %v1577 = vld [vmem:[%s396 + $0x10c0] sm:$0xff]
        %v1578 = vld [vmem:[%s396 + $0x10c8] sm:$0xff]
        %v1579 = vld [vmem:[%s396 + $0x10d0] sm:$0xff]
        %v1580 = vld [vmem:[%s396 + $0x10d8] sm:$0xff]
        %v1581 = vld [vmem:[%s396 + $0x10e0] sm:$0xff]
        %v1582 = vld [vmem:[%s396 + $0x10e8] sm:$0xff]
        %v1583 = vld [vmem:[%s396 + $0x10f0] sm:$0xff]
        %v1584 = vld [vmem:[%s396 + $0x10f8] sm:$0xff]
        %v1585 = vld [vmem:[%s396 + $0x1100] sm:$0xff]
        %v1586 = vld [vmem:[%s396 + $0x1108] sm:$0xff]
        %v1587 = vld [vmem:[%s396 + $0x1110] sm:$0xff]
        %v1588 = vld [vmem:[%s396 + $0x1118] sm:$0xff]
        %v1589 = vld [vmem:[%s396 + $0x1120] sm:$0xff]
        %v1590 = vld [vmem:[%s396 + $0x1128] sm:$0xff]
        %v1591 = vld [vmem:[%s396 + $0x1130] sm:$0xff]
        %v1592 = vld [vmem:[%s396 + $0x1138] sm:$0xff]
        %v1593 = vld [vmem:[%s396 + $0x1140] sm:$0xff]
        %v1594 = vld [vmem:[%s396 + $0x1148] sm:$0xff]
        %v1595 = vld [vmem:[%s396 + $0x1150] sm:$0xff]
        %v1596 = vld [vmem:[%s396 + $0x1158] sm:$0xff]
        %v1597 = vld [vmem:[%s396 + $0x1160] sm:$0xff]
        %v1598 = vld [vmem:[%s396 + $0x1168] sm:$0xff]
        %v1599 = vld [vmem:[%s396 + $0x1170] sm:$0xff]
        %v1600 = vld [vmem:[%s396 + $0x1178] sm:$0xff]
        %v1601 = vld [vmem:[%s396 + $0x1180] sm:$0xff]
        %v1602 = vld [vmem:[%s396 + $0x1188] sm:$0xff]
        %v1603 = vld [vmem:[%s396 + $0x1190] sm:$0xff]
        %v1604 = vld [vmem:[%s396 + $0x1198] sm:$0xff]
        %v1605 = vld [vmem:[%s396 + $0x11a0] sm:$0xff]
        %v1606 = vld [vmem:[%s396 + $0x11a8] sm:$0xff]
        %v1607 = vld [vmem:[%s396 + $0x11b0] sm:$0xff]
        %v1608 = vld [vmem:[%s396 + $0x11b8] sm:$0xff]
        %v1609 = vld [vmem:[%s396 + $0x11c0] sm:$0xff]
        %v1610 = vld [vmem:[%s396 + $0x11c8] sm:$0xff]
        %v1611 = vld [vmem:[%s396 + $0x11d0] sm:$0xff]
        %v1612 = vld [vmem:[%s396 + $0x11d8] sm:$0xff]
        %v1613 = vld [vmem:[%s396 + $0x11e0] sm:$0xff]
        %v1614 = vld [vmem:[%s396 + $0x11e8] sm:$0xff]
        %v1615 = vld [vmem:[%s396 + $0x11f0] sm:$0xff]
        %v1616 = vld [vmem:[%s396 + $0x11f8] sm:$0xff]
        %v1617 = vld [vmem:[%s396 + $0x1200] sm:$0xff]
        %v1618 = vld [vmem:[%s396 + $0x1208] sm:$0xff]
        %v1619 = vld [vmem:[%s396 + $0x1210] sm:$0xff]
        %v1620 = vld [vmem:[%s396 + $0x1218] sm:$0xff]
        %v1621 = vld [vmem:[%s396 + $0x1220] sm:$0xff]
        %v1622 = vld [vmem:[%s396 + $0x1228] sm:$0xff]
        %v1623 = vld [vmem:[%s396 + $0x1230] sm:$0xff]
        %v1624 = vld [vmem:[%s396 + $0x1238] sm:$0xff]
        %v1625 = vld [vmem:[%s396 + $0x1240] sm:$0xff]
        %v1626 = vld [vmem:[%s396 + $0x1248] sm:$0xff]
        %v1627 = vld [vmem:[%s396 + $0x1250] sm:$0xff]
        %v1628 = vld [vmem:[%s396 + $0x1258] sm:$0xff]
        %v1629 = vld [vmem:[%s396 + $0x1260] sm:$0xff]
        %v1630 = vld [vmem:[%s396 + $0x1268] sm:$0xff]
        %v1631 = vld [vmem:[%s396 + $0x1270] sm:$0xff]
        %v1632 = vld [vmem:[%s396 + $0x1278] sm:$0xff]
        %v1633 = vld [vmem:[%s396 + $0x1280] sm:$0xff]
        %v1634 = vld [vmem:[%s396 + $0x1288] sm:$0xff]
        %v1635 = vld [vmem:[%s396 + $0x1290] sm:$0xff]
        %v1636 = vld [vmem:[%s396 + $0x1298] sm:$0xff]
        %v1637 = vld [vmem:[%s396 + $0x12a0] sm:$0xff]
        %v1638 = vld [vmem:[%s396 + $0x12a8] sm:$0xff]
        %v1639 = vld [vmem:[%s396 + $0x12b0] sm:$0xff]
        %v1640 = vld [vmem:[%s396 + $0x12b8] sm:$0xff]
        %v1641 = vld [vmem:[%s396 + $0x12c0] sm:$0xff]
        %v1642 = vld [vmem:[%s396 + $0x12c8] sm:$0xff]
        %v1643 = vld [vmem:[%s396 + $0x12d0] sm:$0xff]
        %v1644 = vld [vmem:[%s396 + $0x12d8] sm:$0xff]
        %v1645 = vld [vmem:[%s396 + $0x12e0] sm:$0xff]
        %v1646 = vld [vmem:[%s396 + $0x12e8] sm:$0xff]
        %v1647 = vld [vmem:[%s396 + $0x12f0] sm:$0xff]
        %v1648 = vld [vmem:[%s396 + $0x12f8] sm:$0xff]
        %v1649 = vld [vmem:[%s396 + $0x1300] sm:$0xff]
        %v1650 = vld [vmem:[%s396 + $0x1308] sm:$0xff]
        %v1651 = vld [vmem:[%s396 + $0x1310] sm:$0xff]
        %v1652 = vld [vmem:[%s396 + $0x1318] sm:$0xff]
        %v1653 = vld [vmem:[%s396 + $0x1320] sm:$0xff]
        %v1654 = vld [vmem:[%s396 + $0x1328] sm:$0xff]
        %v1655 = vld [vmem:[%s396 + $0x1330] sm:$0xff]
        %v1656 = vld [vmem:[%s396 + $0x1338] sm:$0xff]
        %v1657 = vld [vmem:[%s396 + $0x1340] sm:$0xff]
        %v1658 = vld [vmem:[%s396 + $0x1348] sm:$0xff]
        %v1659 = vld [vmem:[%s396 + $0x1350] sm:$0xff]
        %v1660 = vld [vmem:[%s396 + $0x1358] sm:$0xff]
        %v1661 = vld [vmem:[%s396 + $0x1360] sm:$0xff]
        %v1662 = vld [vmem:[%s396 + $0x1368] sm:$0xff]
        %v1663 = vld [vmem:[%s396 + $0x1370] sm:$0xff]
        %v1664 = vld [vmem:[%s396 + $0x1378] sm:$0xff]
        %v1665 = vld [vmem:[%s396 + $0x1380] sm:$0xff]
        %v1666 = vld [vmem:[%s396 + $0x1388] sm:$0xff]
        %v1667 = vld [vmem:[%s396 + $0x1390] sm:$0xff]
        %v1668 = vld [vmem:[%s396 + $0x1398] sm:$0xff]
        %v1669 = vld [vmem:[%s396 + $0x13a0] sm:$0xff]
        %v1670 = vld [vmem:[%s396 + $0x13a8] sm:$0xff]
        %v1671 = vld [vmem:[%s396 + $0x13b0] sm:$0xff]
        %v1672 = vld [vmem:[%s396 + $0x13b8] sm:$0xff]
        %v1673 = vld [vmem:[%s396 + $0x13c0] sm:$0xff]
        %v1674 = vld [vmem:[%s396 + $0x13c8] sm:$0xff]
        %v1675 = vld [vmem:[%s396 + $0x13d0] sm:$0xff]
        %v1676 = vld [vmem:[%s396 + $0x13d8] sm:$0xff]
        %v1677 = vld [vmem:[%s396 + $0x13e0] sm:$0xff]
        %v1678 = vld [vmem:[%s396 + $0x13e8] sm:$0xff]
        %v1679 = vld [vmem:[%s396 + $0x13f0] sm:$0xff]
        %v1680 = vld [vmem:[%s396 + $0x13f8] sm:$0xff]
        %v1681 = vld [vmem:[%s396 + $0x1400] sm:$0xff]
        %v1682 = vld [vmem:[%s396 + $0x1408] sm:$0xff]
        %v1683 = vld [vmem:[%s396 + $0x1410] sm:$0xff]
        %v1684 = vld [vmem:[%s396 + $0x1418] sm:$0xff]
        %v1685 = vld [vmem:[%s396 + $0x1420] sm:$0xff]
        %v1686 = vld [vmem:[%s396 + $0x1428] sm:$0xff]
        %v1687 = vld [vmem:[%s396 + $0x1430] sm:$0xff]
        %v1688 = vld [vmem:[%s396 + $0x1438] sm:$0xff]
        %v1689 = vld [vmem:[%s396 + $0x1440] sm:$0xff]
        %v1690 = vld [vmem:[%s396 + $0x1448] sm:$0xff]
        %v1691 = vld [vmem:[%s396 + $0x1450] sm:$0xff]
        %v1692 = vld [vmem:[%s396 + $0x1458] sm:$0xff]
        %v1693 = vld [vmem:[%s396 + $0x1460] sm:$0xff]
        %v1694 = vld [vmem:[%s396 + $0x1468] sm:$0xff]
        %v1695 = vld [vmem:[%s396 + $0x1470] sm:$0xff]
        %v1696 = vld [vmem:[%s396 + $0x1478] sm:$0xff]
        %v1697 = vld [vmem:[%s396 + $0x1480] sm:$0xff]
        %v1698 = vld [vmem:[%s396 + $0x1488] sm:$0xff]
        %v1699 = vld [vmem:[%s396 + $0x1490] sm:$0xff]
        %v1700 = vld [vmem:[%s396 + $0x1498] sm:$0xff]
        %v1701 = vld [vmem:[%s396 + $0x14a0] sm:$0xff]
        %v1702 = vld [vmem:[%s396 + $0x14a8] sm:$0xff]
        %v1703 = vld [vmem:[%s396 + $0x14b0] sm:$0xff]
        %v1704 = vld [vmem:[%s396 + $0x14b8] sm:$0xff]
        %v1705 = vld [vmem:[%s396 + $0x14c0] sm:$0xff]
        %v1706 = vld [vmem:[%s396 + $0x14c8] sm:$0xff]
        %v1707 = vld [vmem:[%s396 + $0x14d0] sm:$0xff]
        %v1708 = vld [vmem:[%s396 + $0x14d8] sm:$0xff]
        %v1709 = vld [vmem:[%s396 + $0x14e0] sm:$0xff]
        %v1710 = vld [vmem:[%s396 + $0x14e8] sm:$0xff]
        %v1711 = vld [vmem:[%s396 + $0x14f0] sm:$0xff]
        %v1712 = vld [vmem:[%s396 + $0x14f8] sm:$0xff]
        %v1713 = vld [vmem:[%s396 + $0x1500] sm:$0xff]
        %v1714 = vld [vmem:[%s396 + $0x1508] sm:$0xff]
        %v1715 = vld [vmem:[%s396 + $0x1510] sm:$0xff]
        %v1716 = vld [vmem:[%s396 + $0x1518] sm:$0xff]
        %v1717 = vld [vmem:[%s396 + $0x1520] sm:$0xff]
        %v1718 = vld [vmem:[%s396 + $0x1528] sm:$0xff]
        %v1719 = vld [vmem:[%s396 + $0x1530] sm:$0xff]
        %v1720 = vld [vmem:[%s396 + $0x1538] sm:$0xff]
        %v1721 = vld [vmem:[%s396 + $0x1540] sm:$0xff]
        %v1722 = vld [vmem:[%s396 + $0x1548] sm:$0xff]
        %v1723 = vld [vmem:[%s396 + $0x1550] sm:$0xff]
        %v1724 = vld [vmem:[%s396 + $0x1558] sm:$0xff]
        %v1725 = vld [vmem:[%s396 + $0x1560] sm:$0xff]
        %v1726 = vld [vmem:[%s396 + $0x1568] sm:$0xff]
        %v1727 = vld [vmem:[%s396 + $0x1570] sm:$0xff]
        %v1728 = vld [vmem:[%s396 + $0x1578] sm:$0xff]
        %v1729 = vld [vmem:[%s396 + $0x1580] sm:$0xff]
        %v1730 = vld [vmem:[%s396 + $0x1588] sm:$0xff]
        %v1731 = vld [vmem:[%s396 + $0x1590] sm:$0xff]
        %v1732 = vld [vmem:[%s396 + $0x1598] sm:$0xff]
        %v1733 = vld [vmem:[%s396 + $0x15a0] sm:$0xff]
        %v1734 = vld [vmem:[%s396 + $0x15a8] sm:$0xff]
        %v1735 = vld [vmem:[%s396 + $0x15b0] sm:$0xff]
        %v1736 = vld [vmem:[%s396 + $0x15b8] sm:$0xff]
        %v1737 = vld [vmem:[%s396 + $0x15c0] sm:$0xff]
        %v1738 = vld [vmem:[%s396 + $0x15c8] sm:$0xff]
        %v1739 = vld [vmem:[%s396 + $0x15d0] sm:$0xff]
        %v1740 = vld [vmem:[%s396 + $0x15d8] sm:$0xff]
        %v1741 = vld [vmem:[%s396 + $0x15e0] sm:$0xff]
        %v1742 = vld [vmem:[%s396 + $0x15e8] sm:$0xff]
        %v1743 = vld [vmem:[%s396 + $0x15f0] sm:$0xff]
        %v1744 = vld [vmem:[%s396 + $0x15f8] sm:$0xff]
        %v1745 = vld [vmem:[%s396 + $0x1600] sm:$0xff]
        %v1746 = vld [vmem:[%s396 + $0x1608] sm:$0xff]
        %v1747 = vld [vmem:[%s396 + $0x1610] sm:$0xff]
        %v1748 = vld [vmem:[%s396 + $0x1618] sm:$0xff]
        %v1749 = vld [vmem:[%s396 + $0x1620] sm:$0xff]
        %v1750 = vld [vmem:[%s396 + $0x1628] sm:$0xff]
        %v1751 = vld [vmem:[%s396 + $0x1630] sm:$0xff]
        %v1752 = vld [vmem:[%s396 + $0x1638] sm:$0xff]
        %v1753 = vld [vmem:[%s396 + $0x1640] sm:$0xff]
        %v1754 = vld [vmem:[%s396 + $0x1648] sm:$0xff]
        %v1755 = vld [vmem:[%s396 + $0x1650] sm:$0xff]
        %v1756 = vld [vmem:[%s396 + $0x1658] sm:$0xff]
        %v1757 = vld [vmem:[%s396 + $0x1660] sm:$0xff]
        %v1758 = vld [vmem:[%s396 + $0x1668] sm:$0xff]
        %v1759 = vld [vmem:[%s396 + $0x1670] sm:$0xff]
        %v1760 = vld [vmem:[%s396 + $0x1678] sm:$0xff]
        %v1761 = vld [vmem:[%s396 + $0x1680] sm:$0xff]
        %v1762 = vld [vmem:[%s396 + $0x1688] sm:$0xff]
        %v1763 = vld [vmem:[%s396 + $0x1690] sm:$0xff]
        %v1764 = vld [vmem:[%s396 + $0x1698] sm:$0xff]
        %v1765 = vld [vmem:[%s396 + $0x16a0] sm:$0xff]
        %v1766 = vld [vmem:[%s396 + $0x16a8] sm:$0xff]
        %v1767 = vld [vmem:[%s396 + $0x16b0] sm:$0xff]
        %v1768 = vld [vmem:[%s396 + $0x16b8] sm:$0xff]
        %v1769 = vld [vmem:[%s396 + $0x16c0] sm:$0xff]
        %v1770 = vld [vmem:[%s396 + $0x16c8] sm:$0xff]
        %v1771 = vld [vmem:[%s396 + $0x16d0] sm:$0xff]
        %v1772 = vld [vmem:[%s396 + $0x16d8] sm:$0xff]
        %v1773 = vld [vmem:[%s396 + $0x16e0] sm:$0xff]
        %v1774 = vld [vmem:[%s396 + $0x16e8] sm:$0xff]
        %v1775 = vld [vmem:[%s396 + $0x16f0] sm:$0xff]
        %v1776 = vld [vmem:[%s396 + $0x16f8] sm:$0xff]
        %v1777 = vld [vmem:[%s396 + $0x1700] sm:$0xff]
        %v1778 = vld [vmem:[%s396 + $0x1708] sm:$0xff]
        %v1779 = vld [vmem:[%s396 + $0x1710] sm:$0xff]
        %v1780 = vld [vmem:[%s396 + $0x1718] sm:$0xff]
        %v1781 = vld [vmem:[%s396 + $0x1720] sm:$0xff]
        %v1782 = vld [vmem:[%s396 + $0x1728] sm:$0xff]
        %v1783 = vld [vmem:[%s396 + $0x1730] sm:$0xff]
        %v1784 = vld [vmem:[%s396 + $0x1738] sm:$0xff]
        %v1785 = vld [vmem:[%s396 + $0x1740] sm:$0xff]
        %v1786 = vld [vmem:[%s396 + $0x1748] sm:$0xff]
        %v1787 = vld [vmem:[%s396 + $0x1750] sm:$0xff]
        %v1788 = vld [vmem:[%s396 + $0x1758] sm:$0xff]
        %v1789 = vld [vmem:[%s396 + $0x1760] sm:$0xff]
        %v1790 = vld [vmem:[%s396 + $0x1768] sm:$0xff]
        %v1791 = vld [vmem:[%s396 + $0x1770] sm:$0xff]
        %v1792 = vld [vmem:[%s396 + $0x1778] sm:$0xff]
        %v1793 = vld [vmem:[%s396 + $0x1780] sm:$0xff]
        %v1794 = vld [vmem:[%s396 + $0x1788] sm:$0xff]
        %v1795 = vld [vmem:[%s396 + $0x1790] sm:$0xff]
        %v1796 = vld [vmem:[%s396 + $0x1798] sm:$0xff]
        %v1797 = vld [vmem:[%s396 + $0x17a0] sm:$0xff]
        %v1798 = vld [vmem:[%s396 + $0x17a8] sm:$0xff]
        %v1799 = vld [vmem:[%s396 + $0x17b0] sm:$0xff]
        %v1800 = vld [vmem:[%s396 + $0x17b8] sm:$0xff]
        %v1801 = vld [vmem:[%s396 + $0x17c0] sm:$0xff]
        %v1802 = vld [vmem:[%s396 + $0x17c8] sm:$0xff]
        %v1803 = vld [vmem:[%s396 + $0x17d0] sm:$0xff]
        %v1804 = vld [vmem:[%s396 + $0x17d8] sm:$0xff]
        %v1805 = vld [vmem:[%s396 + $0x17e0] sm:$0xff]
        %v1806 = vld [vmem:[%s396 + $0x17e8] sm:$0xff]
        %v1807 = vld [vmem:[%s396 + $0x17f0] sm:$0xff]
        %v1808 = vld [vmem:[%s396 + $0x17f8] sm:$0xff]
        %v1809 = vld [vmem:[%s396 + $0x1800] sm:$0xff]
        %v1810 = vld [vmem:[%s396 + $0x1808] sm:$0xff]
        %v1811 = vld [vmem:[%s396 + $0x1810] sm:$0xff]
        %v1812 = vld [vmem:[%s396 + $0x1818] sm:$0xff]
        %v1813 = vld [vmem:[%s396 + $0x1820] sm:$0xff]
        %v1814 = vld [vmem:[%s396 + $0x1828] sm:$0xff]
        %v1815 = vld [vmem:[%s396 + $0x1830] sm:$0xff]
        %v1816 = vld [vmem:[%s396 + $0x1838] sm:$0xff]
        %v1817 = vld [vmem:[%s396 + $0x1840] sm:$0xff]
        %v1818 = vld [vmem:[%s396 + $0x1848] sm:$0xff]
        %v1819 = vld [vmem:[%s396 + $0x1850] sm:$0xff]
        %v1820 = vld [vmem:[%s396 + $0x1858] sm:$0xff]
        %v1821 = vld [vmem:[%s396 + $0x1860] sm:$0xff]
        %v1822 = vld [vmem:[%s396 + $0x1868] sm:$0xff]
        %v1823 = vld [vmem:[%s396 + $0x1870] sm:$0xff]
        %v1824 = vld [vmem:[%s396 + $0x1878] sm:$0xff]
        %v1825 = vld [vmem:[%s396 + $0x1880] sm:$0xff]
        %v1826 = vld [vmem:[%s396 + $0x1888] sm:$0xff]
        %v1827 = vld [vmem:[%s396 + $0x1890] sm:$0xff]
        %v1828 = vld [vmem:[%s396 + $0x1898] sm:$0xff]
        %v1829 = vld [vmem:[%s396 + $0x18a0] sm:$0xff]
        %v1830 = vld [vmem:[%s396 + $0x18a8] sm:$0xff]
        %v1831 = vld [vmem:[%s396 + $0x18b0] sm:$0xff]
        %v1832 = vld [vmem:[%s396 + $0x18b8] sm:$0xff]
        %v1833 = vld [vmem:[%s396 + $0x18c0] sm:$0xff]
        %v1834 = vld [vmem:[%s396 + $0x18c8] sm:$0xff]
        %v1835 = vld [vmem:[%s396 + $0x18d0] sm:$0xff]
        %v1836 = vld [vmem:[%s396 + $0x18d8] sm:$0xff]
        %v1837 = vld [vmem:[%s396 + $0x18e0] sm:$0xff]
        %v1838 = vld [vmem:[%s396 + $0x18e8] sm:$0xff]
        %v1839 = vld [vmem:[%s396 + $0x18f0] sm:$0xff]
        %v1840 = vld [vmem:[%s396 + $0x18f8] sm:$0xff]
        %v1841 = vld [vmem:[%s396 + $0x1900] sm:$0xff]
        %v1842 = vld [vmem:[%s396 + $0x1908] sm:$0xff]
        %v1843 = vld [vmem:[%s396 + $0x1910] sm:$0xff]
        %v1844 = vld [vmem:[%s396 + $0x1918] sm:$0xff]
        %v1845 = vld [vmem:[%s396 + $0x1920] sm:$0xff]
        %v1846 = vld [vmem:[%s396 + $0x1928] sm:$0xff]
        %v1847 = vld [vmem:[%s396 + $0x1930] sm:$0xff]
        %v1848 = vld [vmem:[%s396 + $0x1938] sm:$0xff]
        %v1849 = vld [vmem:[%s396 + $0x1940] sm:$0xff]
        %v1850 = vld [vmem:[%s396 + $0x1948] sm:$0xff]
        %v1851 = vld [vmem:[%s396 + $0x1950] sm:$0xff]
        %v1852 = vld [vmem:[%s396 + $0x1958] sm:$0xff]
        %v1853 = vld [vmem:[%s396 + $0x1960] sm:$0xff]
        %v1854 = vld [vmem:[%s396 + $0x1968] sm:$0xff]
        %v1855 = vld [vmem:[%s396 + $0x1970] sm:$0xff]
        %v1856 = vld [vmem:[%s396 + $0x1978] sm:$0xff]
        %v1857 = vld [vmem:[%s396 + $0x1980] sm:$0xff]
        %v1858 = vld [vmem:[%s396 + $0x1988] sm:$0xff]
        %v1859 = vld [vmem:[%s396 + $0x1990] sm:$0xff]
        %v1860 = vld [vmem:[%s396 + $0x1998] sm:$0xff]
        %v1861 = vld [vmem:[%s396 + $0x19a0] sm:$0xff]
        %v1862 = vld [vmem:[%s396 + $0x19a8] sm:$0xff]
        %v1863 = vld [vmem:[%s396 + $0x19b0] sm:$0xff]
        %v1864 = vld [vmem:[%s396 + $0x19b8] sm:$0xff]
        %v1865 = vld [vmem:[%s396 + $0x19c0] sm:$0xff]
        %v1866 = vld [vmem:[%s396 + $0x19c8] sm:$0xff]
        %v1867 = vld [vmem:[%s396 + $0x19d0] sm:$0xff]
        %v1868 = vld [vmem:[%s396 + $0x19d8] sm:$0xff]
        %v1869 = vld [vmem:[%s396 + $0x19e0] sm:$0xff]
        %v1870 = vld [vmem:[%s396 + $0x19e8] sm:$0xff]
        %v1871 = vld [vmem:[%s396 + $0x19f0] sm:$0xff]
        %v1872 = vld [vmem:[%s396 + $0x19f8] sm:$0xff]
        %v1873 = vld [vmem:[%s396 + $0x1a00] sm:$0xff]
        %v1874 = vld [vmem:[%s396 + $0x1a08] sm:$0xff]
        %v1875 = vld [vmem:[%s396 + $0x1a10] sm:$0xff]
        %v1876 = vld [vmem:[%s396 + $0x1a18] sm:$0xff]
        %v1877 = vld [vmem:[%s396 + $0x1a20] sm:$0xff]
        %v1878 = vld [vmem:[%s396 + $0x1a28] sm:$0xff]
        %v1879 = vld [vmem:[%s396 + $0x1a30] sm:$0xff]
        %v1880 = vld [vmem:[%s396 + $0x1a38] sm:$0xff]
        %v1881 = vld [vmem:[%s396 + $0x1a40] sm:$0xff]
        %v1882 = vld [vmem:[%s396 + $0x1a48] sm:$0xff]
        %v1883 = vld [vmem:[%s396 + $0x1a50] sm:$0xff]
        %v1884 = vld [vmem:[%s396 + $0x1a58] sm:$0xff]
        %v1885 = vld [vmem:[%s396 + $0x1a60] sm:$0xff]
        %v1886 = vld [vmem:[%s396 + $0x1a68] sm:$0xff]
        %v1887 = vld [vmem:[%s396 + $0x1a70] sm:$0xff]
        %v1888 = vld [vmem:[%s396 + $0x1a78] sm:$0xff]
        %v1889 = vld [vmem:[%s396 + $0x1a80] sm:$0xff]
        %v1890 = vld [vmem:[%s396 + $0x1a88] sm:$0xff]
        %v1891 = vld [vmem:[%s396 + $0x1a90] sm:$0xff]
        %v1892 = vld [vmem:[%s396 + $0x1a98] sm:$0xff]
        %v1893 = vld [vmem:[%s396 + $0x1aa0] sm:$0xff]
        %v1894 = vld [vmem:[%s396 + $0x1aa8] sm:$0xff]
        %v1895 = vld [vmem:[%s396 + $0x1ab0] sm:$0xff]
        %v1896 = vld [vmem:[%s396 + $0x1ab8] sm:$0xff]
        %v1897 = vld [vmem:[%s396 + $0x1ac0] sm:$0xff]
        %v1898 = vld [vmem:[%s396 + $0x1ac8] sm:$0xff]
        %v1899 = vld [vmem:[%s396 + $0x1ad0] sm:$0xff]
        %v1900 = vld [vmem:[%s396 + $0x1ad8] sm:$0xff]
        %v1901 = vld [vmem:[%s396 + $0x1ae0] sm:$0xff]
        %v1902 = vld [vmem:[%s396 + $0x1ae8] sm:$0xff]
        %v1903 = vld [vmem:[%s396 + $0x1af0] sm:$0xff]
        %v1904 = vld [vmem:[%s396 + $0x1af8] sm:$0xff]
        %v1905 = vld [vmem:[%s396 + $0x1b00] sm:$0xff]
        %v1906 = vld [vmem:[%s396 + $0x1b08] sm:$0xff]
        %v1907 = vld [vmem:[%s396 + $0x1b10] sm:$0xff]
        %v1908 = vld [vmem:[%s396 + $0x1b18] sm:$0xff]
        %v1909 = vld [vmem:[%s396 + $0x1b20] sm:$0xff]
        %v1910 = vld [vmem:[%s396 + $0x1b28] sm:$0xff]
        %v1911 = vld [vmem:[%s396 + $0x1b30] sm:$0xff]
        %v1912 = vld [vmem:[%s396 + $0x1b38] sm:$0xff]
        %v1913 = vld [vmem:[%s396 + $0x1b40] sm:$0xff]
        %v1914 = vld [vmem:[%s396 + $0x1b48] sm:$0xff]
        %v1915 = vld [vmem:[%s396 + $0x1b50] sm:$0xff]
        %v1916 = vld [vmem:[%s396 + $0x1b58] sm:$0xff]
        %v1917 = vld [vmem:[%s396 + $0x1b60] sm:$0xff]
        %v1918 = vld [vmem:[%s396 + $0x1b68] sm:$0xff]
        %v1919 = vld [vmem:[%s396 + $0x1b70] sm:$0xff]
        %v1920 = vld [vmem:[%s396 + $0x1b78] sm:$0xff]
        %v1921 = vld [vmem:[%s396 + $0x1b80] sm:$0xff]
        %v1922 = vld [vmem:[%s396 + $0x1b88] sm:$0xff]
        %v1923 = vld [vmem:[%s396 + $0x1b90] sm:$0xff]
        %v1924 = vld [vmem:[%s396 + $0x1b98] sm:$0xff]
        %v1925 = vld [vmem:[%s396 + $0x1ba0] sm:$0xff]
        %v1926 = vld [vmem:[%s396 + $0x1ba8] sm:$0xff]
        %v1927 = vld [vmem:[%s396 + $0x1bb0] sm:$0xff]
        %v1928 = vld [vmem:[%s396 + $0x1bb8] sm:$0xff]
        %v1929 = vld [vmem:[%s396 + $0x1bc0] sm:$0xff]
        %v1930 = vld [vmem:[%s396 + $0x1bc8] sm:$0xff]
        %v1931 = vld [vmem:[%s396 + $0x1bd0] sm:$0xff]
        %v1932 = vld [vmem:[%s396 + $0x1bd8] sm:$0xff]
        %v1933 = vld [vmem:[%s396 + $0x1be0] sm:$0xff]
        %v1934 = vld [vmem:[%s396 + $0x1be8] sm:$0xff]
        %v1935 = vld [vmem:[%s396 + $0x1bf0] sm:$0xff]
        %v1936 = vld [vmem:[%s396 + $0x1bf8] sm:$0xff]
        %v1937 = vld [vmem:[%s396 + $0x1c00] sm:$0xff]
        %v1938 = vld [vmem:[%s396 + $0x1c08] sm:$0xff]
        %v1939 = vld [vmem:[%s396 + $0x1c10] sm:$0xff]
        %v1940 = vld [vmem:[%s396 + $0x1c18] sm:$0xff]
        %v1941 = vld [vmem:[%s396 + $0x1c20] sm:$0xff]
        %v1942 = vld [vmem:[%s396 + $0x1c28] sm:$0xff]
        %v1943 = vld [vmem:[%s396 + $0x1c30] sm:$0xff]
        %v1944 = vld [vmem:[%s396 + $0x1c38] sm:$0xff]
        %v1945 = vld [vmem:[%s396 + $0x1c40] sm:$0xff]
        %v1946 = vld [vmem:[%s396 + $0x1c48] sm:$0xff]
        %v1947 = vld [vmem:[%s396 + $0x1c50] sm:$0xff]
        %v1948 = vld [vmem:[%s396 + $0x1c58] sm:$0xff]
        %v1949 = vld [vmem:[%s396 + $0x1c60] sm:$0xff]
        %v1950 = vld [vmem:[%s396 + $0x1c68] sm:$0xff]
        %v1951 = vld [vmem:[%s396 + $0x1c70] sm:$0xff]
        %v1952 = vld [vmem:[%s396 + $0x1c78] sm:$0xff]
        %v1953 = vld [vmem:[%s396 + $0x1c80] sm:$0xff]
        %v1954 = vld [vmem:[%s396 + $0x1c88] sm:$0xff]
        %v1955 = vld [vmem:[%s396 + $0x1c90] sm:$0xff]
        %v1956 = vld [vmem:[%s396 + $0x1c98] sm:$0xff]
        %v1957 = vld [vmem:[%s396 + $0x1ca0] sm:$0xff]
        %v1958 = vld [vmem:[%s396 + $0x1ca8] sm:$0xff]
        %v1959 = vld [vmem:[%s396 + $0x1cb0] sm:$0xff]
        %v1960 = vld [vmem:[%s396 + $0x1cb8] sm:$0xff]
        %v1961 = vld [vmem:[%s396 + $0x1cc0] sm:$0xff]
        %v1962 = vld [vmem:[%s396 + $0x1cc8] sm:$0xff]
        %v1963 = vld [vmem:[%s396 + $0x1cd0] sm:$0xff]
        %v1964 = vld [vmem:[%s396 + $0x1cd8] sm:$0xff]
        %v1965 = vld [vmem:[%s396 + $0x1ce0] sm:$0xff]
        %v1966 = vld [vmem:[%s396 + $0x1ce8] sm:$0xff]
        %v1967 = vld [vmem:[%s396 + $0x1cf0] sm:$0xff]
        %v1968 = vld [vmem:[%s396 + $0x1cf8] sm:$0xff]
        %v1969 = vld [vmem:[%s396 + $0x1d00] sm:$0xff]
        %v1970 = vld [vmem:[%s396 + $0x1d08] sm:$0xff]
        %v1971 = vld [vmem:[%s396 + $0x1d10] sm:$0xff]
        %v1972 = vld [vmem:[%s396 + $0x1d18] sm:$0xff]
        %v1973 = vld [vmem:[%s396 + $0x1d20] sm:$0xff]
        %v1974 = vld [vmem:[%s396 + $0x1d28] sm:$0xff]
        %v1975 = vld [vmem:[%s396 + $0x1d30] sm:$0xff]
        %v1976 = vld [vmem:[%s396 + $0x1d38] sm:$0xff]
        %v1977 = vld [vmem:[%s396 + $0x1d40] sm:$0xff]
        %v1978 = vld [vmem:[%s396 + $0x1d48] sm:$0xff]
        %v1979 = vld [vmem:[%s396 + $0x1d50] sm:$0xff]
        %v1980 = vld [vmem:[%s396 + $0x1d58] sm:$0xff]
        %v1981 = vld [vmem:[%s396 + $0x1d60] sm:$0xff]
        %v1982 = vld [vmem:[%s396 + $0x1d68] sm:$0xff]
        %v1983 = vld [vmem:[%s396 + $0x1d70] sm:$0xff]
        %v1984 = vld [vmem:[%s396 + $0x1d78] sm:$0xff]
        %v1985 = vld [vmem:[%s396 + $0x1d80] sm:$0xff]
        %v1986 = vld [vmem:[%s396 + $0x1d88] sm:$0xff]
        %v1987 = vld [vmem:[%s396 + $0x1d90] sm:$0xff]
        %v1988 = vld [vmem:[%s396 + $0x1d98] sm:$0xff]
        %v1989 = vld [vmem:[%s396 + $0x1da0] sm:$0xff]
        %v1990 = vld [vmem:[%s396 + $0x1da8] sm:$0xff]
        %v1991 = vld [vmem:[%s396 + $0x1db0] sm:$0xff]
        %v1992 = vld [vmem:[%s396 + $0x1db8] sm:$0xff]
        %v1993 = vld [vmem:[%s396 + $0x1dc0] sm:$0xff]
        %v1994 = vld [vmem:[%s396 + $0x1dc8] sm:$0xff]
        %v1995 = vld [vmem:[%s396 + $0x1dd0] sm:$0xff]
        %v1996 = vld [vmem:[%s396 + $0x1dd8] sm:$0xff]
        %v1997 = vld [vmem:[%s396 + $0x1de0] sm:$0xff]
        %v1998 = vld [vmem:[%s396 + $0x1de8] sm:$0xff]
        %v1999 = vld [vmem:[%s396 + $0x1df0] sm:$0xff]
        %v2000 = vld [vmem:[%s396 + $0x1df8] sm:$0xff]
        %v2001 = vld [vmem:[%s396 + $0x1e00] sm:$0xff]
        %v2002 = vld [vmem:[%s396 + $0x1e08] sm:$0xff]
        %v2003 = vld [vmem:[%s396 + $0x1e10] sm:$0xff]
        %v2004 = vld [vmem:[%s396 + $0x1e18] sm:$0xff]
        %v2005 = vld [vmem:[%s396 + $0x1e20] sm:$0xff]
        %v2006 = vld [vmem:[%s396 + $0x1e28] sm:$0xff]
        %v2007 = vld [vmem:[%s396 + $0x1e30] sm:$0xff]
        %v2008 = vld [vmem:[%s396 + $0x1e38] sm:$0xff]
        %v2009 = vld [vmem:[%s396 + $0x1e40] sm:$0xff]
        %v2010 = vld [vmem:[%s396 + $0x1e48] sm:$0xff]
        %v2011 = vld [vmem:[%s396 + $0x1e50] sm:$0xff]
        %v2012 = vld [vmem:[%s396 + $0x1e58] sm:$0xff]
        %v2013 = vld [vmem:[%s396 + $0x1e60] sm:$0xff]
        %v2014 = vld [vmem:[%s396 + $0x1e68] sm:$0xff]
        %v2015 = vld [vmem:[%s396 + $0x1e70] sm:$0xff]
        %v2016 = vld [vmem:[%s396 + $0x1e78] sm:$0xff]
        %v2017 = vld [vmem:[%s396 + $0x1e80] sm:$0xff]
        %v2018 = vld [vmem:[%s396 + $0x1e88] sm:$0xff]
        %v2019 = vld [vmem:[%s396 + $0x1e90] sm:$0xff]
        %v2020 = vld [vmem:[%s396 + $0x1e98] sm:$0xff]
        %v2021 = vld [vmem:[%s396 + $0x1ea0] sm:$0xff]
        %v2022 = vld [vmem:[%s396 + $0x1ea8] sm:$0xff]
        %v2023 = vld [vmem:[%s396 + $0x1eb0] sm:$0xff]
        %v2024 = vld [vmem:[%s396 + $0x1eb8] sm:$0xff]
        %v2025 = vld [vmem:[%s396 + $0x1ec0] sm:$0xff]
        %v2026 = vld [vmem:[%s396 + $0x1ec8] sm:$0xff]
        %v2027 = vld [vmem:[%s396 + $0x1ed0] sm:$0xff]
        %v2028 = vld [vmem:[%s396 + $0x1ed8] sm:$0xff]
        %v2029 = vld [vmem:[%s396 + $0x1ee0] sm:$0xff]
        %v2030 = vld [vmem:[%s396 + $0x1ee8] sm:$0xff]
        %v2031 = vld [vmem:[%s396 + $0x1ef0] sm:$0xff]
        %v2032 = vld [vmem:[%s396 + $0x1ef8] sm:$0xff]
        %v2033 = vld [vmem:[%s396 + $0x1f00] sm:$0xff]
        %v2034 = vld [vmem:[%s396 + $0x1f08] sm:$0xff]
        %v2035 = vld [vmem:[%s396 + $0x1f10] sm:$0xff]
        %v2036 = vld [vmem:[%s396 + $0x1f18] sm:$0xff]
        %v2037 = vld [vmem:[%s396 + $0x1f20] sm:$0xff]
        %v2038 = vld [vmem:[%s396 + $0x1f28] sm:$0xff]
        %v2039 = vld [vmem:[%s396 + $0x1f30] sm:$0xff]
        %v2040 = vld [vmem:[%s396 + $0x1f38] sm:$0xff]
        %v2041 = vld [vmem:[%s396 + $0x1f40] sm:$0xff]
        %v2042 = vld [vmem:[%s396 + $0x1f48] sm:$0xff]
        %v2043 = vld [vmem:[%s396 + $0x1f50] sm:$0xff]
        %v2044 = vld [vmem:[%s396 + $0x1f58] sm:$0xff]
        %v2045 = vld [vmem:[%s396 + $0x1f60] sm:$0xff]
        %v2046 = vld [vmem:[%s396 + $0x1f68] sm:$0xff]
        %v2047 = vld [vmem:[%s396 + $0x1f70] sm:$0xff]
        %v2048 = vld [vmem:[%s396 + $0x1f78] sm:$0xff]
        %v2049 = vld [vmem:[%s396 + $0x1f80] sm:$0xff]
        %v2050 = vld [vmem:[%s396 + $0x1f88] sm:$0xff]
        %v2051 = vld [vmem:[%s396 + $0x1f90] sm:$0xff]
        %v2052 = vld [vmem:[%s396 + $0x1f98] sm:$0xff]
        %v2053 = vld [vmem:[%s396 + $0x1fa0] sm:$0xff]
        %v2054 = vld [vmem:[%s396 + $0x1fa8] sm:$0xff]
        %v2055 = vld [vmem:[%s396 + $0x1fb0] sm:$0xff]
        %v2056 = vld [vmem:[%s396 + $0x1fb8] sm:$0xff]
        %v2057 = vld [vmem:[%s396 + $0x1fc0] sm:$0xff]
        %v2058 = vld [vmem:[%s396 + $0x1fc8] sm:$0xff]
        %v2059 = vld [vmem:[%s396 + $0x1fd0] sm:$0xff]
        %v2060 = vld [vmem:[%s396 + $0x1fd8] sm:$0xff]
        %v2061 = vld [vmem:[%s396 + $0x1fe0] sm:$0xff]
        %v2062 = vld [vmem:[%s396 + $0x1fe8] sm:$0xff]
        %v2063 = vld [vmem:[%s396 + $0x1ff0] sm:$0xff]
        %v2064 = vld [vmem:[%s396 + $0x1ff8] sm:$0xff]
        %v2073 = vcombine.high %v1031, %v1031
        %v2074 = vcombine.high %v1032, %v1032
        %v2075 = vcombine.high %v1033, %v1033
        %v2076 = vcombine.high %v1034, %v1034
        %v2077 = vcombine.high %v1035, %v1035
        %v2078 = vcombine.high %v1036, %v1036
        %v2079 = vcombine.high %v1037, %v1037
        %v2080 = vcombine.high %v1038, %v1038
        %2089 = vmatprep.subr.mxu0 %v1042
        %2090 = vmatpush1.msra.mxu0 %v1041
        %2091 = vmatprep.subr.mxu0 %v1046
        %2092 = vmatpush1.msra.mxu0 %v1045
        %2093 = vmatprep.subr.mxu0 %v1050
        %2094 = vmatpush1.msra.mxu0 %v1049
        %2095 = vmatprep.subr.mxu0 %v1054
        %2096 = vmatpush1.msra.mxu0 %v1053
        %2097 = vmatprep.subr.mxu0 %v1058
        %2098 = vmatpush1.msra.mxu0 %v1057
        %2099 = vmatprep.subr.mxu0 %v1062
        %2100 = vmatpush1.msra.mxu0 %v1061
        %2101 = vmatprep.subr.mxu0 %v1066
        %2102 = vmatpush1.msra.mxu0 %v1065
        %2103 = vmatprep.subr.mxu0 %v1070
        %2104 = vmatpush1.msra.mxu0 %v1069
        %2105 = vmatprep.subr.mxu0 %v1074
        %2106 = vmatpush1.msra.mxu0 %v1073
        %2107 = vmatprep.subr.mxu0 %v1078
        %2108 = vmatpush1.msra.mxu0 %v1077
        %2109 = vmatprep.subr.mxu0 %v1082
        %2110 = vmatpush1.msra.mxu0 %v1081
        %2111 = vmatprep.subr.mxu0 %v1086
        %2112 = vmatpush1.msra.mxu0 %v1085
        %2113 = vmatprep.subr.mxu0 %v1090
        %2114 = vmatpush1.msra.mxu0 %v1089
        %2115 = vmatprep.subr.mxu0 %v1094
        %2116 = vmatpush1.msra.mxu0 %v1093
        %2117 = vmatprep.subr.mxu0 %v1098
        %2118 = vmatpush1.msra.mxu0 %v1097
        %2119 = vmatprep.subr.mxu0 %v1102
        %2120 = vmatpush1.msra.mxu0 %v1101
        %2121 = vmatprep.subr.mxu0 %v1106
        %2122 = vmatpush1.msra.mxu0 %v1105
        %2123 = vmatprep.subr.mxu0 %v1110
        %2124 = vmatpush1.msra.mxu0 %v1109
        %2125 = vmatprep.subr.mxu0 %v1114
        %2126 = vmatpush1.msra.mxu0 %v1113
        %2127 = vmatprep.subr.mxu0 %v1118
        %2128 = vmatpush1.msra.mxu0 %v1117
        %2129 = vmatprep.subr.mxu0 %v1122
        %2130 = vmatpush1.msra.mxu0 %v1121
        %2131 = vmatprep.subr.mxu0 %v1126
        %2132 = vmatpush1.msra.mxu0 %v1125
        %2133 = vmatprep.subr.mxu0 %v1130
        %2134 = vmatpush1.msra.mxu0 %v1129
        %2135 = vmatprep.subr.mxu0 %v1134
        %2136 = vmatpush1.msra.mxu0 %v1133
        %2137 = vmatprep.subr.mxu0 %v1138
        %2138 = vmatpush1.msra.mxu0 %v1137
        %2139 = vmatprep.subr.mxu0 %v1142
        %2140 = vmatpush1.msra.mxu0 %v1141
        %2141 = vmatprep.subr.mxu0 %v1146
        %2142 = vmatpush1.msra.mxu0 %v1145
        %2143 = vmatprep.subr.mxu0 %v1150
        %2144 = vmatpush1.msra.mxu0 %v1149
        %2145 = vmatprep.subr.mxu0 %v1154
        %2146 = vmatpush1.msra.mxu0 %v1153
        %2147 = vmatprep.subr.mxu0 %v1158
        %2148 = vmatpush1.msra.mxu0 %v1157
        %2149 = vmatprep.subr.mxu0 %v1162
        %2150 = vmatpush1.msra.mxu0 %v1161
        %2151 = vmatprep.subr.mxu0 %v1166
        %2152 = vmatpush1.msra.mxu0 %v1165
        %2153 = vmatprep.mubr.f32.mxu0 %v2073
        %2154 = vmatmul.mubr.f32.gmra.mrb[0].mxu0 %v1031
        %v2155 = vpop.f32.mrb[0].mxu0
        %v2156 = vadd.f32 0.0, %v2155
        %v2157 = vpop.f32.mrb[0].mxu0
        %v2158 = vadd.f32 0.0, %v2157
        %2159 = vdwg.mxu0
        %2160 = vmatprep.subr.mxu0 %v1170
        %2161 = vmatpush1.msra.mxu0 %v1169
        %2162 = vmatprep.subr.mxu0 %v1174
        %2163 = vmatpush1.msra.mxu0 %v1173
        %2164 = vmatprep.subr.mxu0 %v1178
        %2165 = vmatpush1.msra.mxu0 %v1177
        %2166 = vmatprep.subr.mxu0 %v1182
        %2167 = vmatpush1.msra.mxu0 %v1181
        %2168 = vmatprep.subr.mxu0 %v1186
        %2169 = vmatpush1.msra.mxu0 %v1185
        %2170 = vmatprep.subr.mxu0 %v1190
        %2171 = vmatpush1.msra.mxu0 %v1189
        %2172 = vmatprep.subr.mxu0 %v1194
        %2173 = vmatpush1.msra.mxu0 %v1193
        %2174 = vmatprep.subr.mxu0 %v1198
        %2175 = vmatpush1.msra.mxu0 %v1197
        %2176 = vmatprep.subr.mxu0 %v1202
        %2177 = vmatpush1.msra.mxu0 %v1201
        %2178 = vmatprep.subr.mxu0 %v1206
        %2179 = vmatpush1.msra.mxu0 %v1205
        %2180 = vmatprep.subr.mxu0 %v1210
        %2181 = vmatpush1.msra.mxu0 %v1209
        %2182 = vmatprep.subr.mxu0 %v1214
        %2183 = vmatpush1.msra.mxu0 %v1213
        %2184 = vmatprep.subr.mxu0 %v1218
        %2185 = vmatpush1.msra.mxu0 %v1217
        %2186 = vmatprep.subr.mxu0 %v1222
        %2187 = vmatpush1.msra.mxu0 %v1221
        %2188 = vmatprep.subr.mxu0 %v1226
        %2189 = vmatpush1.msra.mxu0 %v1225
        %2190 = vmatprep.subr.mxu0 %v1230
        %2191 = vmatpush1.msra.mxu0 %v1229
        %2192 = vmatprep.subr.mxu0 %v1234
        %2193 = vmatpush1.msra.mxu0 %v1233
        %2194 = vmatprep.subr.mxu0 %v1238
        %2195 = vmatpush1.msra.mxu0 %v1237
        %2196 = vmatprep.subr.mxu0 %v1242
        %2197 = vmatpush1.msra.mxu0 %v1241
        %2198 = vmatprep.subr.mxu0 %v1246
        %2199 = vmatpush1.msra.mxu0 %v1245
        %2200 = vmatprep.subr.mxu0 %v1250
        %2201 = vmatpush1.msra.mxu0 %v1249
        %2202 = vmatprep.subr.mxu0 %v1254
        %2203 = vmatpush1.msra.mxu0 %v1253
        %2204 = vmatprep.subr.mxu0 %v1258
        %2205 = vmatpush1.msra.mxu0 %v1257
        %2206 = vmatprep.subr.mxu0 %v1262
        %2207 = vmatpush1.msra.mxu0 %v1261
        %2208 = vmatprep.subr.mxu0 %v1266
        %2209 = vmatpush1.msra.mxu0 %v1265
        %2210 = vmatprep.subr.mxu0 %v1270
        %2211 = vmatpush1.msra.mxu0 %v1269
        %2212 = vmatprep.subr.mxu0 %v1274
        %2213 = vmatpush1.msra.mxu0 %v1273
        %2214 = vmatprep.subr.mxu0 %v1278
        %2215 = vmatpush1.msra.mxu0 %v1277
        %2216 = vmatprep.subr.mxu0 %v1282
        %2217 = vmatpush1.msra.mxu0 %v1281
        %2218 = vmatprep.subr.mxu0 %v1286
        %2219 = vmatpush1.msra.mxu0 %v1285
        %2220 = vmatprep.subr.mxu0 %v1290
        %2221 = vmatpush1.msra.mxu0 %v1289
        %2222 = vmatprep.subr.mxu0 %v1294
        %2223 = vmatpush1.msra.mxu0 %v1293
        %2224 = vmatprep.mubr.f32.mxu0 %v2074
        %2225 = vmatmul.mubr.f32.gmra.mrb[0].mxu0 %v1032
        %v2226 = vpop.f32.mrb[0].mxu0
        %v2227 = vadd.f32 %v2156, %v2226
        %v2228 = vpop.f32.mrb[0].mxu0
        %v2229 = vadd.f32 %v2158, %v2228
        %2230 = vdwg.mxu0
        %2231 = vmatprep.subr.mxu0 %v1298
        %2232 = vmatpush1.msra.mxu0 %v1297
        %2233 = vmatprep.subr.mxu0 %v1302
        %2234 = vmatpush1.msra.mxu0 %v1301
        %2235 = vmatprep.subr.mxu0 %v1306
        %2236 = vmatpush1.msra.mxu0 %v1305
        %2237 = vmatprep.subr.mxu0 %v1310
        %2238 = vmatpush1.msra.mxu0 %v1309
        %2239 = vmatprep.subr.mxu0 %v1314
        %2240 = vmatpush1.msra.mxu0 %v1313
        %2241 = vmatprep.subr.mxu0 %v1318
        %2242 = vmatpush1.msra.mxu0 %v1317
        %2243 = vmatprep.subr.mxu0 %v1322
        %2244 = vmatpush1.msra.mxu0 %v1321
        %2245 = vmatprep.subr.mxu0 %v1326
        %2246 = vmatpush1.msra.mxu0 %v1325
        %2247 = vmatprep.subr.mxu0 %v1330
        %2248 = vmatpush1.msra.mxu0 %v1329
        %2249 = vmatprep.subr.mxu0 %v1334
        %2250 = vmatpush1.msra.mxu0 %v1333
        %2251 = vmatprep.subr.mxu0 %v1338
        %2252 = vmatpush1.msra.mxu0 %v1337
        %2253 = vmatprep.subr.mxu0 %v1342
        %2254 = vmatpush1.msra.mxu0 %v1341
        %2255 = vmatprep.subr.mxu0 %v1346
        %2256 = vmatpush1.msra.mxu0 %v1345
        %2257 = vmatprep.subr.mxu0 %v1350
        %2258 = vmatpush1.msra.mxu0 %v1349
        %2259 = vmatprep.subr.mxu0 %v1354
        %2260 = vmatpush1.msra.mxu0 %v1353
        %2261 = vmatprep.subr.mxu0 %v1358
        %2262 = vmatpush1.msra.mxu0 %v1357
        %2263 = vmatprep.subr.mxu0 %v1362
        %2264 = vmatpush1.msra.mxu0 %v1361
        %2265 = vmatprep.subr.mxu0 %v1366
        %2266 = vmatpush1.msra.mxu0 %v1365
        %2267 = vmatprep.subr.mxu0 %v1370
        %2268 = vmatpush1.msra.mxu0 %v1369
        %2269 = vmatprep.subr.mxu0 %v1374
        %2270 = vmatpush1.msra.mxu0 %v1373
        %2271 = vmatprep.subr.mxu0 %v1378
        %2272 = vmatpush1.msra.mxu0 %v1377
        %2273 = vmatprep.subr.mxu0 %v1382
        %2274 = vmatpush1.msra.mxu0 %v1381
        %2275 = vmatprep.subr.mxu0 %v1386
        %2276 = vmatpush1.msra.mxu0 %v1385
        %2277 = vmatprep.subr.mxu0 %v1390
        %2278 = vmatpush1.msra.mxu0 %v1389
        %2279 = vmatprep.subr.mxu0 %v1394
        %2280 = vmatpush1.msra.mxu0 %v1393
        %2281 = vmatprep.subr.mxu0 %v1398
        %2282 = vmatpush1.msra.mxu0 %v1397
        %2283 = vmatprep.subr.mxu0 %v1402
        %2284 = vmatpush1.msra.mxu0 %v1401
        %2285 = vmatprep.subr.mxu0 %v1406
        %2286 = vmatpush1.msra.mxu0 %v1405
        %2287 = vmatprep.subr.mxu0 %v1410
        %2288 = vmatpush1.msra.mxu0 %v1409
        %2289 = vmatprep.subr.mxu0 %v1414
        %2290 = vmatpush1.msra.mxu0 %v1413
        %2291 = vmatprep.subr.mxu0 %v1418
        %2292 = vmatpush1.msra.mxu0 %v1417
        %2293 = vmatprep.subr.mxu0 %v1422
        %2294 = vmatpush1.msra.mxu0 %v1421
        %2295 = vmatprep.mubr.f32.mxu0 %v2075
        %2296 = vmatmul.mubr.f32.gmra.mrb[0].mxu0 %v1033
        %v2297 = vpop.f32.mrb[0].mxu0
        %v2298 = vadd.f32 %v2227, %v2297
        %v2299 = vpop.f32.mrb[0].mxu0
        %v2300 = vadd.f32 %v2229, %v2299
        %2301 = vdwg.mxu0
        %2302 = vmatprep.subr.mxu0 %v1426
        %2303 = vmatpush1.msra.mxu0 %v1425
        %2304 = vmatprep.subr.mxu0 %v1430
        %2305 = vmatpush1.msra.mxu0 %v1429
        %2306 = vmatprep.subr.mxu0 %v1434
        %2307 = vmatpush1.msra.mxu0 %v1433
        %2308 = vmatprep.subr.mxu0 %v1438
        %2309 = vmatpush1.msra.mxu0 %v1437
        %2310 = vmatprep.subr.mxu0 %v1442
        %2311 = vmatpush1.msra.mxu0 %v1441
        %2312 = vmatprep.subr.mxu0 %v1446
        %2313 = vmatpush1.msra.mxu0 %v1445
        %2314 = vmatprep.subr.mxu0 %v1450
        %2315 = vmatpush1.msra.mxu0 %v1449
        %2316 = vmatprep.subr.mxu0 %v1454
        %2317 = vmatpush1.msra.mxu0 %v1453
        %2318 = vmatprep.subr.mxu0 %v1458
        %2319 = vmatpush1.msra.mxu0 %v1457
        %2320 = vmatprep.subr.mxu0 %v1462
        %2321 = vmatpush1.msra.mxu0 %v1461
        %2322 = vmatprep.subr.mxu0 %v1466
        %2323 = vmatpush1.msra.mxu0 %v1465
        %2324 = vmatprep.subr.mxu0 %v1470
        %2325 = vmatpush1.msra.mxu0 %v1469
        %2326 = vmatprep.subr.mxu0 %v1474
        %2327 = vmatpush1.msra.mxu0 %v1473
        %2328 = vmatprep.subr.mxu0 %v1478
        %2329 = vmatpush1.msra.mxu0 %v1477
        %2330 = vmatprep.subr.mxu0 %v1482
        %2331 = vmatpush1.msra.mxu0 %v1481
        %2332 = vmatprep.subr.mxu0 %v1486
        %2333 = vmatpush1.msra.mxu0 %v1485
        %2334 = vmatprep.subr.mxu0 %v1490
        %2335 = vmatpush1.msra.mxu0 %v1489
        %2336 = vmatprep.subr.mxu0 %v1494
        %2337 = vmatpush1.msra.mxu0 %v1493
        %2338 = vmatprep.subr.mxu0 %v1498
        %2339 = vmatpush1.msra.mxu0 %v1497
        %2340 = vmatprep.subr.mxu0 %v1502
        %2341 = vmatpush1.msra.mxu0 %v1501
        %2342 = vmatprep.subr.mxu0 %v1506
        %2343 = vmatpush1.msra.mxu0 %v1505
        %2344 = vmatprep.subr.mxu0 %v1510
        %2345 = vmatpush1.msra.mxu0 %v1509
        %2346 = vmatprep.subr.mxu0 %v1514
        %2347 = vmatpush1.msra.mxu0 %v1513
        %2348 = vmatprep.subr.mxu0 %v1518
        %2349 = vmatpush1.msra.mxu0 %v1517
        %2350 = vmatprep.subr.mxu0 %v1522
        %2351 = vmatpush1.msra.mxu0 %v1521
        %2352 = vmatprep.subr.mxu0 %v1526
        %2353 = vmatpush1.msra.mxu0 %v1525
        %2354 = vmatprep.subr.mxu0 %v1530
        %2355 = vmatpush1.msra.mxu0 %v1529
        %2356 = vmatprep.subr.mxu0 %v1534
        %2357 = vmatpush1.msra.mxu0 %v1533
        %2358 = vmatprep.subr.mxu0 %v1538
        %2359 = vmatpush1.msra.mxu0 %v1537
        %2360 = vmatprep.subr.mxu0 %v1542
        %2361 = vmatpush1.msra.mxu0 %v1541
        %2362 = vmatprep.subr.mxu0 %v1546
        %2363 = vmatpush1.msra.mxu0 %v1545
        %2364 = vmatprep.subr.mxu0 %v1550
        %2365 = vmatpush1.msra.mxu0 %v1549
        %2366 = vmatprep.mubr.f32.mxu0 %v2076
        %2367 = vmatmul.mubr.f32.gmra.mrb[0].mxu0 %v1034
        %v2368 = vpop.f32.mrb[0].mxu0
        %v2369 = vadd.f32 %v2298, %v2368
        %v2370 = vpop.f32.mrb[0].mxu0
        %v2371 = vadd.f32 %v2300, %v2370
        %2372 = vdwg.mxu0
        %2373 = vmatprep.subr.mxu0 %v1554
        %2374 = vmatpush1.msra.mxu0 %v1553
        %2375 = vmatprep.subr.mxu0 %v1558
        %2376 = vmatpush1.msra.mxu0 %v1557
        %2377 = vmatprep.subr.mxu0 %v1562
        %2378 = vmatpush1.msra.mxu0 %v1561
        %2379 = vmatprep.subr.mxu0 %v1566
        %2380 = vmatpush1.msra.mxu0 %v1565
        %2381 = vmatprep.subr.mxu0 %v1570
        %2382 = vmatpush1.msra.mxu0 %v1569
        %2383 = vmatprep.subr.mxu0 %v1574
        %2384 = vmatpush1.msra.mxu0 %v1573
        %2385 = vmatprep.subr.mxu0 %v1578
        %2386 = vmatpush1.msra.mxu0 %v1577
        %2387 = vmatprep.subr.mxu0 %v1582
        %2388 = vmatpush1.msra.mxu0 %v1581
        %2389 = vmatprep.subr.mxu0 %v1586
        %2390 = vmatpush1.msra.mxu0 %v1585
        %2391 = vmatprep.subr.mxu0 %v1590
        %2392 = vmatpush1.msra.mxu0 %v1589
        %2393 = vmatprep.subr.mxu0 %v1594
        %2394 = vmatpush1.msra.mxu0 %v1593
        %2395 = vmatprep.subr.mxu0 %v1598
        %2396 = vmatpush1.msra.mxu0 %v1597
        %2397 = vmatprep.subr.mxu0 %v1602
        %2398 = vmatpush1.msra.mxu0 %v1601
        %2399 = vmatprep.subr.mxu0 %v1606
        %2400 = vmatpush1.msra.mxu0 %v1605
        %2401 = vmatprep.subr.mxu0 %v1610
        %2402 = vmatpush1.msra.mxu0 %v1609
        %2403 = vmatprep.subr.mxu0 %v1614
        %2404 = vmatpush1.msra.mxu0 %v1613
        %2405 = vmatprep.subr.mxu0 %v1618
        %2406 = vmatpush1.msra.mxu0 %v1617
        %2407 = vmatprep.subr.mxu0 %v1622
        %2408 = vmatpush1.msra.mxu0 %v1621
        %2409 = vmatprep.subr.mxu0 %v1626
        %2410 = vmatpush1.msra.mxu0 %v1625
        %2411 = vmatprep.subr.mxu0 %v1630
        %2412 = vmatpush1.msra.mxu0 %v1629
        %2413 = vmatprep.subr.mxu0 %v1634
        %2414 = vmatpush1.msra.mxu0 %v1633
        %2415 = vmatprep.subr.mxu0 %v1638
        %2416 = vmatpush1.msra.mxu0 %v1637
        %2417 = vmatprep.subr.mxu0 %v1642
        %2418 = vmatpush1.msra.mxu0 %v1641
        %2419 = vmatprep.subr.mxu0 %v1646
        %2420 = vmatpush1.msra.mxu0 %v1645
        %2421 = vmatprep.subr.mxu0 %v1650
        %2422 = vmatpush1.msra.mxu0 %v1649
        %2423 = vmatprep.subr.mxu0 %v1654
        %2424 = vmatpush1.msra.mxu0 %v1653
        %2425 = vmatprep.subr.mxu0 %v1658
        %2426 = vmatpush1.msra.mxu0 %v1657
        %2427 = vmatprep.subr.mxu0 %v1662
        %2428 = vmatpush1.msra.mxu0 %v1661
        %2429 = vmatprep.subr.mxu0 %v1666
        %2430 = vmatpush1.msra.mxu0 %v1665
        %2431 = vmatprep.subr.mxu0 %v1670
        %2432 = vmatpush1.msra.mxu0 %v1669
        %2433 = vmatprep.subr.mxu0 %v1674
        %2434 = vmatpush1.msra.mxu0 %v1673
        %2435 = vmatprep.subr.mxu0 %v1678
        %2436 = vmatpush1.msra.mxu0 %v1677
        %2437 = vmatprep.mubr.f32.mxu0 %v2077
        %2438 = vmatmul.mubr.f32.gmra.mrb[0].mxu0 %v1035
        %v2439 = vpop.f32.mrb[0].mxu0
        %v2440 = vadd.f32 %v2369, %v2439
        %v2441 = vpop.f32.mrb[0].mxu0
        %v2442 = vadd.f32 %v2371, %v2441
        %2443 = vdwg.mxu0
        %2444 = vmatprep.subr.mxu0 %v1682
        %2445 = vmatpush1.msra.mxu0 %v1681
        %2446 = vmatprep.subr.mxu0 %v1686
        %2447 = vmatpush1.msra.mxu0 %v1685
        %2448 = vmatprep.subr.mxu0 %v1690
        %2449 = vmatpush1.msra.mxu0 %v1689
        %2450 = vmatprep.subr.mxu0 %v1694
        %2451 = vmatpush1.msra.mxu0 %v1693
        %2452 = vmatprep.subr.mxu0 %v1698
        %2453 = vmatpush1.msra.mxu0 %v1697
        %2454 = vmatprep.subr.mxu0 %v1702
        %2455 = vmatpush1.msra.mxu0 %v1701
        %2456 = vmatprep.subr.mxu0 %v1706
        %2457 = vmatpush1.msra.mxu0 %v1705
        %2458 = vmatprep.subr.mxu0 %v1710
        %2459 = vmatpush1.msra.mxu0 %v1709
        %2460 = vmatprep.subr.mxu0 %v1714
        %2461 = vmatpush1.msra.mxu0 %v1713
        %2462 = vmatprep.subr.mxu0 %v1718
        %2463 = vmatpush1.msra.mxu0 %v1717
        %2464 = vmatprep.subr.mxu0 %v1722
        %2465 = vmatpush1.msra.mxu0 %v1721
        %2466 = vmatprep.subr.mxu0 %v1726
        %2467 = vmatpush1.msra.mxu0 %v1725
        %2468 = vmatprep.subr.mxu0 %v1730
        %2469 = vmatpush1.msra.mxu0 %v1729
        %2470 = vmatprep.subr.mxu0 %v1734
        %2471 = vmatpush1.msra.mxu0 %v1733
        %2472 = vmatprep.subr.mxu0 %v1738
        %2473 = vmatpush1.msra.mxu0 %v1737
        %2474 = vmatprep.subr.mxu0 %v1742
        %2475 = vmatpush1.msra.mxu0 %v1741
        %2476 = vmatprep.subr.mxu0 %v1746
        %2477 = vmatpush1.msra.mxu0 %v1745
        %2478 = vmatprep.subr.mxu0 %v1750
        %2479 = vmatpush1.msra.mxu0 %v1749
        %2480 = vmatprep.subr.mxu0 %v1754
        %2481 = vmatpush1.msra.mxu0 %v1753
        %2482 = vmatprep.subr.mxu0 %v1758
        %2483 = vmatpush1.msra.mxu0 %v1757
        %2484 = vmatprep.subr.mxu0 %v1762
        %2485 = vmatpush1.msra.mxu0 %v1761
        %2486 = vmatprep.subr.mxu0 %v1766
        %2487 = vmatpush1.msra.mxu0 %v1765
        %2488 = vmatprep.subr.mxu0 %v1770
        %2489 = vmatpush1.msra.mxu0 %v1769
        %2490 = vmatprep.subr.mxu0 %v1774
        %2491 = vmatpush1.msra.mxu0 %v1773
        %2492 = vmatprep.subr.mxu0 %v1778
        %2493 = vmatpush1.msra.mxu0 %v1777
        %2494 = vmatprep.subr.mxu0 %v1782
        %2495 = vmatpush1.msra.mxu0 %v1781
        %2496 = vmatprep.subr.mxu0 %v1786
        %2497 = vmatpush1.msra.mxu0 %v1785
        %2498 = vmatprep.subr.mxu0 %v1790
        %2499 = vmatpush1.msra.mxu0 %v1789
        %2500 = vmatprep.subr.mxu0 %v1794
        %2501 = vmatpush1.msra.mxu0 %v1793
        %2502 = vmatprep.subr.mxu0 %v1798
        %2503 = vmatpush1.msra.mxu0 %v1797
        %2504 = vmatprep.subr.mxu0 %v1802
        %2505 = vmatpush1.msra.mxu0 %v1801
        %2506 = vmatprep.subr.mxu0 %v1806
        %2507 = vmatpush1.msra.mxu0 %v1805
        %2508 = vmatprep.mubr.f32.mxu0 %v2078
        %2509 = vmatmul.mubr.f32.gmra.mrb[0].mxu0 %v1036
        %v2510 = vpop.f32.mrb[0].mxu0
        %v2511 = vadd.f32 %v2440, %v2510
        %v2512 = vpop.f32.mrb[0].mxu0
        %v2513 = vadd.f32 %v2442, %v2512
        %2514 = vdwg.mxu0
        %2515 = vmatprep.subr.mxu0 %v1810
        %2516 = vmatpush1.msra.mxu0 %v1809
        %2517 = vmatprep.subr.mxu0 %v1814
        %2518 = vmatpush1.msra.mxu0 %v1813
        %2519 = vmatprep.subr.mxu0 %v1818
        %2520 = vmatpush1.msra.mxu0 %v1817
        %2521 = vmatprep.subr.mxu0 %v1822
        %2522 = vmatpush1.msra.mxu0 %v1821
        %2523 = vmatprep.subr.mxu0 %v1826
        %2524 = vmatpush1.msra.mxu0 %v1825
        %2525 = vmatprep.subr.mxu0 %v1830
        %2526 = vmatpush1.msra.mxu0 %v1829
        %2527 = vmatprep.subr.mxu0 %v1834
        %2528 = vmatpush1.msra.mxu0 %v1833
        %2529 = vmatprep.subr.mxu0 %v1838
        %2530 = vmatpush1.msra.mxu0 %v1837
        %2531 = vmatprep.subr.mxu0 %v1842
        %2532 = vmatpush1.msra.mxu0 %v1841
        %2533 = vmatprep.subr.mxu0 %v1846
        %2534 = vmatpush1.msra.mxu0 %v1845
        %2535 = vmatprep.subr.mxu0 %v1850
        %2536 = vmatpush1.msra.mxu0 %v1849
        %2537 = vmatprep.subr.mxu0 %v1854
        %2538 = vmatpush1.msra.mxu0 %v1853
        %2539 = vmatprep.subr.mxu0 %v1858
        %2540 = vmatpush1.msra.mxu0 %v1857
        %2541 = vmatprep.subr.mxu0 %v1862
        %2542 = vmatpush1.msra.mxu0 %v1861
        %2543 = vmatprep.subr.mxu0 %v1866
        %2544 = vmatpush1.msra.mxu0 %v1865
        %2545 = vmatprep.subr.mxu0 %v1870
        %2546 = vmatpush1.msra.mxu0 %v1869
        %2547 = vmatprep.subr.mxu0 %v1874
        %2548 = vmatpush1.msra.mxu0 %v1873
        %2549 = vmatprep.subr.mxu0 %v1878
        %2550 = vmatpush1.msra.mxu0 %v1877
        %2551 = vmatprep.subr.mxu0 %v1882
        %2552 = vmatpush1.msra.mxu0 %v1881
        %2553 = vmatprep.subr.mxu0 %v1886
        %2554 = vmatpush1.msra.mxu0 %v1885
        %2555 = vmatprep.subr.mxu0 %v1890
        %2556 = vmatpush1.msra.mxu0 %v1889
        %2557 = vmatprep.subr.mxu0 %v1894
        %2558 = vmatpush1.msra.mxu0 %v1893
        %2559 = vmatprep.subr.mxu0 %v1898
        %2560 = vmatpush1.msra.mxu0 %v1897
        %2561 = vmatprep.subr.mxu0 %v1902
        %2562 = vmatpush1.msra.mxu0 %v1901
        %2563 = vmatprep.subr.mxu0 %v1906
        %2564 = vmatpush1.msra.mxu0 %v1905
        %2565 = vmatprep.subr.mxu0 %v1910
        %2566 = vmatpush1.msra.mxu0 %v1909
        %2567 = vmatprep.subr.mxu0 %v1914
        %2568 = vmatpush1.msra.mxu0 %v1913
        %2569 = vmatprep.subr.mxu0 %v1918
        %2570 = vmatpush1.msra.mxu0 %v1917
        %2571 = vmatprep.subr.mxu0 %v1922
        %2572 = vmatpush1.msra.mxu0 %v1921
        %2573 = vmatprep.subr.mxu0 %v1926
        %2574 = vmatpush1.msra.mxu0 %v1925
        %2575 = vmatprep.subr.mxu0 %v1930
        %2576 = vmatpush1.msra.mxu0 %v1929
        %2577 = vmatprep.subr.mxu0 %v1934
        %2578 = vmatpush1.msra.mxu0 %v1933
        %2579 = vmatprep.mubr.f32.mxu0 %v2079
        %2580 = vmatmul.mubr.f32.gmra.mrb[0].mxu0 %v1037
        %v2581 = vpop.f32.mrb[0].mxu0
        %v2582 = vadd.f32 %v2511, %v2581
        %v2583 = vpop.f32.mrb[0].mxu0
        %v2584 = vadd.f32 %v2513, %v2583
        %2585 = vdwg.mxu0
        %2586 = vmatprep.subr.mxu0 %v1938
        %2587 = vmatpush1.msra.mxu0 %v1937
        %2588 = vmatprep.subr.mxu0 %v1942
        %2589 = vmatpush1.msra.mxu0 %v1941
        %2590 = vmatprep.subr.mxu0 %v1946
        %2591 = vmatpush1.msra.mxu0 %v1945
        %2592 = vmatprep.subr.mxu0 %v1950
        %2593 = vmatpush1.msra.mxu0 %v1949
        %2594 = vmatprep.subr.mxu0 %v1954
        %2595 = vmatpush1.msra.mxu0 %v1953
        %2596 = vmatprep.subr.mxu0 %v1958
        %2597 = vmatpush1.msra.mxu0 %v1957
        %2598 = vmatprep.subr.mxu0 %v1962
        %2599 = vmatpush1.msra.mxu0 %v1961
        %2600 = vmatprep.subr.mxu0 %v1966
        %2601 = vmatpush1.msra.mxu0 %v1965
        %2602 = vmatprep.subr.mxu0 %v1970
        %2603 = vmatpush1.msra.mxu0 %v1969
        %2604 = vmatprep.subr.mxu0 %v1974
        %2605 = vmatpush1.msra.mxu0 %v1973
        %2606 = vmatprep.subr.mxu0 %v1978
        %2607 = vmatpush1.msra.mxu0 %v1977
        %2608 = vmatprep.subr.mxu0 %v1982
        %2609 = vmatpush1.msra.mxu0 %v1981
        %2610 = vmatprep.subr.mxu0 %v1986
        %2611 = vmatpush1.msra.mxu0 %v1985
        %2612 = vmatprep.subr.mxu0 %v1990
        %2613 = vmatpush1.msra.mxu0 %v1989
        %2614 = vmatprep.subr.mxu0 %v1994
        %2615 = vmatpush1.msra.mxu0 %v1993
        %2616 = vmatprep.subr.mxu0 %v1998
        %2617 = vmatpush1.msra.mxu0 %v1997
        %2618 = vmatprep.subr.mxu0 %v2002
        %2619 = vmatpush1.msra.mxu0 %v2001
        %2620 = vmatprep.subr.mxu0 %v2006
        %2621 = vmatpush1.msra.mxu0 %v2005
        %2622 = vmatprep.subr.mxu0 %v2010
        %2623 = vmatpush1.msra.mxu0 %v2009
        %2624 = vmatprep.subr.mxu0 %v2014
        %2625 = vmatpush1.msra.mxu0 %v2013
        %2626 = vmatprep.subr.mxu0 %v2018
        %2627 = vmatpush1.msra.mxu0 %v2017
        %2628 = vmatprep.subr.mxu0 %v2022
        %2629 = vmatpush1.msra.mxu0 %v2021
        %2630 = vmatprep.subr.mxu0 %v2026
        %2631 = vmatpush1.msra.mxu0 %v2025
        %2632 = vmatprep.subr.mxu0 %v2030
        %2633 = vmatpush1.msra.mxu0 %v2029
        %2634 = vmatprep.subr.mxu0 %v2034
        %2635 = vmatpush1.msra.mxu0 %v2033
        %2636 = vmatprep.subr.mxu0 %v2038
        %2637 = vmatpush1.msra.mxu0 %v2037
        %2638 = vmatprep.subr.mxu0 %v2042
        %2639 = vmatpush1.msra.mxu0 %v2041
        %2640 = vmatprep.subr.mxu0 %v2046
        %2641 = vmatpush1.msra.mxu0 %v2045
        %2642 = vmatprep.subr.mxu0 %v2050
        %2643 = vmatpush1.msra.mxu0 %v2049
        %2644 = vmatprep.subr.mxu0 %v2054
        %2645 = vmatpush1.msra.mxu0 %v2053
        %2646 = vmatprep.subr.mxu0 %v2058
        %2647 = vmatpush1.msra.mxu0 %v2057
        %2648 = vmatprep.subr.mxu0 %v2062
        %2649 = vmatpush1.msra.mxu0 %v2061
        %2650 = vmatprep.mubr.f32.mxu0 %v2080
        %2651 = vmatmul.mubr.f32.gmra.mrb[0].mxu0 %v1038
        %v2652 = vpop.f32.mrb[0].mxu0
        %v2653 = vadd.f32 %v2582, %v2652
        %v2654 = vpop.f32.mrb[0].mxu0
        %v2655 = vadd.f32 %v2584, %v2654
        %2656 = vdwg.mxu0
        %2657 = vmatprep.subr.mxu0 %v1044
        %2658 = vmatpush1.msra.mxu0 %v1043
        %2659 = vmatprep.subr.mxu0 %v1048
        %2660 = vmatpush1.msra.mxu0 %v1047
        %2661 = vmatprep.subr.mxu0 %v1052
        %2662 = vmatpush1.msra.mxu0 %v1051
        %2663 = vmatprep.subr.mxu0 %v1056
        %2664 = vmatpush1.msra.mxu0 %v1055
        %2665 = vmatprep.subr.mxu0 %v1060
        %2666 = vmatpush1.msra.mxu0 %v1059
        %2667 = vmatprep.subr.mxu0 %v1064
        %2668 = vmatpush1.msra.mxu0 %v1063
        %2669 = vmatprep.subr.mxu0 %v1068
        %2670 = vmatpush1.msra.mxu0 %v1067
        %2671 = vmatprep.subr.mxu0 %v1072
        %2672 = vmatpush1.msra.mxu0 %v1071
        %2673 = vmatprep.subr.mxu0 %v1076
        %2674 = vmatpush1.msra.mxu0 %v1075
        %2675 = vmatprep.subr.mxu0 %v1080
        %2676 = vmatpush1.msra.mxu0 %v1079
        %2677 = vmatprep.subr.mxu0 %v1084
        %2678 = vmatpush1.msra.mxu0 %v1083
        %2679 = vmatprep.subr.mxu0 %v1088
        %2680 = vmatpush1.msra.mxu0 %v1087
        %2681 = vmatprep.subr.mxu0 %v1092
        %2682 = vmatpush1.msra.mxu0 %v1091
        %2683 = vmatprep.subr.mxu0 %v1096
        %2684 = vmatpush1.msra.mxu0 %v1095
        %2685 = vmatprep.subr.mxu0 %v1100
        %2686 = vmatpush1.msra.mxu0 %v1099
        %2687 = vmatprep.subr.mxu0 %v1104
        %2688 = vmatpush1.msra.mxu0 %v1103
        %2689 = vmatprep.subr.mxu0 %v1108
        %2690 = vmatpush1.msra.mxu0 %v1107
        %2691 = vmatprep.subr.mxu0 %v1112
        %2692 = vmatpush1.msra.mxu0 %v1111
        %2693 = vmatprep.subr.mxu0 %v1116
        %2694 = vmatpush1.msra.mxu0 %v1115
        %2695 = vmatprep.subr.mxu0 %v1120
        %2696 = vmatpush1.msra.mxu0 %v1119
        %2697 = vmatprep.subr.mxu0 %v1124
        %2698 = vmatpush1.msra.mxu0 %v1123
        %2699 = vmatprep.subr.mxu0 %v1128
        %2700 = vmatpush1.msra.mxu0 %v1127
        %2701 = vmatprep.subr.mxu0 %v1132
        %2702 = vmatpush1.msra.mxu0 %v1131
        %2703 = vmatprep.subr.mxu0 %v1136
        %2704 = vmatpush1.msra.mxu0 %v1135
        %2705 = vmatprep.subr.mxu0 %v1140
        %2706 = vmatpush1.msra.mxu0 %v1139
        %2707 = vmatprep.subr.mxu0 %v1144
        %2708 = vmatpush1.msra.mxu0 %v1143
        %2709 = vmatprep.subr.mxu0 %v1148
        %2710 = vmatpush1.msra.mxu0 %v1147
        %2711 = vmatprep.subr.mxu0 %v1152
        %2712 = vmatpush1.msra.mxu0 %v1151
        %2713 = vmatprep.subr.mxu0 %v1156
        %2714 = vmatpush1.msra.mxu0 %v1155
        %2715 = vmatprep.subr.mxu0 %v1160
        %2716 = vmatpush1.msra.mxu0 %v1159
        %2717 = vmatprep.subr.mxu0 %v1164
        %2718 = vmatpush1.msra.mxu0 %v1163
        %2719 = vmatprep.subr.mxu0 %v1168
        %2720 = vmatpush1.msra.mxu0 %v1167
        %2721 = vmatprep.mubr.f32.mxu0 %v2073
        %2722 = vmatmul.mubr.f32.gmra.mrb[0].mxu0 %v1031
        %v2723 = vpop.f32.mrb[0].mxu0
        %v2724 = vadd.f32 0.0, %v2723
        %v2725 = vpop.f32.mrb[0].mxu0
        %v2726 = vadd.f32 0.0, %v2725
        %2727 = vdwg.mxu0
        %2728 = vmatprep.subr.mxu0 %v1172
        %2729 = vmatpush1.msra.mxu0 %v1171
        %2730 = vmatprep.subr.mxu0 %v1176
        %2731 = vmatpush1.msra.mxu0 %v1175
        %2732 = vmatprep.subr.mxu0 %v1180
        %2733 = vmatpush1.msra.mxu0 %v1179
        %2734 = vmatprep.subr.mxu0 %v1184
        %2735 = vmatpush1.msra.mxu0 %v1183
        %2736 = vmatprep.subr.mxu0 %v1188
        %2737 = vmatpush1.msra.mxu0 %v1187
        %2738 = vmatprep.subr.mxu0 %v1192
        %2739 = vmatpush1.msra.mxu0 %v1191
        %2740 = vmatprep.subr.mxu0 %v1196
        %2741 = vmatpush1.msra.mxu0 %v1195
        %2742 = vmatprep.subr.mxu0 %v1200
        %2743 = vmatpush1.msra.mxu0 %v1199
        %2744 = vmatprep.subr.mxu0 %v1204
        %2745 = vmatpush1.msra.mxu0 %v1203
        %2746 = vmatprep.subr.mxu0 %v1208
        %2747 = vmatpush1.msra.mxu0 %v1207
        %2748 = vmatprep.subr.mxu0 %v1212
        %2749 = vmatpush1.msra.mxu0 %v1211
        %2750 = vmatprep.subr.mxu0 %v1216
        %2751 = vmatpush1.msra.mxu0 %v1215
        %2752 = vmatprep.subr.mxu0 %v1220
        %2753 = vmatpush1.msra.mxu0 %v1219
        %2754 = vmatprep.subr.mxu0 %v1224
        %2755 = vmatpush1.msra.mxu0 %v1223
        %2756 = vmatprep.subr.mxu0 %v1228
        %2757 = vmatpush1.msra.mxu0 %v1227
        %2758 = vmatprep.subr.mxu0 %v1232
        %2759 = vmatpush1.msra.mxu0 %v1231
        %2760 = vmatprep.subr.mxu0 %v1236
        %2761 = vmatpush1.msra.mxu0 %v1235
        %2762 = vmatprep.subr.mxu0 %v1240
        %2763 = vmatpush1.msra.mxu0 %v1239
        %2764 = vmatprep.subr.mxu0 %v1244
        %2765 = vmatpush1.msra.mxu0 %v1243
        %2766 = vmatprep.subr.mxu0 %v1248
        %2767 = vmatpush1.msra.mxu0 %v1247
        %2768 = vmatprep.subr.mxu0 %v1252
        %2769 = vmatpush1.msra.mxu0 %v1251
        %2770 = vmatprep.subr.mxu0 %v1256
        %2771 = vmatpush1.msra.mxu0 %v1255
        %2772 = vmatprep.subr.mxu0 %v1260
        %2773 = vmatpush1.msra.mxu0 %v1259
        %2774 = vmatprep.subr.mxu0 %v1264
        %2775 = vmatpush1.msra.mxu0 %v1263
        %2776 = vmatprep.subr.mxu0 %v1268
        %2777 = vmatpush1.msra.mxu0 %v1267
        %2778 = vmatprep.subr.mxu0 %v1272
        %2779 = vmatpush1.msra.mxu0 %v1271
        %2780 = vmatprep.subr.mxu0 %v1276
        %2781 = vmatpush1.msra.mxu0 %v1275
        %2782 = vmatprep.subr.mxu0 %v1280
        %2783 = vmatpush1.msra.mxu0 %v1279
        %2784 = vmatprep.subr.mxu0 %v1284
        %2785 = vmatpush1.msra.mxu0 %v1283
        %2786 = vmatprep.subr.mxu0 %v1288
        %2787 = vmatpush1.msra.mxu0 %v1287
        %2788 = vmatprep.subr.mxu0 %v1292
        %2789 = vmatpush1.msra.mxu0 %v1291
        %2790 = vmatprep.subr.mxu0 %v1296
        %2791 = vmatpush1.msra.mxu0 %v1295
        %2792 = vmatprep.mubr.f32.mxu0 %v2074
        %2793 = vmatmul.mubr.f32.gmra.mrb[0].mxu0 %v1032
        %v2794 = vpop.f32.mrb[0].mxu0
        %v2795 = vadd.f32 %v2724, %v2794
        %v2796 = vpop.f32.mrb[0].mxu0
        %v2797 = vadd.f32 %v2726, %v2796
        %2798 = vdwg.mxu0
        %2799 = vmatprep.subr.mxu0 %v1300
        %2800 = vmatpush1.msra.mxu0 %v1299
        %2801 = vmatprep.subr.mxu0 %v1304
        %2802 = vmatpush1.msra.mxu0 %v1303
        %2803 = vmatprep.subr.mxu0 %v1308
        %2804 = vmatpush1.msra.mxu0 %v1307
        %2805 = vmatprep.subr.mxu0 %v1312
        %2806 = vmatpush1.msra.mxu0 %v1311
        %2807 = vmatprep.subr.mxu0 %v1316
        %2808 = vmatpush1.msra.mxu0 %v1315
        %2809 = vmatprep.subr.mxu0 %v1320
        %2810 = vmatpush1.msra.mxu0 %v1319
        %2811 = vmatprep.subr.mxu0 %v1324
        %2812 = vmatpush1.msra.mxu0 %v1323
        %2813 = vmatprep.subr.mxu0 %v1328
        %2814 = vmatpush1.msra.mxu0 %v1327
        %2815 = vmatprep.subr.mxu0 %v1332
        %2816 = vmatpush1.msra.mxu0 %v1331
        %2817 = vmatprep.subr.mxu0 %v1336
        %2818 = vmatpush1.msra.mxu0 %v1335
        %2819 = vmatprep.subr.mxu0 %v1340
        %2820 = vmatpush1.msra.mxu0 %v1339
        %2821 = vmatprep.subr.mxu0 %v1344
        %2822 = vmatpush1.msra.mxu0 %v1343
        %2823 = vmatprep.subr.mxu0 %v1348
        %2824 = vmatpush1.msra.mxu0 %v1347
        %2825 = vmatprep.subr.mxu0 %v1352
        %2826 = vmatpush1.msra.mxu0 %v1351
        %2827 = vmatprep.subr.mxu0 %v1356
        %2828 = vmatpush1.msra.mxu0 %v1355
        %2829 = vmatprep.subr.mxu0 %v1360
        %2830 = vmatpush1.msra.mxu0 %v1359
        %2831 = vmatprep.subr.mxu0 %v1364
        %2832 = vmatpush1.msra.mxu0 %v1363
        %2833 = vmatprep.subr.mxu0 %v1368
        %2834 = vmatpush1.msra.mxu0 %v1367
        %2835 = vmatprep.subr.mxu0 %v1372
        %2836 = vmatpush1.msra.mxu0 %v1371
        %2837 = vmatprep.subr.mxu0 %v1376
        %2838 = vmatpush1.msra.mxu0 %v1375
        %2839 = vmatprep.subr.mxu0 %v1380
        %2840 = vmatpush1.msra.mxu0 %v1379
        %2841 = vmatprep.subr.mxu0 %v1384
        %2842 = vmatpush1.msra.mxu0 %v1383
        %2843 = vmatprep.subr.mxu0 %v1388
        %2844 = vmatpush1.msra.mxu0 %v1387
        %2845 = vmatprep.subr.mxu0 %v1392
        %2846 = vmatpush1.msra.mxu0 %v1391
        %2847 = vmatprep.subr.mxu0 %v1396
        %2848 = vmatpush1.msra.mxu0 %v1395
        %2849 = vmatprep.subr.mxu0 %v1400
        %2850 = vmatpush1.msra.mxu0 %v1399
        %2851 = vmatprep.subr.mxu0 %v1404
        %2852 = vmatpush1.msra.mxu0 %v1403
        %2853 = vmatprep.subr.mxu0 %v1408
        %2854 = vmatpush1.msra.mxu0 %v1407
        %2855 = vmatprep.subr.mxu0 %v1412
        %2856 = vmatpush1.msra.mxu0 %v1411
        %2857 = vmatprep.subr.mxu0 %v1416
        %2858 = vmatpush1.msra.mxu0 %v1415
        %2859 = vmatprep.subr.mxu0 %v1420
        %2860 = vmatpush1.msra.mxu0 %v1419
        %2861 = vmatprep.subr.mxu0 %v1424
        %2862 = vmatpush1.msra.mxu0 %v1423
        %2863 = vmatprep.mubr.f32.mxu0 %v2075
        %2864 = vmatmul.mubr.f32.gmra.mrb[0].mxu0 %v1033
        %v2865 = vpop.f32.mrb[0].mxu0
        %v2866 = vadd.f32 %v2795, %v2865
        %v2867 = vpop.f32.mrb[0].mxu0
        %v2868 = vadd.f32 %v2797, %v2867
        %2869 = vdwg.mxu0
        %2870 = vmatprep.subr.mxu0 %v1428
        %2871 = vmatpush1.msra.mxu0 %v1427
        %2872 = vmatprep.subr.mxu0 %v1432
        %2873 = vmatpush1.msra.mxu0 %v1431
        %2874 = vmatprep.subr.mxu0 %v1436
        %2875 = vmatpush1.msra.mxu0 %v1435
        %2876 = vmatprep.subr.mxu0 %v1440
        %2877 = vmatpush1.msra.mxu0 %v1439
        %2878 = vmatprep.subr.mxu0 %v1444
        %2879 = vmatpush1.msra.mxu0 %v1443
        %2880 = vmatprep.subr.mxu0 %v1448
        %2881 = vmatpush1.msra.mxu0 %v1447
        %2882 = vmatprep.subr.mxu0 %v1452
        %2883 = vmatpush1.msra.mxu0 %v1451
        %2884 = vmatprep.subr.mxu0 %v1456
        %2885 = vmatpush1.msra.mxu0 %v1455
        %2886 = vmatprep.subr.mxu0 %v1460
        %2887 = vmatpush1.msra.mxu0 %v1459
        %2888 = vmatprep.subr.mxu0 %v1464
        %2889 = vmatpush1.msra.mxu0 %v1463
        %2890 = vmatprep.subr.mxu0 %v1468
        %2891 = vmatpush1.msra.mxu0 %v1467
        %2892 = vmatprep.subr.mxu0 %v1472
        %2893 = vmatpush1.msra.mxu0 %v1471
        %2894 = vmatprep.subr.mxu0 %v1476
        %2895 = vmatpush1.msra.mxu0 %v1475
        %2896 = vmatprep.subr.mxu0 %v1480
        %2897 = vmatpush1.msra.mxu0 %v1479
        %2898 = vmatprep.subr.mxu0 %v1484
        %2899 = vmatpush1.msra.mxu0 %v1483
        %2900 = vmatprep.subr.mxu0 %v1488
        %2901 = vmatpush1.msra.mxu0 %v1487
        %2902 = vmatprep.subr.mxu0 %v1492
        %2903 = vmatpush1.msra.mxu0 %v1491
        %2904 = vmatprep.subr.mxu0 %v1496
        %2905 = vmatpush1.msra.mxu0 %v1495
        %2906 = vmatprep.subr.mxu0 %v1500
        %2907 = vmatpush1.msra.mxu0 %v1499
        %2908 = vmatprep.subr.mxu0 %v1504
        %2909 = vmatpush1.msra.mxu0 %v1503
        %2910 = vmatprep.subr.mxu0 %v1508
        %2911 = vmatpush1.msra.mxu0 %v1507
        %2912 = vmatprep.subr.mxu0 %v1512
        %2913 = vmatpush1.msra.mxu0 %v1511
        %2914 = vmatprep.subr.mxu0 %v1516
        %2915 = vmatpush1.msra.mxu0 %v1515
        %2916 = vmatprep.subr.mxu0 %v1520
        %2917 = vmatpush1.msra.mxu0 %v1519
        %2918 = vmatprep.subr.mxu0 %v1524
        %2919 = vmatpush1.msra.mxu0 %v1523
        %2920 = vmatprep.subr.mxu0 %v1528
        %2921 = vmatpush1.msra.mxu0 %v1527
        %2922 = vmatprep.subr.mxu0 %v1532
        %2923 = vmatpush1.msra.mxu0 %v1531
        %2924 = vmatprep.subr.mxu0 %v1536
        %2925 = vmatpush1.msra.mxu0 %v1535
        %2926 = vmatprep.subr.mxu0 %v1540
        %2927 = vmatpush1.msra.mxu0 %v1539
        %2928 = vmatprep.subr.mxu0 %v1544
        %2929 = vmatpush1.msra.mxu0 %v1543
        %2930 = vmatprep.subr.mxu0 %v1548
        %2931 = vmatpush1.msra.mxu0 %v1547
        %2932 = vmatprep.subr.mxu0 %v1552
        %2933 = vmatpush1.msra.mxu0 %v1551
        %2934 = vmatprep.mubr.f32.mxu0 %v2076
        %2935 = vmatmul.mubr.f32.gmra.mrb[0].mxu0 %v1034
        %v2936 = vpop.f32.mrb[0].mxu0
        %v2937 = vadd.f32 %v2866, %v2936
        %v2938 = vpop.f32.mrb[0].mxu0
        %v2939 = vadd.f32 %v2868, %v2938
        %2940 = vdwg.mxu0
        %2941 = vmatprep.subr.mxu0 %v1556
        %2942 = vmatpush1.msra.mxu0 %v1555
        %2943 = vmatprep.subr.mxu0 %v1560
        %2944 = vmatpush1.msra.mxu0 %v1559
        %2945 = vmatprep.subr.mxu0 %v1564
        %2946 = vmatpush1.msra.mxu0 %v1563
        %2947 = vmatprep.subr.mxu0 %v1568
        %2948 = vmatpush1.msra.mxu0 %v1567
        %2949 = vmatprep.subr.mxu0 %v1572
        %2950 = vmatpush1.msra.mxu0 %v1571
        %2951 = vmatprep.subr.mxu0 %v1576
        %2952 = vmatpush1.msra.mxu0 %v1575
        %2953 = vmatprep.subr.mxu0 %v1580
        %2954 = vmatpush1.msra.mxu0 %v1579
        %2955 = vmatprep.subr.mxu0 %v1584
        %2956 = vmatpush1.msra.mxu0 %v1583
        %2957 = vmatprep.subr.mxu0 %v1588
        %2958 = vmatpush1.msra.mxu0 %v1587
        %2959 = vmatprep.subr.mxu0 %v1592
        %2960 = vmatpush1.msra.mxu0 %v1591
        %2961 = vmatprep.subr.mxu0 %v1596
        %2962 = vmatpush1.msra.mxu0 %v1595
        %2963 = vmatprep.subr.mxu0 %v1600
        %2964 = vmatpush1.msra.mxu0 %v1599
        %2965 = vmatprep.subr.mxu0 %v1604
        %2966 = vmatpush1.msra.mxu0 %v1603
        %2967 = vmatprep.subr.mxu0 %v1608
        %2968 = vmatpush1.msra.mxu0 %v1607
        %2969 = vmatprep.subr.mxu0 %v1612
        %2970 = vmatpush1.msra.mxu0 %v1611
        %2971 = vmatprep.subr.mxu0 %v1616
        %2972 = vmatpush1.msra.mxu0 %v1615
        %2973 = vmatprep.subr.mxu0 %v1620
        %2974 = vmatpush1.msra.mxu0 %v1619
        %2975 = vmatprep.subr.mxu0 %v1624
        %2976 = vmatpush1.msra.mxu0 %v1623
        %2977 = vmatprep.subr.mxu0 %v1628
        %2978 = vmatpush1.msra.mxu0 %v1627
        %2979 = vmatprep.subr.mxu0 %v1632
        %2980 = vmatpush1.msra.mxu0 %v1631
        %2981 = vmatprep.subr.mxu0 %v1636
        %2982 = vmatpush1.msra.mxu0 %v1635
        %2983 = vmatprep.subr.mxu0 %v1640
        %2984 = vmatpush1.msra.mxu0 %v1639
        %2985 = vmatprep.subr.mxu0 %v1644
        %2986 = vmatpush1.msra.mxu0 %v1643
        %2987 = vmatprep.subr.mxu0 %v1648
        %2988 = vmatpush1.msra.mxu0 %v1647
        %2989 = vmatprep.subr.mxu0 %v1652
        %2990 = vmatpush1.msra.mxu0 %v1651
        %2991 = vmatprep.subr.mxu0 %v1656
        %2992 = vmatpush1.msra.mxu0 %v1655
        %2993 = vmatprep.subr.mxu0 %v1660
        %2994 = vmatpush1.msra.mxu0 %v1659
        %2995 = vmatprep.subr.mxu0 %v1664
        %2996 = vmatpush1.msra.mxu0 %v1663
        %2997 = vmatprep.subr.mxu0 %v1668
        %2998 = vmatpush1.msra.mxu0 %v1667
        %2999 = vmatprep.subr.mxu0 %v1672
        %3000 = vmatpush1.msra.mxu0 %v1671
        %3001 = vmatprep.subr.mxu0 %v1676
        %3002 = vmatpush1.msra.mxu0 %v1675
        %3003 = vmatprep.subr.mxu0 %v1680
        %3004 = vmatpush1.msra.mxu0 %v1679
        %3005 = vmatprep.mubr.f32.mxu0 %v2077
        %3006 = vmatmul.mubr.f32.gmra.mrb[0].mxu0 %v1035
        %v3007 = vpop.f32.mrb[0].mxu0
        %v3008 = vadd.f32 %v2937, %v3007
        %v3009 = vpop.f32.mrb[0].mxu0
        %v3010 = vadd.f32 %v2939, %v3009
        %3011 = vdwg.mxu0
        %3012 = vmatprep.subr.mxu0 %v1684
        %3013 = vmatpush1.msra.mxu0 %v1683
        %3014 = vmatprep.subr.mxu0 %v1688
        %3015 = vmatpush1.msra.mxu0 %v1687
        %3016 = vmatprep.subr.mxu0 %v1692
        %3017 = vmatpush1.msra.mxu0 %v1691
        %3018 = vmatprep.subr.mxu0 %v1696
        %3019 = vmatpush1.msra.mxu0 %v1695
        %3020 = vmatprep.subr.mxu0 %v1700
        %3021 = vmatpush1.msra.mxu0 %v1699
        %3022 = vmatprep.subr.mxu0 %v1704
        %3023 = vmatpush1.msra.mxu0 %v1703
        %3024 = vmatprep.subr.mxu0 %v1708
        %3025 = vmatpush1.msra.mxu0 %v1707
        %3026 = vmatprep.subr.mxu0 %v1712
        %3027 = vmatpush1.msra.mxu0 %v1711
        %3028 = vmatprep.subr.mxu0 %v1716
        %3029 = vmatpush1.msra.mxu0 %v1715
        %3030 = vmatprep.subr.mxu0 %v1720
        %3031 = vmatpush1.msra.mxu0 %v1719
        %3032 = vmatprep.subr.mxu0 %v1724
        %3033 = vmatpush1.msra.mxu0 %v1723
        %3034 = vmatprep.subr.mxu0 %v1728
        %3035 = vmatpush1.msra.mxu0 %v1727
        %3036 = vmatprep.subr.mxu0 %v1732
        %3037 = vmatpush1.msra.mxu0 %v1731
        %3038 = vmatprep.subr.mxu0 %v1736
        %3039 = vmatpush1.msra.mxu0 %v1735
        %3040 = vmatprep.subr.mxu0 %v1740
        %3041 = vmatpush1.msra.mxu0 %v1739
        %3042 = vmatprep.subr.mxu0 %v1744
        %3043 = vmatpush1.msra.mxu0 %v1743
        %3044 = vmatprep.subr.mxu0 %v1748
        %3045 = vmatpush1.msra.mxu0 %v1747
        %3046 = vmatprep.subr.mxu0 %v1752
        %3047 = vmatpush1.msra.mxu0 %v1751
        %3048 = vmatprep.subr.mxu0 %v1756
        %3049 = vmatpush1.msra.mxu0 %v1755
        %3050 = vmatprep.subr.mxu0 %v1760
        %3051 = vmatpush1.msra.mxu0 %v1759
        %3052 = vmatprep.subr.mxu0 %v1764
        %3053 = vmatpush1.msra.mxu0 %v1763
        %3054 = vmatprep.subr.mxu0 %v1768
        %3055 = vmatpush1.msra.mxu0 %v1767
        %3056 = vmatprep.subr.mxu0 %v1772
        %3057 = vmatpush1.msra.mxu0 %v1771
        %3058 = vmatprep.subr.mxu0 %v1776
        %3059 = vmatpush1.msra.mxu0 %v1775
        %3060 = vmatprep.subr.mxu0 %v1780
        %3061 = vmatpush1.msra.mxu0 %v1779
        %3062 = vmatprep.subr.mxu0 %v1784
        %3063 = vmatpush1.msra.mxu0 %v1783
        %3064 = vmatprep.subr.mxu0 %v1788
        %3065 = vmatpush1.msra.mxu0 %v1787
        %3066 = vmatprep.subr.mxu0 %v1792
        %3067 = vmatpush1.msra.mxu0 %v1791
        %3068 = vmatprep.subr.mxu0 %v1796
        %3069 = vmatpush1.msra.mxu0 %v1795
        %3070 = vmatprep.subr.mxu0 %v1800
        %3071 = vmatpush1.msra.mxu0 %v1799
        %3072 = vmatprep.subr.mxu0 %v1804
        %3073 = vmatpush1.msra.mxu0 %v1803
        %3074 = vmatprep.subr.mxu0 %v1808
        %3075 = vmatpush1.msra.mxu0 %v1807
        %3076 = vmatprep.mubr.f32.mxu0 %v2078
        %3077 = vmatmul.mubr.f32.gmra.mrb[0].mxu0 %v1036
        %v3078 = vpop.f32.mrb[0].mxu0
        %v3079 = vadd.f32 %v3008, %v3078
        %v3080 = vpop.f32.mrb[0].mxu0
        %v3081 = vadd.f32 %v3010, %v3080
        %3082 = vdwg.mxu0
        %3083 = vmatprep.subr.mxu0 %v1812
        %3084 = vmatpush1.msra.mxu0 %v1811
        %3085 = vmatprep.subr.mxu0 %v1816
        %3086 = vmatpush1.msra.mxu0 %v1815
        %3087 = vmatprep.subr.mxu0 %v1820
        %3088 = vmatpush1.msra.mxu0 %v1819
        %3089 = vmatprep.subr.mxu0 %v1824
        %3090 = vmatpush1.msra.mxu0 %v1823
        %3091 = vmatprep.subr.mxu0 %v1828
        %3092 = vmatpush1.msra.mxu0 %v1827
        %3093 = vmatprep.subr.mxu0 %v1832
        %3094 = vmatpush1.msra.mxu0 %v1831
        %3095 = vmatprep.subr.mxu0 %v1836
        %3096 = vmatpush1.msra.mxu0 %v1835
        %3097 = vmatprep.subr.mxu0 %v1840
        %3098 = vmatpush1.msra.mxu0 %v1839
        %3099 = vmatprep.subr.mxu0 %v1844
        %3100 = vmatpush1.msra.mxu0 %v1843
        %3101 = vmatprep.subr.mxu0 %v1848
        %3102 = vmatpush1.msra.mxu0 %v1847
        %3103 = vmatprep.subr.mxu0 %v1852
        %3104 = vmatpush1.msra.mxu0 %v1851
        %3105 = vmatprep.subr.mxu0 %v1856
        %3106 = vmatpush1.msra.mxu0 %v1855
        %3107 = vmatprep.subr.mxu0 %v1860
        %3108 = vmatpush1.msra.mxu0 %v1859
        %3109 = vmatprep.subr.mxu0 %v1864
        %3110 = vmatpush1.msra.mxu0 %v1863
        %3111 = vmatprep.subr.mxu0 %v1868
        %3112 = vmatpush1.msra.mxu0 %v1867
        %3113 = vmatprep.subr.mxu0 %v1872
        %3114 = vmatpush1.msra.mxu0 %v1871
        %3115 = vmatprep.subr.mxu0 %v1876
        %3116 = vmatpush1.msra.mxu0 %v1875
        %3117 = vmatprep.subr.mxu0 %v1880
        %3118 = vmatpush1.msra.mxu0 %v1879
        %3119 = vmatprep.subr.mxu0 %v1884
        %3120 = vmatpush1.msra.mxu0 %v1883
        %3121 = vmatprep.subr.mxu0 %v1888
        %3122 = vmatpush1.msra.mxu0 %v1887
        %3123 = vmatprep.subr.mxu0 %v1892
        %3124 = vmatpush1.msra.mxu0 %v1891
        %3125 = vmatprep.subr.mxu0 %v1896
        %3126 = vmatpush1.msra.mxu0 %v1895
        %3127 = vmatprep.subr.mxu0 %v1900
        %3128 = vmatpush1.msra.mxu0 %v1899
        %3129 = vmatprep.subr.mxu0 %v1904
        %3130 = vmatpush1.msra.mxu0 %v1903
        %3131 = vmatprep.subr.mxu0 %v1908
        %3132 = vmatpush1.msra.mxu0 %v1907
        %3133 = vmatprep.subr.mxu0 %v1912
        %3134 = vmatpush1.msra.mxu0 %v1911
        %3135 = vmatprep.subr.mxu0 %v1916
        %3136 = vmatpush1.msra.mxu0 %v1915
        %3137 = vmatprep.subr.mxu0 %v1920
        %3138 = vmatpush1.msra.mxu0 %v1919
        %3139 = vmatprep.subr.mxu0 %v1924
        %3140 = vmatpush1.msra.mxu0 %v1923
        %3141 = vmatprep.subr.mxu0 %v1928
        %3142 = vmatpush1.msra.mxu0 %v1927
        %3143 = vmatprep.subr.mxu0 %v1932
        %3144 = vmatpush1.msra.mxu0 %v1931
        %3145 = vmatprep.subr.mxu0 %v1936
        %3146 = vmatpush1.msra.mxu0 %v1935
        %3147 = vmatprep.mubr.f32.mxu0 %v2079
        %3148 = vmatmul.mubr.f32.gmra.mrb[0].mxu0 %v1037
        %v3149 = vpop.f32.mrb[0].mxu0
        %v3150 = vadd.f32 %v3079, %v3149
        %v3151 = vpop.f32.mrb[0].mxu0
        %v3152 = vadd.f32 %v3081, %v3151
        %3153 = vdwg.mxu0
        %3154 = vmatprep.subr.mxu0 %v1940
        %3155 = vmatpush1.msra.mxu0 %v1939
        %3156 = vmatprep.subr.mxu0 %v1944
        %3157 = vmatpush1.msra.mxu0 %v1943
        %3158 = vmatprep.subr.mxu0 %v1948
        %3159 = vmatpush1.msra.mxu0 %v1947
        %3160 = vmatprep.subr.mxu0 %v1952
        %3161 = vmatpush1.msra.mxu0 %v1951
        %3162 = vmatprep.subr.mxu0 %v1956
        %3163 = vmatpush1.msra.mxu0 %v1955
        %3164 = vmatprep.subr.mxu0 %v1960
        %3165 = vmatpush1.msra.mxu0 %v1959
        %3166 = vmatprep.subr.mxu0 %v1964
        %3167 = vmatpush1.msra.mxu0 %v1963
        %3168 = vmatprep.subr.mxu0 %v1968
        %3169 = vmatpush1.msra.mxu0 %v1967
        %3170 = vmatprep.subr.mxu0 %v1972
        %3171 = vmatpush1.msra.mxu0 %v1971
        %3172 = vmatprep.subr.mxu0 %v1976
        %3173 = vmatpush1.msra.mxu0 %v1975
        %3174 = vmatprep.subr.mxu0 %v1980
        %3175 = vmatpush1.msra.mxu0 %v1979
        %3176 = vmatprep.subr.mxu0 %v1984
        %3177 = vmatpush1.msra.mxu0 %v1983
        %3178 = vmatprep.subr.mxu0 %v1988
        %3179 = vmatpush1.msra.mxu0 %v1987
        %3180 = vmatprep.subr.mxu0 %v1992
        %3181 = vmatpush1.msra.mxu0 %v1991
        %3182 = vmatprep.subr.mxu0 %v1996
        %3183 = vmatpush1.msra.mxu0 %v1995
        %3184 = vmatprep.subr.mxu0 %v2000
        %3185 = vmatpush1.msra.mxu0 %v1999
        %3186 = vmatprep.subr.mxu0 %v2004
        %3187 = vmatpush1.msra.mxu0 %v2003
        %3188 = vmatprep.subr.mxu0 %v2008
        %3189 = vmatpush1.msra.mxu0 %v2007
        %3190 = vmatprep.subr.mxu0 %v2012
        %3191 = vmatpush1.msra.mxu0 %v2011
        %3192 = vmatprep.subr.mxu0 %v2016
        %3193 = vmatpush1.msra.mxu0 %v2015
        %3194 = vmatprep.subr.mxu0 %v2020
        %3195 = vmatpush1.msra.mxu0 %v2019
        %3196 = vmatprep.subr.mxu0 %v2024
        %3197 = vmatpush1.msra.mxu0 %v2023
        %3198 = vmatprep.subr.mxu0 %v2028
        %3199 = vmatpush1.msra.mxu0 %v2027
        %3200 = vmatprep.subr.mxu0 %v2032
        %3201 = vmatpush1.msra.mxu0 %v2031
        %3202 = vmatprep.subr.mxu0 %v2036
        %3203 = vmatpush1.msra.mxu0 %v2035
        %3204 = vmatprep.subr.mxu0 %v2040
        %3205 = vmatpush1.msra.mxu0 %v2039
        %3206 = vmatprep.subr.mxu0 %v2044
        %3207 = vmatpush1.msra.mxu0 %v2043
        %3208 = vmatprep.subr.mxu0 %v2048
        %3209 = vmatpush1.msra.mxu0 %v2047
        %3210 = vmatprep.subr.mxu0 %v2052
        %3211 = vmatpush1.msra.mxu0 %v2051
        %3212 = vmatprep.subr.mxu0 %v2056
        %3213 = vmatpush1.msra.mxu0 %v2055
        %3214 = vmatprep.subr.mxu0 %v2060
        %3215 = vmatpush1.msra.mxu0 %v2059
        %3216 = vmatprep.subr.mxu0 %v2064
        %3217 = vmatpush1.msra.mxu0 %v2063
        %3218 = vmatprep.mubr.f32.mxu0 %v2080
        %3219 = vmatmul.mubr.f32.gmra.mrb[0].mxu0 %v1038
        %v3220 = vpop.f32.mrb[0].mxu0
        %v3221 = vadd.f32 %v3150, %v3220
        %v3222 = vpop.f32.mrb[0].mxu0
        %v3223 = vadd.f32 %v3152, %v3222
        %3224 = vdwg.mxu0
        %v3229 = vcombine.low %v2653, %v2655
        %v3230 = vcombine.low %v3221, %v3223
        %v3233 = vadd.f32 %v1039, %v3229
        %v3234 = vadd.f32 %v1040, %v3230
        %3235 = vst [vmem:[#allocation2] sm:$0xff] %v3233
        %3236 = vst [vmem:[#allocation2 + $0x8] sm:$0xff] %v3234
        %p3237 = scmp.eq.s32.totalorder %s25, 7
        // Predicated region
        $region69: #{discriminator_forward_pallas.5} parent=59 // pred_check
          %p3238 = pneg %p3237
        $region70: #{discriminator_forward_pallas.5} parent=59 // pred_check_branch
          %3240 = sbr.rel (%p3238) target = $region72
        $region71: #{discriminator_forward_pallas.5} parent=59 // pred_region
          %v3241 = vld [vmem:[#allocation2] sm:$0xff]
          %v3242 = vld [vmem:[#allocation2 + $0x8] sm:$0xff]
          %v3243 = vld [vmem:[%s7] sm:$0xf]
          %v3245 = vlaneseq
          %v3246 = vshrl.u32 %v3245, 7
          %v3247 = vsub.s32 0, %v3246
          %v3248 = vrot.slane %v3243, %v3247
          %v3249 = vlaneseq
          %v3250 = vshrl.u32 %v3249, 7
          %v3251 = vsub.s32 1, %v3250
          %v3252 = vrot.slane %v3243, %v3251
          %v3253 = vlaneseq
          %v3254 = vshrl.u32 %v3253, 7
          %v3255 = vsub.s32 2, %v3254
          %v3256 = vrot.slane %v3243, %v3255
          %v3257 = vlaneseq
          %v3258 = vshrl.u32 %v3257, 7
          %v3259 = vsub.s32 3, %v3258
          %v3260 = vrot.slane %v3243, %v3259
          %v3261 = vcombine.low %v3248, %v3252
          %v3262 = vcombine.low %v3256, %v3260
          %v3265 = vadd.f32 %v3241, %v3261
          %v3266 = vadd.f32 %v3242, %v3262
          %v3269 = vcombine.high %v3265, %v3265
          %v3270 = vcombine.high %v3266, %v3266
          %vm3273 = vcmask 1043456
          %v3274 = vsel %vm3273, %v3265, 0.0
          %v3275 = vrot.slane %v3274, 4
          %v3276 = vadd.f32 %v3274, %v3275
          %v3277 = vrot.slane %v3276, 2
          %v3278 = vadd.f32 %v3276, %v3277
          %v3279 = vrot.slane %v3278, 1
          %v3280 = vadd.f32 %v3278, %v3279
          %v3281 = vsel %vm3273, %v3269, 0.0
          %v3282 = vrot.slane %v3281, 4
          %v3283 = vadd.f32 %v3281, %v3282
          %v3284 = vrot.slane %v3283, 2
          %v3285 = vadd.f32 %v3283, %v3284
          %v3286 = vrot.slane %v3285, 1
          %v3287 = vadd.f32 %v3285, %v3286
          %v3288 = vsel %vm3273, %v3266, 0.0
          %v3289 = vrot.slane %v3288, 4
          %v3290 = vadd.f32 %v3288, %v3289
          %v3291 = vrot.slane %v3290, 2
          %v3292 = vadd.f32 %v3290, %v3291
          %v3293 = vrot.slane %v3292, 1
          %v3294 = vadd.f32 %v3292, %v3293
          %v3295 = vsel %vm3273, %v3270, 0.0
          %v3296 = vrot.slane %v3295, 4
          %v3297 = vadd.f32 %v3295, %v3296
          %v3298 = vrot.slane %v3297, 2
          %v3299 = vadd.f32 %v3297, %v3298
          %v3300 = vrot.slane %v3299, 1
          %v3301 = vadd.f32 %v3299, %v3300
          %v3302 = vmul.f32 %v3280, 0.25
          %v3303 = vmul.f32 %v3287, 0.25
          %v3304 = vmul.f32 %v3294, 0.25
          %v3305 = vmul.f32 %v3301, 0.25
          %v3306 = vmul.f32 %v3265, %v3265
          %v3307 = vmul.f32 %v3266, %v3266
          %v3310 = vcombine.high %v3306, %v3306
          %v3311 = vcombine.high %v3307, %v3307
          %v3314 = vsel %vm3273, %v3306, 0.0
          %v3315 = vrot.slane %v3314, 4
          %v3316 = vadd.f32 %v3314, %v3315
          %v3317 = vrot.slane %v3316, 2
          %v3318 = vadd.f32 %v3316, %v3317
          %v3319 = vrot.slane %v3318, 1
          %v3320 = vadd.f32 %v3318, %v3319
          %v3321 = vsel %vm3273, %v3310, 0.0
          %v3322 = vrot.slane %v3321, 4
          %v3323 = vadd.f32 %v3321, %v3322
          %v3324 = vrot.slane %v3323, 2
          %v3325 = vadd.f32 %v3323, %v3324
          %v3326 = vrot.slane %v3325, 1
          %v3327 = vadd.f32 %v3325, %v3326
          %v3328 = vsel %vm3273, %v3307, 0.0
          %v3329 = vrot.slane %v3328, 4
          %v3330 = vadd.f32 %v3328, %v3329
          %v3331 = vrot.slane %v3330, 2
          %v3332 = vadd.f32 %v3330, %v3331
          %v3333 = vrot.slane %v3332, 1
          %v3334 = vadd.f32 %v3332, %v3333
          %v3335 = vsel %vm3273, %v3311, 0.0
          %v3336 = vrot.slane %v3335, 4
          %v3337 = vadd.f32 %v3335, %v3336
          %v3338 = vrot.slane %v3337, 2
          %v3339 = vadd.f32 %v3337, %v3338
          %v3340 = vrot.slane %v3339, 1
          %v3341 = vadd.f32 %v3339, %v3340
          %v3342 = vmul.f32 %v3320, 0.25
          %v3343 = vmul.f32 %v3327, 0.25
          %v3344 = vmul.f32 %v3334, 0.25
          %v3345 = vmul.f32 %v3341, 0.25
          %v3346 = vmul.f32 %v3302, %v3302
          %v3347 = vmul.f32 %v3303, %v3303
          %v3348 = vmul.f32 %v3304, %v3304
          %v3349 = vmul.f32 %v3305, %v3305
          %v3350 = vsub.f32 %v3342, %v3346
          %v3351 = vsub.f32 %v3343, %v3347
          %v3352 = vsub.f32 %v3344, %v3348
          %v3353 = vsub.f32 %v3345, %v3349
          %v3358 = vcombine.low %v3302, %v3303
          %v3359 = vcombine.low %v3304, %v3305
          %v3362 = vsub.f32 %v3265, %v3358
          %v3363 = vsub.f32 %v3266, %v3359
          %v3364 = vadd.f32 %v3350, 1e-05
          %v3365 = vadd.f32 %v3351, 1e-05
          %v3366 = vadd.f32 %v3352, 1e-05
          %v3367 = vadd.f32 %v3353, 1e-05
          %v3368 = vrsqrt.pop %v3364
          %v3369 = vrsqrt.pop %v3365
          %v3370 = vrsqrt.pop %v3366
          %v3371 = vrsqrt.pop %v3367
          %v3376 = vcombine.low %v3368, %v3369
          %v3377 = vcombine.low %v3370, %v3371
          %v3380 = vmul.f32 %v3362, %v3376
          %v3381 = vmul.f32 %v3363, %v3377
          %v3382 = vld [vmem:[%s8] sm:$0xf]
          %v3384 = vlaneseq
          %v3385 = vshrl.u32 %v3384, 7
          %v3386 = vsub.s32 0, %v3385
          %v3387 = vrot.slane %v3382, %v3386
          %v3388 = vlaneseq
          %v3389 = vshrl.u32 %v3388, 7
          %v3390 = vsub.s32 1, %v3389
          %v3391 = vrot.slane %v3382, %v3390
          %v3392 = vlaneseq
          %v3393 = vshrl.u32 %v3392, 7
          %v3394 = vsub.s32 2, %v3393
          %v3395 = vrot.slane %v3382, %v3394
          %v3396 = vlaneseq
          %v3397 = vshrl.u32 %v3396, 7
          %v3398 = vsub.s32 3, %v3397
          %v3399 = vrot.slane %v3382, %v3398
          %v3400 = vcombine.low %v3387, %v3391
          %v3401 = vcombine.low %v3395, %v3399
          %v3404 = vmul.f32 %v3380, %v3400
          %v3405 = vmul.f32 %v3381, %v3401
          %v3406 = vld [vmem:[%s9] sm:$0xf]
          %v3408 = vlaneseq
          %v3409 = vshrl.u32 %v3408, 7
          %v3410 = vsub.s32 0, %v3409
          %v3411 = vrot.slane %v3406, %v3410
          %v3412 = vlaneseq
          %v3413 = vshrl.u32 %v3412, 7
          %v3414 = vsub.s32 1, %v3413
          %v3415 = vrot.slane %v3406, %v3414
          %v3416 = vlaneseq
          %v3417 = vshrl.u32 %v3416, 7
          %v3418 = vsub.s32 2, %v3417
          %v3419 = vrot.slane %v3406, %v3418
          %v3420 = vlaneseq
          %v3421 = vshrl.u32 %v3420, 7
          %v3422 = vsub.s32 3, %v3421
          %v3423 = vrot.slane %v3406, %v3422
          %v3424 = vcombine.low %v3411, %v3415
          %v3425 = vcombine.low %v3419, %v3423
          %v3428 = vadd.f32 %v3404, %v3424
          %v3429 = vadd.f32 %v3405, %v3425
          %3430 = vst [vmem:[#allocation6] sm:$0xff] %v3428
          %3431 = vst [vmem:[#allocation6 + $0x8] sm:$0xff] %v3429
        $region72: #{discriminator_forward_pallas.5} parent=59 // pred_fallthru
          _
        // Predicated region
        $region73: #{discriminator_forward_pallas.5} parent=59 // pred_check
          %p3432 = pneg %p283
        $region74: #{discriminator_forward_pallas.5} parent=59 // pred_check_branch
          %3434 = sbr.rel (%p3432) target = $region76
        $region75: #{discriminator_forward_pallas.5} parent=59 // pred_region
          %s3436 = ssub.s32 256, 256
          %3437 = vsyncadd [#allocation5], %s3436
          %s3439 = sshll.u32 [#allocation6], 4
          %s3440 = int_to_ptr.vmem [resolvable:$true] %s3439
          %3442 = dma.vmem_to_hbm [thread:$0]  %s3440, 256, %s10, [#allocation5]
        $region76: #{discriminator_forward_pallas.5} parent=59 // pred_fallthru
          _
        // Predicated region
        $region77: #{discriminator_forward_pallas.5} parent=59 // pred_check
          %p3443 = pneg %p283
        $region78: #{discriminator_forward_pallas.5} parent=59 // pred_check_branch
          %3445 = sbr.rel (%p3443) target = $region80
        $region79: #{discriminator_forward_pallas.5} parent=59 // pred_region
          %3446 = dma.done [#allocation5], 256
        $region80: #{discriminator_forward_pallas.5} parent=59 // pred_fallthru
          _
      $region60: #{discriminator_forward_pallas.5} parent=5 // pred_fallthru
        _
      %p3447 = scmp.le.s32.totalorder 2, %s20
      // Predicated region
      $region81: #{discriminator_forward_pallas.5} parent=5 // pred_check
        %p3448 = pneg %p3447
      $region82: #{discriminator_forward_pallas.5} parent=5 // pred_check_branch
        %3450 = sbr.rel (%p3448) target = $region84
      $region83: #{discriminator_forward_pallas.5} parent=5 // pred_region
        %s3451 = ssub.s32 %s20, 2
      $region84: #{discriminator_forward_pallas.5} parent=5 // pred_fallthru
        _
    $region6: #{discriminator_forward_pallas.5} parent=1 // loop_footer
      %s24 = sadd.s32 1, %s20
    $region7: #{discriminator_forward_pallas.5} parent=1 // loop_footer_branch
      %19 = sbr.rel target = $region3
    $region8: #{discriminator_forward_pallas.5} parent=1 // loop_exit
      _
    %3452 = vsyncpa [#allocation4], 1
    %s3453 = scalar_lea.sflag [#allocation4], 1
    %3454 = vsyncpa %s3453, 1
    %3455 = vsyncpa [#allocation5], 1
    %s3456 = scalar_lea.sflag [#allocation5], 1
    %3457 = vsyncpa %s3456, 1

// kernel: discriminator_forward_pallas.3
$region0: #{discriminator_forward_pallas.3}
  #allocation0 [shape = 'u32[]', space=smem, size = 0x4, offset = 0x4, fixed_abs, tag = 'smem constant byte address 0x4 - core index']
  #allocation1 [shape = 'u32[144,128]{1,0:T(1,128)}', space=vmem, size = 0x12000, scoped, tag = 'internal scratch']
  #allocation2 [shape = 'f32[304,192]{1,0:T(8,128)}', space=vmem, size = 0x4c000, scoped, tag = 'scratch operand']
  %s0 = inlined_call_operand.vmem [shape: f32[4,256,192], index: 0, kind: input, shape index: {}]
  %s1 = inlined_call_operand.vmem [shape: f32[1728,64], index: 1, kind: input, shape index: {}]
  %s2 = inlined_call_operand.vmem [shape: f32[1,64], index: 2, kind: input, shape index: {}]
  %s3 = inlined_call_operand.vmem [shape: f32[4,256,64], index: 3, kind: output, shape index: {0}]
  %s4 = inlined_call_operand.vmem [shape: f32[4,2,64], index: 4, kind: output, shape index: {1}]
  %5 = xla_tuple %s3, %s4
  %s6 = sld [smem:[#allocation0]]
  $region53: #{discriminator_forward_pallas.3} parent=0
    _
  %s8 = ssub.s32 1, %s6
  %s9 = scalar_select 0, %s8, %s6
  loop: start=0, step=1, limit=6
  $region2: #{discriminator_forward_pallas.3} parent=0 // loop_pre_header
    _
  $region3: #{discriminator_forward_pallas.3} parent=0 // loop_header
    %s11 = sphi 0, %s15
    %p12 = scmp.ge.s32.totalorder %s11, 6
    %s21 = sphi 0, %s23
    %s24 = sphi 0, %s21
    %s25 = sphi 0, %s24
    %s41 = sphi 0, %s25
    %s45 = sphi 0, %s45
    %s47 = sphi 0, %s45
    %s48 = sphi 0, %s47
    %s62 = sphi 0, %s48
    %s66 = sphi 0, %s66
    %s68 = sphi 0, %s66
    %s69 = sphi 0, %s68
    %s83 = sphi 0, %s69
    %s89 = sphi 0, %s91
    %s92 = sphi 0, %s89
    %s93 = sphi 0, %s92
    %s109 = sphi 0, %s93
    %s115 = sphi 0, %s117
    %s118 = sphi 0, %s115
    %s119 = sphi 0, %s118
    %s135 = sphi 0, %s119
  $region4: #{discriminator_forward_pallas.3} parent=0 // loop_header_branch
    %14 = sbr.rel (%p12) target = $region8
  $region5: #{discriminator_forward_pallas.3} parent=0 // loop_body
    %s16 = ssub.s32 %s11, 1
    %s17 = ssub.s32 %s11, 2
    %s18 = sadd.s32 %s11, 1
    %s19 = ssub.s32 %s11, %s18
    %p20 = scmp.eq.s32.totalorder %s19, 0
    %s22 = sadd.s32 %s21, 1
    %s23 = scalar_select %p20, %s21, %s22
    %p26 = pneg %p20
    %p27 = scmp.eq.s32.totalorder %s11, 3
    %p28 = por %p26, %p27
    %p29 = scmp.ne.s32.totalorder %s21, %s24
    %p30 = scmp.eq.s32.totalorder %s11, 0
    %p31 = por %p29, %p30
    %p32 = scmp.ne.s32.totalorder %s21, %s24
    %p33 = scmp.eq.s32.totalorder %s16, 3
    %p34 = por %p32, %p33
    %p35 = scmp.ne.s32.totalorder %s24, %s25
    %p36 = scmp.eq.s32.totalorder %s16, 0
    %p37 = por %p35, %p36
    %p38 = scmp.ne.s32.totalorder %s24, %s25
    %p39 = scmp.eq.s32.totalorder %s17, 3
    %p40 = por %p38, %p39
    %p42 = scmp.ne.s32.totalorder %s25, %s41
    %p43 = scmp.eq.s32.totalorder %s17, 0
    %p44 = por %p42, %p43
    %s46 = sadd.s32 %s45, 1
    %p49 = scmp.eq.s32.totalorder %s11, 3
    %p50 = scmp.ne.s32.totalorder %s45, %s47
    %p51 = scmp.eq.s32.totalorder %s11, 0
    %p52 = por %p50, %p51
    %p53 = scmp.ne.s32.totalorder %s45, %s47
    %p54 = scmp.eq.s32.totalorder %s16, 3
    %p55 = por %p53, %p54
    %p56 = scmp.ne.s32.totalorder %s47, %s48
    %p57 = scmp.eq.s32.totalorder %s16, 0
    %p58 = por %p56, %p57
    %p59 = scmp.ne.s32.totalorder %s47, %s48
    %p60 = scmp.eq.s32.totalorder %s17, 3
    %p61 = por %p59, %p60
    %p63 = scmp.ne.s32.totalorder %s48, %s62
    %p64 = scmp.eq.s32.totalorder %s17, 0
    %p65 = por %p63, %p64
    %s67 = sadd.s32 %s66, 1
    %p70 = scmp.eq.s32.totalorder %s11, 3
    %p71 = scmp.ne.s32.totalorder %s66, %s68
    %p72 = scmp.eq.s32.totalorder %s11, 0
    %p73 = por %p71, %p72
    %p74 = scmp.ne.s32.totalorder %s66, %s68
    %p75 = scmp.eq.s32.totalorder %s16, 3
    %p76 = por %p74, %p75
    %p77 = scmp.ne.s32.totalorder %s68, %s69
    %p78 = scmp.eq.s32.totalorder %s16, 0
    %p79 = por %p77, %p78
    %p80 = scmp.ne.s32.totalorder %s68, %s69
    %p81 = scmp.eq.s32.totalorder %s17, 3
    %p82 = por %p80, %p81
    %p84 = scmp.ne.s32.totalorder %s69, %s83
    %p85 = scmp.eq.s32.totalorder %s17, 0
    %p86 = por %p84, %p85
    %s87 = ssub.s32 %s11, %s18
    %p88 = scmp.eq.s32.totalorder %s87, 0
    %s90 = sadd.s32 %s89, 1
    %s91 = scalar_select %p88, %s89, %s90
    %p94 = pneg %p88
    %p95 = scmp.eq.s32.totalorder %s11, 3
    %p96 = por %p94, %p95
    %p97 = scmp.ne.s32.totalorder %s89, %s92
    %p98 = scmp.eq.s32.totalorder %s11, 0
    %p99 = por %p97, %p98
    %p100 = scmp.ne.s32.totalorder %s89, %s92
    %p101 = scmp.eq.s32.totalorder %s16, 3
    %p102 = por %p100, %p101
    %p103 = scmp.ne.s32.totalorder %s92, %s93
    %p104 = scmp.eq.s32.totalorder %s16, 0
    %p105 = por %p103, %p104
    %p106 = scmp.ne.s32.totalorder %s92, %s93
    %p107 = scmp.eq.s32.totalorder %s17, 3
    %p108 = por %p106, %p107
    %p110 = scmp.ne.s32.totalorder %s93, %s109
    %p111 = scmp.eq.s32.totalorder %s17, 0
    %p112 = por %p110, %p111
    %s113 = ssub.s32 %s11, %s18
    %p114 = scmp.eq.s32.totalorder %s113, 0
    %s116 = sadd.s32 %s115, 1
    %s117 = scalar_select %p114, %s115, %s116
    %p120 = pneg %p114
    %p121 = scmp.eq.s32.totalorder %s11, 3
    %p122 = por %p120, %p121
    %p123 = scmp.ne.s32.totalorder %s115, %s118
    %p124 = scmp.eq.s32.totalorder %s11, 0
    %p125 = por %p123, %p124
    %p126 = scmp.ne.s32.totalorder %s115, %s118
    %p127 = scmp.eq.s32.totalorder %s16, 3
    %p128 = por %p126, %p127
    %p129 = scmp.ne.s32.totalorder %s118, %s119
    %p130 = scmp.eq.s32.totalorder %s16, 0
    %p131 = por %p129, %p130
    %p132 = scmp.ne.s32.totalorder %s118, %s119
    %p133 = scmp.eq.s32.totalorder %s17, 3
    %p134 = por %p132, %p133
    %p136 = scmp.ne.s32.totalorder %s119, %s135
    %p137 = scmp.eq.s32.totalorder %s17, 0
    %p138 = por %p136, %p137
    %p139 = scmp.le.s32.totalorder 1, %s11
    %p140 = scmp.lt.s32.totalorder %s11, 5
    %p141 = pnand %p139, %p140
    %p142 = pneg %p141
    // Predicated region
    $region9: #{discriminator_forward_pallas.3} parent=5 // pred_check
      _
    $region10: #{discriminator_forward_pallas.3} parent=5 // pred_check_branch
      %144 = sbr.rel (%p141) target = $region12
    $region11: #{discriminator_forward_pallas.3} parent=5 // pred_region
      %s145 = ssub.s32 %s11, 1
      // Predicated region
      $region13: #{discriminator_forward_pallas.3} parent=11 // pred_check
        %p146 = pneg %p58
      $region14: #{discriminator_forward_pallas.3} parent=11 // pred_check_branch
        %148 = sbr.rel (%p146) target = $region16
      $region15: #{discriminator_forward_pallas.3} parent=11 // pred_region
        _
      $region16: #{discriminator_forward_pallas.3} parent=11 // pred_fallthru
        _
      // Predicated region
      $region17: #{discriminator_forward_pallas.3} parent=11 // pred_check
        %p149 = pneg %p79
      $region18: #{discriminator_forward_pallas.3} parent=11 // pred_check_branch
        %151 = sbr.rel (%p149) target = $region20
      $region19: #{discriminator_forward_pallas.3} parent=11 // pred_region
        _
      $region20: #{discriminator_forward_pallas.3} parent=11 // pred_fallthru
        _
    $region12: #{discriminator_forward_pallas.3} parent=5 // pred_fallthru
      _
    %p152 = scmp.lt.s32.totalorder %s11, 4
    // Predicated region
    $region21: #{discriminator_forward_pallas.3} parent=5 // pred_check
      %p153 = pneg %p152
    $region22: #{discriminator_forward_pallas.3} parent=5 // pred_check_branch
      %155 = sbr.rel (%p153) target = $region24
    $region23: #{discriminator_forward_pallas.3} parent=5 // pred_region
      // Predicated region
      $region25: #{discriminator_forward_pallas.3} parent=23 // pred_check
        %p156 = pneg %p31
      $region26: #{discriminator_forward_pallas.3} parent=23 // pred_check_branch
        %158 = sbr.rel (%p156) target = $region28
      $region27: #{discriminator_forward_pallas.3} parent=23 // pred_region
        %p159 = scmp.lt.s32.totalorder %s11, 3
        %s160 = scalar_select %p159, %s11, 3
        %s161 = smul.addr %s160, 64
        %s162 = smul.addr %s161, 8
        %s163 = scalar_lea.vmem %s0, %s162
      $region28: #{discriminator_forward_pallas.3} parent=23 // pred_fallthru
        _
    $region24: #{discriminator_forward_pallas.3} parent=5 // pred_fallthru
      _
    %p164 = scmp.le.s32.totalorder 1, %s11
    %p165 = scmp.lt.s32.totalorder %s11, 5
    %p166 = pnand %p164, %p165
    %p167 = pneg %p166
    // Predicated region
    $region29: #{discriminator_forward_pallas.3} parent=5 // pred_check
      _
    $region30: #{discriminator_forward_pallas.3} parent=5 // pred_check_branch
      %169 = sbr.rel (%p166) target = $region32
    $region31: #{discriminator_forward_pallas.3} parent=5 // pred_region
      %s170 = ssub.s32 %s11, 1
      %p171 = scmp.lt.s32.totalorder %s16, 3
      %s172 = scalar_select %p171, %s16, 3
      %s173 = smul.addr %s172, 64
      %s174 = smul.addr %s173, 8
      %s175 = scalar_lea.vmem %s0, %s174
      %p176 = pneg %p37
      %p177 = pneg %p34
      %p178 = pneg %p58
      %p179 = pneg %p55
      %p180 = pneg %p79
      %p181 = pneg %p76
      %p182 = pneg %p105
      %p183 = pneg %p102
      %p184 = scmp.lt.s32.totalorder %s16, 3
      %s185 = scalar_select %p184, %s16, 3
      %s186 = smul.addr %s185, 32
      %s187 = smul.addr %s186, 8
      %s188 = scalar_lea.vmem %s3, %s187
      %p189 = pneg %p131
      %p190 = pneg %p128
      %p191 = scmp.lt.s32.totalorder %s16, 3
      %s192 = scalar_select %p191, %s16, 3
      %s193 = smul.addr %s192, 2
      %s194 = scalar_lea.vmem %s4, %s193
      %p195 = scmp.lt.s32.totalorder %s16, 3
      %s196 = scalar_select %p195, %s16, 3
      %s197 = smul.addr %s196, 64
      %s198 = smul.addr %s197, 8
      %s199 = scalar_lea.vmem %s0, %s198
      %p200 = scmp.lt.s32.totalorder %s16, 3
      %s201 = scalar_select %p200, %s16, 3
      %s202 = smul.addr %s201, 32
      %s203 = smul.addr %s202, 8
      %s204 = scalar_lea.vmem %s3, %s203
      %p205 = scmp.lt.s32.totalorder %s16, 3
      %s206 = scalar_select %p205, %s16, 3
      %s207 = smul.addr %s206, 2
      %s208 = scalar_lea.vmem %s4, %s207
      %209 = vst [vmem:[#allocation2] sm:$0xff] 0.0
      %vm210 = vcmask 523264
      %211 = vst.msk [vmem:[#allocation2 + $0x8] sm:$0xff] %vm210, 0.0
      %212 = vst [vmem:[#allocation2 + $0x10] sm:$0xff] 0.0
      %213 = vst.msk [vmem:[#allocation2 + $0x18] sm:$0xff] %vm210, 0.0
      %214 = vst [vmem:[#allocation2 + $0x20] sm:$0xff] 0.0
      %215 = vst.msk [vmem:[#allocation2 + $0x28] sm:$0xff] %vm210, 0.0
      %216 = vst [vmem:[#allocation2 + $0x230] sm:$0xff] 0.0
      %217 = vst.msk [vmem:[#allocation2 + $0x238] sm:$0xff] %vm210, 0.0
      %218 = vst [vmem:[#allocation2 + $0x240] sm:$0xff] 0.0
      %219 = vst.msk [vmem:[#allocation2 + $0x248] sm:$0xff] %vm210, 0.0
      %220 = vst [vmem:[#allocation2 + $0x250] sm:$0xff] 0.0
      %221 = vst.msk [vmem:[#allocation2 + $0x258] sm:$0xff] %vm210, 0.0
      %v222 = vlaneseq
      %v223 = vshrl.u32 %v222, 7
      %v224 = vadd.s32 %v223, 8
      %v225 = vadd.s32 %v223, 16
      %v226 = vadd.s32 %v223, 24
      %v227 = vadd.s32 %v223, 32
      %v228 = vadd.s32 %v223, 40
      %v229 = vadd.s32 %v223, 48
      %v230 = vadd.s32 %v223, 56
      %v231 = vadd.s32 %v223, 64
      %v232 = vadd.s32 %v223, 72
      %v233 = vadd.s32 %v223, 80
      %v234 = vadd.s32 %v223, 88
      %v235 = vadd.s32 %v223, 96
      %v236 = vadd.s32 %v223, 104
      %v237 = vadd.s32 %v223, 112
      %v238 = vadd.s32 %v223, 120
      %v239 = vadd.s32 %v223, 128
      %v240 = vadd.s32 %v223, 136
      %v241 = vadd.s32 %v223, 144
      %v242 = vadd.s32 %v223, 152
      %v243 = vadd.s32 %v223, 160
      %v244 = vadd.s32 %v223, 168
      %v245 = vadd.s32 %v223, 176
      %v246 = vadd.s32 %v223, 184
      %v247 = vadd.s32 %v223, 192
      %v248 = vadd.s32 %v223, 200
      %v249 = vadd.s32 %v223, 208
      %v250 = vadd.s32 %v223, 216
      %v251 = vadd.s32 %v223, 224
      %v252 = vadd.s32 %v223, 232
      %v253 = vadd.s32 %v223, 240
      %v254 = vadd.s32 %v223, 248
      %vm255 = vcmp.lt.s32.totalorder %v223, 0
      %v256 = vsub.s32 0, %v223
      %v257 = vsel %vm255, %v256, %v223
      %v258 = vshrl.u32 %v257, 4
      %v259 = vand.u32 %v257, 15
      %v260 = vsub.s32 0, %v259
      %v261 = vsel %vm255, %v260, %v259
      %vm262 = vcmp.lt.s32.totalorder %v224, 0
      %v263 = vsub.s32 0, %v224
      %v264 = vsel %vm262, %v263, %v224
      %v265 = vshrl.u32 %v264, 4
      %v266 = vand.u32 %v264, 15
      %v267 = vsub.s32 0, %v266
      %v268 = vsel %vm262, %v267, %v266
      %vm269 = vcmp.lt.s32.totalorder %v225, 0
      %v270 = vsub.s32 0, %v225
      %v271 = vsel %vm269, %v270, %v225
      %v272 = vshrl.u32 %v271, 4
      %v273 = vand.u32 %v271, 15
      %v274 = vsub.s32 0, %v273
      %v275 = vsel %vm269, %v274, %v273
      %vm276 = vcmp.lt.s32.totalorder %v226, 0
      %v277 = vsub.s32 0, %v226
      %v278 = vsel %vm276, %v277, %v226
      %v279 = vshrl.u32 %v278, 4
      %v280 = vand.u32 %v278, 15
      %v281 = vsub.s32 0, %v280
      %v282 = vsel %vm276, %v281, %v280
      %vm283 = vcmp.lt.s32.totalorder %v227, 0
      %v284 = vsub.s32 0, %v227
      %v285 = vsel %vm283, %v284, %v227
      %v286 = vshrl.u32 %v285, 4
      %v287 = vand.u32 %v285, 15
      %v288 = vsub.s32 0, %v287
      %v289 = vsel %vm283, %v288, %v287
      %vm290 = vcmp.lt.s32.totalorder %v228, 0
      %v291 = vsub.s32 0, %v228
      %v292 = vsel %vm290, %v291, %v228
      %v293 = vshrl.u32 %v292, 4
      %v294 = vand.u32 %v292, 15
      %v295 = vsub.s32 0, %v294
      %v296 = vsel %vm290, %v295, %v294
      %vm297 = vcmp.lt.s32.totalorder %v229, 0
      %v298 = vsub.s32 0, %v229
      %v299 = vsel %vm297, %v298, %v229
      %v300 = vshrl.u32 %v299, 4
      %v301 = vand.u32 %v299, 15
      %v302 = vsub.s32 0, %v301
      %v303 = vsel %vm297, %v302, %v301
      %vm304 = vcmp.lt.s32.totalorder %v230, 0
      %v305 = vsub.s32 0, %v230
      %v306 = vsel %vm304, %v305, %v230
      %v307 = vshrl.u32 %v306, 4
      %v308 = vand.u32 %v306, 15
      %v309 = vsub.s32 0, %v308
      %v310 = vsel %vm304, %v309, %v308
      %vm311 = vcmp.lt.s32.totalorder %v231, 0
      %v312 = vsub.s32 0, %v231
      %v313 = vsel %vm311, %v312, %v231
      %v314 = vshrl.u32 %v313, 4
      %v315 = vand.u32 %v313, 15
      %v316 = vsub.s32 0, %v315
      %v317 = vsel %vm311, %v316, %v315
      %vm318 = vcmp.lt.s32.totalorder %v232, 0
      %v319 = vsub.s32 0, %v232
      %v320 = vsel %vm318, %v319, %v232
      %v321 = vshrl.u32 %v320, 4
      %v322 = vand.u32 %v320, 15
      %v323 = vsub.s32 0, %v322
      %v324 = vsel %vm318, %v323, %v322
      %vm325 = vcmp.lt.s32.totalorder %v233, 0
      %v326 = vsub.s32 0, %v233
      %v327 = vsel %vm325, %v326, %v233
      %v328 = vshrl.u32 %v327, 4
      %v329 = vand.u32 %v327, 15
      %v330 = vsub.s32 0, %v329
      %v331 = vsel %vm325, %v330, %v329
      %vm332 = vcmp.lt.s32.totalorder %v234, 0
      %v333 = vsub.s32 0, %v234
      %v334 = vsel %vm332, %v333, %v234
      %v335 = vshrl.u32 %v334, 4
      %v336 = vand.u32 %v334, 15
      %v337 = vsub.s32 0, %v336
      %v338 = vsel %vm332, %v337, %v336
      %vm339 = vcmp.lt.s32.totalorder %v235, 0
      %v340 = vsub.s32 0, %v235
      %v341 = vsel %vm339, %v340, %v235
      %v342 = vshrl.u32 %v341, 4
      %v343 = vand.u32 %v341, 15
      %v344 = vsub.s32 0, %v343
      %v345 = vsel %vm339, %v344, %v343
      %vm346 = vcmp.lt.s32.totalorder %v236, 0
      %v347 = vsub.s32 0, %v236
      %v348 = vsel %vm346, %v347, %v236
      %v349 = vshrl.u32 %v348, 4
      %v350 = vand.u32 %v348, 15
      %v351 = vsub.s32 0, %v350
      %v352 = vsel %vm346, %v351, %v350
      %vm353 = vcmp.lt.s32.totalorder %v237, 0
      %v354 = vsub.s32 0, %v237
      %v355 = vsel %vm353, %v354, %v237
      %v356 = vshrl.u32 %v355, 4
      %v357 = vand.u32 %v355, 15
      %v358 = vsub.s32 0, %v357
      %v359 = vsel %vm353, %v358, %v357
      %vm360 = vcmp.lt.s32.totalorder %v238, 0
      %v361 = vsub.s32 0, %v238
      %v362 = vsel %vm360, %v361, %v238
      %v363 = vshrl.u32 %v362, 4
      %v364 = vand.u32 %v362, 15
      %v365 = vsub.s32 0, %v364
      %v366 = vsel %vm360, %v365, %v364
      %vm367 = vcmp.lt.s32.totalorder %v239, 0
      %v368 = vsub.s32 0, %v239
      %v369 = vsel %vm367, %v368, %v239
      %v370 = vshrl.u32 %v369, 4
      %v371 = vand.u32 %v369, 15
      %v372 = vsub.s32 0, %v371
      %v373 = vsel %vm367, %v372, %v371
      %vm374 = vcmp.lt.s32.totalorder %v240, 0
      %v375 = vsub.s32 0, %v240
      %v376 = vsel %vm374, %v375, %v240
      %v377 = vshrl.u32 %v376, 4
      %v378 = vand.u32 %v376, 15
      %v379 = vsub.s32 0, %v378
      %v380 = vsel %vm374, %v379, %v378
      %vm381 = vcmp.lt.s32.totalorder %v241, 0
      %v382 = vsub.s32 0, %v241
      %v383 = vsel %vm381, %v382, %v241
      %v384 = vshrl.u32 %v383, 4
      %v385 = vand.u32 %v383, 15
      %v386 = vsub.s32 0, %v385
      %v387 = vsel %vm381, %v386, %v385
      %vm388 = vcmp.lt.s32.totalorder %v242, 0
      %v389 = vsub.s32 0, %v242
      %v390 = vsel %vm388, %v389, %v242
      %v391 = vshrl.u32 %v390, 4
      %v392 = vand.u32 %v390, 15
      %v393 = vsub.s32 0, %v392
      %v394 = vsel %vm388, %v393, %v392
      %vm395 = vcmp.lt.s32.totalorder %v243, 0
      %v396 = vsub.s32 0, %v243
      %v397 = vsel %vm395, %v396, %v243
      %v398 = vshrl.u32 %v397, 4
      %v399 = vand.u32 %v397, 15
      %v400 = vsub.s32 0, %v399
      %v401 = vsel %vm395, %v400, %v399
      %vm402 = vcmp.lt.s32.totalorder %v244, 0
      %v403 = vsub.s32 0, %v244
      %v404 = vsel %vm402, %v403, %v244
      %v405 = vshrl.u32 %v404, 4
      %v406 = vand.u32 %v404, 15
      %v407 = vsub.s32 0, %v406
      %v408 = vsel %vm402, %v407, %v406
      %vm409 = vcmp.lt.s32.totalorder %v245, 0
      %v410 = vsub.s32 0, %v245
      %v411 = vsel %vm409, %v410, %v245
      %v412 = vshrl.u32 %v411, 4
      %v413 = vand.u32 %v411, 15
      %v414 = vsub.s32 0, %v413
      %v415 = vsel %vm409, %v414, %v413
      %vm416 = vcmp.lt.s32.totalorder %v246, 0
      %v417 = vsub.s32 0, %v246
      %v418 = vsel %vm416, %v417, %v246
      %v419 = vshrl.u32 %v418, 4
      %v420 = vand.u32 %v418, 15
      %v421 = vsub.s32 0, %v420
      %v422 = vsel %vm416, %v421, %v420
      %vm423 = vcmp.lt.s32.totalorder %v247, 0
      %v424 = vsub.s32 0, %v247
      %v425 = vsel %vm423, %v424, %v247
      %v426 = vshrl.u32 %v425, 4
      %v427 = vand.u32 %v425, 15
      %v428 = vsub.s32 0, %v427
      %v429 = vsel %vm423, %v428, %v427
      %vm430 = vcmp.lt.s32.totalorder %v248, 0
      %v431 = vsub.s32 0, %v248
      %v432 = vsel %vm430, %v431, %v248
      %v433 = vshrl.u32 %v432, 4
      %v434 = vand.u32 %v432, 15
      %v435 = vsub.s32 0, %v434
      %v436 = vsel %vm430, %v435, %v434
      %vm437 = vcmp.lt.s32.totalorder %v249, 0
      %v438 = vsub.s32 0, %v249
      %v439 = vsel %vm437, %v438, %v249
      %v440 = vshrl.u32 %v439, 4
      %v441 = vand.u32 %v439, 15
      %v442 = vsub.s32 0, %v441
      %v443 = vsel %vm437, %v442, %v441
      %vm444 = vcmp.lt.s32.totalorder %v250, 0
      %v445 = vsub.s32 0, %v250
      %v446 = vsel %vm444, %v445, %v250
      %v447 = vshrl.u32 %v446, 4
      %v448 = vand.u32 %v446, 15
      %v449 = vsub.s32 0, %v448
      %v450 = vsel %vm444, %v449, %v448
      %vm451 = vcmp.lt.s32.totalorder %v251, 0
      %v452 = vsub.s32 0, %v251
      %v453 = vsel %vm451, %v452, %v251
      %v454 = vshrl.u32 %v453, 4
      %v455 = vand.u32 %v453, 15
      %v456 = vsub.s32 0, %v455
      %v457 = vsel %vm451, %v456, %v455
      %vm458 = vcmp.lt.s32.totalorder %v252, 0
      %v459 = vsub.s32 0, %v252
      %v460 = vsel %vm458, %v459, %v252
      %v461 = vshrl.u32 %v460, 4
      %v462 = vand.u32 %v460, 15
      %v463 = vsub.s32 0, %v462
      %v464 = vsel %vm458, %v463, %v462
      %vm465 = vcmp.lt.s32.totalorder %v253, 0
      %v466 = vsub.s32 0, %v253
      %v467 = vsel %vm465, %v466, %v253
      %v468 = vshrl.u32 %v467, 4
      %v469 = vand.u32 %v467, 15
      %v470 = vsub.s32 0, %v469
      %v471 = vsel %vm465, %v470, %v469
      %vm472 = vcmp.lt.s32.totalorder %v254, 0
      %v473 = vsub.s32 0, %v254
      %v474 = vsel %vm472, %v473, %v254
      %v475 = vshrl.u32 %v474, 4
      %v476 = vand.u32 %v474, 15
      %v477 = vsub.s32 0, %v476
      %v478 = vsel %vm472, %v477, %v476
      %vm479 = vcmp.ne.s32.totalorder %v261, 0
      %vm480 = vcmp.ne.s32.totalorder %v268, 0
      %vm481 = vcmp.ne.s32.totalorder %v275, 0
      %vm482 = vcmp.ne.s32.totalorder %v282, 0
      %vm483 = vcmp.ne.s32.totalorder %v289, 0
      %vm484 = vcmp.ne.s32.totalorder %v296, 0
      %vm485 = vcmp.ne.s32.totalorder %v303, 0
      %vm486 = vcmp.ne.s32.totalorder %v310, 0
      %vm487 = vcmp.ne.s32.totalorder %v317, 0
      %vm488 = vcmp.ne.s32.totalorder %v324, 0
      %vm489 = vcmp.ne.s32.totalorder %v331, 0
      %vm490 = vcmp.ne.s32.totalorder %v338, 0
      %vm491 = vcmp.ne.s32.totalorder %v345, 0
      %vm492 = vcmp.ne.s32.totalorder %v352, 0
      %vm493 = vcmp.ne.s32.totalorder %v359, 0
      %vm494 = vcmp.ne.s32.totalorder %v366, 0
      %vm495 = vcmp.ne.s32.totalorder %v373, 0
      %vm496 = vcmp.ne.s32.totalorder %v380, 0
      %vm497 = vcmp.ne.s32.totalorder %v387, 0
      %vm498 = vcmp.ne.s32.totalorder %v394, 0
      %vm499 = vcmp.ne.s32.totalorder %v401, 0
      %vm500 = vcmp.ne.s32.totalorder %v408, 0
      %vm501 = vcmp.ne.s32.totalorder %v415, 0
      %vm502 = vcmp.ne.s32.totalorder %v422, 0
      %vm503 = vcmp.ne.s32.totalorder %v429, 0
      %vm504 = vcmp.ne.s32.totalorder %v436, 0
      %vm505 = vcmp.ne.s32.totalorder %v443, 0
      %vm506 = vcmp.ne.s32.totalorder %v450, 0
      %vm507 = vcmp.ne.s32.totalorder %v457, 0
      %vm508 = vcmp.ne.s32.totalorder %v464, 0
      %vm509 = vcmp.ne.s32.totalorder %v471, 0
      %vm510 = vcmp.ne.s32.totalorder %v478, 0
      %vm511 = vcmp.lt.s32.totalorder %v261, 0
      %vm512 = vcmp.lt.s32.totalorder %v268, 0
      %vm513 = vcmp.lt.s32.totalorder %v275, 0
      %vm514 = vcmp.lt.s32.totalorder %v282, 0
      %vm515 = vcmp.lt.s32.totalorder %v289, 0
      %vm516 = vcmp.lt.s32.totalorder %v296, 0
      %vm517 = vcmp.lt.s32.totalorder %v303, 0
      %vm518 = vcmp.lt.s32.totalorder %v310, 0
      %vm519 = vcmp.lt.s32.totalorder %v317, 0
      %vm520 = vcmp.lt.s32.totalorder %v324, 0
      %vm521 = vcmp.lt.s32.totalorder %v331, 0
      %vm522 = vcmp.lt.s32.totalorder %v338, 0
      %vm523 = vcmp.lt.s32.totalorder %v345, 0
      %vm524 = vcmp.lt.s32.totalorder %v352, 0
      %vm525 = vcmp.lt.s32.totalorder %v359, 0
      %vm526 = vcmp.lt.s32.totalorder %v366, 0
      %vm527 = vcmp.lt.s32.totalorder %v373, 0
      %vm528 = vcmp.lt.s32.totalorder %v380, 0
      %vm529 = vcmp.lt.s32.totalorder %v387, 0
      %vm530 = vcmp.lt.s32.totalorder %v394, 0
      %vm531 = vcmp.lt.s32.totalorder %v401, 0
      %vm532 = vcmp.lt.s32.totalorder %v408, 0
      %vm533 = vcmp.lt.s32.totalorder %v415, 0
      %vm534 = vcmp.lt.s32.totalorder %v422, 0
      %vm535 = vcmp.lt.s32.totalorder %v429, 0
      %vm536 = vcmp.lt.s32.totalorder %v436, 0
      %vm537 = vcmp.lt.s32.totalorder %v443, 0
      %vm538 = vcmp.lt.s32.totalorder %v450, 0
      %vm539 = vcmp.lt.s32.totalorder %v457, 0
      %vm540 = vcmp.lt.s32.totalorder %v464, 0
      %vm541 = vcmp.lt.s32.totalorder %v471, 0
      %vm542 = vcmp.lt.s32.totalorder %v478, 0
      %vm543 = vmand %vm511, %vm479
      %vm544 = vmand %vm512, %vm480
      %vm545 = vmand %vm513, %vm481
      %vm546 = vmand %vm514, %vm482
      %vm547 = vmand %vm515, %vm483
      %vm548 = vmand %vm516, %vm484
      %vm549 = vmand %vm517, %vm485
      %vm550 = vmand %vm518, %vm486
      %vm551 = vmand %vm519, %vm487
      %vm552 = vmand %vm520, %vm488
      %vm553 = vmand %vm521, %vm489
      %vm554 = vmand %vm522, %vm490
      %vm555 = vmand %vm523, %vm491
      %vm556 = vmand %vm524, %vm492
      %vm557 = vmand %vm525, %vm493
      %vm558 = vmand %vm526, %vm494
      %vm559 = vmand %vm527, %vm495
      %vm560 = vmand %vm528, %vm496
      %vm561 = vmand %vm529, %vm497
      %vm562 = vmand %vm530, %vm498
      %vm563 = vmand %vm531, %vm499
      %vm564 = vmand %vm532, %vm500
      %vm565 = vmand %vm533, %vm501
      %vm566 = vmand %vm534, %vm502
      %vm567 = vmand %vm535, %vm503
      %vm568 = vmand %vm536, %vm504
      %vm569 = vmand %vm537, %vm505
      %vm570 = vmand %vm538, %vm506
      %vm571 = vmand %vm539, %vm507
      %vm572 = vmand %vm540, %vm508
      %vm573 = vmand %vm541, %vm509
      %vm574 = vmand %vm542, %vm510
      %v575 = vadd.s32 %v261, 16
      %v576 = vadd.s32 %v268, 16
      %v577 = vadd.s32 %v275, 16
      %v578 = vadd.s32 %v282, 16
      %v579 = vadd.s32 %v289, 16
      %v580 = vadd.s32 %v296, 16
      %v581 = vadd.s32 %v303, 16
      %v582 = vadd.s32 %v310, 16
      %v583 = vadd.s32 %v317, 16
      %v584 = vadd.s32 %v324, 16
      %v585 = vadd.s32 %v331, 16
      %v586 = vadd.s32 %v338, 16
      %v587 = vadd.s32 %v345, 16
      %v588 = vadd.s32 %v352, 16
      %v589 = vadd.s32 %v359, 16
      %v590 = vadd.s32 %v366, 16
      %v591 = vadd.s32 %v373, 16
      %v592 = vadd.s32 %v380, 16
      %v593 = vadd.s32 %v387, 16
      %v594 = vadd.s32 %v394, 16
      %v595 = vadd.s32 %v401, 16
      %v596 = vadd.s32 %v408, 16
      %v597 = vadd.s32 %v415, 16
      %v598 = vadd.s32 %v422, 16
      %v599 = vadd.s32 %v429, 16
      %v600 = vadd.s32 %v436, 16
      %v601 = vadd.s32 %v443, 16
      %v602 = vadd.s32 %v450, 16
      %v603 = vadd.s32 %v457, 16
      %v604 = vadd.s32 %v464, 16
      %v605 = vadd.s32 %v471, 16
      %v606 = vadd.s32 %v478, 16
      %v607 = vsel %vm543, %v575, %v261
      %v608 = vsel %vm544, %v576, %v268
      %v609 = vsel %vm545, %v577, %v275
      %v610 = vsel %vm546, %v578, %v282
      %v611 = vsel %vm547, %v579, %v289
      %v612 = vsel %vm548, %v580, %v296
      %v613 = vsel %vm549, %v581, %v303
      %v614 = vsel %vm550, %v582, %v310
      %v615 = vsel %vm551, %v583, %v317
      %v616 = vsel %vm552, %v584, %v324
      %v617 = vsel %vm553, %v585, %v331
      %v618 = vsel %vm554, %v586, %v338
      %v619 = vsel %vm555, %v587, %v345
      %v620 = vsel %vm556, %v588, %v352
      %v621 = vsel %vm557, %v589, %v359
      %v622 = vsel %vm558, %v590, %v366
      %v623 = vsel %vm559, %v591, %v373
      %v624 = vsel %vm560, %v592, %v380
      %v625 = vsel %vm561, %v593, %v387
      %v626 = vsel %vm562, %v594, %v394
      %v627 = vsel %vm563, %v595, %v401
      %v628 = vsel %vm564, %v596, %v408
      %v629 = vsel %vm565, %v597, %v415
      %v630 = vsel %vm566, %v598, %v422
      %v631 = vsel %vm567, %v599, %v429
      %v632 = vsel %vm568, %v600, %v436
      %v633 = vsel %vm569, %v601, %v443
      %v634 = vsel %vm570, %v602, %v450
      %v635 = vsel %vm571, %v603, %v457
      %v636 = vsel %vm572, %v604, %v464
      %v637 = vsel %vm573, %v605, %v471
      %v638 = vsel %vm574, %v606, %v478
      %vm639 = vcmp.gt.s32.totalorder %v607, 0
      %vm640 = vcmp.gt.s32.totalorder %v608, 0
      %vm641 = vcmp.gt.s32.totalorder %v609, 0
      %vm642 = vcmp.gt.s32.totalorder %v610, 0
      %vm643 = vcmp.gt.s32.totalorder %v611, 0
      %vm644 = vcmp.gt.s32.totalorder %v612, 0
      %vm645 = vcmp.gt.s32.totalorder %v613, 0
      %vm646 = vcmp.gt.s32.totalorder %v614, 0
      %vm647 = vcmp.gt.s32.totalorder %v615, 0
      %vm648 = vcmp.gt.s32.totalorder %v616, 0
      %vm649 = vcmp.gt.s32.totalorder %v617, 0
      %vm650 = vcmp.gt.s32.totalorder %v618, 0
      %vm651 = vcmp.gt.s32.totalorder %v619, 0
      %vm652 = vcmp.gt.s32.totalorder %v620, 0
      %vm653 = vcmp.gt.s32.totalorder %v621, 0
      %vm654 = vcmp.gt.s32.totalorder %v622, 0
      %vm655 = vcmp.gt.s32.totalorder %v623, 0
      %vm656 = vcmp.gt.s32.totalorder %v624, 0
      %vm657 = vcmp.gt.s32.totalorder %v625, 0
      %vm658 = vcmp.gt.s32.totalorder %v626, 0
      %vm659 = vcmp.gt.s32.totalorder %v627, 0
      %vm660 = vcmp.gt.s32.totalorder %v628, 0
      %vm661 = vcmp.gt.s32.totalorder %v629, 0
      %vm662 = vcmp.gt.s32.totalorder %v630, 0
      %vm663 = vcmp.gt.s32.totalorder %v631, 0
      %vm664 = vcmp.gt.s32.totalorder %v632, 0
      %vm665 = vcmp.gt.s32.totalorder %v633, 0
      %vm666 = vcmp.gt.s32.totalorder %v634, 0
      %vm667 = vcmp.gt.s32.totalorder %v635, 0
      %vm668 = vcmp.gt.s32.totalorder %v636, 0
      %vm669 = vcmp.gt.s32.totalorder %v637, 0
      %vm670 = vcmp.gt.s32.totalorder %v638, 0
      %vm671 = vcmp.lt.s32.totalorder %v607, 15
      %vm672 = vcmp.lt.s32.totalorder %v608, 15
      %vm673 = vcmp.lt.s32.totalorder %v609, 15
      %vm674 = vcmp.lt.s32.totalorder %v610, 15
      %vm675 = vcmp.lt.s32.totalorder %v611, 15
      %vm676 = vcmp.lt.s32.totalorder %v612, 15
      %vm677 = vcmp.lt.s32.totalorder %v613, 15
      %vm678 = vcmp.lt.s32.totalorder %v614, 15
      %vm679 = vcmp.lt.s32.totalorder %v615, 15
      %vm680 = vcmp.lt.s32.totalorder %v616, 15
      %vm681 = vcmp.lt.s32.totalorder %v617, 15
      %vm682 = vcmp.lt.s32.totalorder %v618, 15
      %vm683 = vcmp.lt.s32.totalorder %v619, 15
      %vm684 = vcmp.lt.s32.totalorder %v620, 15
      %vm685 = vcmp.lt.s32.totalorder %v621, 15
      %vm686 = vcmp.lt.s32.totalorder %v622, 15
      %vm687 = vcmp.lt.s32.totalorder %v623, 15
      %vm688 = vcmp.lt.s32.totalorder %v624, 15
      %vm689 = vcmp.lt.s32.totalorder %v625, 15
      %vm690 = vcmp.lt.s32.totalorder %v626, 15
      %vm691 = vcmp.lt.s32.totalorder %v627, 15
      %vm692 = vcmp.lt.s32.totalorder %v628, 15
      %vm693 = vcmp.lt.s32.totalorder %v629, 15
      %vm694 = vcmp.lt.s32.totalorder %v630, 15
      %vm695 = vcmp.lt.s32.totalorder %v631, 15
      %vm696 = vcmp.lt.s32.totalorder %v632, 15
      %vm697 = vcmp.lt.s32.totalorder %v633, 15
      %vm698 = vcmp.lt.s32.totalorder %v634, 15
      %vm699 = vcmp.lt.s32.totalorder %v635, 15
      %vm700 = vcmp.lt.s32.totalorder %v636, 15
      %vm701 = vcmp.lt.s32.totalorder %v637, 15
      %vm702 = vcmp.lt.s32.totalorder %v638, 15
      %v703 = vld [vmem:[%s199] sm:$0xff]
      %v704 = vld [vmem:[%s199 + $0x8] sm:$0xff]
      %v705 = vld [vmem:[%s199 + $0x10] sm:$0xff]
      %v706 = vld [vmem:[%s199 + $0x18] sm:$0xff]
      %v707 = vld [vmem:[%s199 + $0x20] sm:$0xff]
      %v708 = vld [vmem:[%s199 + $0x28] sm:$0xff]
      %v709 = vld [vmem:[%s199 + $0x30] sm:$0xff]
      %v710 = vld [vmem:[%s199 + $0x38] sm:$0xff]
      %v711 = vld [vmem:[%s199 + $0x40] sm:$0xff]
      %v712 = vld [vmem:[%s199 + $0x48] sm:$0xff]
      %v713 = vld [vmem:[%s199 + $0x50] sm:$0xff]
      %v714 = vld [vmem:[%s199 + $0x58] sm:$0xff]
      %v715 = vld [vmem:[%s199 + $0x60] sm:$0xff]
      %v716 = vld [vmem:[%s199 + $0x68] sm:$0xff]
      %v717 = vld [vmem:[%s199 + $0x70] sm:$0xff]
      %v718 = vld [vmem:[%s199 + $0x78] sm:$0xff]
      %v719 = vld [vmem:[%s199 + $0x80] sm:$0xff]
      %v720 = vld [vmem:[%s199 + $0x88] sm:$0xff]
      %v721 = vld [vmem:[%s199 + $0x90] sm:$0xff]
      %v722 = vld [vmem:[%s199 + $0x98] sm:$0xff]
      %v723 = vld [vmem:[%s199 + $0xa0] sm:$0xff]
      %v724 = vld [vmem:[%s199 + $0xa8] sm:$0xff]
      %v725 = vld [vmem:[%s199 + $0xb0] sm:$0xff]
      %v726 = vld [vmem:[%s199 + $0xb8] sm:$0xff]
      %v727 = vld [vmem:[%s199 + $0xc0] sm:$0xff]
      %v728 = vld [vmem:[%s199 + $0xc8] sm:$0xff]
      %v729 = vld [vmem:[%s199 + $0xd0] sm:$0xff]
      %v730 = vld [vmem:[%s199 + $0xd8] sm:$0xff]
      %v731 = vld [vmem:[%s199 + $0xe0] sm:$0xff]
      %v732 = vld [vmem:[%s199 + $0xe8] sm:$0xff]
      %v733 = vld [vmem:[%s199 + $0xf0] sm:$0xff]
      %v734 = vld [vmem:[%s199 + $0xf8] sm:$0xff]
      %v735 = vld [vmem:[%s199 + $0x100] sm:$0xff]
      %v736 = vld [vmem:[%s199 + $0x108] sm:$0xff]
      %v737 = vld [vmem:[%s199 + $0x110] sm:$0xff]
      %v738 = vld [vmem:[%s199 + $0x118] sm:$0xff]
      %v739 = vld [vmem:[%s199 + $0x120] sm:$0xff]
      %v740 = vld [vmem:[%s199 + $0x128] sm:$0xff]
      %v741 = vld [vmem:[%s199 + $0x130] sm:$0xff]
      %v742 = vld [vmem:[%s199 + $0x138] sm:$0xff]
      %v743 = vld [vmem:[%s199 + $0x140] sm:$0xff]
      %v744 = vld [vmem:[%s199 + $0x148] sm:$0xff]
      %v745 = vld [vmem:[%s199 + $0x150] sm:$0xff]
      %v746 = vld [vmem:[%s199 + $0x158] sm:$0xff]
      %v747 = vld [vmem:[%s199 + $0x160] sm:$0xff]
      %v748 = vld [vmem:[%s199 + $0x168] sm:$0xff]
      %v749 = vld [vmem:[%s199 + $0x170] sm:$0xff]
      %v750 = vld [vmem:[%s199 + $0x178] sm:$0xff]
      %v751 = vld [vmem:[%s199 + $0x180] sm:$0xff]
      %v752 = vld [vmem:[%s199 + $0x188] sm:$0xff]
      %v753 = vld [vmem:[%s199 + $0x190] sm:$0xff]
      %v754 = vld [vmem:[%s199 + $0x198] sm:$0xff]
      %v755 = vld [vmem:[%s199 + $0x1a0] sm:$0xff]
      %v756 = vld [vmem:[%s199 + $0x1a8] sm:$0xff]
      %v757 = vld [vmem:[%s199 + $0x1b0] sm:$0xff]
      %v758 = vld [vmem:[%s199 + $0x1b8] sm:$0xff]
      %v759 = vld [vmem:[%s199 + $0x1c0] sm:$0xff]
      %v760 = vld [vmem:[%s199 + $0x1c8] sm:$0xff]
      %v761 = vld [vmem:[%s199 + $0x1d0] sm:$0xff]
      %v762 = vld [vmem:[%s199 + $0x1d8] sm:$0xff]
      %v763 = vld [vmem:[%s199 + $0x1e0] sm:$0xff]
      %v764 = vld [vmem:[%s199 + $0x1e8] sm:$0xff]
      %v765 = vld [vmem:[%s199 + $0x1f0] sm:$0xff]
      %v766 = vld [vmem:[%s199 + $0x1f8] sm:$0xff]
      %767 = vst [vmem:[#allocation2 + $0x30] sm:$0xff] %v703
      %768 = vst.msk [vmem:[#allocation2 + $0x38] sm:$0xff] %vm210, %v704
      %769 = vst [vmem:[#allocation2 + $0x40] sm:$0xff] %v705
      %770 = vst.msk [vmem:[#allocation2 + $0x48] sm:$0xff] %vm210, %v706
      %771 = vst [vmem:[#allocation2 + $0x50] sm:$0xff] %v707
      %772 = vst.msk [vmem:[#allocation2 + $0x58] sm:$0xff] %vm210, %v708
      %773 = vst [vmem:[#allocation2 + $0x60] sm:$0xff] %v709
      %774 = vst.msk [vmem:[#allocation2 + $0x68] sm:$0xff] %vm210, %v710
      %775 = vst [vmem:[#allocation2 + $0x70] sm:$0xff] %v711
      %776 = vst.msk [vmem:[#allocation2 + $0x78] sm:$0xff] %vm210, %v712
      %777 = vst [vmem:[#allocation2 + $0x80] sm:$0xff] %v713
      %778 = vst.msk [vmem:[#allocation2 + $0x88] sm:$0xff] %vm210, %v714
      %779 = vst [vmem:[#allocation2 + $0x90] sm:$0xff] %v715
      %780 = vst.msk [vmem:[#allocation2 + $0x98] sm:$0xff] %vm210, %v716
      %781 = vst [vmem:[#allocation2 + $0xa0] sm:$0xff] %v717
      %782 = vst.msk [vmem:[#allocation2 + $0xa8] sm:$0xff] %vm210, %v718
      %783 = vst [vmem:[#allocation2 + $0xb0] sm:$0xff] %v719
      %784 = vst.msk [vmem:[#allocation2 + $0xb8] sm:$0xff] %vm210, %v720
      %785 = vst [vmem:[#allocation2 + $0xc0] sm:$0xff] %v721
      %786 = vst.msk [vmem:[#allocation2 + $0xc8] sm:$0xff] %vm210, %v722
      %787 = vst [vmem:[#allocation2 + $0xd0] sm:$0xff] %v723
      %788 = vst.msk [vmem:[#allocation2 + $0xd8] sm:$0xff] %vm210, %v724
      %789 = vst [vmem:[#allocation2 + $0xe0] sm:$0xff] %v725
      %790 = vst.msk [vmem:[#allocation2 + $0xe8] sm:$0xff] %vm210, %v726
      %791 = vst [vmem:[#allocation2 + $0xf0] sm:$0xff] %v727
      %792 = vst.msk [vmem:[#allocation2 + $0xf8] sm:$0xff] %vm210, %v728
      %793 = vst [vmem:[#allocation2 + $0x100] sm:$0xff] %v729
      %794 = vst.msk [vmem:[#allocation2 + $0x108] sm:$0xff] %vm210, %v730
      %795 = vst [vmem:[#allocation2 + $0x110] sm:$0xff] %v731
      %796 = vst.msk [vmem:[#allocation2 + $0x118] sm:$0xff] %vm210, %v732
      %797 = vst [vmem:[#allocation2 + $0x120] sm:$0xff] %v733
      %798 = vst.msk [vmem:[#allocation2 + $0x128] sm:$0xff] %vm210, %v734
      %799 = vst [vmem:[#allocation2 + $0x130] sm:$0xff] %v735
      %800 = vst.msk [vmem:[#allocation2 + $0x138] sm:$0xff] %vm210, %v736
      %801 = vst [vmem:[#allocation2 + $0x140] sm:$0xff] %v737
      %802 = vst.msk [vmem:[#allocation2 + $0x148] sm:$0xff] %vm210, %v738
      %803 = vst [vmem:[#allocation2 + $0x150] sm:$0xff] %v739
      %804 = vst.msk [vmem:[#allocation2 + $0x158] sm:$0xff] %vm210, %v740
      %805 = vst [vmem:[#allocation2 + $0x160] sm:$0xff] %v741
      %806 = vst.msk [vmem:[#allocation2 + $0x168] sm:$0xff] %vm210, %v742
      %807 = vst [vmem:[#allocation2 + $0x170] sm:$0xff] %v743
      %808 = vst.msk [vmem:[#allocation2 + $0x178] sm:$0xff] %vm210, %v744
      %809 = vst [vmem:[#allocation2 + $0x180] sm:$0xff] %v745
      %810 = vst.msk [vmem:[#allocation2 + $0x188] sm:$0xff] %vm210, %v746
      %811 = vst [vmem:[#allocation2 + $0x190] sm:$0xff] %v747
      %812 = vst.msk [vmem:[#allocation2 + $0x198] sm:$0xff] %vm210, %v748
      %813 = vst [vmem:[#allocation2 + $0x1a0] sm:$0xff] %v749
      %814 = vst.msk [vmem:[#allocation2 + $0x1a8] sm:$0xff] %vm210, %v750
      %815 = vst [vmem:[#allocation2 + $0x1b0] sm:$0xff] %v751
      %816 = vst.msk [vmem:[#allocation2 + $0x1b8] sm:$0xff] %vm210, %v752
      %817 = vst [vmem:[#allocation2 + $0x1c0] sm:$0xff] %v753
      %818 = vst.msk [vmem:[#allocation2 + $0x1c8] sm:$0xff] %vm210, %v754
      %819 = vst [vmem:[#allocation2 + $0x1d0] sm:$0xff] %v755
      %820 = vst.msk [vmem:[#allocation2 + $0x1d8] sm:$0xff] %vm210, %v756
      %821 = vst [vmem:[#allocation2 + $0x1e0] sm:$0xff] %v757
      %822 = vst.msk [vmem:[#allocation2 + $0x1e8] sm:$0xff] %vm210, %v758
      %823 = vst [vmem:[#allocation2 + $0x1f0] sm:$0xff] %v759
      %824 = vst.msk [vmem:[#allocation2 + $0x1f8] sm:$0xff] %vm210, %v760
      %825 = vst [vmem:[#allocation2 + $0x200] sm:$0xff] %v761
      %826 = vst.msk [vmem:[#allocation2 + $0x208] sm:$0xff] %vm210, %v762
      %827 = vst [vmem:[#allocation2 + $0x210] sm:$0xff] %v763
      %828 = vst.msk [vmem:[#allocation2 + $0x218] sm:$0xff] %vm210, %v764
      %829 = vst [vmem:[#allocation2 + $0x220] sm:$0xff] %v765
      %830 = vst.msk [vmem:[#allocation2 + $0x228] sm:$0xff] %vm210, %v766
      %v831 = vld [vmem:[#allocation2] sm:$0x80]
      %v832 = vld [vmem:[#allocation2 + $0x8] sm:$0x80]
      %v833 = vld [vmem:[#allocation2 + $0x10] sm:$0xff]
      %v834 = vld [vmem:[#allocation2 + $0x18] sm:$0xff]
      %v835 = vld [vmem:[#allocation2 + $0x20] sm:$0xff]
      %v836 = vld [vmem:[#allocation2 + $0x28] sm:$0xff]
      %v837 = vld [vmem:[#allocation2 + $0x30] sm:$0xff]
      %v838 = vld [vmem:[#allocation2 + $0x38] sm:$0xff]
      %v839 = vld [vmem:[#allocation2 + $0x40] sm:$0xff]
      %v840 = vld [vmem:[#allocation2 + $0x48] sm:$0xff]
      %v841 = vld [vmem:[#allocation2 + $0x50] sm:$0xff]
      %v842 = vld [vmem:[#allocation2 + $0x58] sm:$0xff]
      %v843 = vld [vmem:[#allocation2 + $0x60] sm:$0xff]
      %v844 = vld [vmem:[#allocation2 + $0x68] sm:$0xff]
      %v845 = vld [vmem:[#allocation2 + $0x70] sm:$0xff]
      %v846 = vld [vmem:[#allocation2 + $0x78] sm:$0xff]
      %v847 = vld [vmem:[#allocation2 + $0x80] sm:$0xff]
      %v848 = vld [vmem:[#allocation2 + $0x88] sm:$0xff]
      %v849 = vld [vmem:[#allocation2 + $0x90] sm:$0xff]
      %v850 = vld [vmem:[#allocation2 + $0x98] sm:$0xff]
      %v851 = vld [vmem:[#allocation2 + $0xa0] sm:$0xff]
      %v852 = vld [vmem:[#allocation2 + $0xa8] sm:$0xff]
      %v853 = vld [vmem:[#allocation2 + $0xb0] sm:$0xff]
      %v854 = vld [vmem:[#allocation2 + $0xb8] sm:$0xff]
      %v855 = vld [vmem:[#allocation2 + $0xc0] sm:$0xff]
      %v856 = vld [vmem:[#allocation2 + $0xc8] sm:$0xff]
      %v857 = vld [vmem:[#allocation2 + $0xd0] sm:$0xff]
      %v858 = vld [vmem:[#allocation2 + $0xd8] sm:$0xff]
      %v859 = vld [vmem:[#allocation2 + $0xe0] sm:$0xff]
      %v860 = vld [vmem:[#allocation2 + $0xe8] sm:$0xff]
      %v861 = vld [vmem:[#allocation2 + $0xf0] sm:$0xff]
      %v862 = vld [vmem:[#allocation2 + $0xf8] sm:$0xff]
      %v863 = vld [vmem:[#allocation2 + $0x100] sm:$0xff]
      %v864 = vld [vmem:[#allocation2 + $0x108] sm:$0xff]
      %v865 = vld [vmem:[#allocation2 + $0x110] sm:$0xff]
      %v866 = vld [vmem:[#allocation2 + $0x118] sm:$0xff]
      %v867 = vld [vmem:[#allocation2 + $0x120] sm:$0xff]
      %v868 = vld [vmem:[#allocation2 + $0x128] sm:$0xff]
      %v869 = vld [vmem:[#allocation2 + $0x130] sm:$0xff]
      %v870 = vld [vmem:[#allocation2 + $0x138] sm:$0xff]
      %v871 = vld [vmem:[#allocation2 + $0x140] sm:$0xff]
      %v872 = vld [vmem:[#allocation2 + $0x148] sm:$0xff]
      %v873 = vld [vmem:[#allocation2 + $0x150] sm:$0xff]
      %v874 = vld [vmem:[#allocation2 + $0x158] sm:$0xff]
      %v875 = vld [vmem:[#allocation2 + $0x160] sm:$0xff]
      %v876 = vld [vmem:[#allocation2 + $0x168] sm:$0xff]
      %v877 = vld [vmem:[#allocation2 + $0x170] sm:$0xff]
      %v878 = vld [vmem:[#allocation2 + $0x178] sm:$0xff]
      %v879 = vld [vmem:[#allocation2 + $0x180] sm:$0xff]
      %v880 = vld [vmem:[#allocation2 + $0x188] sm:$0xff]
      %v881 = vld [vmem:[#allocation2 + $0x190] sm:$0xff]
      %v882 = vld [vmem:[#allocation2 + $0x198] sm:$0xff]
      %v883 = vld [vmem:[#allocation2 + $0x1a0] sm:$0xff]
      %v884 = vld [vmem:[#allocation2 + $0x1a8] sm:$0xff]
      %v885 = vld [vmem:[#allocation2 + $0x1b0] sm:$0xff]
      %v886 = vld [vmem:[#allocation2 + $0x1b8] sm:$0xff]
      %v887 = vld [vmem:[#allocation2 + $0x1c0] sm:$0xff]
      %v888 = vld [vmem:[#allocation2 + $0x1c8] sm:$0xff]
      %v889 = vld [vmem:[#allocation2 + $0x1d0] sm:$0xff]
      %v890 = vld [vmem:[#allocation2 + $0x1d8] sm:$0xff]
      %v891 = vld [vmem:[#allocation2 + $0x1e0] sm:$0xff]
      %v892 = vld [vmem:[#allocation2 + $0x1e8] sm:$0xff]
      %v893 = vld [vmem:[#allocation2 + $0x1f0] sm:$0xff]
      %v894 = vld [vmem:[#allocation2 + $0x1f8] sm:$0xff]
      %v895 = vld [vmem:[#allocation2 + $0x200] sm:$0x7f]
      %v896 = vld [vmem:[#allocation2 + $0x208] sm:$0x7f]
      %vm963 = vcmask 1040384
      %v964 = vrot.slane %v831, 7
      %v965 = vrot.slane %v833, 7
      %v966 = vsel %vm963, %v964, %v965
      %v967 = vrot.slane %v832, 7
      %v968 = vrot.slane %v834, 7
      %v969 = vsel %vm963, %v967, %v968
      %v970 = vrot.slane %v835, 7
      %v971 = vsel %vm963, %v965, %v970
      %v972 = vrot.slane %v836, 7
      %v973 = vsel %vm963, %v968, %v972
      %v974 = vrot.slane %v837, 7
      %v975 = vsel %vm963, %v970, %v974
      %v976 = vrot.slane %v838, 7
      %v977 = vsel %vm963, %v972, %v976
      %v978 = vrot.slane %v839, 7
      %v979 = vsel %vm963, %v974, %v978
      %v980 = vrot.slane %v840, 7
      %v981 = vsel %vm963, %v976, %v980
      %v982 = vrot.slane %v841, 7
      %v983 = vsel %vm963, %v978, %v982
      %v984 = vrot.slane %v842, 7
      %v985 = vsel %vm963, %v980, %v984
      %v986 = vrot.slane %v843, 7
      %v987 = vsel %vm963, %v982, %v986
      %v988 = vrot.slane %v844, 7
      %v989 = vsel %vm963, %v984, %v988
      %v990 = vrot.slane %v845, 7
      %v991 = vsel %vm963, %v986, %v990
      %v992 = vrot.slane %v846, 7
      %v993 = vsel %vm963, %v988, %v992
      %v994 = vrot.slane %v847, 7
      %v995 = vsel %vm963, %v990, %v994
      %v996 = vrot.slane %v848, 7
      %v997 = vsel %vm963, %v992, %v996
      %v998 = vrot.slane %v849, 7
      %v999 = vsel %vm963, %v994, %v998
      %v1000 = vrot.slane %v850, 7
      %v1001 = vsel %vm963, %v996, %v1000
      %v1002 = vrot.slane %v851, 7
      %v1003 = vsel %vm963, %v998, %v1002
      %v1004 = vrot.slane %v852, 7
      %v1005 = vsel %vm963, %v1000, %v1004
      %v1006 = vrot.slane %v853, 7
      %v1007 = vsel %vm963, %v1002, %v1006
      %v1008 = vrot.slane %v854, 7
      %v1009 = vsel %vm963, %v1004, %v1008
      %v1010 = vrot.slane %v855, 7
      %v1011 = vsel %vm963, %v1006, %v1010
      %v1012 = vrot.slane %v856, 7
      %v1013 = vsel %vm963, %v1008, %v1012
      %v1014 = vrot.slane %v857, 7
      %v1015 = vsel %vm963, %v1010, %v1014
      %v1016 = vrot.slane %v858, 7
      %v1017 = vsel %vm963, %v1012, %v1016
      %v1018 = vrot.slane %v859, 7
      %v1019 = vsel %vm963, %v1014, %v1018
      %v1020 = vrot.slane %v860, 7
      %v1021 = vsel %vm963, %v1016, %v1020
      %v1022 = vrot.slane %v861, 7
      %v1023 = vsel %vm963, %v1018, %v1022
      %v1024 = vrot.slane %v862, 7
      %v1025 = vsel %vm963, %v1020, %v1024
      %v1026 = vrot.slane %v863, 7
      %v1027 = vsel %vm963, %v1022, %v1026
      %v1028 = vrot.slane %v864, 7
      %v1029 = vsel %vm963, %v1024, %v1028
      %v1030 = vrot.slane %v865, 7
      %v1031 = vsel %vm963, %v1026, %v1030
      %v1032 = vrot.slane %v866, 7
      %v1033 = vsel %vm963, %v1028, %v1032
      %v1034 = vrot.slane %v867, 7
      %v1035 = vsel %vm963, %v1030, %v1034
      %v1036 = vrot.slane %v868, 7
      %v1037 = vsel %vm963, %v1032, %v1036
      %v1038 = vrot.slane %v869, 7
      %v1039 = vsel %vm963, %v1034, %v1038
      %v1040 = vrot.slane %v870, 7
      %v1041 = vsel %vm963, %v1036, %v1040
      %v1042 = vrot.slane %v871, 7
      %v1043 = vsel %vm963, %v1038, %v1042
      %v1044 = vrot.slane %v872, 7
      %v1045 = vsel %vm963, %v1040, %v1044
      %v1046 = vrot.slane %v873, 7
      %v1047 = vsel %vm963, %v1042, %v1046
      %v1048 = vrot.slane %v874, 7
      %v1049 = vsel %vm963, %v1044, %v1048
      %v1050 = vrot.slane %v875, 7
      %v1051 = vsel %vm963, %v1046, %v1050
      %v1052 = vrot.slane %v876, 7
      %v1053 = vsel %vm963, %v1048, %v1052
      %v1054 = vrot.slane %v877, 7
      %v1055 = vsel %vm963, %v1050, %v1054
      %v1056 = vrot.slane %v878, 7
      %v1057 = vsel %vm963, %v1052, %v1056
      %v1058 = vrot.slane %v879, 7
      %v1059 = vsel %vm963, %v1054, %v1058
      %v1060 = vrot.slane %v880, 7
      %v1061 = vsel %vm963, %v1056, %v1060
      %v1062 = vrot.slane %v881, 7
      %v1063 = vsel %vm963, %v1058, %v1062
      %v1064 = vrot.slane %v882, 7
      %v1065 = vsel %vm963, %v1060, %v1064
      %v1066 = vrot.slane %v883, 7
      %v1067 = vsel %vm963, %v1062, %v1066
      %v1068 = vrot.slane %v884, 7
      %v1069 = vsel %vm963, %v1064, %v1068
      %v1070 = vrot.slane %v885, 7
      %v1071 = vsel %vm963, %v1066, %v1070
      %v1072 = vrot.slane %v886, 7
      %v1073 = vsel %vm963, %v1068, %v1072
      %v1074 = vrot.slane %v887, 7
      %v1075 = vsel %vm963, %v1070, %v1074
      %v1076 = vrot.slane %v888, 7
      %v1077 = vsel %vm963, %v1072, %v1076
      %v1078 = vrot.slane %v889, 7
      %v1079 = vsel %vm963, %v1074, %v1078
      %v1080 = vrot.slane %v890, 7
      %v1081 = vsel %vm963, %v1076, %v1080
      %v1082 = vrot.slane %v891, 7
      %v1083 = vsel %vm963, %v1078, %v1082
      %v1084 = vrot.slane %v892, 7
      %v1085 = vsel %vm963, %v1080, %v1084
      %v1086 = vrot.slane %v893, 7
      %v1087 = vsel %vm963, %v1082, %v1086
      %v1088 = vrot.slane %v894, 7
      %v1089 = vsel %vm963, %v1084, %v1088
      %v1090 = vrot.slane %v895, 7
      %v1091 = vsel %vm963, %v1086, %v1090
      %v1092 = vrot.slane %v896, 7
      %v1093 = vsel %vm963, %v1088, %v1092
      %v1158 = vsel %vm639, %v966, 0.0
      %v1159 = vsel %vm639, %v969, 0.0
      %v1160 = vsel %vm640, %v971, 0.0
      %v1161 = vsel %vm640, %v973, 0.0
      %v1162 = vsel %vm641, %v975, 0.0
      %v1163 = vsel %vm641, %v977, 0.0
      %v1164 = vsel %vm642, %v979, 0.0
      %v1165 = vsel %vm642, %v981, 0.0
      %v1166 = vsel %vm643, %v983, 0.0
      %v1167 = vsel %vm643, %v985, 0.0
      %v1168 = vsel %vm644, %v987, 0.0
      %v1169 = vsel %vm644, %v989, 0.0
      %v1170 = vsel %vm645, %v991, 0.0
      %v1171 = vsel %vm645, %v993, 0.0
      %v1172 = vsel %vm646, %v995, 0.0
      %v1173 = vsel %vm646, %v997, 0.0
      %v1174 = vsel %vm647, %v999, 0.0
      %v1175 = vsel %vm647, %v1001, 0.0
      %v1176 = vsel %vm648, %v1003, 0.0
      %v1177 = vsel %vm648, %v1005, 0.0
      %v1178 = vsel %vm649, %v1007, 0.0
      %v1179 = vsel %vm649, %v1009, 0.0
      %v1180 = vsel %vm650, %v1011, 0.0
      %v1181 = vsel %vm650, %v1013, 0.0
      %v1182 = vsel %vm651, %v1015, 0.0
      %v1183 = vsel %vm651, %v1017, 0.0
      %v1184 = vsel %vm652, %v1019, 0.0
      %v1185 = vsel %vm652, %v1021, 0.0
      %v1186 = vsel %vm653, %v1023, 0.0
      %v1187 = vsel %vm653, %v1025, 0.0
      %v1188 = vsel %vm654, %v1027, 0.0
      %v1189 = vsel %vm654, %v1029, 0.0
      %v1190 = vsel %vm655, %v1031, 0.0
      %v1191 = vsel %vm655, %v1033, 0.0
      %v1192 = vsel %vm656, %v1035, 0.0
      %v1193 = vsel %vm656, %v1037, 0.0
      %v1194 = vsel %vm657, %v1039, 0.0
      %v1195 = vsel %vm657, %v1041, 0.0
      %v1196 = vsel %vm658, %v1043, 0.0
      %v1197 = vsel %vm658, %v1045, 0.0
      %v1198 = vsel %vm659, %v1047, 0.0
      %v1199 = vsel %vm659, %v1049, 0.0
      %v1200 = vsel %vm660, %v1051, 0.0
      %v1201 = vsel %vm660, %v1053, 0.0
      %v1202 = vsel %vm661, %v1055, 0.0
      %v1203 = vsel %vm661, %v1057, 0.0
      %v1204 = vsel %vm662, %v1059, 0.0
      %v1205 = vsel %vm662, %v1061, 0.0
      %v1206 = vsel %vm663, %v1063, 0.0
      %v1207 = vsel %vm663, %v1065, 0.0
      %v1208 = vsel %vm664, %v1067, 0.0
      %v1209 = vsel %vm664, %v1069, 0.0
      %v1210 = vsel %vm665, %v1071, 0.0
      %v1211 = vsel %vm665, %v1073, 0.0
      %v1212 = vsel %vm666, %v1075, 0.0
      %v1213 = vsel %vm666, %v1077, 0.0
      %v1214 = vsel %vm667, %v1079, 0.0
      %v1215 = vsel %vm667, %v1081, 0.0
      %v1216 = vsel %vm668, %v1083, 0.0
      %v1217 = vsel %vm668, %v1085, 0.0
      %v1218 = vsel %vm669, %v1087, 0.0
      %v1219 = vsel %vm669, %v1089, 0.0
      %v1220 = vsel %vm670, %v1091, 0.0
      %v1221 = vsel %vm670, %v1093, 0.0
      %v1222 = vld [vmem:[#allocation2 + $0x200] sm:$0xff]
      %v1223 = vld [vmem:[#allocation2 + $0x208] sm:$0xff]
      %v1224 = vld [vmem:[#allocation2 + $0x10] sm:$0xfe]
      %v1225 = vld [vmem:[#allocation2 + $0x18] sm:$0xfe]
      %v1226 = vld [vmem:[#allocation2 + $0x210] sm:$0x1]
      %v1227 = vld [vmem:[#allocation2 + $0x218] sm:$0x1]
      %vm1234 = vcmask 1046528
      %v1235 = vrot.slane %v1224, 1
      %v1236 = vrot.slane %v835, 1
      %v1237 = vsel %vm1234, %v1235, %v1236
      %v1238 = vrot.slane %v1225, 1
      %v1239 = vrot.slane %v836, 1
      %v1240 = vsel %vm1234, %v1238, %v1239
      %v1241 = vrot.slane %v837, 1
      %v1242 = vsel %vm1234, %v1236, %v1241
      %v1243 = vrot.slane %v838, 1
      %v1244 = vsel %vm1234, %v1239, %v1243
      %v1245 = vrot.slane %v839, 1
      %v1246 = vsel %vm1234, %v1241, %v1245
      %v1247 = vrot.slane %v840, 1
      %v1248 = vsel %vm1234, %v1243, %v1247
      %v1249 = vrot.slane %v841, 1
      %v1250 = vsel %vm1234, %v1245, %v1249
      %v1251 = vrot.slane %v842, 1
      %v1252 = vsel %vm1234, %v1247, %v1251
      %v1253 = vrot.slane %v843, 1
      %v1254 = vsel %vm1234, %v1249, %v1253
      %v1255 = vrot.slane %v844, 1
      %v1256 = vsel %vm1234, %v1251, %v1255
      %v1257 = vrot.slane %v845, 1
      %v1258 = vsel %vm1234, %v1253, %v1257
      %v1259 = vrot.slane %v846, 1
      %v1260 = vsel %vm1234, %v1255, %v1259
      %v1261 = vrot.slane %v847, 1
      %v1262 = vsel %vm1234, %v1257, %v1261
      %v1263 = vrot.slane %v848, 1
      %v1264 = vsel %vm1234, %v1259, %v1263
      %v1265 = vrot.slane %v849, 1
      %v1266 = vsel %vm1234, %v1261, %v1265
      %v1267 = vrot.slane %v850, 1
      %v1268 = vsel %vm1234, %v1263, %v1267
      %v1269 = vrot.slane %v851, 1
      %v1270 = vsel %vm1234, %v1265, %v1269
      %v1271 = vrot.slane %v852, 1
      %v1272 = vsel %vm1234, %v1267, %v1271
      %v1273 = vrot.slane %v853, 1
      %v1274 = vsel %vm1234, %v1269, %v1273
      %v1275 = vrot.slane %v854, 1
      %v1276 = vsel %vm1234, %v1271, %v1275
      %v1277 = vrot.slane %v855, 1
      %v1278 = vsel %vm1234, %v1273, %v1277
      %v1279 = vrot.slane %v856, 1
      %v1280 = vsel %vm1234, %v1275, %v1279
      %v1281 = vrot.slane %v857, 1
      %v1282 = vsel %vm1234, %v1277, %v1281
      %v1283 = vrot.slane %v858, 1
      %v1284 = vsel %vm1234, %v1279, %v1283
      %v1285 = vrot.slane %v859, 1
      %v1286 = vsel %vm1234, %v1281, %v1285
      %v1287 = vrot.slane %v860, 1
      %v1288 = vsel %vm1234, %v1283, %v1287
      %v1289 = vrot.slane %v861, 1
      %v1290 = vsel %vm1234, %v1285, %v1289
      %v1291 = vrot.slane %v862, 1
      %v1292 = vsel %vm1234, %v1287, %v1291
      %v1293 = vrot.slane %v863, 1
      %v1294 = vsel %vm1234, %v1289, %v1293
      %v1295 = vrot.slane %v864, 1
      %v1296 = vsel %vm1234, %v1291, %v1295
      %v1297 = vrot.slane %v865, 1
      %v1298 = vsel %vm1234, %v1293, %v1297
      %v1299 = vrot.slane %v866, 1
      %v1300 = vsel %vm1234, %v1295, %v1299
      %v1301 = vrot.slane %v867, 1
      %v1302 = vsel %vm1234, %v1297, %v1301
      %v1303 = vrot.slane %v868, 1
      %v1304 = vsel %vm1234, %v1299, %v1303
      %v1305 = vrot.slane %v869, 1
      %v1306 = vsel %vm1234, %v1301, %v1305
      %v1307 = vrot.slane %v870, 1
      %v1308 = vsel %vm1234, %v1303, %v1307
      %v1309 = vrot.slane %v871, 1
      %v1310 = vsel %vm1234, %v1305, %v1309
      %v1311 = vrot.slane %v872, 1
      %v1312 = vsel %vm1234, %v1307, %v1311
      %v1313 = vrot.slane %v873, 1
      %v1314 = vsel %vm1234, %v1309, %v1313
      %v1315 = vrot.slane %v874, 1
      %v1316 = vsel %vm1234, %v1311, %v1315
      %v1317 = vrot.slane %v875, 1
      %v1318 = vsel %vm1234, %v1313, %v1317
      %v1319 = vrot.slane %v876, 1
      %v1320 = vsel %vm1234, %v1315, %v1319
      %v1321 = vrot.slane %v877, 1
      %v1322 = vsel %vm1234, %v1317, %v1321
      %v1323 = vrot.slane %v878, 1
      %v1324 = vsel %vm1234, %v1319, %v1323
      %v1325 = vrot.slane %v879, 1
      %v1326 = vsel %vm1234, %v1321, %v1325
      %v1327 = vrot.slane %v880, 1
      %v1328 = vsel %vm1234, %v1323, %v1327
      %v1329 = vrot.slane %v881, 1
      %v1330 = vsel %vm1234, %v1325, %v1329
      %v1331 = vrot.slane %v882, 1
      %v1332 = vsel %vm1234, %v1327, %v1331
      %v1333 = vrot.slane %v883, 1
      %v1334 = vsel %vm1234, %v1329, %v1333
      %v1335 = vrot.slane %v884, 1
      %v1336 = vsel %vm1234, %v1331, %v1335
      %v1337 = vrot.slane %v885, 1
      %v1338 = vsel %vm1234, %v1333, %v1337
      %v1339 = vrot.slane %v886, 1
      %v1340 = vsel %vm1234, %v1335, %v1339
      %v1341 = vrot.slane %v887, 1
      %v1342 = vsel %vm1234, %v1337, %v1341
      %v1343 = vrot.slane %v888, 1
      %v1344 = vsel %vm1234, %v1339, %v1343
      %v1345 = vrot.slane %v889, 1
      %v1346 = vsel %vm1234, %v1341, %v1345
      %v1347 = vrot.slane %v890, 1
      %v1348 = vsel %vm1234, %v1343, %v1347
      %v1349 = vrot.slane %v891, 1
      %v1350 = vsel %vm1234, %v1345, %v1349
      %v1351 = vrot.slane %v892, 1
      %v1352 = vsel %vm1234, %v1347, %v1351
      %v1353 = vrot.slane %v893, 1
      %v1354 = vsel %vm1234, %v1349, %v1353
      %v1355 = vrot.slane %v894, 1
      %v1356 = vsel %vm1234, %v1351, %v1355
      %v1357 = vrot.slane %v1222, 1
      %v1358 = vsel %vm1234, %v1353, %v1357
      %v1359 = vrot.slane %v1223, 1
      %v1360 = vsel %vm1234, %v1355, %v1359
      %v1361 = vrot.slane %v1226, 1
      %v1362 = vsel %vm1234, %v1357, %v1361
      %v1363 = vrot.slane %v1227, 1
      %v1364 = vsel %vm1234, %v1359, %v1363
      %v1429 = vsel %vm671, %v1237, 0.0
      %v1430 = vsel %vm671, %v1240, 0.0
      %v1431 = vsel %vm672, %v1242, 0.0
      %v1432 = vsel %vm672, %v1244, 0.0
      %v1433 = vsel %vm673, %v1246, 0.0
      %v1434 = vsel %vm673, %v1248, 0.0
      %v1435 = vsel %vm674, %v1250, 0.0
      %v1436 = vsel %vm674, %v1252, 0.0
      %v1437 = vsel %vm675, %v1254, 0.0
      %v1438 = vsel %vm675, %v1256, 0.0
      %v1439 = vsel %vm676, %v1258, 0.0
      %v1440 = vsel %vm676, %v1260, 0.0
      %v1441 = vsel %vm677, %v1262, 0.0
      %v1442 = vsel %vm677, %v1264, 0.0
      %v1443 = vsel %vm678, %v1266, 0.0
      %v1444 = vsel %vm678, %v1268, 0.0
      %v1445 = vsel %vm679, %v1270, 0.0
      %v1446 = vsel %vm679, %v1272, 0.0
      %v1447 = vsel %vm680, %v1274, 0.0
      %v1448 = vsel %vm680, %v1276, 0.0
      %v1449 = vsel %vm681, %v1278, 0.0
      %v1450 = vsel %vm681, %v1280, 0.0
      %v1451 = vsel %vm682, %v1282, 0.0
      %v1452 = vsel %vm682, %v1284, 0.0
      %v1453 = vsel %vm683, %v1286, 0.0
      %v1454 = vsel %vm683, %v1288, 0.0
      %v1455 = vsel %vm684, %v1290, 0.0
      %v1456 = vsel %vm684, %v1292, 0.0
      %v1457 = vsel %vm685, %v1294, 0.0
      %v1458 = vsel %vm685, %v1296, 0.0
      %v1459 = vsel %vm686, %v1298, 0.0
      %v1460 = vsel %vm686, %v1300, 0.0
      %v1461 = vsel %vm687, %v1302, 0.0
      %v1462 = vsel %vm687, %v1304, 0.0
      %v1463 = vsel %vm688, %v1306, 0.0
      %v1464 = vsel %vm688, %v1308, 0.0
      %v1465 = vsel %vm689, %v1310, 0.0
      %v1466 = vsel %vm689, %v1312, 0.0
      %v1467 = vsel %vm690, %v1314, 0.0
      %v1468 = vsel %vm690, %v1316, 0.0
      %v1469 = vsel %vm691, %v1318, 0.0
      %v1470 = vsel %vm691, %v1320, 0.0
      %v1471 = vsel %vm692, %v1322, 0.0
      %v1472 = vsel %vm692, %v1324, 0.0
      %v1473 = vsel %vm693, %v1326, 0.0
      %v1474 = vsel %vm693, %v1328, 0.0
      %v1475 = vsel %vm694, %v1330, 0.0
      %v1476 = vsel %vm694, %v1332, 0.0
      %v1477 = vsel %vm695, %v1334, 0.0
      %v1478 = vsel %vm695, %v1336, 0.0
      %v1479 = vsel %vm696, %v1338, 0.0
      %v1480 = vsel %vm696, %v1340, 0.0
      %v1481 = vsel %vm697, %v1342, 0.0
      %v1482 = vsel %vm697, %v1344, 0.0
      %v1483 = vsel %vm698, %v1346, 0.0
      %v1484 = vsel %vm698, %v1348, 0.0
      %v1485 = vsel %vm699, %v1350, 0.0
      %v1486 = vsel %vm699, %v1352, 0.0
      %v1487 = vsel %vm700, %v1354, 0.0
      %v1488 = vsel %vm700, %v1356, 0.0
      %v1489 = vsel %vm701, %v1358, 0.0
      %v1490 = vsel %vm701, %v1360, 0.0
      %v1491 = vsel %vm702, %v1362, 0.0
      %v1492 = vsel %vm702, %v1364, 0.0
      %v1493 = vld [vmem:[#allocation2 + $0x20] sm:$0x80]
      %v1494 = vld [vmem:[#allocation2 + $0x28] sm:$0x80]
      %v1495 = vld [vmem:[#allocation2 + $0x210] sm:$0xff]
      %v1496 = vld [vmem:[#allocation2 + $0x218] sm:$0xff]
      %v1497 = vld [vmem:[#allocation2 + $0x220] sm:$0x7f]
      %v1498 = vld [vmem:[#allocation2 + $0x228] sm:$0x7f]
      %v1505 = vrot.slane %v1493, 7
      %v1506 = vsel %vm963, %v1505, %v974
      %v1507 = vrot.slane %v1494, 7
      %v1508 = vsel %vm963, %v1507, %v976
      %v1509 = vrot.slane %v1222, 7
      %v1510 = vsel %vm963, %v1086, %v1509
      %v1511 = vrot.slane %v1223, 7
      %v1512 = vsel %vm963, %v1088, %v1511
      %v1513 = vrot.slane %v1495, 7
      %v1514 = vsel %vm963, %v1509, %v1513
      %v1515 = vrot.slane %v1496, 7
      %v1516 = vsel %vm963, %v1511, %v1515
      %v1517 = vrot.slane %v1497, 7
      %v1518 = vsel %vm963, %v1513, %v1517
      %v1519 = vrot.slane %v1498, 7
      %v1520 = vsel %vm963, %v1515, %v1519
      %v1529 = vsel %vm639, %v1506, 0.0
      %v1530 = vsel %vm639, %v1508, 0.0
      %v1531 = vsel %vm640, %v979, 0.0
      %v1532 = vsel %vm640, %v981, 0.0
      %v1533 = vsel %vm641, %v983, 0.0
      %v1534 = vsel %vm641, %v985, 0.0
      %v1535 = vsel %vm642, %v987, 0.0
      %v1536 = vsel %vm642, %v989, 0.0
      %v1537 = vsel %vm643, %v991, 0.0
      %v1538 = vsel %vm643, %v993, 0.0
      %v1539 = vsel %vm644, %v995, 0.0
      %v1540 = vsel %vm644, %v997, 0.0
      %v1541 = vsel %vm645, %v999, 0.0
      %v1542 = vsel %vm645, %v1001, 0.0
      %v1543 = vsel %vm646, %v1003, 0.0
      %v1544 = vsel %vm646, %v1005, 0.0
      %v1545 = vsel %vm647, %v1007, 0.0
      %v1546 = vsel %vm647, %v1009, 0.0
      %v1547 = vsel %vm648, %v1011, 0.0
      %v1548 = vsel %vm648, %v1013, 0.0
      %v1549 = vsel %vm649, %v1015, 0.0
      %v1550 = vsel %vm649, %v1017, 0.0
      %v1551 = vsel %vm650, %v1019, 0.0
      %v1552 = vsel %vm650, %v1021, 0.0
      %v1553 = vsel %vm651, %v1023, 0.0
      %v1554 = vsel %vm651, %v1025, 0.0
      %v1555 = vsel %vm652, %v1027, 0.0
      %v1556 = vsel %vm652, %v1029, 0.0
      %v1557 = vsel %vm653, %v1031, 0.0
      %v1558 = vsel %vm653, %v1033, 0.0
      %v1559 = vsel %vm654, %v1035, 0.0
      %v1560 = vsel %vm654, %v1037, 0.0
      %v1561 = vsel %vm655, %v1039, 0.0
      %v1562 = vsel %vm655, %v1041, 0.0
      %v1563 = vsel %vm656, %v1043, 0.0
      %v1564 = vsel %vm656, %v1045, 0.0
      %v1565 = vsel %vm657, %v1047, 0.0
      %v1566 = vsel %vm657, %v1049, 0.0
      %v1567 = vsel %vm658, %v1051, 0.0
      %v1568 = vsel %vm658, %v1053, 0.0
      %v1569 = vsel %vm659, %v1055, 0.0
      %v1570 = vsel %vm659, %v1057, 0.0
      %v1571 = vsel %vm660, %v1059, 0.0
      %v1572 = vsel %vm660, %v1061, 0.0
      %v1573 = vsel %vm661, %v1063, 0.0
      %v1574 = vsel %vm661, %v1065, 0.0
      %v1575 = vsel %vm662, %v1067, 0.0
      %v1576 = vsel %vm662, %v1069, 0.0
      %v1577 = vsel %vm663, %v1071, 0.0
      %v1578 = vsel %vm663, %v1073, 0.0
      %v1579 = vsel %vm664, %v1075, 0.0
      %v1580 = vsel %vm664, %v1077, 0.0
      %v1581 = vsel %vm665, %v1079, 0.0
      %v1582 = vsel %vm665, %v1081, 0.0
      %v1583 = vsel %vm666, %v1083, 0.0
      %v1584 = vsel %vm666, %v1085, 0.0
      %v1585 = vsel %vm667, %v1087, 0.0
      %v1586 = vsel %vm667, %v1089, 0.0
      %v1587 = vsel %vm668, %v1510, 0.0
      %v1588 = vsel %vm668, %v1512, 0.0
      %v1589 = vsel %vm669, %v1514, 0.0
      %v1590 = vsel %vm669, %v1516, 0.0
      %v1591 = vsel %vm670, %v1518, 0.0
      %v1592 = vsel %vm670, %v1520, 0.0
      %v1593 = vld [vmem:[#allocation2 + $0x220] sm:$0xff]
      %v1594 = vld [vmem:[#allocation2 + $0x228] sm:$0xff]
      %v1595 = vld [vmem:[#allocation2 + $0x30] sm:$0xfe]
      %v1596 = vld [vmem:[#allocation2 + $0x38] sm:$0xfe]
      %v1597 = vld [vmem:[#allocation2 + $0x230] sm:$0x1]
      %v1598 = vld [vmem:[#allocation2 + $0x238] sm:$0x1]
      %v1605 = vrot.slane %v1595, 1
      %v1606 = vsel %vm1234, %v1605, %v1245
      %v1607 = vrot.slane %v1596, 1
      %v1608 = vsel %vm1234, %v1607, %v1247
      %v1609 = vrot.slane %v1495, 1
      %v1610 = vsel %vm1234, %v1357, %v1609
      %v1611 = vrot.slane %v1496, 1
      %v1612 = vsel %vm1234, %v1359, %v1611
      %v1613 = vrot.slane %v1593, 1
      %v1614 = vsel %vm1234, %v1609, %v1613
      %v1615 = vrot.slane %v1594, 1
      %v1616 = vsel %vm1234, %v1611, %v1615
      %v1617 = vrot.slane %v1597, 1
      %v1618 = vsel %vm1234, %v1613, %v1617
      %v1619 = vrot.slane %v1598, 1
      %v1620 = vsel %vm1234, %v1615, %v1619
      %v1629 = vsel %vm671, %v1606, 0.0
      %v1630 = vsel %vm671, %v1608, 0.0
      %v1631 = vsel %vm672, %v1250, 0.0
      %v1632 = vsel %vm672, %v1252, 0.0
      %v1633 = vsel %vm673, %v1254, 0.0
      %v1634 = vsel %vm673, %v1256, 0.0
      %v1635 = vsel %vm674, %v1258, 0.0
      %v1636 = vsel %vm674, %v1260, 0.0
      %v1637 = vsel %vm675, %v1262, 0.0
      %v1638 = vsel %vm675, %v1264, 0.0
      %v1639 = vsel %vm676, %v1266, 0.0
      %v1640 = vsel %vm676, %v1268, 0.0
      %v1641 = vsel %vm677, %v1270, 0.0
      %v1642 = vsel %vm677, %v1272, 0.0
      %v1643 = vsel %vm678, %v1274, 0.0
      %v1644 = vsel %vm678, %v1276, 0.0
      %v1645 = vsel %vm679, %v1278, 0.0
      %v1646 = vsel %vm679, %v1280, 0.0
      %v1647 = vsel %vm680, %v1282, 0.0
      %v1648 = vsel %vm680, %v1284, 0.0
      %v1649 = vsel %vm681, %v1286, 0.0
      %v1650 = vsel %vm681, %v1288, 0.0
      %v1651 = vsel %vm682, %v1290, 0.0
      %v1652 = vsel %vm682, %v1292, 0.0
      %v1653 = vsel %vm683, %v1294, 0.0
      %v1654 = vsel %vm683, %v1296, 0.0
      %v1655 = vsel %vm684, %v1298, 0.0
      %v1656 = vsel %vm684, %v1300, 0.0
      %v1657 = vsel %vm685, %v1302, 0.0
      %v1658 = vsel %vm685, %v1304, 0.0
      %v1659 = vsel %vm686, %v1306, 0.0
      %v1660 = vsel %vm686, %v1308, 0.0
      %v1661 = vsel %vm687, %v1310, 0.0
      %v1662 = vsel %vm687, %v1312, 0.0
      %v1663 = vsel %vm688, %v1314, 0.0
      %v1664 = vsel %vm688, %v1316, 0.0
      %v1665 = vsel %vm689, %v1318, 0.0
      %v1666 = vsel %vm689, %v1320, 0.0
      %v1667 = vsel %vm690, %v1322, 0.0
      %v1668 = vsel %vm690, %v1324, 0.0
      %v1669 = vsel %vm691, %v1326, 0.0
      %v1670 = vsel %vm691, %v1328, 0.0
      %v1671 = vsel %vm692, %v1330, 0.0
      %v1672 = vsel %vm692, %v1332, 0.0
      %v1673 = vsel %vm693, %v1334, 0.0
      %v1674 = vsel %vm693, %v1336, 0.0
      %v1675 = vsel %vm694, %v1338, 0.0
      %v1676 = vsel %vm694, %v1340, 0.0
      %v1677 = vsel %vm695, %v1342, 0.0
      %v1678 = vsel %vm695, %v1344, 0.0
      %v1679 = vsel %vm696, %v1346, 0.0
      %v1680 = vsel %vm696, %v1348, 0.0
      %v1681 = vsel %vm697, %v1350, 0.0
      %v1682 = vsel %vm697, %v1352, 0.0
      %v1683 = vsel %vm698, %v1354, 0.0
      %v1684 = vsel %vm698, %v1356, 0.0
      %v1685 = vsel %vm699, %v1358, 0.0
      %v1686 = vsel %vm699, %v1360, 0.0
      %v1687 = vsel %vm700, %v1610, 0.0
      %v1688 = vsel %vm700, %v1612, 0.0
      %v1689 = vsel %vm701, %v1614, 0.0
      %v1690 = vsel %vm701, %v1616, 0.0
      %v1691 = vsel %vm702, %v1618, 0.0
      %v1692 = vsel %vm702, %v1620, 0.0
      %v1693 = vld [vmem:[#allocation2 + $0x40] sm:$0x80]
      %v1694 = vld [vmem:[#allocation2 + $0x48] sm:$0x80]
      %v1695 = vld [vmem:[#allocation2 + $0x230] sm:$0xff]
      %v1696 = vld [vmem:[#allocation2 + $0x238] sm:$0xff]
      %v1697 = vld [vmem:[#allocation2 + $0x240] sm:$0x7f]
      %v1698 = vld [vmem:[#allocation2 + $0x248] sm:$0x7f]
      %v1705 = vrot.slane %v1693, 7
      %v1706 = vsel %vm963, %v1705, %v982
      %v1707 = vrot.slane %v1694, 7
      %v1708 = vsel %vm963, %v1707, %v984
      %v1709 = vrot.slane %v1593, 7
      %v1710 = vsel %vm963, %v1513, %v1709
      %v1711 = vrot.slane %v1594, 7
      %v1712 = vsel %vm963, %v1515, %v1711
      %v1713 = vrot.slane %v1695, 7
      %v1714 = vsel %vm963, %v1709, %v1713
      %v1715 = vrot.slane %v1696, 7
      %v1716 = vsel %vm963, %v1711, %v1715
      %v1717 = vrot.slane %v1697, 7
      %v1718 = vsel %vm963, %v1713, %v1717
      %v1719 = vrot.slane %v1698, 7
      %v1720 = vsel %vm963, %v1715, %v1719
      %v1729 = vsel %vm639, %v1706, 0.0
      %v1730 = vsel %vm639, %v1708, 0.0
      %v1731 = vsel %vm640, %v987, 0.0
      %v1732 = vsel %vm640, %v989, 0.0
      %v1733 = vsel %vm641, %v991, 0.0
      %v1734 = vsel %vm641, %v993, 0.0
      %v1735 = vsel %vm642, %v995, 0.0
      %v1736 = vsel %vm642, %v997, 0.0
      %v1737 = vsel %vm643, %v999, 0.0
      %v1738 = vsel %vm643, %v1001, 0.0
      %v1739 = vsel %vm644, %v1003, 0.0
      %v1740 = vsel %vm644, %v1005, 0.0
      %v1741 = vsel %vm645, %v1007, 0.0
      %v1742 = vsel %vm645, %v1009, 0.0
      %v1743 = vsel %vm646, %v1011, 0.0
      %v1744 = vsel %vm646, %v1013, 0.0
      %v1745 = vsel %vm647, %v1015, 0.0
      %v1746 = vsel %vm647, %v1017, 0.0
      %v1747 = vsel %vm648, %v1019, 0.0
      %v1748 = vsel %vm648, %v1021, 0.0
      %v1749 = vsel %vm649, %v1023, 0.0
      %v1750 = vsel %vm649, %v1025, 0.0
      %v1751 = vsel %vm650, %v1027, 0.0
      %v1752 = vsel %vm650, %v1029, 0.0
      %v1753 = vsel %vm651, %v1031, 0.0
      %v1754 = vsel %vm651, %v1033, 0.0
      %v1755 = vsel %vm652, %v1035, 0.0
      %v1756 = vsel %vm652, %v1037, 0.0
      %v1757 = vsel %vm653, %v1039, 0.0
      %v1758 = vsel %vm653, %v1041, 0.0
      %v1759 = vsel %vm654, %v1043, 0.0
      %v1760 = vsel %vm654, %v1045, 0.0
      %v1761 = vsel %vm655, %v1047, 0.0
      %v1762 = vsel %vm655, %v1049, 0.0
      %v1763 = vsel %vm656, %v1051, 0.0
      %v1764 = vsel %vm656, %v1053, 0.0
      %v1765 = vsel %vm657, %v1055, 0.0
      %v1766 = vsel %vm657, %v1057, 0.0
      %v1767 = vsel %vm658, %v1059, 0.0
      %v1768 = vsel %vm658, %v1061, 0.0
      %v1769 = vsel %vm659, %v1063, 0.0
      %v1770 = vsel %vm659, %v1065, 0.0
      %v1771 = vsel %vm660, %v1067, 0.0
      %v1772 = vsel %vm660, %v1069, 0.0
      %v1773 = vsel %vm661, %v1071, 0.0
      %v1774 = vsel %vm661, %v1073, 0.0
      %v1775 = vsel %vm662, %v1075, 0.0
      %v1776 = vsel %vm662, %v1077, 0.0
      %v1777 = vsel %vm663, %v1079, 0.0
      %v1778 = vsel %vm663, %v1081, 0.0
      %v1779 = vsel %vm664, %v1083, 0.0
      %v1780 = vsel %vm664, %v1085, 0.0
      %v1781 = vsel %vm665, %v1087, 0.0
      %v1782 = vsel %vm665, %v1089, 0.0
      %v1783 = vsel %vm666, %v1510, 0.0
      %v1784 = vsel %vm666, %v1512, 0.0
      %v1785 = vsel %vm667, %v1514, 0.0
      %v1786 = vsel %vm667, %v1516, 0.0
      %v1787 = vsel %vm668, %v1710, 0.0
      %v1788 = vsel %vm668, %v1712, 0.0
      %v1789 = vsel %vm669, %v1714, 0.0
      %v1790 = vsel %vm669, %v1716, 0.0
      %v1791 = vsel %vm670, %v1718, 0.0
      %v1792 = vsel %vm670, %v1720, 0.0
      %v1793 = vld [vmem:[#allocation2 + $0x240] sm:$0xff]
      %v1794 = vld [vmem:[#allocation2 + $0x248] sm:$0xff]
      %v1795 = vld [vmem:[#allocation2 + $0x50] sm:$0xfe]
      %v1796 = vld [vmem:[#allocation2 + $0x58] sm:$0xfe]
      %v1797 = vld [vmem:[#allocation2 + $0x250] sm:$0x1]
      %v1798 = vld [vmem:[#allocation2 + $0x258] sm:$0x1]
      %v1805 = vrot.slane %v1795, 1
      %v1806 = vsel %vm1234, %v1805, %v1253
      %v1807 = vrot.slane %v1796, 1
      %v1808 = vsel %vm1234, %v1807, %v1255
      %v1809 = vrot.slane %v1695, 1
      %v1810 = vsel %vm1234, %v1613, %v1809
      %v1811 = vrot.slane %v1696, 1
      %v1812 = vsel %vm1234, %v1615, %v1811
      %v1813 = vrot.slane %v1793, 1
      %v1814 = vsel %vm1234, %v1809, %v1813
      %v1815 = vrot.slane %v1794, 1
      %v1816 = vsel %vm1234, %v1811, %v1815
      %v1817 = vrot.slane %v1797, 1
      %v1818 = vsel %vm1234, %v1813, %v1817
      %v1819 = vrot.slane %v1798, 1
      %v1820 = vsel %vm1234, %v1815, %v1819
      %v1829 = vsel %vm671, %v1806, 0.0
      %v1830 = vsel %vm671, %v1808, 0.0
      %v1831 = vsel %vm672, %v1258, 0.0
      %v1832 = vsel %vm672, %v1260, 0.0
      %v1833 = vsel %vm673, %v1262, 0.0
      %v1834 = vsel %vm673, %v1264, 0.0
      %v1835 = vsel %vm674, %v1266, 0.0
      %v1836 = vsel %vm674, %v1268, 0.0
      %v1837 = vsel %vm675, %v1270, 0.0
      %v1838 = vsel %vm675, %v1272, 0.0
      %v1839 = vsel %vm676, %v1274, 0.0
      %v1840 = vsel %vm676, %v1276, 0.0
      %v1841 = vsel %vm677, %v1278, 0.0
      %v1842 = vsel %vm677, %v1280, 0.0
      %v1843 = vsel %vm678, %v1282, 0.0
      %v1844 = vsel %vm678, %v1284, 0.0
      %v1845 = vsel %vm679, %v1286, 0.0
      %v1846 = vsel %vm679, %v1288, 0.0
      %v1847 = vsel %vm680, %v1290, 0.0
      %v1848 = vsel %vm680, %v1292, 0.0
      %v1849 = vsel %vm681, %v1294, 0.0
      %v1850 = vsel %vm681, %v1296, 0.0
      %v1851 = vsel %vm682, %v1298, 0.0
      %v1852 = vsel %vm682, %v1300, 0.0
      %v1853 = vsel %vm683, %v1302, 0.0
      %v1854 = vsel %vm683, %v1304, 0.0
      %v1855 = vsel %vm684, %v1306, 0.0
      %v1856 = vsel %vm684, %v1308, 0.0
      %v1857 = vsel %vm685, %v1310, 0.0
      %v1858 = vsel %vm685, %v1312, 0.0
      %v1859 = vsel %vm686, %v1314, 0.0
      %v1860 = vsel %vm686, %v1316, 0.0
      %v1861 = vsel %vm687, %v1318, 0.0
      %v1862 = vsel %vm687, %v1320, 0.0
      %v1863 = vsel %vm688, %v1322, 0.0
      %v1864 = vsel %vm688, %v1324, 0.0
      %v1865 = vsel %vm689, %v1326, 0.0
      %v1866 = vsel %vm689, %v1328, 0.0
      %v1867 = vsel %vm690, %v1330, 0.0
      %v1868 = vsel %vm690, %v1332, 0.0
      %v1869 = vsel %vm691, %v1334, 0.0
      %v1870 = vsel %vm691, %v1336, 0.0
      %v1871 = vsel %vm692, %v1338, 0.0
      %v1872 = vsel %vm692, %v1340, 0.0
      %v1873 = vsel %vm693, %v1342, 0.0
      %v1874 = vsel %vm693, %v1344, 0.0
      %v1875 = vsel %vm694, %v1346, 0.0
      %v1876 = vsel %vm694, %v1348, 0.0
      %v1877 = vsel %vm695, %v1350, 0.0
      %v1878 = vsel %vm695, %v1352, 0.0
      %v1879 = vsel %vm696, %v1354, 0.0
      %v1880 = vsel %vm696, %v1356, 0.0
      %v1881 = vsel %vm697, %v1358, 0.0
      %v1882 = vsel %vm697, %v1360, 0.0
      %v1883 = vsel %vm698, %v1610, 0.0
      %v1884 = vsel %vm698, %v1612, 0.0
      %v1885 = vsel %vm699, %v1614, 0.0
      %v1886 = vsel %vm699, %v1616, 0.0
      %v1887 = vsel %vm700, %v1810, 0.0
      %v1888 = vsel %vm700, %v1812, 0.0
      %v1889 = vsel %vm701, %v1814, 0.0
      %v1890 = vsel %vm701, %v1816, 0.0
      %v1891 = vsel %vm702, %v1818, 0.0
      %v1892 = vsel %vm702, %v1820, 0.0
      %1893 = vrot.lane.b32.xlu0 %v833, 64
      %v1894 = vpop.permute.xlu0 %1893
      %1895 = vrot.lane.b32.xlu0 %v834, 64
      %v1896 = vpop.permute.xlu0 %1895
      %1897 = vrot.lane.b32.xlu0 %v835, 64
      %v1898 = vpop.permute.xlu0 %1897
      %1899 = vrot.lane.b32.xlu0 %v836, 64
      %v1900 = vpop.permute.xlu0 %1899
      %1901 = vrot.lane.b32.xlu0 %v837, 64
      %v1902 = vpop.permute.xlu0 %1901
      %1903 = vrot.lane.b32.xlu0 %v838, 64
      %v1904 = vpop.permute.xlu0 %1903
      %1905 = vrot.lane.b32.xlu0 %v839, 64
      %v1906 = vpop.permute.xlu0 %1905
      %1907 = vrot.lane.b32.xlu0 %v840, 64
      %v1908 = vpop.permute.xlu0 %1907
      %1909 = vrot.lane.b32.xlu0 %v841, 64
      %v1910 = vpop.permute.xlu0 %1909
      %1911 = vrot.lane.b32.xlu0 %v842, 64
      %v1912 = vpop.permute.xlu0 %1911
      %1913 = vrot.lane.b32.xlu0 %v843, 64
      %v1914 = vpop.permute.xlu0 %1913
      %1915 = vrot.lane.b32.xlu0 %v844, 64
      %v1916 = vpop.permute.xlu0 %1915
      %1917 = vrot.lane.b32.xlu0 %v845, 64
      %v1918 = vpop.permute.xlu0 %1917
      %1919 = vrot.lane.b32.xlu0 %v846, 64
      %v1920 = vpop.permute.xlu0 %1919
      %1921 = vrot.lane.b32.xlu0 %v847, 64
      %v1922 = vpop.permute.xlu0 %1921
      %1923 = vrot.lane.b32.xlu0 %v848, 64
      %v1924 = vpop.permute.xlu0 %1923
      %1925 = vrot.lane.b32.xlu0 %v849, 64
      %v1926 = vpop.permute.xlu0 %1925
      %1927 = vrot.lane.b32.xlu0 %v850, 64
      %v1928 = vpop.permute.xlu0 %1927
      %1929 = vrot.lane.b32.xlu0 %v851, 64
      %v1930 = vpop.permute.xlu0 %1929
      %1931 = vrot.lane.b32.xlu0 %v852, 64
      %v1932 = vpop.permute.xlu0 %1931
      %1933 = vrot.lane.b32.xlu0 %v853, 64
      %v1934 = vpop.permute.xlu0 %1933
      %1935 = vrot.lane.b32.xlu0 %v854, 64
      %v1936 = vpop.permute.xlu0 %1935
      %1937 = vrot.lane.b32.xlu0 %v855, 64
      %v1938 = vpop.permute.xlu0 %1937
      %1939 = vrot.lane.b32.xlu0 %v856, 64
      %v1940 = vpop.permute.xlu0 %1939
      %1941 = vrot.lane.b32.xlu0 %v857, 64
      %v1942 = vpop.permute.xlu0 %1941
      %1943 = vrot.lane.b32.xlu0 %v858, 64
      %v1944 = vpop.permute.xlu0 %1943
      %1945 = vrot.lane.b32.xlu0 %v859, 64
      %v1946 = vpop.permute.xlu0 %1945
      %1947 = vrot.lane.b32.xlu0 %v860, 64
      %v1948 = vpop.permute.xlu0 %1947
      %1949 = vrot.lane.b32.xlu0 %v861, 64
      %v1950 = vpop.permute.xlu0 %1949
      %1951 = vrot.lane.b32.xlu0 %v862, 64
      %v1952 = vpop.permute.xlu0 %1951
      %1953 = vrot.lane.b32.xlu0 %v863, 64
      %v1954 = vpop.permute.xlu0 %1953
      %1955 = vrot.lane.b32.xlu0 %v864, 64
      %v1956 = vpop.permute.xlu0 %1955
      %1957 = vrot.lane.b32.xlu0 %v865, 64
      %v1958 = vpop.permute.xlu0 %1957
      %1959 = vrot.lane.b32.xlu0 %v866, 64
      %v1960 = vpop.permute.xlu0 %1959
      %1961 = vrot.lane.b32.xlu0 %v867, 64
      %v1962 = vpop.permute.xlu0 %1961
      %1963 = vrot.lane.b32.xlu0 %v868, 64
      %v1964 = vpop.permute.xlu0 %1963
      %1965 = vrot.lane.b32.xlu0 %v869, 64
      %v1966 = vpop.permute.xlu0 %1965
      %1967 = vrot.lane.b32.xlu0 %v870, 64
      %v1968 = vpop.permute.xlu0 %1967
      %1969 = vrot.lane.b32.xlu0 %v871, 64
      %v1970 = vpop.permute.xlu0 %1969
      %1971 = vrot.lane.b32.xlu0 %v872, 64
      %v1972 = vpop.permute.xlu0 %1971
      %1973 = vrot.lane.b32.xlu0 %v873, 64
      %v1974 = vpop.permute.xlu0 %1973
      %1975 = vrot.lane.b32.xlu0 %v874, 64
      %v1976 = vpop.permute.xlu0 %1975
      %1977 = vrot.lane.b32.xlu0 %v875, 64
      %v1978 = vpop.permute.xlu0 %1977
      %1979 = vrot.lane.b32.xlu0 %v876, 64
      %v1980 = vpop.permute.xlu0 %1979
      %1981 = vrot.lane.b32.xlu0 %v877, 64
      %v1982 = vpop.permute.xlu0 %1981
      %1983 = vrot.lane.b32.xlu0 %v878, 64
      %v1984 = vpop.permute.xlu0 %1983
      %1985 = vrot.lane.b32.xlu0 %v879, 64
      %v1986 = vpop.permute.xlu0 %1985
      %1987 = vrot.lane.b32.xlu0 %v880, 64
      %v1988 = vpop.permute.xlu0 %1987
      %1989 = vrot.lane.b32.xlu0 %v881, 64
      %v1990 = vpop.permute.xlu0 %1989
      %1991 = vrot.lane.b32.xlu0 %v882, 64
      %v1992 = vpop.permute.xlu0 %1991
      %1993 = vrot.lane.b32.xlu0 %v883, 64
      %v1994 = vpop.permute.xlu0 %1993
      %1995 = vrot.lane.b32.xlu0 %v884, 64
      %v1996 = vpop.permute.xlu0 %1995
      %1997 = vrot.lane.b32.xlu0 %v885, 64
      %v1998 = vpop.permute.xlu0 %1997
      %1999 = vrot.lane.b32.xlu0 %v886, 64
      %v2000 = vpop.permute.xlu0 %1999
      %2001 = vrot.lane.b32.xlu0 %v887, 64
      %v2002 = vpop.permute.xlu0 %2001
      %2003 = vrot.lane.b32.xlu0 %v888, 64
      %v2004 = vpop.permute.xlu0 %2003
      %2005 = vrot.lane.b32.xlu0 %v889, 64
      %v2006 = vpop.permute.xlu0 %2005
      %2007 = vrot.lane.b32.xlu0 %v890, 64
      %v2008 = vpop.permute.xlu0 %2007
      %2009 = vrot.lane.b32.xlu0 %v891, 64
      %v2010 = vpop.permute.xlu0 %2009
      %2011 = vrot.lane.b32.xlu0 %v892, 64
      %v2012 = vpop.permute.xlu0 %2011
      %2013 = vrot.lane.b32.xlu0 %v893, 64
      %v2014 = vpop.permute.xlu0 %2013
      %2015 = vrot.lane.b32.xlu0 %v894, 64
      %v2016 = vpop.permute.xlu0 %2015
      %2017 = vrot.lane.b32.xlu0 %v1222, 64
      %v2018 = vpop.permute.xlu0 %2017
      %2019 = vrot.lane.b32.xlu0 %v1223, 64
      %v2020 = vpop.permute.xlu0 %2019
      %v2021 = vsel %vm210, %v1894, %v1896
      %v2022 = vsel %vm210, %v1898, %v1900
      %v2023 = vsel %vm210, %v1902, %v1904
      %v2024 = vsel %vm210, %v1906, %v1908
      %v2025 = vsel %vm210, %v1910, %v1912
      %v2026 = vsel %vm210, %v1914, %v1916
      %v2027 = vsel %vm210, %v1918, %v1920
      %v2028 = vsel %vm210, %v1922, %v1924
      %v2029 = vsel %vm210, %v1926, %v1928
      %v2030 = vsel %vm210, %v1930, %v1932
      %v2031 = vsel %vm210, %v1934, %v1936
      %v2032 = vsel %vm210, %v1938, %v1940
      %v2033 = vsel %vm210, %v1942, %v1944
      %v2034 = vsel %vm210, %v1946, %v1948
      %v2035 = vsel %vm210, %v1950, %v1952
      %v2036 = vsel %vm210, %v1954, %v1956
      %v2037 = vsel %vm210, %v1958, %v1960
      %v2038 = vsel %vm210, %v1962, %v1964
      %v2039 = vsel %vm210, %v1966, %v1968
      %v2040 = vsel %vm210, %v1970, %v1972
      %v2041 = vsel %vm210, %v1974, %v1976
      %v2042 = vsel %vm210, %v1978, %v1980
      %v2043 = vsel %vm210, %v1982, %v1984
      %v2044 = vsel %vm210, %v1986, %v1988
      %v2045 = vsel %vm210, %v1990, %v1992
      %v2046 = vsel %vm210, %v1994, %v1996
      %v2047 = vsel %vm210, %v1998, %v2000
      %v2048 = vsel %vm210, %v2002, %v2004
      %v2049 = vsel %vm210, %v2006, %v2008
      %v2050 = vsel %vm210, %v2010, %v2012
      %v2051 = vsel %vm210, %v2014, %v2016
      %v2052 = vsel %vm210, %v2018, %v2020
      %2181 = vrot.lane.b32.xlu0 %v1529, 64
      %v2182 = vpop.permute.xlu0 %2181
      %2183 = vrot.lane.b32.xlu0 %v1530, 64
      %v2184 = vpop.permute.xlu0 %2183
      %2185 = vrot.lane.b32.xlu0 %v1531, 64
      %v2186 = vpop.permute.xlu0 %2185
      %2187 = vrot.lane.b32.xlu0 %v1532, 64
      %v2188 = vpop.permute.xlu0 %2187
      %2189 = vrot.lane.b32.xlu0 %v1533, 64
      %v2190 = vpop.permute.xlu0 %2189
      %2191 = vrot.lane.b32.xlu0 %v1534, 64
      %v2192 = vpop.permute.xlu0 %2191
      %2193 = vrot.lane.b32.xlu0 %v1535, 64
      %v2194 = vpop.permute.xlu0 %2193
      %2195 = vrot.lane.b32.xlu0 %v1536, 64
      %v2196 = vpop.permute.xlu0 %2195
      %2197 = vrot.lane.b32.xlu0 %v1537, 64
      %v2198 = vpop.permute.xlu0 %2197
      %2199 = vrot.lane.b32.xlu0 %v1538, 64
      %v2200 = vpop.permute.xlu0 %2199
      %2201 = vrot.lane.b32.xlu0 %v1539, 64
      %v2202 = vpop.permute.xlu0 %2201
      %2203 = vrot.lane.b32.xlu0 %v1540, 64
      %v2204 = vpop.permute.xlu0 %2203
      %2205 = vrot.lane.b32.xlu0 %v1541, 64
      %v2206 = vpop.permute.xlu0 %2205
      %2207 = vrot.lane.b32.xlu0 %v1542, 64
      %v2208 = vpop.permute.xlu0 %2207
      %2209 = vrot.lane.b32.xlu0 %v1543, 64
      %v2210 = vpop.permute.xlu0 %2209
      %2211 = vrot.lane.b32.xlu0 %v1544, 64
      %v2212 = vpop.permute.xlu0 %2211
      %2213 = vrot.lane.b32.xlu0 %v1545, 64
      %v2214 = vpop.permute.xlu0 %2213
      %2215 = vrot.lane.b32.xlu0 %v1546, 64
      %v2216 = vpop.permute.xlu0 %2215
      %2217 = vrot.lane.b32.xlu0 %v1547, 64
      %v2218 = vpop.permute.xlu0 %2217
      %2219 = vrot.lane.b32.xlu0 %v1548, 64
      %v2220 = vpop.permute.xlu0 %2219
      %2221 = vrot.lane.b32.xlu0 %v1549, 64
      %v2222 = vpop.permute.xlu0 %2221
      %2223 = vrot.lane.b32.xlu0 %v1550, 64
      %v2224 = vpop.permute.xlu0 %2223
      %2225 = vrot.lane.b32.xlu0 %v1551, 64
      %v2226 = vpop.permute.xlu0 %2225
      %2227 = vrot.lane.b32.xlu0 %v1552, 64
      %v2228 = vpop.permute.xlu0 %2227
      %2229 = vrot.lane.b32.xlu0 %v1553, 64
      %v2230 = vpop.permute.xlu0 %2229
      %2231 = vrot.lane.b32.xlu0 %v1554, 64
      %v2232 = vpop.permute.xlu0 %2231
      %2233 = vrot.lane.b32.xlu0 %v1555, 64
      %v2234 = vpop.permute.xlu0 %2233
      %2235 = vrot.lane.b32.xlu0 %v1556, 64
      %v2236 = vpop.permute.xlu0 %2235
      %2237 = vrot.lane.b32.xlu0 %v1557, 64
      %v2238 = vpop.permute.xlu0 %2237
      %2239 = vrot.lane.b32.xlu0 %v1558, 64
      %v2240 = vpop.permute.xlu0 %2239
      %2241 = vrot.lane.b32.xlu0 %v1559, 64
      %v2242 = vpop.permute.xlu0 %2241
      %2243 = vrot.lane.b32.xlu0 %v1560, 64
      %v2244 = vpop.permute.xlu0 %2243
      %2245 = vrot.lane.b32.xlu0 %v1561, 64
      %v2246 = vpop.permute.xlu0 %2245
      %2247 = vrot.lane.b32.xlu0 %v1562, 64
      %v2248 = vpop.permute.xlu0 %2247
      %2249 = vrot.lane.b32.xlu0 %v1563, 64
      %v2250 = vpop.permute.xlu0 %2249
      %2251 = vrot.lane.b32.xlu0 %v1564, 64
      %v2252 = vpop.permute.xlu0 %2251
      %2253 = vrot.lane.b32.xlu0 %v1565, 64
      %v2254 = vpop.permute.xlu0 %2253
      %2255 = vrot.lane.b32.xlu0 %v1566, 64
      %v2256 = vpop.permute.xlu0 %2255
      %2257 = vrot.lane.b32.xlu0 %v1567, 64
      %v2258 = vpop.permute.xlu0 %2257
      %2259 = vrot.lane.b32.xlu0 %v1568, 64
      %v2260 = vpop.permute.xlu0 %2259
      %2261 = vrot.lane.b32.xlu0 %v1569, 64
      %v2262 = vpop.permute.xlu0 %2261
      %2263 = vrot.lane.b32.xlu0 %v1570, 64
      %v2264 = vpop.permute.xlu0 %2263
      %2265 = vrot.lane.b32.xlu0 %v1571, 64
      %v2266 = vpop.permute.xlu0 %2265
      %2267 = vrot.lane.b32.xlu0 %v1572, 64
      %v2268 = vpop.permute.xlu0 %2267
      %2269 = vrot.lane.b32.xlu0 %v1573, 64
      %v2270 = vpop.permute.xlu0 %2269
      %2271 = vrot.lane.b32.xlu0 %v1574, 64
      %v2272 = vpop.permute.xlu0 %2271
      %2273 = vrot.lane.b32.xlu0 %v1575, 64
      %v2274 = vpop.permute.xlu0 %2273
      %2275 = vrot.lane.b32.xlu0 %v1576, 64
      %v2276 = vpop.permute.xlu0 %2275
      %2277 = vrot.lane.b32.xlu0 %v1577, 64
      %v2278 = vpop.permute.xlu0 %2277
      %2279 = vrot.lane.b32.xlu0 %v1578, 64
      %v2280 = vpop.permute.xlu0 %2279
      %2281 = vrot.lane.b32.xlu0 %v1579, 64
      %v2282 = vpop.permute.xlu0 %2281
      %2283 = vrot.lane.b32.xlu0 %v1580, 64
      %v2284 = vpop.permute.xlu0 %2283
      %2285 = vrot.lane.b32.xlu0 %v1581, 64
      %v2286 = vpop.permute.xlu0 %2285
      %2287 = vrot.lane.b32.xlu0 %v1582, 64
      %v2288 = vpop.permute.xlu0 %2287
      %2289 = vrot.lane.b32.xlu0 %v1583, 64
      %v2290 = vpop.permute.xlu0 %2289
      %2291 = vrot.lane.b32.xlu0 %v1584, 64
      %v2292 = vpop.permute.xlu0 %2291
      %2293 = vrot.lane.b32.xlu0 %v1585, 64
      %v2294 = vpop.permute.xlu0 %2293
      %2295 = vrot.lane.b32.xlu0 %v1586, 64
      %v2296 = vpop.permute.xlu0 %2295
      %2297 = vrot.lane.b32.xlu0 %v1587, 64
      %v2298 = vpop.permute.xlu0 %2297
      %2299 = vrot.lane.b32.xlu0 %v1588, 64
      %v2300 = vpop.permute.xlu0 %2299
      %2301 = vrot.lane.b32.xlu0 %v1589, 64
      %v2302 = vpop.permute.xlu0 %2301
      %2303 = vrot.lane.b32.xlu0 %v1590, 64
      %v2304 = vpop.permute.xlu0 %2303
      %2305 = vrot.lane.b32.xlu0 %v1591, 64
      %v2306 = vpop.permute.xlu0 %2305
      %2307 = vrot.lane.b32.xlu0 %v1592, 64
      %v2308 = vpop.permute.xlu0 %2307
      %v2309 = vsel %vm210, %v2182, %v2184
      %v2310 = vsel %vm210, %v2186, %v2188
      %v2311 = vsel %vm210, %v2190, %v2192
      %v2312 = vsel %vm210, %v2194, %v2196
      %v2313 = vsel %vm210, %v2198, %v2200
      %v2314 = vsel %vm210, %v2202, %v2204
      %v2315 = vsel %vm210, %v2206, %v2208
      %v2316 = vsel %vm210, %v2210, %v2212
      %v2317 = vsel %vm210, %v2214, %v2216
      %v2318 = vsel %vm210, %v2218, %v2220
      %v2319 = vsel %vm210, %v2222, %v2224
      %v2320 = vsel %vm210, %v2226, %v2228
      %v2321 = vsel %vm210, %v2230, %v2232
      %v2322 = vsel %vm210, %v2234, %v2236
      %v2323 = vsel %vm210, %v2238, %v2240
      %v2324 = vsel %vm210, %v2242, %v2244
      %v2325 = vsel %vm210, %v2246, %v2248
      %v2326 = vsel %vm210, %v2250, %v2252
      %v2327 = vsel %vm210, %v2254, %v2256
      %v2328 = vsel %vm210, %v2258, %v2260
      %v2329 = vsel %vm210, %v2262, %v2264
      %v2330 = vsel %vm210, %v2266, %v2268
      %v2331 = vsel %vm210, %v2270, %v2272
      %v2332 = vsel %vm210, %v2274, %v2276
      %v2333 = vsel %vm210, %v2278, %v2280
      %v2334 = vsel %vm210, %v2282, %v2284
      %v2335 = vsel %vm210, %v2286, %v2288
      %v2336 = vsel %vm210, %v2290, %v2292
      %v2337 = vsel %vm210, %v2294, %v2296
      %v2338 = vsel %vm210, %v2298, %v2300
      %v2339 = vsel %vm210, %v2302, %v2304
      %v2340 = vsel %vm210, %v2306, %v2308
      %2469 = vrot.lane.b32.xlu0 %v1629, 64
      %v2470 = vpop.permute.xlu0 %2469
      %2471 = vrot.lane.b32.xlu0 %v1630, 64
      %v2472 = vpop.permute.xlu0 %2471
      %2473 = vrot.lane.b32.xlu0 %v1631, 64
      %v2474 = vpop.permute.xlu0 %2473
      %2475 = vrot.lane.b32.xlu0 %v1632, 64
      %v2476 = vpop.permute.xlu0 %2475
      %2477 = vrot.lane.b32.xlu0 %v1633, 64
      %v2478 = vpop.permute.xlu0 %2477
      %2479 = vrot.lane.b32.xlu0 %v1634, 64
      %v2480 = vpop.permute.xlu0 %2479
      %2481 = vrot.lane.b32.xlu0 %v1635, 64
      %v2482 = vpop.permute.xlu0 %2481
      %2483 = vrot.lane.b32.xlu0 %v1636, 64
      %v2484 = vpop.permute.xlu0 %2483
      %2485 = vrot.lane.b32.xlu0 %v1637, 64
      %v2486 = vpop.permute.xlu0 %2485
      %2487 = vrot.lane.b32.xlu0 %v1638, 64
      %v2488 = vpop.permute.xlu0 %2487
      %2489 = vrot.lane.b32.xlu0 %v1639, 64
      %v2490 = vpop.permute.xlu0 %2489
      %2491 = vrot.lane.b32.xlu0 %v1640, 64
      %v2492 = vpop.permute.xlu0 %2491
      %2493 = vrot.lane.b32.xlu0 %v1641, 64
      %v2494 = vpop.permute.xlu0 %2493
      %2495 = vrot.lane.b32.xlu0 %v1642, 64
      %v2496 = vpop.permute.xlu0 %2495
      %2497 = vrot.lane.b32.xlu0 %v1643, 64
      %v2498 = vpop.permute.xlu0 %2497
      %2499 = vrot.lane.b32.xlu0 %v1644, 64
      %v2500 = vpop.permute.xlu0 %2499
      %2501 = vrot.lane.b32.xlu0 %v1645, 64
      %v2502 = vpop.permute.xlu0 %2501
      %2503 = vrot.lane.b32.xlu0 %v1646, 64
      %v2504 = vpop.permute.xlu0 %2503
      %2505 = vrot.lane.b32.xlu0 %v1647, 64
      %v2506 = vpop.permute.xlu0 %2505
      %2507 = vrot.lane.b32.xlu0 %v1648, 64
      %v2508 = vpop.permute.xlu0 %2507
      %2509 = vrot.lane.b32.xlu0 %v1649, 64
      %v2510 = vpop.permute.xlu0 %2509
      %2511 = vrot.lane.b32.xlu0 %v1650, 64
      %v2512 = vpop.permute.xlu0 %2511
      %2513 = vrot.lane.b32.xlu0 %v1651, 64
      %v2514 = vpop.permute.xlu0 %2513
      %2515 = vrot.lane.b32.xlu0 %v1652, 64
      %v2516 = vpop.permute.xlu0 %2515
      %2517 = vrot.lane.b32.xlu0 %v1653, 64
      %v2518 = vpop.permute.xlu0 %2517
      %2519 = vrot.lane.b32.xlu0 %v1654, 64
      %v2520 = vpop.permute.xlu0 %2519
      %2521 = vrot.lane.b32.xlu0 %v1655, 64
      %v2522 = vpop.permute.xlu0 %2521
      %2523 = vrot.lane.b32.xlu0 %v1656, 64
      %v2524 = vpop.permute.xlu0 %2523
      %2525 = vrot.lane.b32.xlu0 %v1657, 64
      %v2526 = vpop.permute.xlu0 %2525
      %2527 = vrot.lane.b32.xlu0 %v1658, 64
      %v2528 = vpop.permute.xlu0 %2527
      %2529 = vrot.lane.b32.xlu0 %v1659, 64
      %v2530 = vpop.permute.xlu0 %2529
      %2531 = vrot.lane.b32.xlu0 %v1660, 64
      %v2532 = vpop.permute.xlu0 %2531
      %2533 = vrot.lane.b32.xlu0 %v1661, 64
      %v2534 = vpop.permute.xlu0 %2533
      %2535 = vrot.lane.b32.xlu0 %v1662, 64
      %v2536 = vpop.permute.xlu0 %2535
      %2537 = vrot.lane.b32.xlu0 %v1663, 64
      %v2538 = vpop.permute.xlu0 %2537
      %2539 = vrot.lane.b32.xlu0 %v1664, 64
      %v2540 = vpop.permute.xlu0 %2539
      %2541 = vrot.lane.b32.xlu0 %v1665, 64
      %v2542 = vpop.permute.xlu0 %2541
      %2543 = vrot.lane.b32.xlu0 %v1666, 64
      %v2544 = vpop.permute.xlu0 %2543
      %2545 = vrot.lane.b32.xlu0 %v1667, 64
      %v2546 = vpop.permute.xlu0 %2545
      %2547 = vrot.lane.b32.xlu0 %v1668, 64
      %v2548 = vpop.permute.xlu0 %2547
      %2549 = vrot.lane.b32.xlu0 %v1669, 64
      %v2550 = vpop.permute.xlu0 %2549
      %2551 = vrot.lane.b32.xlu0 %v1670, 64
      %v2552 = vpop.permute.xlu0 %2551
      %2553 = vrot.lane.b32.xlu0 %v1671, 64
      %v2554 = vpop.permute.xlu0 %2553
      %2555 = vrot.lane.b32.xlu0 %v1672, 64
      %v2556 = vpop.permute.xlu0 %2555
      %2557 = vrot.lane.b32.xlu0 %v1673, 64
      %v2558 = vpop.permute.xlu0 %2557
      %2559 = vrot.lane.b32.xlu0 %v1674, 64
      %v2560 = vpop.permute.xlu0 %2559
      %2561 = vrot.lane.b32.xlu0 %v1675, 64
      %v2562 = vpop.permute.xlu0 %2561
      %2563 = vrot.lane.b32.xlu0 %v1676, 64
      %v2564 = vpop.permute.xlu0 %2563
      %2565 = vrot.lane.b32.xlu0 %v1677, 64
      %v2566 = vpop.permute.xlu0 %2565
      %2567 = vrot.lane.b32.xlu0 %v1678, 64
      %v2568 = vpop.permute.xlu0 %2567
      %2569 = vrot.lane.b32.xlu0 %v1679, 64
      %v2570 = vpop.permute.xlu0 %2569
      %2571 = vrot.lane.b32.xlu0 %v1680, 64
      %v2572 = vpop.permute.xlu0 %2571
      %2573 = vrot.lane.b32.xlu0 %v1681, 64
      %v2574 = vpop.permute.xlu0 %2573
      %2575 = vrot.lane.b32.xlu0 %v1682, 64
      %v2576 = vpop.permute.xlu0 %2575
      %2577 = vrot.lane.b32.xlu0 %v1683, 64
      %v2578 = vpop.permute.xlu0 %2577
      %2579 = vrot.lane.b32.xlu0 %v1684, 64
      %v2580 = vpop.permute.xlu0 %2579
      %2581 = vrot.lane.b32.xlu0 %v1685, 64
      %v2582 = vpop.permute.xlu0 %2581
      %2583 = vrot.lane.b32.xlu0 %v1686, 64
      %v2584 = vpop.permute.xlu0 %2583
      %2585 = vrot.lane.b32.xlu0 %v1687, 64
      %v2586 = vpop.permute.xlu0 %2585
      %2587 = vrot.lane.b32.xlu0 %v1688, 64
      %v2588 = vpop.permute.xlu0 %2587
      %2589 = vrot.lane.b32.xlu0 %v1689, 64
      %v2590 = vpop.permute.xlu0 %2589
      %2591 = vrot.lane.b32.xlu0 %v1690, 64
      %v2592 = vpop.permute.xlu0 %2591
      %2593 = vrot.lane.b32.xlu0 %v1691, 64
      %v2594 = vpop.permute.xlu0 %2593
      %2595 = vrot.lane.b32.xlu0 %v1692, 64
      %v2596 = vpop.permute.xlu0 %2595
      %v2597 = vsel %vm210, %v2470, %v2472
      %v2598 = vsel %vm210, %v2474, %v2476
      %v2599 = vsel %vm210, %v2478, %v2480
      %v2600 = vsel %vm210, %v2482, %v2484
      %v2601 = vsel %vm210, %v2486, %v2488
      %v2602 = vsel %vm210, %v2490, %v2492
      %v2603 = vsel %vm210, %v2494, %v2496
      %v2604 = vsel %vm210, %v2498, %v2500
      %v2605 = vsel %vm210, %v2502, %v2504
      %v2606 = vsel %vm210, %v2506, %v2508
      %v2607 = vsel %vm210, %v2510, %v2512
      %v2608 = vsel %vm210, %v2514, %v2516
      %v2609 = vsel %vm210, %v2518, %v2520
      %v2610 = vsel %vm210, %v2522, %v2524
      %v2611 = vsel %vm210, %v2526, %v2528
      %v2612 = vsel %vm210, %v2530, %v2532
      %v2613 = vsel %vm210, %v2534, %v2536
      %v2614 = vsel %vm210, %v2538, %v2540
      %v2615 = vsel %vm210, %v2542, %v2544
      %v2616 = vsel %vm210, %v2546, %v2548
      %v2617 = vsel %vm210, %v2550, %v2552
      %v2618 = vsel %vm210, %v2554, %v2556
      %v2619 = vsel %vm210, %v2558, %v2560
      %v2620 = vsel %vm210, %v2562, %v2564
      %v2621 = vsel %vm210, %v2566, %v2568
      %v2622 = vsel %vm210, %v2570, %v2572
      %v2623 = vsel %vm210, %v2574, %v2576
      %v2624 = vsel %vm210, %v2578, %v2580
      %v2625 = vsel %vm210, %v2582, %v2584
      %v2626 = vsel %vm210, %v2586, %v2588
      %v2627 = vsel %vm210, %v2590, %v2592
      %v2628 = vsel %vm210, %v2594, %v2596
      %2693 = vrot.lane.b32.xlu0 %v1495, 64
      %v2694 = vpop.permute.xlu0 %2693
      %2695 = vrot.lane.b32.xlu0 %v1496, 64
      %v2696 = vpop.permute.xlu0 %2695
      %2697 = vrot.lane.b32.xlu0 %v1593, 64
      %v2698 = vpop.permute.xlu0 %2697
      %2699 = vrot.lane.b32.xlu0 %v1594, 64
      %v2700 = vpop.permute.xlu0 %2699
      %2701 = vrot.lane.b32.xlu0 %v1695, 64
      %v2702 = vpop.permute.xlu0 %2701
      %2703 = vrot.lane.b32.xlu0 %v1696, 64
      %v2704 = vpop.permute.xlu0 %2703
      %2705 = vrot.lane.b32.xlu0 %v1793, 64
      %v2706 = vpop.permute.xlu0 %2705
      %2707 = vrot.lane.b32.xlu0 %v1794, 64
      %v2708 = vpop.permute.xlu0 %2707
      %v2709 = vsel %vm210, %v2694, %v2696
      %v2710 = vsel %vm210, %v2698, %v2700
      %v2711 = vsel %vm210, %v2702, %v2704
      %v2712 = vsel %vm210, %v2706, %v2708
      %v2721 = vsel %vm210, %v1159, %v1894
      %v2722 = vsel %vm210, %v1161, %v1898
      %v2723 = vsel %vm210, %v1163, %v1902
      %v2724 = vsel %vm210, %v1165, %v1906
      %v2725 = vsel %vm210, %v1167, %v1910
      %v2726 = vsel %vm210, %v1169, %v1914
      %v2727 = vsel %vm210, %v1171, %v1918
      %v2728 = vsel %vm210, %v1173, %v1922
      %v2729 = vsel %vm210, %v1175, %v1926
      %v2730 = vsel %vm210, %v1177, %v1930
      %v2731 = vsel %vm210, %v1179, %v1934
      %v2732 = vsel %vm210, %v1181, %v1938
      %v2733 = vsel %vm210, %v1183, %v1942
      %v2734 = vsel %vm210, %v1185, %v1946
      %v2735 = vsel %vm210, %v1187, %v1950
      %v2736 = vsel %vm210, %v1189, %v1954
      %v2737 = vsel %vm210, %v1191, %v1958
      %v2738 = vsel %vm210, %v1193, %v1962
      %v2739 = vsel %vm210, %v1195, %v1966
      %v2740 = vsel %vm210, %v1197, %v1970
      %v2741 = vsel %vm210, %v1199, %v1974
      %v2742 = vsel %vm210, %v1201, %v1978
      %v2743 = vsel %vm210, %v1203, %v1982
      %v2744 = vsel %vm210, %v1205, %v1986
      %v2745 = vsel %vm210, %v1207, %v1990
      %v2746 = vsel %vm210, %v1209, %v1994
      %v2747 = vsel %vm210, %v1211, %v1998
      %v2748 = vsel %vm210, %v1213, %v2002
      %v2749 = vsel %vm210, %v1215, %v2006
      %v2750 = vsel %vm210, %v1217, %v2010
      %v2751 = vsel %vm210, %v1219, %v2014
      %v2752 = vsel %vm210, %v1221, %v2018
      %v2753 = vsel %vm210, %v1430, %v2182
      %v2754 = vsel %vm210, %v1432, %v2186
      %v2755 = vsel %vm210, %v1434, %v2190
      %v2756 = vsel %vm210, %v1436, %v2194
      %v2757 = vsel %vm210, %v1438, %v2198
      %v2758 = vsel %vm210, %v1440, %v2202
      %v2759 = vsel %vm210, %v1442, %v2206
      %v2760 = vsel %vm210, %v1444, %v2210
      %v2761 = vsel %vm210, %v1446, %v2214
      %v2762 = vsel %vm210, %v1448, %v2218
      %v2763 = vsel %vm210, %v1450, %v2222
      %v2764 = vsel %vm210, %v1452, %v2226
      %v2765 = vsel %vm210, %v1454, %v2230
      %v2766 = vsel %vm210, %v1456, %v2234
      %v2767 = vsel %vm210, %v1458, %v2238
      %v2768 = vsel %vm210, %v1460, %v2242
      %v2769 = vsel %vm210, %v1462, %v2246
      %v2770 = vsel %vm210, %v1464, %v2250
      %v2771 = vsel %vm210, %v1466, %v2254
      %v2772 = vsel %vm210, %v1468, %v2258
      %v2773 = vsel %vm210, %v1470, %v2262
      %v2774 = vsel %vm210, %v1472, %v2266
      %v2775 = vsel %vm210, %v1474, %v2270
      %v2776 = vsel %vm210, %v1476, %v2274
      %v2777 = vsel %vm210, %v1478, %v2278
      %v2778 = vsel %vm210, %v1480, %v2282
      %v2779 = vsel %vm210, %v1482, %v2286
      %v2780 = vsel %vm210, %v1484, %v2290
      %v2781 = vsel %vm210, %v1486, %v2294
      %v2782 = vsel %vm210, %v1488, %v2298
      %v2783 = vsel %vm210, %v1490, %v2302
      %v2784 = vsel %vm210, %v1492, %v2306
      %v2785 = vsel %vm210, %v838, %v2470
      %v2786 = vsel %vm210, %v840, %v2474
      %v2787 = vsel %vm210, %v842, %v2478
      %v2788 = vsel %vm210, %v844, %v2482
      %v2789 = vsel %vm210, %v846, %v2486
      %v2790 = vsel %vm210, %v848, %v2490
      %v2791 = vsel %vm210, %v850, %v2494
      %v2792 = vsel %vm210, %v852, %v2498
      %v2793 = vsel %vm210, %v854, %v2502
      %v2794 = vsel %vm210, %v856, %v2506
      %v2795 = vsel %vm210, %v858, %v2510
      %v2796 = vsel %vm210, %v860, %v2514
      %v2797 = vsel %vm210, %v862, %v2518
      %v2798 = vsel %vm210, %v864, %v2522
      %v2799 = vsel %vm210, %v866, %v2526
      %v2800 = vsel %vm210, %v868, %v2530
      %v2801 = vsel %vm210, %v870, %v2534
      %v2802 = vsel %vm210, %v872, %v2538
      %v2803 = vsel %vm210, %v874, %v2542
      %v2804 = vsel %vm210, %v876, %v2546
      %v2805 = vsel %vm210, %v878, %v2550
      %v2806 = vsel %vm210, %v880, %v2554
      %v2807 = vsel %vm210, %v882, %v2558
      %v2808 = vsel %vm210, %v884, %v2562
      %v2809 = vsel %vm210, %v886, %v2566
      %v2810 = vsel %vm210, %v888, %v2570
      %v2811 = vsel %vm210, %v890, %v2574
      %v2812 = vsel %vm210, %v892, %v2578
      %v2813 = vsel %vm210, %v894, %v2582
      %v2814 = vsel %vm210, %v1223, %v2586
      %v2815 = vsel %vm210, %v1496, %v2590
      %v2816 = vsel %vm210, %v1594, %v2594
      %v2817 = vsel %vm210, %v1730, %v1910
      %v2818 = vsel %vm210, %v1732, %v1914
      %v2819 = vsel %vm210, %v1734, %v1918
      %v2820 = vsel %vm210, %v1736, %v1922
      %v2821 = vsel %vm210, %v1738, %v1926
      %v2822 = vsel %vm210, %v1740, %v1930
      %v2823 = vsel %vm210, %v1742, %v1934
      %v2824 = vsel %vm210, %v1744, %v1938
      %v2825 = vsel %vm210, %v1746, %v1942
      %v2826 = vsel %vm210, %v1748, %v1946
      %v2827 = vsel %vm210, %v1750, %v1950
      %v2828 = vsel %vm210, %v1752, %v1954
      %v2829 = vsel %vm210, %v1754, %v1958
      %v2830 = vsel %vm210, %v1756, %v1962
      %v2831 = vsel %vm210, %v1758, %v1966
      %v2832 = vsel %vm210, %v1760, %v1970
      %v2833 = vsel %vm210, %v1762, %v1974
      %v2834 = vsel %vm210, %v1764, %v1978
      %v2835 = vsel %vm210, %v1766, %v1982
      %v2836 = vsel %vm210, %v1768, %v1986
      %v2837 = vsel %vm210, %v1770, %v1990
      %v2838 = vsel %vm210, %v1772, %v1994
      %v2839 = vsel %vm210, %v1774, %v1998
      %v2840 = vsel %vm210, %v1776, %v2002
      %v2841 = vsel %vm210, %v1778, %v2006
      %v2842 = vsel %vm210, %v1780, %v2010
      %v2843 = vsel %vm210, %v1782, %v2014
      %v2844 = vsel %vm210, %v1784, %v2018
      %v2845 = vsel %vm210, %v1786, %v2694
      %v2846 = vsel %vm210, %v1788, %v2698
      %v2847 = vsel %vm210, %v1790, %v2702
      %v2848 = vsel %vm210, %v1792, %v2706
      %v2849 = vld [vmem:[%s1] sm:$0xff]
      %v2850 = vld [vmem:[%s1 + $0x8] sm:$0xff]
      %v2851 = vld [vmem:[%s1 + $0x10] sm:$0xff]
      %v2852 = vld [vmem:[%s1 + $0x18] sm:$0xff]
      %v2853 = vld [vmem:[%s1 + $0x20] sm:$0xff]
      %v2854 = vld [vmem:[%s1 + $0x28] sm:$0xff]
      %v2855 = vld [vmem:[%s1 + $0x30] sm:$0xff]
      %v2856 = vld [vmem:[%s1 + $0x38] sm:$0xff]
      %v2857 = vld [vmem:[%s1 + $0x40] sm:$0xff]
      %v2858 = vld [vmem:[%s1 + $0x48] sm:$0xff]
      %v2859 = vld [vmem:[%s1 + $0x50] sm:$0xff]
      %v2860 = vld [vmem:[%s1 + $0x58] sm:$0xff]
      %v2861 = vld [vmem:[%s1 + $0x60] sm:$0xff]
      %v2862 = vld [vmem:[%s1 + $0x68] sm:$0xff]
      %v2863 = vld [vmem:[%s1 + $0x70] sm:$0xff]
      %v2864 = vld [vmem:[%s1 + $0x78] sm:$0xff]
      %v2865 = vld [vmem:[%s1 + $0x80] sm:$0xff]
      %v2866 = vld [vmem:[%s1 + $0x88] sm:$0xff]
      %v2867 = vld [vmem:[%s1 + $0x90] sm:$0xff]
      %v2868 = vld [vmem:[%s1 + $0x98] sm:$0xff]
      %v2869 = vld [vmem:[%s1 + $0xa0] sm:$0xff]
      %v2870 = vld [vmem:[%s1 + $0xa8] sm:$0xff]
      %v2871 = vld [vmem:[%s1 + $0xb0] sm:$0xff]
      %v2872 = vld [vmem:[%s1 + $0xb8] sm:$0xff]
      %v2873 = vld [vmem:[%s1 + $0xc0] sm:$0xff]
      %v2874 = vld [vmem:[%s1 + $0xc8] sm:$0xff]
      %v2875 = vld [vmem:[%s1 + $0xd0] sm:$0xff]
      %v2876 = vld [vmem:[%s1 + $0xd8] sm:$0xff]
      %v2877 = vld [vmem:[%s1 + $0xe0] sm:$0xff]
      %v2878 = vld [vmem:[%s1 + $0xe8] sm:$0xff]
      %v2879 = vld [vmem:[%s1 + $0xf0] sm:$0xff]
      %v2880 = vld [vmem:[%s1 + $0xf8] sm:$0xff]
      %v2881 = vld [vmem:[%s1 + $0x100] sm:$0xff]
      %v2882 = vld [vmem:[%s1 + $0x108] sm:$0xff]
      %v2883 = vld [vmem:[%s1 + $0x110] sm:$0xff]
      %v2884 = vld [vmem:[%s1 + $0x118] sm:$0xff]
      %v2885 = vld [vmem:[%s1 + $0x120] sm:$0xff]
      %v2886 = vld [vmem:[%s1 + $0x128] sm:$0xff]
      %v2887 = vld [vmem:[%s1 + $0x130] sm:$0xff]
      %v2888 = vld [vmem:[%s1 + $0x138] sm:$0xff]
      %v2889 = vld [vmem:[%s1 + $0x140] sm:$0xff]
      %v2890 = vld [vmem:[%s1 + $0x148] sm:$0xff]
      %v2891 = vld [vmem:[%s1 + $0x150] sm:$0xff]
      %v2892 = vld [vmem:[%s1 + $0x158] sm:$0xff]
      %v2893 = vld [vmem:[%s1 + $0x160] sm:$0xff]
      %v2894 = vld [vmem:[%s1 + $0x168] sm:$0xff]
      %v2895 = vld [vmem:[%s1 + $0x170] sm:$0xff]
      %v2896 = vld [vmem:[%s1 + $0x178] sm:$0xff]
      %v2897 = vld [vmem:[%s1 + $0x180] sm:$0xff]
      %v2898 = vld [vmem:[%s1 + $0x188] sm:$0xff]
      %v2899 = vld [vmem:[%s1 + $0x190] sm:$0xff]
      %v2900 = vld [vmem:[%s1 + $0x198] sm:$0xff]
      %v2901 = vld [vmem:[%s1 + $0x1a0] sm:$0xff]
      %v2902 = vld [vmem:[%s1 + $0x1a8] sm:$0xff]
      %v2903 = vld [vmem:[%s1 + $0x1b0] sm:$0xff]
      %v2904 = vld [vmem:[%s1 + $0x1b8] sm:$0xff]
      %v2905 = vld [vmem:[%s1 + $0x1c0] sm:$0xff]
      %v2906 = vld [vmem:[%s1 + $0x1c8] sm:$0xff]
      %v2907 = vld [vmem:[%s1 + $0x1d0] sm:$0xff]
      %v2908 = vld [vmem:[%s1 + $0x1d8] sm:$0xff]
      %v2909 = vld [vmem:[%s1 + $0x1e0] sm:$0xff]
      %v2910 = vld [vmem:[%s1 + $0x1e8] sm:$0xff]
      %v2911 = vld [vmem:[%s1 + $0x1f0] sm:$0xff]
      %v2912 = vld [vmem:[%s1 + $0x1f8] sm:$0xff]
      %v2913 = vld [vmem:[%s1 + $0x200] sm:$0xff]
      %v2914 = vld [vmem:[%s1 + $0x208] sm:$0xff]
      %v2915 = vld [vmem:[%s1 + $0x210] sm:$0xff]
      %v2916 = vld [vmem:[%s1 + $0x218] sm:$0xff]
      %v2917 = vld [vmem:[%s1 + $0x220] sm:$0xff]
      %v2918 = vld [vmem:[%s1 + $0x228] sm:$0xff]
      %v2919 = vld [vmem:[%s1 + $0x230] sm:$0xff]
      %v2920 = vld [vmem:[%s1 + $0x238] sm:$0xff]
      %v2921 = vld [vmem:[%s1 + $0x240] sm:$0xff]
      %v2922 = vld [vmem:[%s1 + $0x248] sm:$0xff]
      %v2923 = vld [vmem:[%s1 + $0x250] sm:$0xff]
      %v2924 = vld [vmem:[%s1 + $0x258] sm:$0xff]
      %v2925 = vld [vmem:[%s1 + $0x260] sm:$0xff]
      %v2926 = vld [vmem:[%s1 + $0x268] sm:$0xff]
      %v2927 = vld [vmem:[%s1 + $0x270] sm:$0xff]
      %v2928 = vld [vmem:[%s1 + $0x278] sm:$0xff]
      %v2929 = vld [vmem:[%s1 + $0x280] sm:$0xff]
      %v2930 = vld [vmem:[%s1 + $0x288] sm:$0xff]
      %v2931 = vld [vmem:[%s1 + $0x290] sm:$0xff]
      %v2932 = vld [vmem:[%s1 + $0x298] sm:$0xff]
      %v2933 = vld [vmem:[%s1 + $0x2a0] sm:$0xff]
      %v2934 = vld [vmem:[%s1 + $0x2a8] sm:$0xff]
      %v2935 = vld [vmem:[%s1 + $0x2b0] sm:$0xff]
      %v2936 = vld [vmem:[%s1 + $0x2b8] sm:$0xff]
      %v2937 = vld [vmem:[%s1 + $0x2c0] sm:$0xff]
      %v2938 = vld [vmem:[%s1 + $0x2c8] sm:$0xff]
      %v2939 = vld [vmem:[%s1 + $0x2d0] sm:$0xff]
      %v2940 = vld [vmem:[%s1 + $0x2d8] sm:$0xff]
      %v2941 = vld [vmem:[%s1 + $0x2e0] sm:$0xff]
      %v2942 = vld [vmem:[%s1 + $0x2e8] sm:$0xff]
      %v2943 = vld [vmem:[%s1 + $0x2f0] sm:$0xff]
      %v2944 = vld [vmem:[%s1 + $0x2f8] sm:$0xff]
      %v2945 = vld [vmem:[%s1 + $0x300] sm:$0xff]
      %v2946 = vld [vmem:[%s1 + $0x308] sm:$0xff]
      %v2947 = vld [vmem:[%s1 + $0x310] sm:$0xff]
      %v2948 = vld [vmem:[%s1 + $0x318] sm:$0xff]
      %v2949 = vld [vmem:[%s1 + $0x320] sm:$0xff]
      %v2950 = vld [vmem:[%s1 + $0x328] sm:$0xff]
      %v2951 = vld [vmem:[%s1 + $0x330] sm:$0xff]
      %v2952 = vld [vmem:[%s1 + $0x338] sm:$0xff]
      %v2953 = vld [vmem:[%s1 + $0x340] sm:$0xff]
      %v2954 = vld [vmem:[%s1 + $0x348] sm:$0xff]
      %v2955 = vld [vmem:[%s1 + $0x350] sm:$0xff]
      %v2956 = vld [vmem:[%s1 + $0x358] sm:$0xff]
      %v2957 = vld [vmem:[%s1 + $0x360] sm:$0xff]
      %v2958 = vld [vmem:[%s1 + $0x368] sm:$0xff]
      %v2959 = vld [vmem:[%s1 + $0x370] sm:$0xff]
      %v2960 = vld [vmem:[%s1 + $0x378] sm:$0xff]
      %v2961 = vld [vmem:[%s1 + $0x380] sm:$0xff]
      %v2962 = vld [vmem:[%s1 + $0x388] sm:$0xff]
      %v2963 = vld [vmem:[%s1 + $0x390] sm:$0xff]
      %v2964 = vld [vmem:[%s1 + $0x398] sm:$0xff]
      %v2965 = vld [vmem:[%s1 + $0x3a0] sm:$0xff]
      %v2966 = vld [vmem:[%s1 + $0x3a8] sm:$0xff]
      %v2967 = vld [vmem:[%s1 + $0x3b0] sm:$0xff]
      %v2968 = vld [vmem:[%s1 + $0x3b8] sm:$0xff]
      %v2969 = vld [vmem:[%s1 + $0x3c0] sm:$0xff]
      %v2970 = vld [vmem:[%s1 + $0x3c8] sm:$0xff]
      %v2971 = vld [vmem:[%s1 + $0x3d0] sm:$0xff]
      %v2972 = vld [vmem:[%s1 + $0x3d8] sm:$0xff]
      %v2973 = vld [vmem:[%s1 + $0x3e0] sm:$0xff]
      %v2974 = vld [vmem:[%s1 + $0x3e8] sm:$0xff]
      %v2975 = vld [vmem:[%s1 + $0x3f0] sm:$0xff]
      %v2976 = vld [vmem:[%s1 + $0x3f8] sm:$0xff]
      %v2977 = vld [vmem:[%s1 + $0x400] sm:$0xff]
      %v2978 = vld [vmem:[%s1 + $0x408] sm:$0xff]
      %v2979 = vld [vmem:[%s1 + $0x410] sm:$0xff]
      %v2980 = vld [vmem:[%s1 + $0x418] sm:$0xff]
      %v2981 = vld [vmem:[%s1 + $0x420] sm:$0xff]
      %v2982 = vld [vmem:[%s1 + $0x428] sm:$0xff]
      %v2983 = vld [vmem:[%s1 + $0x430] sm:$0xff]
      %v2984 = vld [vmem:[%s1 + $0x438] sm:$0xff]
      %v2985 = vld [vmem:[%s1 + $0x440] sm:$0xff]
      %v2986 = vld [vmem:[%s1 + $0x448] sm:$0xff]
      %v2987 = vld [vmem:[%s1 + $0x450] sm:$0xff]
      %v2988 = vld [vmem:[%s1 + $0x458] sm:$0xff]
      %v2989 = vld [vmem:[%s1 + $0x460] sm:$0xff]
      %v2990 = vld [vmem:[%s1 + $0x468] sm:$0xff]
      %v2991 = vld [vmem:[%s1 + $0x470] sm:$0xff]
      %v2992 = vld [vmem:[%s1 + $0x478] sm:$0xff]
      %v2993 = vld [vmem:[%s1 + $0x480] sm:$0xff]
      %v2994 = vld [vmem:[%s1 + $0x488] sm:$0xff]
      %v2995 = vld [vmem:[%s1 + $0x490] sm:$0xff]
      %v2996 = vld [vmem:[%s1 + $0x498] sm:$0xff]
      %v2997 = vld [vmem:[%s1 + $0x4a0] sm:$0xff]
      %v2998 = vld [vmem:[%s1 + $0x4a8] sm:$0xff]
      %v2999 = vld [vmem:[%s1 + $0x4b0] sm:$0xff]
      %v3000 = vld [vmem:[%s1 + $0x4b8] sm:$0xff]
      %v3001 = vld [vmem:[%s1 + $0x4c0] sm:$0xff]
      %v3002 = vld [vmem:[%s1 + $0x4c8] sm:$0xff]
      %v3003 = vld [vmem:[%s1 + $0x4d0] sm:$0xff]
      %v3004 = vld [vmem:[%s1 + $0x4d8] sm:$0xff]
      %v3005 = vld [vmem:[%s1 + $0x4e0] sm:$0xff]
      %v3006 = vld [vmem:[%s1 + $0x4e8] sm:$0xff]
      %v3007 = vld [vmem:[%s1 + $0x4f0] sm:$0xff]
      %v3008 = vld [vmem:[%s1 + $0x4f8] sm:$0xff]
      %v3009 = vld [vmem:[%s1 + $0x500] sm:$0xff]
      %v3010 = vld [vmem:[%s1 + $0x508] sm:$0xff]
      %v3011 = vld [vmem:[%s1 + $0x510] sm:$0xff]
      %v3012 = vld [vmem:[%s1 + $0x518] sm:$0xff]
      %v3013 = vld [vmem:[%s1 + $0x520] sm:$0xff]
      %v3014 = vld [vmem:[%s1 + $0x528] sm:$0xff]
      %v3015 = vld [vmem:[%s1 + $0x530] sm:$0xff]
      %v3016 = vld [vmem:[%s1 + $0x538] sm:$0xff]
      %v3017 = vld [vmem:[%s1 + $0x540] sm:$0xff]
      %v3018 = vld [vmem:[%s1 + $0x548] sm:$0xff]
      %v3019 = vld [vmem:[%s1 + $0x550] sm:$0xff]
      %v3020 = vld [vmem:[%s1 + $0x558] sm:$0xff]
      %v3021 = vld [vmem:[%s1 + $0x560] sm:$0xff]
      %v3022 = vld [vmem:[%s1 + $0x568] sm:$0xff]
      %v3023 = vld [vmem:[%s1 + $0x570] sm:$0xff]
      %v3024 = vld [vmem:[%s1 + $0x578] sm:$0xff]
      %v3025 = vld [vmem:[%s1 + $0x580] sm:$0xff]
      %v3026 = vld [vmem:[%s1 + $0x588] sm:$0xff]
      %v3027 = vld [vmem:[%s1 + $0x590] sm:$0xff]
      %v3028 = vld [vmem:[%s1 + $0x598] sm:$0xff]
      %v3029 = vld [vmem:[%s1 + $0x5a0] sm:$0xff]
      %v3030 = vld [vmem:[%s1 + $0x5a8] sm:$0xff]
      %v3031 = vld [vmem:[%s1 + $0x5b0] sm:$0xff]
      %v3032 = vld [vmem:[%s1 + $0x5b8] sm:$0xff]
      %v3033 = vld [vmem:[%s1 + $0x5c0] sm:$0xff]
      %v3034 = vld [vmem:[%s1 + $0x5c8] sm:$0xff]
      %v3035 = vld [vmem:[%s1 + $0x5d0] sm:$0xff]
      %v3036 = vld [vmem:[%s1 + $0x5d8] sm:$0xff]
      %v3037 = vld [vmem:[%s1 + $0x5e0] sm:$0xff]
      %v3038 = vld [vmem:[%s1 + $0x5e8] sm:$0xff]
      %v3039 = vld [vmem:[%s1 + $0x5f0] sm:$0xff]
      %v3040 = vld [vmem:[%s1 + $0x5f8] sm:$0xff]
      %v3041 = vld [vmem:[%s1 + $0x600] sm:$0xff]
      %v3042 = vld [vmem:[%s1 + $0x608] sm:$0xff]
      %v3043 = vld [vmem:[%s1 + $0x610] sm:$0xff]
      %v3044 = vld [vmem:[%s1 + $0x618] sm:$0xff]
      %v3045 = vld [vmem:[%s1 + $0x620] sm:$0xff]
      %v3046 = vld [vmem:[%s1 + $0x628] sm:$0xff]
      %v3047 = vld [vmem:[%s1 + $0x630] sm:$0xff]
      %v3048 = vld [vmem:[%s1 + $0x638] sm:$0xff]
      %v3049 = vld [vmem:[%s1 + $0x640] sm:$0xff]
      %v3050 = vld [vmem:[%s1 + $0x648] sm:$0xff]
      %v3051 = vld [vmem:[%s1 + $0x650] sm:$0xff]
      %v3052 = vld [vmem:[%s1 + $0x658] sm:$0xff]
      %v3053 = vld [vmem:[%s1 + $0x660] sm:$0xff]
      %v3054 = vld [vmem:[%s1 + $0x668] sm:$0xff]
      %v3055 = vld [vmem:[%s1 + $0x670] sm:$0xff]
      %v3056 = vld [vmem:[%s1 + $0x678] sm:$0xff]
      %v3057 = vld [vmem:[%s1 + $0x680] sm:$0xff]
      %v3058 = vld [vmem:[%s1 + $0x688] sm:$0xff]
      %v3059 = vld [vmem:[%s1 + $0x690] sm:$0xff]
      %v3060 = vld [vmem:[%s1 + $0x698] sm:$0xff]
      %v3061 = vld [vmem:[%s1 + $0x6a0] sm:$0xff]
      %v3062 = vld [vmem:[%s1 + $0x6a8] sm:$0xff]
      %v3063 = vld [vmem:[%s1 + $0x6b0] sm:$0xff]
      %v3064 = vld [vmem:[%s1 + $0x6b8] sm:$0xff]
      %v3065 = vld [vmem:[%s2] sm:$0x1]
      %v3067 = vlaneseq
      %v3068 = vshrl.u32 %v3067, 7
      %v3069 = vsub.s32 0, %v3068
      %v3070 = vrot.slane %v3065, %v3069
      %v3073 = vsel %vm210, %v1830, 0
      %v3076 = vsel %vm210, %v1832, 0
      %v3079 = vsel %vm210, %v1834, 0
      %v3082 = vsel %vm210, %v1836, 0
      %v3085 = vsel %vm210, %v1838, 0
      %v3088 = vsel %vm210, %v1840, 0
      %v3091 = vsel %vm210, %v1842, 0
      %v3094 = vsel %vm210, %v1844, 0
      %v3097 = vsel %vm210, %v1846, 0
      %v3100 = vsel %vm210, %v1848, 0
      %v3103 = vsel %vm210, %v1850, 0
      %v3106 = vsel %vm210, %v1852, 0
      %v3109 = vsel %vm210, %v1854, 0
      %v3112 = vsel %vm210, %v1856, 0
      %v3115 = vsel %vm210, %v1858, 0
      %v3118 = vsel %vm210, %v1860, 0
      %v3121 = vsel %vm210, %v1862, 0
      %v3124 = vsel %vm210, %v1864, 0
      %v3127 = vsel %vm210, %v1866, 0
      %v3130 = vsel %vm210, %v1868, 0
      %v3133 = vsel %vm210, %v1870, 0
      %v3136 = vsel %vm210, %v1872, 0
      %v3139 = vsel %vm210, %v1874, 0
      %v3142 = vsel %vm210, %v1876, 0
      %v3145 = vsel %vm210, %v1878, 0
      %v3148 = vsel %vm210, %v1880, 0
      %v3151 = vsel %vm210, %v1882, 0
      %v3154 = vsel %vm210, %v1884, 0
      %v3157 = vsel %vm210, %v1886, 0
      %v3160 = vsel %vm210, %v1888, 0
      %v3163 = vsel %vm210, %v1890, 0
      %v3166 = vsel %vm210, %v1892, 0
      %3168 = vmatprep.subr.mxu0 0.0
      %3169 = vmatpush1.msra.mxu0 %v2849
      %3170 = vmatprep.subr.mxu0 0.0
      %3171 = vmatpush1.msra.mxu0 %v2850
      %3172 = vmatprep.subr.mxu0 0.0
      %3173 = vmatpush1.msra.mxu0 %v2851
      %3174 = vmatprep.subr.mxu0 0.0
      %3175 = vmatpush1.msra.mxu0 %v2852
      %3176 = vmatprep.subr.mxu0 0.0
      %3177 = vmatpush1.msra.mxu0 %v2853
      %3178 = vmatprep.subr.mxu0 0.0
      %3179 = vmatpush1.msra.mxu0 %v2854
      %3180 = vmatprep.subr.mxu0 0.0
      %3181 = vmatpush1.msra.mxu0 %v2855
      %3182 = vmatprep.subr.mxu0 0.0
      %3183 = vmatpush1.msra.mxu0 %v2856
      %3184 = vmatprep.subr.mxu0 0.0
      %3185 = vmatpush1.msra.mxu0 %v2857
      %3186 = vmatprep.subr.mxu0 0.0
      %3187 = vmatpush1.msra.mxu0 %v2858
      %3188 = vmatprep.subr.mxu0 0.0
      %3189 = vmatpush1.msra.mxu0 %v2859
      %3190 = vmatprep.subr.mxu0 0.0
      %3191 = vmatpush1.msra.mxu0 %v2860
      %3192 = vmatprep.subr.mxu0 0.0
      %3193 = vmatpush1.msra.mxu0 %v2861
      %3194 = vmatprep.subr.mxu0 0.0
      %3195 = vmatpush1.msra.mxu0 %v2862
      %3196 = vmatprep.subr.mxu0 0.0
      %3197 = vmatpush1.msra.mxu0 %v2863
      %3198 = vmatprep.subr.mxu0 0.0
      %3199 = vmatpush1.msra.mxu0 %v2864
      %3200 = vmatprep.subr.mxu0 0.0
      %3201 = vmatpush1.msra.mxu0 %v2865
      %3202 = vmatprep.subr.mxu0 0.0
      %3203 = vmatpush1.msra.mxu0 %v2866
      %3204 = vmatprep.subr.mxu0 0.0
      %3205 = vmatpush1.msra.mxu0 %v2867
      %3206 = vmatprep.subr.mxu0 0.0
      %3207 = vmatpush1.msra.mxu0 %v2868
      %3208 = vmatprep.subr.mxu0 0.0
      %3209 = vmatpush1.msra.mxu0 %v2869
      %3210 = vmatprep.subr.mxu0 0.0
      %3211 = vmatpush1.msra.mxu0 %v2870
      %3212 = vmatprep.subr.mxu0 0.0
      %3213 = vmatpush1.msra.mxu0 %v2871
      %3214 = vmatprep.subr.mxu0 0.0
      %3215 = vmatpush1.msra.mxu0 %v2872
      %3216 = vmatprep.subr.mxu0 0.0
      %3217 = vmatpush1.msra.mxu0 %v2873
      %3218 = vmatprep.subr.mxu0 0.0
      %3219 = vmatpush1.msra.mxu0 %v2874
      %3220 = vmatprep.subr.mxu0 0.0
      %3221 = vmatpush1.msra.mxu0 %v2875
      %3222 = vmatprep.subr.mxu0 0.0
      %3223 = vmatpush1.msra.mxu0 %v2876
      %3224 = vmatprep.subr.mxu0 0.0
      %3225 = vmatpush1.msra.mxu0 %v2877
      %3226 = vmatprep.subr.mxu0 0.0
      %3227 = vmatpush1.msra.mxu0 %v2878
      %3228 = vmatprep.subr.mxu0 0.0
      %3229 = vmatpush1.msra.mxu0 %v2879
      %3230 = vmatprep.subr.mxu0 0.0
      %3231 = vmatpush1.msra.mxu0 %v2880
      %3232 = vmatprep.mubr.f32.mxu0 %v2721
      %3233 = vmatmul.mubr.f32.gmra.mrb[0].mxu0 %v1158
      %v3234 = vpop.f32.mrb[0].mxu0
      %v3235 = vadd.f32 %v3070, %v3234
      %v3236 = vpop.f32.mrb[0].mxu0
      %3237 = vmatprep.mubr.f32.mxu0 %v2722
      %3238 = vmatmul.mubr.f32.gmra.mrb[0].mxu0 %v1160
      %v3239 = vpop.f32.mrb[0].mxu0
      %v3240 = vadd.f32 %v3070, %v3239
      %v3241 = vpop.f32.mrb[0].mxu0
      %3242 = vmatprep.mubr.f32.mxu0 %v2723
      %3243 = vmatmul.mubr.f32.gmra.mrb[0].mxu0 %v1162
      %v3244 = vpop.f32.mrb[0].mxu0
      %v3245 = vadd.f32 %v3070, %v3244
      %v3246 = vpop.f32.mrb[0].mxu0
      %3247 = vmatprep.mubr.f32.mxu0 %v2724
      %3248 = vmatmul.mubr.f32.gmra.mrb[0].mxu0 %v1164
      %v3249 = vpop.f32.mrb[0].mxu0
      %v3250 = vadd.f32 %v3070, %v3249
      %v3251 = vpop.f32.mrb[0].mxu0
      %3252 = vmatprep.mubr.f32.mxu0 %v2725
      %3253 = vmatmul.mubr.f32.gmra.mrb[0].mxu0 %v1166
      %v3254 = vpop.f32.mrb[0].mxu0
      %v3255 = vadd.f32 %v3070, %v3254
      %v3256 = vpop.f32.mrb[0].mxu0
      %3257 = vmatprep.mubr.f32.mxu0 %v2726
      %3258 = vmatmul.mubr.f32.gmra.mrb[0].mxu0 %v1168
      %v3259 = vpop.f32.mrb[0].mxu0
      %v3260 = vadd.f32 %v3070, %v3259
      %v3261 = vpop.f32.mrb[0].mxu0
      %3262 = vmatprep.mubr.f32.mxu0 %v2727
      %3263 = vmatmul.mubr.f32.gmra.mrb[0].mxu0 %v1170
      %v3264 = vpop.f32.mrb[0].mxu0
      %v3265 = vadd.f32 %v3070, %v3264
      %v3266 = vpop.f32.mrb[0].mxu0
      %3267 = vmatprep.mubr.f32.mxu0 %v2728
      %3268 = vmatmul.mubr.f32.gmra.mrb[0].mxu0 %v1172
      %v3269 = vpop.f32.mrb[0].mxu0
      %v3270 = vadd.f32 %v3070, %v3269
      %v3271 = vpop.f32.mrb[0].mxu0
      %3272 = vmatprep.mubr.f32.mxu0 %v2729
      %3273 = vmatmul.mubr.f32.gmra.mrb[0].mxu0 %v1174
      %v3274 = vpop.f32.mrb[0].mxu0
      %v3275 = vadd.f32 %v3070, %v3274
      %v3276 = vpop.f32.mrb[0].mxu0
      %3277 = vmatprep.mubr.f32.mxu0 %v2730
      %3278 = vmatmul.mubr.f32.gmra.mrb[0].mxu0 %v1176
      %v3279 = vpop.f32.mrb[0].mxu0
      %v3280 = vadd.f32 %v3070, %v3279
      %v3281 = vpop.f32.mrb[0].mxu0
      %3282 = vmatprep.mubr.f32.mxu0 %v2731
      %3283 = vmatmul.mubr.f32.gmra.mrb[0].mxu0 %v1178
      %v3284 = vpop.f32.mrb[0].mxu0
      %v3285 = vadd.f32 %v3070, %v3284
      %v3286 = vpop.f32.mrb[0].mxu0
      %3287 = vmatprep.mubr.f32.mxu0 %v2732
      %3288 = vmatmul.mubr.f32.gmra.mrb[0].mxu0 %v1180
      %v3289 = vpop.f32.mrb[0].mxu0
      %v3290 = vadd.f32 %v3070, %v3289
      %v3291 = vpop.f32.mrb[0].mxu0
      %3292 = vmatprep.mubr.f32.mxu0 %v2733
      %3293 = vmatmul.mubr.f32.gmra.mrb[0].mxu0 %v1182
      %v3294 = vpop.f32.mrb[0].mxu0
      %v3295 = vadd.f32 %v3070, %v3294
      %v3296 = vpop.f32.mrb[0].mxu0
      %3297 = vmatprep.mubr.f32.mxu0 %v2734
      %3298 = vmatmul.mubr.f32.gmra.mrb[0].mxu0 %v1184
      %v3299 = vpop.f32.mrb[0].mxu0
      %v3300 = vadd.f32 %v3070, %v3299
      %v3301 = vpop.f32.mrb[0].mxu0
      %3302 = vmatprep.mubr.f32.mxu0 %v2735
      %3303 = vmatmul.mubr.f32.gmra.mrb[0].mxu0 %v1186
      %v3304 = vpop.f32.mrb[0].mxu0
      %v3305 = vadd.f32 %v3070, %v3304
      %v3306 = vpop.f32.mrb[0].mxu0
      %3307 = vmatprep.mubr.f32.mxu0 %v2736
      %3308 = vmatmul.mubr.f32.gmra.mrb[0].mxu0 %v1188
      %v3309 = vpop.f32.mrb[0].mxu0
      %v3310 = vadd.f32 %v3070, %v3309
      %v3311 = vpop.f32.mrb[0].mxu0
      %3312 = vmatprep.mubr.f32.mxu0 %v2737
      %3313 = vmatmul.mubr.f32.gmra.mrb[0].mxu0 %v1190
      %v3314 = vpop.f32.mrb[0].mxu0
      %v3315 = vadd.f32 %v3070, %v3314
      %v3316 = vpop.f32.mrb[0].mxu0
      %3317 = vmatprep.mubr.f32.mxu0 %v2738
      %3318 = vmatmul.mubr.f32.gmra.mrb[0].mxu0 %v1192
      %v3319 = vpop.f32.mrb[0].mxu0
      %v3320 = vadd.f32 %v3070, %v3319
      %v3321 = vpop.f32.mrb[0].mxu0
      %3322 = vmatprep.mubr.f32.mxu0 %v2739
      %3323 = vmatmul.mubr.f32.gmra.mrb[0].mxu0 %v1194
      %v3324 = vpop.f32.mrb[0].mxu0
      %v3325 = vadd.f32 %v3070, %v3324
      %v3326 = vpop.f32.mrb[0].mxu0
      %3327 = vmatprep.mubr.f32.mxu0 %v2740
      %3328 = vmatmul.mubr.f32.gmra.mrb[0].mxu0 %v1196
      %v3329 = vpop.f32.mrb[0].mxu0
      %v3330 = vadd.f32 %v3070, %v3329
      %v3331 = vpop.f32.mrb[0].mxu0
      %3332 = vmatprep.mubr.f32.mxu0 %v2741
      %3333 = vmatmul.mubr.f32.gmra.mrb[0].mxu0 %v1198
      %v3334 = vpop.f32.mrb[0].mxu0
      %v3335 = vadd.f32 %v3070, %v3334
      %v3336 = vpop.f32.mrb[0].mxu0
      %3337 = vmatprep.mubr.f32.mxu0 %v2742
      %3338 = vmatmul.mubr.f32.gmra.mrb[0].mxu0 %v1200
      %v3339 = vpop.f32.mrb[0].mxu0
      %v3340 = vadd.f32 %v3070, %v3339
      %v3341 = vpop.f32.mrb[0].mxu0
      %3342 = vmatprep.mubr.f32.mxu0 %v2743
      %3343 = vmatmul.mubr.f32.gmra.mrb[0].mxu0 %v1202
      %v3344 = vpop.f32.mrb[0].mxu0
      %v3345 = vadd.f32 %v3070, %v3344
      %v3346 = vpop.f32.mrb[0].mxu0
      %3347 = vmatprep.mubr.f32.mxu0 %v2744
      %3348 = vmatmul.mubr.f32.gmra.mrb[0].mxu0 %v1204
      %v3349 = vpop.f32.mrb[0].mxu0
      %v3350 = vadd.f32 %v3070, %v3349
      %v3351 = vpop.f32.mrb[0].mxu0
      %3352 = vmatprep.mubr.f32.mxu0 %v2745
      %3353 = vmatmul.mubr.f32.gmra.mrb[0].mxu0 %v1206
      %v3354 = vpop.f32.mrb[0].mxu0
      %v3355 = vadd.f32 %v3070, %v3354
      %v3356 = vpop.f32.mrb[0].mxu0
      %3357 = vmatprep.mubr.f32.mxu0 %v2746
      %3358 = vmatmul.mubr.f32.gmra.mrb[0].mxu0 %v1208
      %v3359 = vpop.f32.mrb[0].mxu0
      %v3360 = vadd.f32 %v3070, %v3359
      %v3361 = vpop.f32.mrb[0].mxu0
      %3362 = vmatprep.mubr.f32.mxu0 %v2747
      %3363 = vmatmul.mubr.f32.gmra.mrb[0].mxu0 %v1210
      %v3364 = vpop.f32.mrb[0].mxu0
      %v3365 = vadd.f32 %v3070, %v3364
      %v3366 = vpop.f32.mrb[0].mxu0
      %3367 = vmatprep.mubr.f32.mxu0 %v2748
      %3368 = vmatmul.mubr.f32.gmra.mrb[0].mxu0 %v1212
      %v3369 = vpop.f32.mrb[0].mxu0
      %v3370 = vadd.f32 %v3070, %v3369
      %v3371 = vpop.f32.mrb[0].mxu0
      %3372 = vmatprep.mubr.f32.mxu0 %v2749
      %3373 = vmatmul.mubr.f32.gmra.mrb[0].mxu0 %v1214
      %v3374 = vpop.f32.mrb[0].mxu0
      %v3375 = vadd.f32 %v3070, %v3374
      %v3376 = vpop.f32.mrb[0].mxu0
      %3377 = vmatprep.mubr.f32.mxu0 %v2750
      %3378 = vmatmul.mubr.f32.gmra.mrb[0].mxu0 %v1216
      %v3379 = vpop.f32.mrb[0].mxu0
      %v3380 = vadd.f32 %v3070, %v3379
      %v3381 = vpop.f32.mrb[0].mxu0
      %3382 = vmatprep.mubr.f32.mxu0 %v2751
      %3383 = vmatmul.mubr.f32.gmra.mrb[0].mxu0 %v1218
      %v3384 = vpop.f32.mrb[0].mxu0
      %v3385 = vadd.f32 %v3070, %v3384
      %v3386 = vpop.f32.mrb[0].mxu0
      %3387 = vmatprep.mubr.f32.mxu0 %v2752
      %3388 = vmatmul.mubr.f32.gmra.mrb[0].mxu0 %v1220
      %v3389 = vpop.f32.mrb[0].mxu0
      %v3390 = vadd.f32 %v3070, %v3389
      %v3391 = vpop.f32.mrb[0].mxu0
      %3392 = vdwg.mxu0
      %3393 = vmatprep.subr.mxu0 0.0
      %3394 = vmatpush1.msra.mxu0 %v2881
      %3395 = vmatprep.subr.mxu0 0.0
      %3396 = vmatpush1.msra.mxu0 %v2882
      %3397 = vmatprep.subr.mxu0 0.0
      %3398 = vmatpush1.msra.mxu0 %v2883
      %3399 = vmatprep.subr.mxu0 0.0
      %3400 = vmatpush1.msra.mxu0 %v2884
      %3401 = vmatprep.subr.mxu0 0.0
      %3402 = vmatpush1.msra.mxu0 %v2885
      %3403 = vmatprep.subr.mxu0 0.0
      %3404 = vmatpush1.msra.mxu0 %v2886
      %3405 = vmatprep.subr.mxu0 0.0
      %3406 = vmatpush1.msra.mxu0 %v2887
      %3407 = vmatprep.subr.mxu0 0.0
      %3408 = vmatpush1.msra.mxu0 %v2888
      %3409 = vmatprep.subr.mxu0 0.0
      %3410 = vmatpush1.msra.mxu0 %v2889
      %3411 = vmatprep.subr.mxu0 0.0
      %3412 = vmatpush1.msra.mxu0 %v2890
      %3413 = vmatprep.subr.mxu0 0.0
      %3414 = vmatpush1.msra.mxu0 %v2891
      %3415 = vmatprep.subr.mxu0 0.0
      %3416 = vmatpush1.msra.mxu0 %v2892
      %3417 = vmatprep.subr.mxu0 0.0
      %3418 = vmatpush1.msra.mxu0 %v2893
      %3419 = vmatprep.subr.mxu0 0.0
      %3420 = vmatpush1.msra.mxu0 %v2894
      %3421 = vmatprep.subr.mxu0 0.0
      %3422 = vmatpush1.msra.mxu0 %v2895
      %3423 = vmatprep.subr.mxu0 0.0
      %3424 = vmatpush1.msra.mxu0 %v2896
      %3425 = vmatprep.subr.mxu0 0.0
      %3426 = vmatpush1.msra.mxu0 %v2897
      %3427 = vmatprep.subr.mxu0 0.0
      %3428 = vmatpush1.msra.mxu0 %v2898
      %3429 = vmatprep.subr.mxu0 0.0
      %3430 = vmatpush1.msra.mxu0 %v2899
      %3431 = vmatprep.subr.mxu0 0.0
      %3432 = vmatpush1.msra.mxu0 %v2900
      %3433 = vmatprep.subr.mxu0 0.0
      %3434 = vmatpush1.msra.mxu0 %v2901
      %3435 = vmatprep.subr.mxu0 0.0
      %3436 = vmatpush1.msra.mxu0 %v2902
      %3437 = vmatprep.subr.mxu0 0.0
      %3438 = vmatpush1.msra.mxu0 %v2903
      %3439 = vmatprep.subr.mxu0 0.0
      %3440 = vmatpush1.msra.mxu0 %v2904
      %3441 = vmatprep.subr.mxu0 0.0
      %3442 = vmatpush1.msra.mxu0 %v2905
      %3443 = vmatprep.subr.mxu0 0.0
      %3444 = vmatpush1.msra.mxu0 %v2906
      %3445 = vmatprep.subr.mxu0 0.0
      %3446 = vmatpush1.msra.mxu0 %v2907
      %3447 = vmatprep.subr.mxu0 0.0
      %3448 = vmatpush1.msra.mxu0 %v2908
      %3449 = vmatprep.subr.mxu0 0.0
      %3450 = vmatpush1.msra.mxu0 %v2909
      %3451 = vmatprep.subr.mxu0 0.0
      %3452 = vmatpush1.msra.mxu0 %v2910
      %3453 = vmatprep.subr.mxu0 0.0
      %3454 = vmatpush1.msra.mxu0 %v2911
      %3455 = vmatprep.subr.mxu0 0.0
      %3456 = vmatpush1.msra.mxu0 %v2912
      %3457 = vmatprep.mubr.f32.mxu0 %v1429
      %3458 = vmatmul.mubr.f32.gmra.mrb[0].mxu0 %v2021
      %v3459 = vpop.f32.mrb[0].mxu0
      %v3460 = vadd.f32 %v3235, %v3459
      %v3461 = vpop.f32.mrb[0].mxu0
      %3462 = vmatprep.mubr.f32.mxu0 %v1431
      %3463 = vmatmul.mubr.f32.gmra.mrb[0].mxu0 %v2022
      %v3464 = vpop.f32.mrb[0].mxu0
      %v3465 = vadd.f32 %v3240, %v3464
      %v3466 = vpop.f32.mrb[0].mxu0
      %3467 = vmatprep.mubr.f32.mxu0 %v1433
      %3468 = vmatmul.mubr.f32.gmra.mrb[0].mxu0 %v2023
      %v3469 = vpop.f32.mrb[0].mxu0
      %v3470 = vadd.f32 %v3245, %v3469
      %v3471 = vpop.f32.mrb[0].mxu0
      %3472 = vmatprep.mubr.f32.mxu0 %v1435
      %3473 = vmatmul.mubr.f32.gmra.mrb[0].mxu0 %v2024
      %v3474 = vpop.f32.mrb[0].mxu0
      %v3475 = vadd.f32 %v3250, %v3474
      %v3476 = vpop.f32.mrb[0].mxu0
      %3477 = vmatprep.mubr.f32.mxu0 %v1437
      %3478 = vmatmul.mubr.f32.gmra.mrb[0].mxu0 %v2025
      %v3479 = vpop.f32.mrb[0].mxu0
      %v3480 = vadd.f32 %v3255, %v3479
      %v3481 = vpop.f32.mrb[0].mxu0
      %3482 = vmatprep.mubr.f32.mxu0 %v1439
      %3483 = vmatmul.mubr.f32.gmra.mrb[0].mxu0 %v2026
      %v3484 = vpop.f32.mrb[0].mxu0
      %v3485 = vadd.f32 %v3260, %v3484
      %v3486 = vpop.f32.mrb[0].mxu0
      %3487 = vmatprep.mubr.f32.mxu0 %v1441
      %3488 = vmatmul.mubr.f32.gmra.mrb[0].mxu0 %v2027
      %v3489 = vpop.f32.mrb[0].mxu0
      %v3490 = vadd.f32 %v3265, %v3489
      %v3491 = vpop.f32.mrb[0].mxu0
      %3492 = vmatprep.mubr.f32.mxu0 %v1443
      %3493 = vmatmul.mubr.f32.gmra.mrb[0].mxu0 %v2028
      %v3494 = vpop.f32.mrb[0].mxu0
      %v3495 = vadd.f32 %v3270, %v3494
      %v3496 = vpop.f32.mrb[0].mxu0
      %3497 = vmatprep.mubr.f32.mxu0 %v1445
      %3498 = vmatmul.mubr.f32.gmra.mrb[0].mxu0 %v2029
      %v3499 = vpop.f32.mrb[0].mxu0
      %v3500 = vadd.f32 %v3275, %v3499
      %v3501 = vpop.f32.mrb[0].mxu0
      %3502 = vmatprep.mubr.f32.mxu0 %v1447
      %3503 = vmatmul.mubr.f32.gmra.mrb[0].mxu0 %v2030
      %v3504 = vpop.f32.mrb[0].mxu0
      %v3505 = vadd.f32 %v3280, %v3504
      %v3506 = vpop.f32.mrb[0].mxu0
      %3507 = vmatprep.mubr.f32.mxu0 %v1449
      %3508 = vmatmul.mubr.f32.gmra.mrb[0].mxu0 %v2031
      %v3509 = vpop.f32.mrb[0].mxu0
      %v3510 = vadd.f32 %v3285, %v3509
      %v3511 = vpop.f32.mrb[0].mxu0
      %3512 = vmatprep.mubr.f32.mxu0 %v1451
      %3513 = vmatmul.mubr.f32.gmra.mrb[0].mxu0 %v2032
      %v3514 = vpop.f32.mrb[0].mxu0
      %v3515 = vadd.f32 %v3290, %v3514
      %v3516 = vpop.f32.mrb[0].mxu0
      %3517 = vmatprep.mubr.f32.mxu0 %v1453
      %3518 = vmatmul.mubr.f32.gmra.mrb[0].mxu0 %v2033
      %v3519 = vpop.f32.mrb[0].mxu0
      %v3520 = vadd.f32 %v3295, %v3519
      %v3521 = vpop.f32.mrb[0].mxu0
      %3522 = vmatprep.mubr.f32.mxu0 %v1455
      %3523 = vmatmul.mubr.f32.gmra.mrb[0].mxu0 %v2034
      %v3524 = vpop.f32.mrb[0].mxu0
      %v3525 = vadd.f32 %v3300, %v3524
      %v3526 = vpop.f32.mrb[0].mxu0
      %3527 = vmatprep.mubr.f32.mxu0 %v1457
      %3528 = vmatmul.mubr.f32.gmra.mrb[0].mxu0 %v2035
      %v3529 = vpop.f32.mrb[0].mxu0
      %v3530 = vadd.f32 %v3305, %v3529
      %v3531 = vpop.f32.mrb[0].mxu0
      %3532 = vmatprep.mubr.f32.mxu0 %v1459
      %3533 = vmatmul.mubr.f32.gmra.mrb[0].mxu0 %v2036
      %v3534 = vpop.f32.mrb[0].mxu0
      %v3535 = vadd.f32 %v3310, %v3534
      %v3536 = vpop.f32.mrb[0].mxu0
      %3537 = vmatprep.mubr.f32.mxu0 %v1461
      %3538 = vmatmul.mubr.f32.gmra.mrb[0].mxu0 %v2037
      %v3539 = vpop.f32.mrb[0].mxu0
      %v3540 = vadd.f32 %v3315, %v3539
      %v3541 = vpop.f32.mrb[0].mxu0
      %3542 = vmatprep.mubr.f32.mxu0 %v1463
      %3543 = vmatmul.mubr.f32.gmra.mrb[0].mxu0 %v2038
      %v3544 = vpop.f32.mrb[0].mxu0
      %v3545 = vadd.f32 %v3320, %v3544
      %v3546 = vpop.f32.mrb[0].mxu0
      %3547 = vmatprep.mubr.f32.mxu0 %v1465
      %3548 = vmatmul.mubr.f32.gmra.mrb[0].mxu0 %v2039
      %v3549 = vpop.f32.mrb[0].mxu0
      %v3550 = vadd.f32 %v3325, %v3549
      %v3551 = vpop.f32.mrb[0].mxu0
      %3552 = vmatprep.mubr.f32.mxu0 %v1467
      %3553 = vmatmul.mubr.f32.gmra.mrb[0].mxu0 %v2040
      %v3554 = vpop.f32.mrb[0].mxu0
      %v3555 = vadd.f32 %v3330, %v3554
      %v3556 = vpop.f32.mrb[0].mxu0
      %3557 = vmatprep.mubr.f32.mxu0 %v1469
      %3558 = vmatmul.mubr.f32.gmra.mrb[0].mxu0 %v2041
      %v3559 = vpop.f32.mrb[0].mxu0
      %v3560 = vadd.f32 %v3335, %v3559
      %v3561 = vpop.f32.mrb[0].mxu0
      %3562 = vmatprep.mubr.f32.mxu0 %v1471
      %3563 = vmatmul.mubr.f32.gmra.mrb[0].mxu0 %v2042
      %v3564 = vpop.f32.mrb[0].mxu0
      %v3565 = vadd.f32 %v3340, %v3564
      %v3566 = vpop.f32.mrb[0].mxu0
      %3567 = vmatprep.mubr.f32.mxu0 %v1473
      %3568 = vmatmul.mubr.f32.gmra.mrb[0].mxu0 %v2043
      %v3569 = vpop.f32.mrb[0].mxu0
      %v3570 = vadd.f32 %v3345, %v3569
      %v3571 = vpop.f32.mrb[0].mxu0
      %3572 = vmatprep.mubr.f32.mxu0 %v1475
      %3573 = vmatmul.mubr.f32.gmra.mrb[0].mxu0 %v2044
      %v3574 = vpop.f32.mrb[0].mxu0
      %v3575 = vadd.f32 %v3350, %v3574
      %v3576 = vpop.f32.mrb[0].mxu0
      %3577 = vmatprep.mubr.f32.mxu0 %v1477
      %3578 = vmatmul.mubr.f32.gmra.mrb[0].mxu0 %v2045
      %v3579 = vpop.f32.mrb[0].mxu0
      %v3580 = vadd.f32 %v3355, %v3579
      %v3581 = vpop.f32.mrb[0].mxu0
      %3582 = vmatprep.mubr.f32.mxu0 %v1479
      %3583 = vmatmul.mubr.f32.gmra.mrb[0].mxu0 %v2046
      %v3584 = vpop.f32.mrb[0].mxu0
      %v3585 = vadd.f32 %v3360, %v3584
      %v3586 = vpop.f32.mrb[0].mxu0
      %3587 = vmatprep.mubr.f32.mxu0 %v1481
      %3588 = vmatmul.mubr.f32.gmra.mrb[0].mxu0 %v2047
      %v3589 = vpop.f32.mrb[0].mxu0
      %v3590 = vadd.f32 %v3365, %v3589
      %v3591 = vpop.f32.mrb[0].mxu0
      %3592 = vmatprep.mubr.f32.mxu0 %v1483
      %3593 = vmatmul.mubr.f32.gmra.mrb[0].mxu0 %v2048
      %v3594 = vpop.f32.mrb[0].mxu0
      %v3595 = vadd.f32 %v3370, %v3594
      %v3596 = vpop.f32.mrb[0].mxu0
      %3597 = vmatprep.mubr.f32.mxu0 %v1485
      %3598 = vmatmul.mubr.f32.gmra.mrb[0].mxu0 %v2049
      %v3599 = vpop.f32.mrb[0].mxu0
      %v3600 = vadd.f32 %v3375, %v3599
      %v3601 = vpop.f32.mrb[0].mxu0
      %3602 = vmatprep.mubr.f32.mxu0 %v1487
      %3603 = vmatmul.mubr.f32.gmra.mrb[0].mxu0 %v2050
      %v3604 = vpop.f32.mrb[0].mxu0
      %v3605 = vadd.f32 %v3380, %v3604
      %v3606 = vpop.f32.mrb[0].mxu0
      %3607 = vmatprep.mubr.f32.mxu0 %v1489
      %3608 = vmatmul.mubr.f32.gmra.mrb[0].mxu0 %v2051
      %v3609 = vpop.f32.mrb[0].mxu0
      %v3610 = vadd.f32 %v3385, %v3609
      %v3611 = vpop.f32.mrb[0].mxu0
      %3612 = vmatprep.mubr.f32.mxu0 %v1491
      %3613 = vmatmul.mubr.f32.gmra.mrb[0].mxu0 %v2052
      %v3614 = vpop.f32.mrb[0].mxu0
      %v3615 = vadd.f32 %v3390, %v3614
      %v3616 = vpop.f32.mrb[0].mxu0
      %3617 = vdwg.mxu0
      %3618 = vmatprep.subr.mxu0 0.0
      %3619 = vmatpush1.msra.mxu0 %v2913
      %3620 = vmatprep.subr.mxu0 0.0
      %3621 = vmatpush1.msra.mxu0 %v2914
      %3622 = vmatprep.subr.mxu0 0.0
      %3623 = vmatpush1.msra.mxu0 %v2915
      %3624 = vmatprep.subr.mxu0 0.0
      %3625 = vmatpush1.msra.mxu0 %v2916
      %3626 = vmatprep.subr.mxu0 0.0
      %3627 = vmatpush1.msra.mxu0 %v2917
      %3628 = vmatprep.subr.mxu0 0.0
      %3629 = vmatpush1.msra.mxu0 %v2918
      %3630 = vmatprep.subr.mxu0 0.0
      %3631 = vmatpush1.msra.mxu0 %v2919
      %3632 = vmatprep.subr.mxu0 0.0
      %3633 = vmatpush1.msra.mxu0 %v2920
      %3634 = vmatprep.subr.mxu0 0.0
      %3635 = vmatpush1.msra.mxu0 %v2921
      %3636 = vmatprep.subr.mxu0 0.0
      %3637 = vmatpush1.msra.mxu0 %v2922
      %3638 = vmatprep.subr.mxu0 0.0
      %3639 = vmatpush1.msra.mxu0 %v2923
      %3640 = vmatprep.subr.mxu0 0.0
      %3641 = vmatpush1.msra.mxu0 %v2924
      %3642 = vmatprep.subr.mxu0 0.0
      %3643 = vmatpush1.msra.mxu0 %v2925
      %3644 = vmatprep.subr.mxu0 0.0
      %3645 = vmatpush1.msra.mxu0 %v2926
      %3646 = vmatprep.subr.mxu0 0.0
      %3647 = vmatpush1.msra.mxu0 %v2927
      %3648 = vmatprep.subr.mxu0 0.0
      %3649 = vmatpush1.msra.mxu0 %v2928
      %3650 = vmatprep.subr.mxu0 0.0
      %3651 = vmatpush1.msra.mxu0 %v2929
      %3652 = vmatprep.subr.mxu0 0.0
      %3653 = vmatpush1.msra.mxu0 %v2930
      %3654 = vmatprep.subr.mxu0 0.0
      %3655 = vmatpush1.msra.mxu0 %v2931
      %3656 = vmatprep.subr.mxu0 0.0
      %3657 = vmatpush1.msra.mxu0 %v2932
      %3658 = vmatprep.subr.mxu0 0.0
      %3659 = vmatpush1.msra.mxu0 %v2933
      %3660 = vmatprep.subr.mxu0 0.0
      %3661 = vmatpush1.msra.mxu0 %v2934
      %3662 = vmatprep.subr.mxu0 0.0
      %3663 = vmatpush1.msra.mxu0 %v2935
      %3664 = vmatprep.subr.mxu0 0.0
      %3665 = vmatpush1.msra.mxu0 %v2936
      %3666 = vmatprep.subr.mxu0 0.0
      %3667 = vmatpush1.msra.mxu0 %v2937
      %3668 = vmatprep.subr.mxu0 0.0
      %3669 = vmatpush1.msra.mxu0 %v2938
      %3670 = vmatprep.subr.mxu0 0.0
      %3671 = vmatpush1.msra.mxu0 %v2939
      %3672 = vmatprep.subr.mxu0 0.0
      %3673 = vmatpush1.msra.mxu0 %v2940
      %3674 = vmatprep.subr.mxu0 0.0
      %3675 = vmatpush1.msra.mxu0 %v2941
      %3676 = vmatprep.subr.mxu0 0.0
      %3677 = vmatpush1.msra.mxu0 %v2942
      %3678 = vmatprep.subr.mxu0 0.0
      %3679 = vmatpush1.msra.mxu0 %v2943
      %3680 = vmatprep.subr.mxu0 0.0
      %3681 = vmatpush1.msra.mxu0 %v2944
      %3682 = vmatprep.mubr.f32.mxu0 %v2309
      %3683 = vmatmul.mubr.f32.gmra.mrb[0].mxu0 %v2753
      %v3684 = vpop.f32.mrb[0].mxu0
      %v3685 = vadd.f32 %v3460, %v3684
      %v3686 = vpop.f32.mrb[0].mxu0
      %3687 = vmatprep.mubr.f32.mxu0 %v2310
      %3688 = vmatmul.mubr.f32.gmra.mrb[0].mxu0 %v2754
      %v3689 = vpop.f32.mrb[0].mxu0
      %v3690 = vadd.f32 %v3465, %v3689
      %v3691 = vpop.f32.mrb[0].mxu0
      %3692 = vmatprep.mubr.f32.mxu0 %v2311
      %3693 = vmatmul.mubr.f32.gmra.mrb[0].mxu0 %v2755
      %v3694 = vpop.f32.mrb[0].mxu0
      %v3695 = vadd.f32 %v3470, %v3694
      %v3696 = vpop.f32.mrb[0].mxu0
      %3697 = vmatprep.mubr.f32.mxu0 %v2312
      %3698 = vmatmul.mubr.f32.gmra.mrb[0].mxu0 %v2756
      %v3699 = vpop.f32.mrb[0].mxu0
      %v3700 = vadd.f32 %v3475, %v3699
      %v3701 = vpop.f32.mrb[0].mxu0
      %3702 = vmatprep.mubr.f32.mxu0 %v2313
      %3703 = vmatmul.mubr.f32.gmra.mrb[0].mxu0 %v2757
      %v3704 = vpop.f32.mrb[0].mxu0
      %v3705 = vadd.f32 %v3480, %v3704
      %v3706 = vpop.f32.mrb[0].mxu0
      %3707 = vmatprep.mubr.f32.mxu0 %v2314
      %3708 = vmatmul.mubr.f32.gmra.mrb[0].mxu0 %v2758
      %v3709 = vpop.f32.mrb[0].mxu0
      %v3710 = vadd.f32 %v3485, %v3709
      %v3711 = vpop.f32.mrb[0].mxu0
      %3712 = vmatprep.mubr.f32.mxu0 %v2315
      %3713 = vmatmul.mubr.f32.gmra.mrb[0].mxu0 %v2759
      %v3714 = vpop.f32.mrb[0].mxu0
      %v3715 = vadd.f32 %v3490, %v3714
      %v3716 = vpop.f32.mrb[0].mxu0
      %3717 = vmatprep.mubr.f32.mxu0 %v2316
      %3718 = vmatmul.mubr.f32.gmra.mrb[0].mxu0 %v2760
      %v3719 = vpop.f32.mrb[0].mxu0
      %v3720 = vadd.f32 %v3495, %v3719
      %v3721 = vpop.f32.mrb[0].mxu0
      %3722 = vmatprep.mubr.f32.mxu0 %v2317
      %3723 = vmatmul.mubr.f32.gmra.mrb[0].mxu0 %v2761
      %v3724 = vpop.f32.mrb[0].mxu0
      %v3725 = vadd.f32 %v3500, %v3724
      %v3726 = vpop.f32.mrb[0].mxu0
      %3727 = vmatprep.mubr.f32.mxu0 %v2318
      %3728 = vmatmul.mubr.f32.gmra.mrb[0].mxu0 %v2762
      %v3729 = vpop.f32.mrb[0].mxu0
      %v3730 = vadd.f32 %v3505, %v3729
      %v3731 = vpop.f32.mrb[0].mxu0
      %3732 = vmatprep.mubr.f32.mxu0 %v2319
      %3733 = vmatmul.mubr.f32.gmra.mrb[0].mxu0 %v2763
      %v3734 = vpop.f32.mrb[0].mxu0
      %v3735 = vadd.f32 %v3510, %v3734
      %v3736 = vpop.f32.mrb[0].mxu0
      %3737 = vmatprep.mubr.f32.mxu0 %v2320
      %3738 = vmatmul.mubr.f32.gmra.mrb[0].mxu0 %v2764
      %v3739 = vpop.f32.mrb[0].mxu0
      %v3740 = vadd.f32 %v3515, %v3739
      %v3741 = vpop.f32.mrb[0].mxu0
      %3742 = vmatprep.mubr.f32.mxu0 %v2321
      %3743 = vmatmul.mubr.f32.gmra.mrb[0].mxu0 %v2765
      %v3744 = vpop.f32.mrb[0].mxu0
      %v3745 = vadd.f32 %v3520, %v3744
      %v3746 = vpop.f32.mrb[0].mxu0
      %3747 = vmatprep.mubr.f32.mxu0 %v2322
      %3748 = vmatmul.mubr.f32.gmra.mrb[0].mxu0 %v2766
      %v3749 = vpop.f32.mrb[0].mxu0
      %v3750 = vadd.f32 %v3525, %v3749
      %v3751 = vpop.f32.mrb[0].mxu0
      %3752 = vmatprep.mubr.f32.mxu0 %v2323
      %3753 = vmatmul.mubr.f32.gmra.mrb[0].mxu0 %v2767
      %v3754 = vpop.f32.mrb[0].mxu0
      %v3755 = vadd.f32 %v3530, %v3754
      %v3756 = vpop.f32.mrb[0].mxu0
      %3757 = vmatprep.mubr.f32.mxu0 %v2324
      %3758 = vmatmul.mubr.f32.gmra.mrb[0].mxu0 %v2768
      %v3759 = vpop.f32.mrb[0].mxu0
      %v3760 = vadd.f32 %v3535, %v3759
      %v3761 = vpop.f32.mrb[0].mxu0
      %3762 = vmatprep.mubr.f32.mxu0 %v2325
      %3763 = vmatmul.mubr.f32.gmra.mrb[0].mxu0 %v2769
      %v3764 = vpop.f32.mrb[0].mxu0
      %v3765 = vadd.f32 %v3540, %v3764
      %v3766 = vpop.f32.mrb[0].mxu0
      %3767 = vmatprep.mubr.f32.mxu0 %v2326
      %3768 = vmatmul.mubr.f32.gmra.mrb[0].mxu0 %v2770
      %v3769 = vpop.f32.mrb[0].mxu0
      %v3770 = vadd.f32 %v3545, %v3769
      %v3771 = vpop.f32.mrb[0].mxu0
      %3772 = vmatprep.mubr.f32.mxu0 %v2327
      %3773 = vmatmul.mubr.f32.gmra.mrb[0].mxu0 %v2771
      %v3774 = vpop.f32.mrb[0].mxu0
      %v3775 = vadd.f32 %v3550, %v3774
      %v3776 = vpop.f32.mrb[0].mxu0
      %3777 = vmatprep.mubr.f32.mxu0 %v2328
      %3778 = vmatmul.mubr.f32.gmra.mrb[0].mxu0 %v2772
      %v3779 = vpop.f32.mrb[0].mxu0
      %v3780 = vadd.f32 %v3555, %v3779
      %v3781 = vpop.f32.mrb[0].mxu0
      %3782 = vmatprep.mubr.f32.mxu0 %v2329
      %3783 = vmatmul.mubr.f32.gmra.mrb[0].mxu0 %v2773
      %v3784 = vpop.f32.mrb[0].mxu0
      %v3785 = vadd.f32 %v3560, %v3784
      %v3786 = vpop.f32.mrb[0].mxu0
      %3787 = vmatprep.mubr.f32.mxu0 %v2330
      %3788 = vmatmul.mubr.f32.gmra.mrb[0].mxu0 %v2774
      %v3789 = vpop.f32.mrb[0].mxu0
      %v3790 = vadd.f32 %v3565, %v3789
      %v3791 = vpop.f32.mrb[0].mxu0
      %3792 = vmatprep.mubr.f32.mxu0 %v2331
      %3793 = vmatmul.mubr.f32.gmra.mrb[0].mxu0 %v2775
      %v3794 = vpop.f32.mrb[0].mxu0
      %v3795 = vadd.f32 %v3570, %v3794
      %v3796 = vpop.f32.mrb[0].mxu0
      %3797 = vmatprep.mubr.f32.mxu0 %v2332
      %3798 = vmatmul.mubr.f32.gmra.mrb[0].mxu0 %v2776
      %v3799 = vpop.f32.mrb[0].mxu0
      %v3800 = vadd.f32 %v3575, %v3799
      %v3801 = vpop.f32.mrb[0].mxu0
      %3802 = vmatprep.mubr.f32.mxu0 %v2333
      %3803 = vmatmul.mubr.f32.gmra.mrb[0].mxu0 %v2777
      %v3804 = vpop.f32.mrb[0].mxu0
      %v3805 = vadd.f32 %v3580, %v3804
      %v3806 = vpop.f32.mrb[0].mxu0
      %3807 = vmatprep.mubr.f32.mxu0 %v2334
      %3808 = vmatmul.mubr.f32.gmra.mrb[0].mxu0 %v2778
      %v3809 = vpop.f32.mrb[0].mxu0
      %v3810 = vadd.f32 %v3585, %v3809
      %v3811 = vpop.f32.mrb[0].mxu0
      %3812 = vmatprep.mubr.f32.mxu0 %v2335
      %3813 = vmatmul.mubr.f32.gmra.mrb[0].mxu0 %v2779
      %v3814 = vpop.f32.mrb[0].mxu0
      %v3815 = vadd.f32 %v3590, %v3814
      %v3816 = vpop.f32.mrb[0].mxu0
      %3817 = vmatprep.mubr.f32.mxu0 %v2336
      %3818 = vmatmul.mubr.f32.gmra.mrb[0].mxu0 %v2780
      %v3819 = vpop.f32.mrb[0].mxu0
      %v3820 = vadd.f32 %v3595, %v3819
      %v3821 = vpop.f32.mrb[0].mxu0
      %3822 = vmatprep.mubr.f32.mxu0 %v2337
      %3823 = vmatmul.mubr.f32.gmra.mrb[0].mxu0 %v2781
      %v3824 = vpop.f32.mrb[0].mxu0
      %v3825 = vadd.f32 %v3600, %v3824
      %v3826 = vpop.f32.mrb[0].mxu0
      %3827 = vmatprep.mubr.f32.mxu0 %v2338
      %3828 = vmatmul.mubr.f32.gmra.mrb[0].mxu0 %v2782
      %v3829 = vpop.f32.mrb[0].mxu0
      %v3830 = vadd.f32 %v3605, %v3829
      %v3831 = vpop.f32.mrb[0].mxu0
      %3832 = vmatprep.mubr.f32.mxu0 %v2339
      %3833 = vmatmul.mubr.f32.gmra.mrb[0].mxu0 %v2783
      %v3834 = vpop.f32.mrb[0].mxu0
      %v3835 = vadd.f32 %v3610, %v3834
      %v3836 = vpop.f32.mrb[0].mxu0
      %3837 = vmatprep.mubr.f32.mxu0 %v2340
      %3838 = vmatmul.mubr.f32.gmra.mrb[0].mxu0 %v2784
      %v3839 = vpop.f32.mrb[0].mxu0
      %v3840 = vadd.f32 %v3615, %v3839
      %v3841 = vpop.f32.mrb[0].mxu0
      %3842 = vdwg.mxu0
      %3843 = vmatprep.subr.mxu0 0.0
      %3844 = vmatpush1.msra.mxu0 %v2945
      %3845 = vmatprep.subr.mxu0 0.0
      %3846 = vmatpush1.msra.mxu0 %v2946
      %3847 = vmatprep.subr.mxu0 0.0
      %3848 = vmatpush1.msra.mxu0 %v2947
      %3849 = vmatprep.subr.mxu0 0.0
      %3850 = vmatpush1.msra.mxu0 %v2948
      %3851 = vmatprep.subr.mxu0 0.0
      %3852 = vmatpush1.msra.mxu0 %v2949
      %3853 = vmatprep.subr.mxu0 0.0
      %3854 = vmatpush1.msra.mxu0 %v2950
      %3855 = vmatprep.subr.mxu0 0.0
      %3856 = vmatpush1.msra.mxu0 %v2951
      %3857 = vmatprep.subr.mxu0 0.0
      %3858 = vmatpush1.msra.mxu0 %v2952
      %3859 = vmatprep.subr.mxu0 0.0
      %3860 = vmatpush1.msra.mxu0 %v2953
      %3861 = vmatprep.subr.mxu0 0.0
      %3862 = vmatpush1.msra.mxu0 %v2954
      %3863 = vmatprep.subr.mxu0 0.0
      %3864 = vmatpush1.msra.mxu0 %v2955
      %3865 = vmatprep.subr.mxu0 0.0
      %3866 = vmatpush1.msra.mxu0 %v2956
      %3867 = vmatprep.subr.mxu0 0.0
      %3868 = vmatpush1.msra.mxu0 %v2957
      %3869 = vmatprep.subr.mxu0 0.0
      %3870 = vmatpush1.msra.mxu0 %v2958
      %3871 = vmatprep.subr.mxu0 0.0
      %3872 = vmatpush1.msra.mxu0 %v2959
      %3873 = vmatprep.subr.mxu0 0.0
      %3874 = vmatpush1.msra.mxu0 %v2960
      %3875 = vmatprep.subr.mxu0 0.0
      %3876 = vmatpush1.msra.mxu0 %v2961
      %3877 = vmatprep.subr.mxu0 0.0
      %3878 = vmatpush1.msra.mxu0 %v2962
      %3879 = vmatprep.subr.mxu0 0.0
      %3880 = vmatpush1.msra.mxu0 %v2963
      %3881 = vmatprep.subr.mxu0 0.0
      %3882 = vmatpush1.msra.mxu0 %v2964
      %3883 = vmatprep.subr.mxu0 0.0
      %3884 = vmatpush1.msra.mxu0 %v2965
      %3885 = vmatprep.subr.mxu0 0.0
      %3886 = vmatpush1.msra.mxu0 %v2966
      %3887 = vmatprep.subr.mxu0 0.0
      %3888 = vmatpush1.msra.mxu0 %v2967
      %3889 = vmatprep.subr.mxu0 0.0
      %3890 = vmatpush1.msra.mxu0 %v2968
      %3891 = vmatprep.subr.mxu0 0.0
      %3892 = vmatpush1.msra.mxu0 %v2969
      %3893 = vmatprep.subr.mxu0 0.0
      %3894 = vmatpush1.msra.mxu0 %v2970
      %3895 = vmatprep.subr.mxu0 0.0
      %3896 = vmatpush1.msra.mxu0 %v2971
      %3897 = vmatprep.subr.mxu0 0.0
      %3898 = vmatpush1.msra.mxu0 %v2972
      %3899 = vmatprep.subr.mxu0 0.0
      %3900 = vmatpush1.msra.mxu0 %v2973
      %3901 = vmatprep.subr.mxu0 0.0
      %3902 = vmatpush1.msra.mxu0 %v2974
      %3903 = vmatprep.subr.mxu0 0.0
      %3904 = vmatpush1.msra.mxu0 %v2975
      %3905 = vmatprep.subr.mxu0 0.0
      %3906 = vmatpush1.msra.mxu0 %v2976
      %3907 = vmatprep.mubr.f32.mxu0 %v2785
      %3908 = vmatmul.mubr.f32.gmra.mrb[0].mxu0 %v837
      %v3909 = vpop.f32.mrb[0].mxu0
      %v3910 = vadd.f32 %v3685, %v3909
      %v3911 = vpop.f32.mrb[0].mxu0
      %3912 = vmatprep.mubr.f32.mxu0 %v2786
      %3913 = vmatmul.mubr.f32.gmra.mrb[0].mxu0 %v839
      %v3914 = vpop.f32.mrb[0].mxu0
      %v3915 = vadd.f32 %v3690, %v3914
      %v3916 = vpop.f32.mrb[0].mxu0
      %3917 = vmatprep.mubr.f32.mxu0 %v2787
      %3918 = vmatmul.mubr.f32.gmra.mrb[0].mxu0 %v841
      %v3919 = vpop.f32.mrb[0].mxu0
      %v3920 = vadd.f32 %v3695, %v3919
      %v3921 = vpop.f32.mrb[0].mxu0
      %3922 = vmatprep.mubr.f32.mxu0 %v2788
      %3923 = vmatmul.mubr.f32.gmra.mrb[0].mxu0 %v843
      %v3924 = vpop.f32.mrb[0].mxu0
      %v3925 = vadd.f32 %v3700, %v3924
      %v3926 = vpop.f32.mrb[0].mxu0
      %3927 = vmatprep.mubr.f32.mxu0 %v2789
      %3928 = vmatmul.mubr.f32.gmra.mrb[0].mxu0 %v845
      %v3929 = vpop.f32.mrb[0].mxu0
      %v3930 = vadd.f32 %v3705, %v3929
      %v3931 = vpop.f32.mrb[0].mxu0
      %3932 = vmatprep.mubr.f32.mxu0 %v2790
      %3933 = vmatmul.mubr.f32.gmra.mrb[0].mxu0 %v847
      %v3934 = vpop.f32.mrb[0].mxu0
      %v3935 = vadd.f32 %v3710, %v3934
      %v3936 = vpop.f32.mrb[0].mxu0
      %3937 = vmatprep.mubr.f32.mxu0 %v2791
      %3938 = vmatmul.mubr.f32.gmra.mrb[0].mxu0 %v849
      %v3939 = vpop.f32.mrb[0].mxu0
      %v3940 = vadd.f32 %v3715, %v3939
      %v3941 = vpop.f32.mrb[0].mxu0
      %3942 = vmatprep.mubr.f32.mxu0 %v2792
      %3943 = vmatmul.mubr.f32.gmra.mrb[0].mxu0 %v851
      %v3944 = vpop.f32.mrb[0].mxu0
      %v3945 = vadd.f32 %v3720, %v3944
      %v3946 = vpop.f32.mrb[0].mxu0
      %3947 = vmatprep.mubr.f32.mxu0 %v2793
      %3948 = vmatmul.mubr.f32.gmra.mrb[0].mxu0 %v853
      %v3949 = vpop.f32.mrb[0].mxu0
      %v3950 = vadd.f32 %v3725, %v3949
      %v3951 = vpop.f32.mrb[0].mxu0
      %3952 = vmatprep.mubr.f32.mxu0 %v2794
      %3953 = vmatmul.mubr.f32.gmra.mrb[0].mxu0 %v855
      %v3954 = vpop.f32.mrb[0].mxu0
      %v3955 = vadd.f32 %v3730, %v3954
      %v3956 = vpop.f32.mrb[0].mxu0
      %3957 = vmatprep.mubr.f32.mxu0 %v2795
      %3958 = vmatmul.mubr.f32.gmra.mrb[0].mxu0 %v857
      %v3959 = vpop.f32.mrb[0].mxu0
      %v3960 = vadd.f32 %v3735, %v3959
      %v3961 = vpop.f32.mrb[0].mxu0
      %3962 = vmatprep.mubr.f32.mxu0 %v2796
      %3963 = vmatmul.mubr.f32.gmra.mrb[0].mxu0 %v859
      %v3964 = vpop.f32.mrb[0].mxu0
      %v3965 = vadd.f32 %v3740, %v3964
      %v3966 = vpop.f32.mrb[0].mxu0
      %3967 = vmatprep.mubr.f32.mxu0 %v2797
      %3968 = vmatmul.mubr.f32.gmra.mrb[0].mxu0 %v861
      %v3969 = vpop.f32.mrb[0].mxu0
      %v3970 = vadd.f32 %v3745, %v3969
      %v3971 = vpop.f32.mrb[0].mxu0
      %3972 = vmatprep.mubr.f32.mxu0 %v2798
      %3973 = vmatmul.mubr.f32.gmra.mrb[0].mxu0 %v863
      %v3974 = vpop.f32.mrb[0].mxu0
      %v3975 = vadd.f32 %v3750, %v3974
      %v3976 = vpop.f32.mrb[0].mxu0
      %3977 = vmatprep.mubr.f32.mxu0 %v2799
      %3978 = vmatmul.mubr.f32.gmra.mrb[0].mxu0 %v865
      %v3979 = vpop.f32.mrb[0].mxu0
      %v3980 = vadd.f32 %v3755, %v3979
      %v3981 = vpop.f32.mrb[0].mxu0
      %3982 = vmatprep.mubr.f32.mxu0 %v2800
      %3983 = vmatmul.mubr.f32.gmra.mrb[0].mxu0 %v867
      %v3984 = vpop.f32.mrb[0].mxu0
      %v3985 = vadd.f32 %v3760, %v3984
      %v3986 = vpop.f32.mrb[0].mxu0
      %3987 = vmatprep.mubr.f32.mxu0 %v2801
      %3988 = vmatmul.mubr.f32.gmra.mrb[0].mxu0 %v869
      %v3989 = vpop.f32.mrb[0].mxu0
      %v3990 = vadd.f32 %v3765, %v3989
      %v3991 = vpop.f32.mrb[0].mxu0
      %3992 = vmatprep.mubr.f32.mxu0 %v2802
      %3993 = vmatmul.mubr.f32.gmra.mrb[0].mxu0 %v871
      %v3994 = vpop.f32.mrb[0].mxu0
      %v3995 = vadd.f32 %v3770, %v3994
      %v3996 = vpop.f32.mrb[0].mxu0
      %3997 = vmatprep.mubr.f32.mxu0 %v2803
      %3998 = vmatmul.mubr.f32.gmra.mrb[0].mxu0 %v873
      %v3999 = vpop.f32.mrb[0].mxu0
      %v4000 = vadd.f32 %v3775, %v3999
      %v4001 = vpop.f32.mrb[0].mxu0
      %4002 = vmatprep.mubr.f32.mxu0 %v2804
      %4003 = vmatmul.mubr.f32.gmra.mrb[0].mxu0 %v875
      %v4004 = vpop.f32.mrb[0].mxu0
      %v4005 = vadd.f32 %v3780, %v4004
      %v4006 = vpop.f32.mrb[0].mxu0
      %4007 = vmatprep.mubr.f32.mxu0 %v2805
      %4008 = vmatmul.mubr.f32.gmra.mrb[0].mxu0 %v877
      %v4009 = vpop.f32.mrb[0].mxu0
      %v4010 = vadd.f32 %v3785, %v4009
      %v4011 = vpop.f32.mrb[0].mxu0
      %4012 = vmatprep.mubr.f32.mxu0 %v2806
      %4013 = vmatmul.mubr.f32.gmra.mrb[0].mxu0 %v879
      %v4014 = vpop.f32.mrb[0].mxu0
      %v4015 = vadd.f32 %v3790, %v4014
      %v4016 = vpop.f32.mrb[0].mxu0
      %4017 = vmatprep.mubr.f32.mxu0 %v2807
      %4018 = vmatmul.mubr.f32.gmra.mrb[0].mxu0 %v881
      %v4019 = vpop.f32.mrb[0].mxu0
      %v4020 = vadd.f32 %v3795, %v4019
      %v4021 = vpop.f32.mrb[0].mxu0
      %4022 = vmatprep.mubr.f32.mxu0 %v2808
      %4023 = vmatmul.mubr.f32.gmra.mrb[0].mxu0 %v883
      %v4024 = vpop.f32.mrb[0].mxu0
      %v4025 = vadd.f32 %v3800, %v4024
      %v4026 = vpop.f32.mrb[0].mxu0
      %4027 = vmatprep.mubr.f32.mxu0 %v2809
      %4028 = vmatmul.mubr.f32.gmra.mrb[0].mxu0 %v885
      %v4029 = vpop.f32.mrb[0].mxu0
      %v4030 = vadd.f32 %v3805, %v4029
      %v4031 = vpop.f32.mrb[0].mxu0
      %4032 = vmatprep.mubr.f32.mxu0 %v2810
      %4033 = vmatmul.mubr.f32.gmra.mrb[0].mxu0 %v887
      %v4034 = vpop.f32.mrb[0].mxu0
      %v4035 = vadd.f32 %v3810, %v4034
      %v4036 = vpop.f32.mrb[0].mxu0
      %4037 = vmatprep.mubr.f32.mxu0 %v2811
      %4038 = vmatmul.mubr.f32.gmra.mrb[0].mxu0 %v889
      %v4039 = vpop.f32.mrb[0].mxu0
      %v4040 = vadd.f32 %v3815, %v4039
      %v4041 = vpop.f32.mrb[0].mxu0
      %4042 = vmatprep.mubr.f32.mxu0 %v2812
      %4043 = vmatmul.mubr.f32.gmra.mrb[0].mxu0 %v891
      %v4044 = vpop.f32.mrb[0].mxu0
      %v4045 = vadd.f32 %v3820, %v4044
      %v4046 = vpop.f32.mrb[0].mxu0
      %4047 = vmatprep.mubr.f32.mxu0 %v2813
      %4048 = vmatmul.mubr.f32.gmra.mrb[0].mxu0 %v893
      %v4049 = vpop.f32.mrb[0].mxu0
      %v4050 = vadd.f32 %v3825, %v4049
      %v4051 = vpop.f32.mrb[0].mxu0
      %4052 = vmatprep.mubr.f32.mxu0 %v2814
      %4053 = vmatmul.mubr.f32.gmra.mrb[0].mxu0 %v1222
      %v4054 = vpop.f32.mrb[0].mxu0
      %v4055 = vadd.f32 %v3830, %v4054
      %v4056 = vpop.f32.mrb[0].mxu0
      %4057 = vmatprep.mubr.f32.mxu0 %v2815
      %4058 = vmatmul.mubr.f32.gmra.mrb[0].mxu0 %v1495
      %v4059 = vpop.f32.mrb[0].mxu0
      %v4060 = vadd.f32 %v3835, %v4059
      %v4061 = vpop.f32.mrb[0].mxu0
      %4062 = vmatprep.mubr.f32.mxu0 %v2816
      %4063 = vmatmul.mubr.f32.gmra.mrb[0].mxu0 %v1593
      %v4064 = vpop.f32.mrb[0].mxu0
      %v4065 = vadd.f32 %v3840, %v4064
      %v4066 = vpop.f32.mrb[0].mxu0
      %4067 = vdwg.mxu0
      %4068 = vmatprep.subr.mxu0 0.0
      %4069 = vmatpush1.msra.mxu0 %v2977
      %4070 = vmatprep.subr.mxu0 0.0
      %4071 = vmatpush1.msra.mxu0 %v2978
      %4072 = vmatprep.subr.mxu0 0.0
      %4073 = vmatpush1.msra.mxu0 %v2979
      %4074 = vmatprep.subr.mxu0 0.0
      %4075 = vmatpush1.msra.mxu0 %v2980
      %4076 = vmatprep.subr.mxu0 0.0
      %4077 = vmatpush1.msra.mxu0 %v2981
      %4078 = vmatprep.subr.mxu0 0.0
      %4079 = vmatpush1.msra.mxu0 %v2982
      %4080 = vmatprep.subr.mxu0 0.0
      %4081 = vmatpush1.msra.mxu0 %v2983
      %4082 = vmatprep.subr.mxu0 0.0
      %4083 = vmatpush1.msra.mxu0 %v2984
      %4084 = vmatprep.subr.mxu0 0.0
      %4085 = vmatpush1.msra.mxu0 %v2985
      %4086 = vmatprep.subr.mxu0 0.0
      %4087 = vmatpush1.msra.mxu0 %v2986
      %4088 = vmatprep.subr.mxu0 0.0
      %4089 = vmatpush1.msra.mxu0 %v2987
      %4090 = vmatprep.subr.mxu0 0.0
      %4091 = vmatpush1.msra.mxu0 %v2988
      %4092 = vmatprep.subr.mxu0 0.0
      %4093 = vmatpush1.msra.mxu0 %v2989
      %4094 = vmatprep.subr.mxu0 0.0
      %4095 = vmatpush1.msra.mxu0 %v2990
      %4096 = vmatprep.subr.mxu0 0.0
      %4097 = vmatpush1.msra.mxu0 %v2991
      %4098 = vmatprep.subr.mxu0 0.0
      %4099 = vmatpush1.msra.mxu0 %v2992
      %4100 = vmatprep.subr.mxu0 0.0
      %4101 = vmatpush1.msra.mxu0 %v2993
      %4102 = vmatprep.subr.mxu0 0.0
      %4103 = vmatpush1.msra.mxu0 %v2994
      %4104 = vmatprep.subr.mxu0 0.0
      %4105 = vmatpush1.msra.mxu0 %v2995
      %4106 = vmatprep.subr.mxu0 0.0
      %4107 = vmatpush1.msra.mxu0 %v2996
      %4108 = vmatprep.subr.mxu0 0.0
      %4109 = vmatpush1.msra.mxu0 %v2997
      %4110 = vmatprep.subr.mxu0 0.0
      %4111 = vmatpush1.msra.mxu0 %v2998
      %4112 = vmatprep.subr.mxu0 0.0
      %4113 = vmatpush1.msra.mxu0 %v2999
      %4114 = vmatprep.subr.mxu0 0.0
      %4115 = vmatpush1.msra.mxu0 %v3000
      %4116 = vmatprep.subr.mxu0 0.0
      %4117 = vmatpush1.msra.mxu0 %v3001
      %4118 = vmatprep.subr.mxu0 0.0
      %4119 = vmatpush1.msra.mxu0 %v3002
      %4120 = vmatprep.subr.mxu0 0.0
      %4121 = vmatpush1.msra.mxu0 %v3003
      %4122 = vmatprep.subr.mxu0 0.0
      %4123 = vmatpush1.msra.mxu0 %v3004
      %4124 = vmatprep.subr.mxu0 0.0
      %4125 = vmatpush1.msra.mxu0 %v3005
      %4126 = vmatprep.subr.mxu0 0.0
      %4127 = vmatpush1.msra.mxu0 %v3006
      %4128 = vmatprep.subr.mxu0 0.0
      %4129 = vmatpush1.msra.mxu0 %v3007
      %4130 = vmatprep.subr.mxu0 0.0
      %4131 = vmatpush1.msra.mxu0 %v3008
      %4132 = vmatprep.mubr.f32.mxu0 %v1729
      %4133 = vmatmul.mubr.f32.gmra.mrb[0].mxu0 %v2597
      %v4134 = vpop.f32.mrb[0].mxu0
      %v4135 = vadd.f32 %v3910, %v4134
      %v4136 = vpop.f32.mrb[0].mxu0
      %4137 = vmatprep.mubr.f32.mxu0 %v1731
      %4138 = vmatmul.mubr.f32.gmra.mrb[0].mxu0 %v2598
      %v4139 = vpop.f32.mrb[0].mxu0
      %v4140 = vadd.f32 %v3915, %v4139
      %v4141 = vpop.f32.mrb[0].mxu0
      %4142 = vmatprep.mubr.f32.mxu0 %v1733
      %4143 = vmatmul.mubr.f32.gmra.mrb[0].mxu0 %v2599
      %v4144 = vpop.f32.mrb[0].mxu0
      %v4145 = vadd.f32 %v3920, %v4144
      %v4146 = vpop.f32.mrb[0].mxu0
      %4147 = vmatprep.mubr.f32.mxu0 %v1735
      %4148 = vmatmul.mubr.f32.gmra.mrb[0].mxu0 %v2600
      %v4149 = vpop.f32.mrb[0].mxu0
      %v4150 = vadd.f32 %v3925, %v4149
      %v4151 = vpop.f32.mrb[0].mxu0
      %4152 = vmatprep.mubr.f32.mxu0 %v1737
      %4153 = vmatmul.mubr.f32.gmra.mrb[0].mxu0 %v2601
      %v4154 = vpop.f32.mrb[0].mxu0
      %v4155 = vadd.f32 %v3930, %v4154
      %v4156 = vpop.f32.mrb[0].mxu0
      %4157 = vmatprep.mubr.f32.mxu0 %v1739
      %4158 = vmatmul.mubr.f32.gmra.mrb[0].mxu0 %v2602
      %v4159 = vpop.f32.mrb[0].mxu0
      %v4160 = vadd.f32 %v3935, %v4159
      %v4161 = vpop.f32.mrb[0].mxu0
      %4162 = vmatprep.mubr.f32.mxu0 %v1741
      %4163 = vmatmul.mubr.f32.gmra.mrb[0].mxu0 %v2603
      %v4164 = vpop.f32.mrb[0].mxu0
      %v4165 = vadd.f32 %v3940, %v4164
      %v4166 = vpop.f32.mrb[0].mxu0
      %4167 = vmatprep.mubr.f32.mxu0 %v1743
      %4168 = vmatmul.mubr.f32.gmra.mrb[0].mxu0 %v2604
      %v4169 = vpop.f32.mrb[0].mxu0
      %v4170 = vadd.f32 %v3945, %v4169
      %v4171 = vpop.f32.mrb[0].mxu0
      %4172 = vmatprep.mubr.f32.mxu0 %v1745
      %4173 = vmatmul.mubr.f32.gmra.mrb[0].mxu0 %v2605
      %v4174 = vpop.f32.mrb[0].mxu0
      %v4175 = vadd.f32 %v3950, %v4174
      %v4176 = vpop.f32.mrb[0].mxu0
      %4177 = vmatprep.mubr.f32.mxu0 %v1747
      %4178 = vmatmul.mubr.f32.gmra.mrb[0].mxu0 %v2606
      %v4179 = vpop.f32.mrb[0].mxu0
      %v4180 = vadd.f32 %v3955, %v4179
      %v4181 = vpop.f32.mrb[0].mxu0
      %4182 = vmatprep.mubr.f32.mxu0 %v1749
      %4183 = vmatmul.mubr.f32.gmra.mrb[0].mxu0 %v2607
      %v4184 = vpop.f32.mrb[0].mxu0
      %v4185 = vadd.f32 %v3960, %v4184
      %v4186 = vpop.f32.mrb[0].mxu0
      %4187 = vmatprep.mubr.f32.mxu0 %v1751
      %4188 = vmatmul.mubr.f32.gmra.mrb[0].mxu0 %v2608
      %v4189 = vpop.f32.mrb[0].mxu0
      %v4190 = vadd.f32 %v3965, %v4189
      %v4191 = vpop.f32.mrb[0].mxu0
      %4192 = vmatprep.mubr.f32.mxu0 %v1753
      %4193 = vmatmul.mubr.f32.gmra.mrb[0].mxu0 %v2609
      %v4194 = vpop.f32.mrb[0].mxu0
      %v4195 = vadd.f32 %v3970, %v4194
      %v4196 = vpop.f32.mrb[0].mxu0
      %4197 = vmatprep.mubr.f32.mxu0 %v1755
      %4198 = vmatmul.mubr.f32.gmra.mrb[0].mxu0 %v2610
      %v4199 = vpop.f32.mrb[0].mxu0
      %v4200 = vadd.f32 %v3975, %v4199
      %v4201 = vpop.f32.mrb[0].mxu0
      %4202 = vmatprep.mubr.f32.mxu0 %v1757
      %4203 = vmatmul.mubr.f32.gmra.mrb[0].mxu0 %v2611
      %v4204 = vpop.f32.mrb[0].mxu0
      %v4205 = vadd.f32 %v3980, %v4204
      %v4206 = vpop.f32.mrb[0].mxu0
      %4207 = vmatprep.mubr.f32.mxu0 %v1759
      %4208 = vmatmul.mubr.f32.gmra.mrb[0].mxu0 %v2612
      %v4209 = vpop.f32.mrb[0].mxu0
      %v4210 = vadd.f32 %v3985, %v4209
      %v4211 = vpop.f32.mrb[0].mxu0
      %4212 = vmatprep.mubr.f32.mxu0 %v1761
      %4213 = vmatmul.mubr.f32.gmra.mrb[0].mxu0 %v2613
      %v4214 = vpop.f32.mrb[0].mxu0
      %v4215 = vadd.f32 %v3990, %v4214
      %v4216 = vpop.f32.mrb[0].mxu0
      %4217 = vmatprep.mubr.f32.mxu0 %v1763
      %4218 = vmatmul.mubr.f32.gmra.mrb[0].mxu0 %v2614
      %v4219 = vpop.f32.mrb[0].mxu0
      %v4220 = vadd.f32 %v3995, %v4219
      %v4221 = vpop.f32.mrb[0].mxu0
      %4222 = vmatprep.mubr.f32.mxu0 %v1765
      %4223 = vmatmul.mubr.f32.gmra.mrb[0].mxu0 %v2615
      %v4224 = vpop.f32.mrb[0].mxu0
      %v4225 = vadd.f32 %v4000, %v4224
      %v4226 = vpop.f32.mrb[0].mxu0
      %4227 = vmatprep.mubr.f32.mxu0 %v1767
      %4228 = vmatmul.mubr.f32.gmra.mrb[0].mxu0 %v2616
      %v4229 = vpop.f32.mrb[0].mxu0
      %v4230 = vadd.f32 %v4005, %v4229
      %v4231 = vpop.f32.mrb[0].mxu0
      %4232 = vmatprep.mubr.f32.mxu0 %v1769
      %4233 = vmatmul.mubr.f32.gmra.mrb[0].mxu0 %v2617
      %v4234 = vpop.f32.mrb[0].mxu0
      %v4235 = vadd.f32 %v4010, %v4234
      %v4236 = vpop.f32.mrb[0].mxu0
      %4237 = vmatprep.mubr.f32.mxu0 %v1771
      %4238 = vmatmul.mubr.f32.gmra.mrb[0].mxu0 %v2618
      %v4239 = vpop.f32.mrb[0].mxu0
      %v4240 = vadd.f32 %v4015, %v4239
      %v4241 = vpop.f32.mrb[0].mxu0
      %4242 = vmatprep.mubr.f32.mxu0 %v1773
      %4243 = vmatmul.mubr.f32.gmra.mrb[0].mxu0 %v2619
      %v4244 = vpop.f32.mrb[0].mxu0
      %v4245 = vadd.f32 %v4020, %v4244
      %v4246 = vpop.f32.mrb[0].mxu0
      %4247 = vmatprep.mubr.f32.mxu0 %v1775
      %4248 = vmatmul.mubr.f32.gmra.mrb[0].mxu0 %v2620
      %v4249 = vpop.f32.mrb[0].mxu0
      %v4250 = vadd.f32 %v4025, %v4249
      %v4251 = vpop.f32.mrb[0].mxu0
      %4252 = vmatprep.mubr.f32.mxu0 %v1777
      %4253 = vmatmul.mubr.f32.gmra.mrb[0].mxu0 %v2621
      %v4254 = vpop.f32.mrb[0].mxu0
      %v4255 = vadd.f32 %v4030, %v4254
      %v4256 = vpop.f32.mrb[0].mxu0
      %4257 = vmatprep.mubr.f32.mxu0 %v1779
      %4258 = vmatmul.mubr.f32.gmra.mrb[0].mxu0 %v2622
      %v4259 = vpop.f32.mrb[0].mxu0
      %v4260 = vadd.f32 %v4035, %v4259
      %v4261 = vpop.f32.mrb[0].mxu0
      %4262 = vmatprep.mubr.f32.mxu0 %v1781
      %4263 = vmatmul.mubr.f32.gmra.mrb[0].mxu0 %v2623
      %v4264 = vpop.f32.mrb[0].mxu0
      %v4265 = vadd.f32 %v4040, %v4264
      %v4266 = vpop.f32.mrb[0].mxu0
      %4267 = vmatprep.mubr.f32.mxu0 %v1783
      %4268 = vmatmul.mubr.f32.gmra.mrb[0].mxu0 %v2624
      %v4269 = vpop.f32.mrb[0].mxu0
      %v4270 = vadd.f32 %v4045, %v4269
      %v4271 = vpop.f32.mrb[0].mxu0
      %4272 = vmatprep.mubr.f32.mxu0 %v1785
      %4273 = vmatmul.mubr.f32.gmra.mrb[0].mxu0 %v2625
      %v4274 = vpop.f32.mrb[0].mxu0
      %v4275 = vadd.f32 %v4050, %v4274
      %v4276 = vpop.f32.mrb[0].mxu0
      %4277 = vmatprep.mubr.f32.mxu0 %v1787
      %4278 = vmatmul.mubr.f32.gmra.mrb[0].mxu0 %v2626
      %v4279 = vpop.f32.mrb[0].mxu0
      %v4280 = vadd.f32 %v4055, %v4279
      %v4281 = vpop.f32.mrb[0].mxu0
      %4282 = vmatprep.mubr.f32.mxu0 %v1789
      %4283 = vmatmul.mubr.f32.gmra.mrb[0].mxu0 %v2627
      %v4284 = vpop.f32.mrb[0].mxu0
      %v4285 = vadd.f32 %v4060, %v4284
      %v4286 = vpop.f32.mrb[0].mxu0
      %4287 = vmatprep.mubr.f32.mxu0 %v1791
      %4288 = vmatmul.mubr.f32.gmra.mrb[0].mxu0 %v2628
      %v4289 = vpop.f32.mrb[0].mxu0
      %v4290 = vadd.f32 %v4065, %v4289
      %v4291 = vpop.f32.mrb[0].mxu0
      %4292 = vdwg.mxu0
      %4293 = vmatprep.subr.mxu0 0.0
      %4294 = vmatpush1.msra.mxu0 %v3009
      %4295 = vmatprep.subr.mxu0 0.0
      %4296 = vmatpush1.msra.mxu0 %v3010
      %4297 = vmatprep.subr.mxu0 0.0
      %4298 = vmatpush1.msra.mxu0 %v3011
      %4299 = vmatprep.subr.mxu0 0.0
      %4300 = vmatpush1.msra.mxu0 %v3012
      %4301 = vmatprep.subr.mxu0 0.0
      %4302 = vmatpush1.msra.mxu0 %v3013
      %4303 = vmatprep.subr.mxu0 0.0
      %4304 = vmatpush1.msra.mxu0 %v3014
      %4305 = vmatprep.subr.mxu0 0.0
      %4306 = vmatpush1.msra.mxu0 %v3015
      %4307 = vmatprep.subr.mxu0 0.0
      %4308 = vmatpush1.msra.mxu0 %v3016
      %4309 = vmatprep.subr.mxu0 0.0
      %4310 = vmatpush1.msra.mxu0 %v3017
      %4311 = vmatprep.subr.mxu0 0.0
      %4312 = vmatpush1.msra.mxu0 %v3018
      %4313 = vmatprep.subr.mxu0 0.0
      %4314 = vmatpush1.msra.mxu0 %v3019
      %4315 = vmatprep.subr.mxu0 0.0
      %4316 = vmatpush1.msra.mxu0 %v3020
      %4317 = vmatprep.subr.mxu0 0.0
      %4318 = vmatpush1.msra.mxu0 %v3021
      %4319 = vmatprep.subr.mxu0 0.0
      %4320 = vmatpush1.msra.mxu0 %v3022
      %4321 = vmatprep.subr.mxu0 0.0
      %4322 = vmatpush1.msra.mxu0 %v3023
      %4323 = vmatprep.subr.mxu0 0.0
      %4324 = vmatpush1.msra.mxu0 %v3024
      %4325 = vmatprep.subr.mxu0 0.0
      %4326 = vmatpush1.msra.mxu0 %v3025
      %4327 = vmatprep.subr.mxu0 0.0
      %4328 = vmatpush1.msra.mxu0 %v3026
      %4329 = vmatprep.subr.mxu0 0.0
      %4330 = vmatpush1.msra.mxu0 %v3027
      %4331 = vmatprep.subr.mxu0 0.0
      %4332 = vmatpush1.msra.mxu0 %v3028
      %4333 = vmatprep.subr.mxu0 0.0
      %4334 = vmatpush1.msra.mxu0 %v3029
      %4335 = vmatprep.subr.mxu0 0.0
      %4336 = vmatpush1.msra.mxu0 %v3030
      %4337 = vmatprep.subr.mxu0 0.0
      %4338 = vmatpush1.msra.mxu0 %v3031
      %4339 = vmatprep.subr.mxu0 0.0
      %4340 = vmatpush1.msra.mxu0 %v3032
      %4341 = vmatprep.subr.mxu0 0.0
      %4342 = vmatpush1.msra.mxu0 %v3033
      %4343 = vmatprep.subr.mxu0 0.0
      %4344 = vmatpush1.msra.mxu0 %v3034
      %4345 = vmatprep.subr.mxu0 0.0
      %4346 = vmatpush1.msra.mxu0 %v3035
      %4347 = vmatprep.subr.mxu0 0.0
      %4348 = vmatpush1.msra.mxu0 %v3036
      %4349 = vmatprep.subr.mxu0 0.0
      %4350 = vmatpush1.msra.mxu0 %v3037
      %4351 = vmatprep.subr.mxu0 0.0
      %4352 = vmatpush1.msra.mxu0 %v3038
      %4353 = vmatprep.subr.mxu0 0.0
      %4354 = vmatpush1.msra.mxu0 %v3039
      %4355 = vmatprep.subr.mxu0 0.0
      %4356 = vmatpush1.msra.mxu0 %v3040
      %4357 = vmatprep.mubr.f32.mxu0 %v2025
      %4358 = vmatmul.mubr.f32.gmra.mrb[0].mxu0 %v2817
      %v4359 = vpop.f32.mrb[0].mxu0
      %v4360 = vadd.f32 %v4135, %v4359
      %v4361 = vpop.f32.mrb[0].mxu0
      %4362 = vmatprep.mubr.f32.mxu0 %v2026
      %4363 = vmatmul.mubr.f32.gmra.mrb[0].mxu0 %v2818
      %v4364 = vpop.f32.mrb[0].mxu0
      %v4365 = vadd.f32 %v4140, %v4364
      %v4366 = vpop.f32.mrb[0].mxu0
      %4367 = vmatprep.mubr.f32.mxu0 %v2027
      %4368 = vmatmul.mubr.f32.gmra.mrb[0].mxu0 %v2819
      %v4369 = vpop.f32.mrb[0].mxu0
      %v4370 = vadd.f32 %v4145, %v4369
      %v4371 = vpop.f32.mrb[0].mxu0
      %4372 = vmatprep.mubr.f32.mxu0 %v2028
      %4373 = vmatmul.mubr.f32.gmra.mrb[0].mxu0 %v2820
      %v4374 = vpop.f32.mrb[0].mxu0
      %v4375 = vadd.f32 %v4150, %v4374
      %v4376 = vpop.f32.mrb[0].mxu0
      %4377 = vmatprep.mubr.f32.mxu0 %v2029
      %4378 = vmatmul.mubr.f32.gmra.mrb[0].mxu0 %v2821
      %v4379 = vpop.f32.mrb[0].mxu0
      %v4380 = vadd.f32 %v4155, %v4379
      %v4381 = vpop.f32.mrb[0].mxu0
      %4382 = vmatprep.mubr.f32.mxu0 %v2030
      %4383 = vmatmul.mubr.f32.gmra.mrb[0].mxu0 %v2822
      %v4384 = vpop.f32.mrb[0].mxu0
      %v4385 = vadd.f32 %v4160, %v4384
      %v4386 = vpop.f32.mrb[0].mxu0
      %4387 = vmatprep.mubr.f32.mxu0 %v2031
      %4388 = vmatmul.mubr.f32.gmra.mrb[0].mxu0 %v2823
      %v4389 = vpop.f32.mrb[0].mxu0
      %v4390 = vadd.f32 %v4165, %v4389
      %v4391 = vpop.f32.mrb[0].mxu0
      %4392 = vmatprep.mubr.f32.mxu0 %v2032
      %4393 = vmatmul.mubr.f32.gmra.mrb[0].mxu0 %v2824
      %v4394 = vpop.f32.mrb[0].mxu0
      %v4395 = vadd.f32 %v4170, %v4394
      %v4396 = vpop.f32.mrb[0].mxu0
      %4397 = vmatprep.mubr.f32.mxu0 %v2033
      %4398 = vmatmul.mubr.f32.gmra.mrb[0].mxu0 %v2825
      %v4399 = vpop.f32.mrb[0].mxu0
      %v4400 = vadd.f32 %v4175, %v4399
      %v4401 = vpop.f32.mrb[0].mxu0
      %4402 = vmatprep.mubr.f32.mxu0 %v2034
      %4403 = vmatmul.mubr.f32.gmra.mrb[0].mxu0 %v2826
      %v4404 = vpop.f32.mrb[0].mxu0
      %v4405 = vadd.f32 %v4180, %v4404
      %v4406 = vpop.f32.mrb[0].mxu0
      %4407 = vmatprep.mubr.f32.mxu0 %v2035
      %4408 = vmatmul.mubr.f32.gmra.mrb[0].mxu0 %v2827
      %v4409 = vpop.f32.mrb[0].mxu0
      %v4410 = vadd.f32 %v4185, %v4409
      %v4411 = vpop.f32.mrb[0].mxu0
      %4412 = vmatprep.mubr.f32.mxu0 %v2036
      %4413 = vmatmul.mubr.f32.gmra.mrb[0].mxu0 %v2828
      %v4414 = vpop.f32.mrb[0].mxu0
      %v4415 = vadd.f32 %v4190, %v4414
      %v4416 = vpop.f32.mrb[0].mxu0
      %4417 = vmatprep.mubr.f32.mxu0 %v2037
      %4418 = vmatmul.mubr.f32.gmra.mrb[0].mxu0 %v2829
      %v4419 = vpop.f32.mrb[0].mxu0
      %v4420 = vadd.f32 %v4195, %v4419
      %v4421 = vpop.f32.mrb[0].mxu0
      %4422 = vmatprep.mubr.f32.mxu0 %v2038
      %4423 = vmatmul.mubr.f32.gmra.mrb[0].mxu0 %v2830
      %v4424 = vpop.f32.mrb[0].mxu0
      %v4425 = vadd.f32 %v4200, %v4424
      %v4426 = vpop.f32.mrb[0].mxu0
      %4427 = vmatprep.mubr.f32.mxu0 %v2039
      %4428 = vmatmul.mubr.f32.gmra.mrb[0].mxu0 %v2831
      %v4429 = vpop.f32.mrb[0].mxu0
      %v4430 = vadd.f32 %v4205, %v4429
      %v4431 = vpop.f32.mrb[0].mxu0
      %4432 = vmatprep.mubr.f32.mxu0 %v2040
      %4433 = vmatmul.mubr.f32.gmra.mrb[0].mxu0 %v2832
      %v4434 = vpop.f32.mrb[0].mxu0
      %v4435 = vadd.f32 %v4210, %v4434
      %v4436 = vpop.f32.mrb[0].mxu0
      %4437 = vmatprep.mubr.f32.mxu0 %v2041
      %4438 = vmatmul.mubr.f32.gmra.mrb[0].mxu0 %v2833
      %v4439 = vpop.f32.mrb[0].mxu0
      %v4440 = vadd.f32 %v4215, %v4439
      %v4441 = vpop.f32.mrb[0].mxu0
      %4442 = vmatprep.mubr.f32.mxu0 %v2042
      %4443 = vmatmul.mubr.f32.gmra.mrb[0].mxu0 %v2834
      %v4444 = vpop.f32.mrb[0].mxu0
      %v4445 = vadd.f32 %v4220, %v4444
      %v4446 = vpop.f32.mrb[0].mxu0
      %4447 = vmatprep.mubr.f32.mxu0 %v2043
      %4448 = vmatmul.mubr.f32.gmra.mrb[0].mxu0 %v2835
      %v4449 = vpop.f32.mrb[0].mxu0
      %v4450 = vadd.f32 %v4225, %v4449
      %v4451 = vpop.f32.mrb[0].mxu0
      %4452 = vmatprep.mubr.f32.mxu0 %v2044
      %4453 = vmatmul.mubr.f32.gmra.mrb[0].mxu0 %v2836
      %v4454 = vpop.f32.mrb[0].mxu0
      %v4455 = vadd.f32 %v4230, %v4454
      %v4456 = vpop.f32.mrb[0].mxu0
      %4457 = vmatprep.mubr.f32.mxu0 %v2045
      %4458 = vmatmul.mubr.f32.gmra.mrb[0].mxu0 %v2837
      %v4459 = vpop.f32.mrb[0].mxu0
      %v4460 = vadd.f32 %v4235, %v4459
      %v4461 = vpop.f32.mrb[0].mxu0
      %4462 = vmatprep.mubr.f32.mxu0 %v2046
      %4463 = vmatmul.mubr.f32.gmra.mrb[0].mxu0 %v2838
      %v4464 = vpop.f32.mrb[0].mxu0
      %v4465 = vadd.f32 %v4240, %v4464
      %v4466 = vpop.f32.mrb[0].mxu0
      %4467 = vmatprep.mubr.f32.mxu0 %v2047
      %4468 = vmatmul.mubr.f32.gmra.mrb[0].mxu0 %v2839
      %v4469 = vpop.f32.mrb[0].mxu0
      %v4470 = vadd.f32 %v4245, %v4469
      %v4471 = vpop.f32.mrb[0].mxu0
      %4472 = vmatprep.mubr.f32.mxu0 %v2048
      %4473 = vmatmul.mubr.f32.gmra.mrb[0].mxu0 %v2840
      %v4474 = vpop.f32.mrb[0].mxu0
      %v4475 = vadd.f32 %v4250, %v4474
      %v4476 = vpop.f32.mrb[0].mxu0
      %4477 = vmatprep.mubr.f32.mxu0 %v2049
      %4478 = vmatmul.mubr.f32.gmra.mrb[0].mxu0 %v2841
      %v4479 = vpop.f32.mrb[0].mxu0
      %v4480 = vadd.f32 %v4255, %v4479
      %v4481 = vpop.f32.mrb[0].mxu0
      %4482 = vmatprep.mubr.f32.mxu0 %v2050
      %4483 = vmatmul.mubr.f32.gmra.mrb[0].mxu0 %v2842
      %v4484 = vpop.f32.mrb[0].mxu0
      %v4485 = vadd.f32 %v4260, %v4484
      %v4486 = vpop.f32.mrb[0].mxu0
      %4487 = vmatprep.mubr.f32.mxu0 %v2051
      %4488 = vmatmul.mubr.f32.gmra.mrb[0].mxu0 %v2843
      %v4489 = vpop.f32.mrb[0].mxu0
      %v4490 = vadd.f32 %v4265, %v4489
      %v4491 = vpop.f32.mrb[0].mxu0
      %4492 = vmatprep.mubr.f32.mxu0 %v2052
      %4493 = vmatmul.mubr.f32.gmra.mrb[0].mxu0 %v2844
      %v4494 = vpop.f32.mrb[0].mxu0
      %v4495 = vadd.f32 %v4270, %v4494
      %v4496 = vpop.f32.mrb[0].mxu0
      %4497 = vmatprep.mubr.f32.mxu0 %v2709
      %4498 = vmatmul.mubr.f32.gmra.mrb[0].mxu0 %v2845
      %v4499 = vpop.f32.mrb[0].mxu0
      %v4500 = vadd.f32 %v4275, %v4499
      %v4501 = vpop.f32.mrb[0].mxu0
      %4502 = vmatprep.mubr.f32.mxu0 %v2710
      %4503 = vmatmul.mubr.f32.gmra.mrb[0].mxu0 %v2846
      %v4504 = vpop.f32.mrb[0].mxu0
      %v4505 = vadd.f32 %v4280, %v4504
      %v4506 = vpop.f32.mrb[0].mxu0
      %4507 = vmatprep.mubr.f32.mxu0 %v2711
      %4508 = vmatmul.mubr.f32.gmra.mrb[0].mxu0 %v2847
      %v4509 = vpop.f32.mrb[0].mxu0
      %v4510 = vadd.f32 %v4285, %v4509
      %v4511 = vpop.f32.mrb[0].mxu0
      %4512 = vmatprep.mubr.f32.mxu0 %v2712
      %4513 = vmatmul.mubr.f32.gmra.mrb[0].mxu0 %v2848
      %v4514 = vpop.f32.mrb[0].mxu0
      %v4515 = vadd.f32 %v4290, %v4514
      %v4516 = vpop.f32.mrb[0].mxu0
      %4517 = vdwg.mxu0
      %4518 = vmatprep.subr.mxu0 0.0
      %4519 = vmatpush1.msra.mxu0 %v3041
      %4520 = vmatprep.subr.mxu0 0.0
      %4521 = vmatpush1.msra.mxu0 %v3042
      %4522 = vmatprep.subr.mxu0 0.0
      %4523 = vmatpush1.msra.mxu0 %v3043
      %4524 = vmatprep.subr.mxu0 0.0
      %4525 = vmatpush1.msra.mxu0 %v3044
      %4526 = vmatprep.subr.mxu0 0.0
      %4527 = vmatpush1.msra.mxu0 %v3045
      %4528 = vmatprep.subr.mxu0 0.0
      %4529 = vmatpush1.msra.mxu0 %v3046
      %4530 = vmatprep.subr.mxu0 0.0
      %4531 = vmatpush1.msra.mxu0 %v3047
      %4532 = vmatprep.subr.mxu0 0.0
      %4533 = vmatpush1.msra.mxu0 %v3048
      %4534 = vmatprep.subr.mxu0 0.0
      %4535 = vmatpush1.msra.mxu0 %v3049
      %4536 = vmatprep.subr.mxu0 0.0
      %4537 = vmatpush1.msra.mxu0 %v3050
      %4538 = vmatprep.subr.mxu0 0.0
      %4539 = vmatpush1.msra.mxu0 %v3051
      %4540 = vmatprep.subr.mxu0 0.0
      %4541 = vmatpush1.msra.mxu0 %v3052
      %4542 = vmatprep.subr.mxu0 0.0
      %4543 = vmatpush1.msra.mxu0 %v3053
      %4544 = vmatprep.subr.mxu0 0.0
      %4545 = vmatpush1.msra.mxu0 %v3054
      %4546 = vmatprep.subr.mxu0 0.0
      %4547 = vmatpush1.msra.mxu0 %v3055
      %4548 = vmatprep.subr.mxu0 0.0
      %4549 = vmatpush1.msra.mxu0 %v3056
      %4550 = vmatprep.subr.mxu0 0.0
      %4551 = vmatpush1.msra.mxu0 %v3057
      %4552 = vmatprep.subr.mxu0 0.0
      %4553 = vmatpush1.msra.mxu0 %v3058
      %4554 = vmatprep.subr.mxu0 0.0
      %4555 = vmatpush1.msra.mxu0 %v3059
      %4556 = vmatprep.subr.mxu0 0.0
      %4557 = vmatpush1.msra.mxu0 %v3060
      %4558 = vmatprep.subr.mxu0 0.0
      %4559 = vmatpush1.msra.mxu0 %v3061
      %4560 = vmatprep.subr.mxu0 0.0
      %4561 = vmatpush1.msra.mxu0 %v3062
      %4562 = vmatprep.subr.mxu0 0.0
      %4563 = vmatpush1.msra.mxu0 %v3063
      %4564 = vmatprep.subr.mxu0 0.0
      %4565 = vmatpush1.msra.mxu0 %v3064
      %4566 = vmatprep.subr.mxu0 0.0
      %4567 = vmatpush1.msra.mxu0 0.0
      %4568 = vmatprep.subr.mxu0 0.0
      %4569 = vmatpush1.msra.mxu0 0.0
      %4570 = vmatprep.subr.mxu0 0.0
      %4571 = vmatpush1.msra.mxu0 0.0
      %4572 = vmatprep.subr.mxu0 0.0
      %4573 = vmatpush1.msra.mxu0 0.0
      %4574 = vmatprep.subr.mxu0 0.0
      %4575 = vmatpush1.msra.mxu0 0.0
      %4576 = vmatprep.subr.mxu0 0.0
      %4577 = vmatpush1.msra.mxu0 0.0
      %4578 = vmatprep.subr.mxu0 0.0
      %4579 = vmatpush1.msra.mxu0 0.0
      %4580 = vmatprep.subr.mxu0 0.0
      %4581 = vmatpush1.msra.mxu0 0.0
      %4582 = vmatprep.mubr.f32.mxu0 %v3073
      %4583 = vmatmul.mubr.f32.gmra.mrb[0].mxu0 %v1829
      %v4584 = vpop.f32.mrb[0].mxu0
      %v4585 = vadd.f32 %v4360, %v4584
      %v4586 = vpop.f32.mrb[0].mxu0
      %4587 = vmatprep.mubr.f32.mxu0 %v3076
      %4588 = vmatmul.mubr.f32.gmra.mrb[0].mxu0 %v1831
      %v4589 = vpop.f32.mrb[0].mxu0
      %v4590 = vadd.f32 %v4365, %v4589
      %v4591 = vpop.f32.mrb[0].mxu0
      %4592 = vmatprep.mubr.f32.mxu0 %v3079
      %4593 = vmatmul.mubr.f32.gmra.mrb[0].mxu0 %v1833
      %v4594 = vpop.f32.mrb[0].mxu0
      %v4595 = vadd.f32 %v4370, %v4594
      %v4596 = vpop.f32.mrb[0].mxu0
      %4597 = vmatprep.mubr.f32.mxu0 %v3082
      %4598 = vmatmul.mubr.f32.gmra.mrb[0].mxu0 %v1835
      %v4599 = vpop.f32.mrb[0].mxu0
      %v4600 = vadd.f32 %v4375, %v4599
      %v4601 = vpop.f32.mrb[0].mxu0
      %4602 = vmatprep.mubr.f32.mxu0 %v3085
      %4603 = vmatmul.mubr.f32.gmra.mrb[0].mxu0 %v1837
      %v4604 = vpop.f32.mrb[0].mxu0
      %v4605 = vadd.f32 %v4380, %v4604
      %v4606 = vpop.f32.mrb[0].mxu0
      %4607 = vmatprep.mubr.f32.mxu0 %v3088
      %4608 = vmatmul.mubr.f32.gmra.mrb[0].mxu0 %v1839
      %v4609 = vpop.f32.mrb[0].mxu0
      %v4610 = vadd.f32 %v4385, %v4609
      %v4611 = vpop.f32.mrb[0].mxu0
      %4612 = vmatprep.mubr.f32.mxu0 %v3091
      %4613 = vmatmul.mubr.f32.gmra.mrb[0].mxu0 %v1841
      %v4614 = vpop.f32.mrb[0].mxu0
      %v4615 = vadd.f32 %v4390, %v4614
      %v4616 = vpop.f32.mrb[0].mxu0
      %4617 = vmatprep.mubr.f32.mxu0 %v3094
      %4618 = vmatmul.mubr.f32.gmra.mrb[0].mxu0 %v1843
      %v4619 = vpop.f32.mrb[0].mxu0
      %v4620 = vadd.f32 %v4395, %v4619
      %v4621 = vpop.f32.mrb[0].mxu0
      %4622 = vmatprep.mubr.f32.mxu0 %v3097
      %4623 = vmatmul.mubr.f32.gmra.mrb[0].mxu0 %v1845
      %v4624 = vpop.f32.mrb[0].mxu0
      %v4625 = vadd.f32 %v4400, %v4624
      %v4626 = vpop.f32.mrb[0].mxu0
      %4627 = vmatprep.mubr.f32.mxu0 %v3100
      %4628 = vmatmul.mubr.f32.gmra.mrb[0].mxu0 %v1847
      %v4629 = vpop.f32.mrb[0].mxu0
      %v4630 = vadd.f32 %v4405, %v4629
      %v4631 = vpop.f32.mrb[0].mxu0
      %4632 = vmatprep.mubr.f32.mxu0 %v3103
      %4633 = vmatmul.mubr.f32.gmra.mrb[0].mxu0 %v1849
      %v4634 = vpop.f32.mrb[0].mxu0
      %v4635 = vadd.f32 %v4410, %v4634
      %v4636 = vpop.f32.mrb[0].mxu0
      %4637 = vmatprep.mubr.f32.mxu0 %v3106
      %4638 = vmatmul.mubr.f32.gmra.mrb[0].mxu0 %v1851
      %v4639 = vpop.f32.mrb[0].mxu0
      %v4640 = vadd.f32 %v4415, %v4639
      %v4641 = vpop.f32.mrb[0].mxu0
      %4642 = vmatprep.mubr.f32.mxu0 %v3109
      %4643 = vmatmul.mubr.f32.gmra.mrb[0].mxu0 %v1853
      %v4644 = vpop.f32.mrb[0].mxu0
      %v4645 = vadd.f32 %v4420, %v4644
      %v4646 = vpop.f32.mrb[0].mxu0
      %4647 = vmatprep.mubr.f32.mxu0 %v3112
      %4648 = vmatmul.mubr.f32.gmra.mrb[0].mxu0 %v1855
      %v4649 = vpop.f32.mrb[0].mxu0
      %v4650 = vadd.f32 %v4425, %v4649
      %v4651 = vpop.f32.mrb[0].mxu0
      %4652 = vmatprep.mubr.f32.mxu0 %v3115
      %4653 = vmatmul.mubr.f32.gmra.mrb[0].mxu0 %v1857
      %v4654 = vpop.f32.mrb[0].mxu0
      %v4655 = vadd.f32 %v4430, %v4654
      %v4656 = vpop.f32.mrb[0].mxu0
      %4657 = vmatprep.mubr.f32.mxu0 %v3118
      %4658 = vmatmul.mubr.f32.gmra.mrb[0].mxu0 %v1859
      %v4659 = vpop.f32.mrb[0].mxu0
      %v4660 = vadd.f32 %v4435, %v4659
      %v4661 = vpop.f32.mrb[0].mxu0
      %4662 = vmatprep.mubr.f32.mxu0 %v3121
      %4663 = vmatmul.mubr.f32.gmra.mrb[0].mxu0 %v1861
      %v4664 = vpop.f32.mrb[0].mxu0
      %v4665 = vadd.f32 %v4440, %v4664
      %v4666 = vpop.f32.mrb[0].mxu0
      %4667 = vmatprep.mubr.f32.mxu0 %v3124
      %4668 = vmatmul.mubr.f32.gmra.mrb[0].mxu0 %v1863
      %v4669 = vpop.f32.mrb[0].mxu0
      %v4670 = vadd.f32 %v4445, %v4669
      %v4671 = vpop.f32.mrb[0].mxu0
      %4672 = vmatprep.mubr.f32.mxu0 %v3127
      %4673 = vmatmul.mubr.f32.gmra.mrb[0].mxu0 %v1865
      %v4674 = vpop.f32.mrb[0].mxu0
      %v4675 = vadd.f32 %v4450, %v4674
      %v4676 = vpop.f32.mrb[0].mxu0
      %4677 = vmatprep.mubr.f32.mxu0 %v3130
      %4678 = vmatmul.mubr.f32.gmra.mrb[0].mxu0 %v1867
      %v4679 = vpop.f32.mrb[0].mxu0
      %v4680 = vadd.f32 %v4455, %v4679
      %v4681 = vpop.f32.mrb[0].mxu0
      %4682 = vmatprep.mubr.f32.mxu0 %v3133
      %4683 = vmatmul.mubr.f32.gmra.mrb[0].mxu0 %v1869
      %v4684 = vpop.f32.mrb[0].mxu0
      %v4685 = vadd.f32 %v4460, %v4684
      %v4686 = vpop.f32.mrb[0].mxu0
      %4687 = vmatprep.mubr.f32.mxu0 %v3136
      %4688 = vmatmul.mubr.f32.gmra.mrb[0].mxu0 %v1871
      %v4689 = vpop.f32.mrb[0].mxu0
      %v4690 = vadd.f32 %v4465, %v4689
      %v4691 = vpop.f32.mrb[0].mxu0
      %4692 = vmatprep.mubr.f32.mxu0 %v3139
      %4693 = vmatmul.mubr.f32.gmra.mrb[0].mxu0 %v1873
      %v4694 = vpop.f32.mrb[0].mxu0
      %v4695 = vadd.f32 %v4470, %v4694
      %v4696 = vpop.f32.mrb[0].mxu0
      %4697 = vmatprep.mubr.f32.mxu0 %v3142
      %4698 = vmatmul.mubr.f32.gmra.mrb[0].mxu0 %v1875
      %v4699 = vpop.f32.mrb[0].mxu0
      %v4700 = vadd.f32 %v4475, %v4699
      %v4701 = vpop.f32.mrb[0].mxu0
      %4702 = vmatprep.mubr.f32.mxu0 %v3145
      %4703 = vmatmul.mubr.f32.gmra.mrb[0].mxu0 %v1877
      %v4704 = vpop.f32.mrb[0].mxu0
      %v4705 = vadd.f32 %v4480, %v4704
      %v4706 = vpop.f32.mrb[0].mxu0
      %4707 = vmatprep.mubr.f32.mxu0 %v3148
      %4708 = vmatmul.mubr.f32.gmra.mrb[0].mxu0 %v1879
      %v4709 = vpop.f32.mrb[0].mxu0
      %v4710 = vadd.f32 %v4485, %v4709
      %v4711 = vpop.f32.mrb[0].mxu0
      %4712 = vmatprep.mubr.f32.mxu0 %v3151
      %4713 = vmatmul.mubr.f32.gmra.mrb[0].mxu0 %v1881
      %v4714 = vpop.f32.mrb[0].mxu0
      %v4715 = vadd.f32 %v4490, %v4714
      %v4716 = vpop.f32.mrb[0].mxu0
      %4717 = vmatprep.mubr.f32.mxu0 %v3154
      %4718 = vmatmul.mubr.f32.gmra.mrb[0].mxu0 %v1883
      %v4719 = vpop.f32.mrb[0].mxu0
      %v4720 = vadd.f32 %v4495, %v4719
      %v4721 = vpop.f32.mrb[0].mxu0
      %4722 = vmatprep.mubr.f32.mxu0 %v3157
      %4723 = vmatmul.mubr.f32.gmra.mrb[0].mxu0 %v1885
      %v4724 = vpop.f32.mrb[0].mxu0
      %v4725 = vadd.f32 %v4500, %v4724
      %v4726 = vpop.f32.mrb[0].mxu0
      %4727 = vmatprep.mubr.f32.mxu0 %v3160
      %4728 = vmatmul.mubr.f32.gmra.mrb[0].mxu0 %v1887
      %v4729 = vpop.f32.mrb[0].mxu0
      %v4730 = vadd.f32 %v4505, %v4729
      %v4731 = vpop.f32.mrb[0].mxu0
      %4732 = vmatprep.mubr.f32.mxu0 %v3163
      %4733 = vmatmul.mubr.f32.gmra.mrb[0].mxu0 %v1889
      %v4734 = vpop.f32.mrb[0].mxu0
      %v4735 = vadd.f32 %v4510, %v4734
      %v4736 = vpop.f32.mrb[0].mxu0
      %4737 = vmatprep.mubr.f32.mxu0 %v3166
      %4738 = vmatmul.mubr.f32.gmra.mrb[0].mxu0 %v1891
      %v4739 = vpop.f32.mrb[0].mxu0
      %v4740 = vadd.f32 %v4515, %v4739
      %v4741 = vpop.f32.mrb[0].mxu0
      %4742 = vdwg.mxu0
      %4743 = vst.msk [vmem:[%s204] sm:$0xff] %vm210, %v4585
      %4744 = vst.msk [vmem:[%s204 + $0x8] sm:$0xff] %vm210, %v4590
      %4745 = vst.msk [vmem:[%s204 + $0x10] sm:$0xff] %vm210, %v4595
      %4746 = vst.msk [vmem:[%s204 + $0x18] sm:$0xff] %vm210, %v4600
      %4747 = vst.msk [vmem:[%s204 + $0x20] sm:$0xff] %vm210, %v4605
      %4748 = vst.msk [vmem:[%s204 + $0x28] sm:$0xff] %vm210, %v4610
      %4749 = vst.msk [vmem:[%s204 + $0x30] sm:$0xff] %vm210, %v4615
      %4750 = vst.msk [vmem:[%s204 + $0x38] sm:$0xff] %vm210, %v4620
      %4751 = vst.msk [vmem:[%s204 + $0x40] sm:$0xff] %vm210, %v4625
      %4752 = vst.msk [vmem:[%s204 + $0x48] sm:$0xff] %vm210, %v4630
      %4753 = vst.msk [vmem:[%s204 + $0x50] sm:$0xff] %vm210, %v4635
      %4754 = vst.msk [vmem:[%s204 + $0x58] sm:$0xff] %vm210, %v4640
      %4755 = vst.msk [vmem:[%s204 + $0x60] sm:$0xff] %vm210, %v4645
      %4756 = vst.msk [vmem:[%s204 + $0x68] sm:$0xff] %vm210, %v4650
      %4757 = vst.msk [vmem:[%s204 + $0x70] sm:$0xff] %vm210, %v4655
      %4758 = vst.msk [vmem:[%s204 + $0x78] sm:$0xff] %vm210, %v4660
      %4759 = vst.msk [vmem:[%s204 + $0x80] sm:$0xff] %vm210, %v4665
      %4760 = vst.msk [vmem:[%s204 + $0x88] sm:$0xff] %vm210, %v4670
      %4761 = vst.msk [vmem:[%s204 + $0x90] sm:$0xff] %vm210, %v4675
      %4762 = vst.msk [vmem:[%s204 + $0x98] sm:$0xff] %vm210, %v4680
      %4763 = vst.msk [vmem:[%s204 + $0xa0] sm:$0xff] %vm210, %v4685
      %4764 = vst.msk [vmem:[%s204 + $0xa8] sm:$0xff] %vm210, %v4690
      %4765 = vst.msk [vmem:[%s204 + $0xb0] sm:$0xff] %vm210, %v4695
      %4766 = vst.msk [vmem:[%s204 + $0xb8] sm:$0xff] %vm210, %v4700
      %4767 = vst.msk [vmem:[%s204 + $0xc0] sm:$0xff] %vm210, %v4705
      %4768 = vst.msk [vmem:[%s204 + $0xc8] sm:$0xff] %vm210, %v4710
      %4769 = vst.msk [vmem:[%s204 + $0xd0] sm:$0xff] %vm210, %v4715
      %4770 = vst.msk [vmem:[%s204 + $0xd8] sm:$0xff] %vm210, %v4720
      %4771 = vst.msk [vmem:[%s204 + $0xe0] sm:$0xff] %vm210, %v4725
      %4772 = vst.msk [vmem:[%s204 + $0xe8] sm:$0xff] %vm210, %v4730
      %4773 = vst.msk [vmem:[%s204 + $0xf0] sm:$0xff] %vm210, %v4735
      %4774 = vst.msk [vmem:[%s204 + $0xf8] sm:$0xff] %vm210, %v4740
      %v4775 = vsel %vm210, %v4585, 0.0
      %v4776 = vsel %vm210, %v4590, 0.0
      %v4777 = vadd.f32 %v4775, %v4776
      %v4778 = vsel %vm210, %v4595, 0.0
      %v4779 = vadd.f32 %v4777, %v4778
      %v4780 = vsel %vm210, %v4600, 0.0
      %v4781 = vadd.f32 %v4779, %v4780
      %v4782 = vsel %vm210, %v4605, 0.0
      %v4783 = vadd.f32 %v4781, %v4782
      %v4784 = vsel %vm210, %v4610, 0.0
      %v4785 = vadd.f32 %v4783, %v4784
      %v4786 = vsel %vm210, %v4615, 0.0
      %v4787 = vadd.f32 %v4785, %v4786
      %v4788 = vsel %vm210, %v4620, 0.0
      %v4789 = vadd.f32 %v4787, %v4788
      %v4790 = vsel %vm210, %v4625, 0.0
      %v4791 = vadd.f32 %v4789, %v4790
      %v4792 = vsel %vm210, %v4630, 0.0
      %v4793 = vadd.f32 %v4791, %v4792
      %v4794 = vsel %vm210, %v4635, 0.0
      %v4795 = vadd.f32 %v4793, %v4794
      %v4796 = vsel %vm210, %v4640, 0.0
      %v4797 = vadd.f32 %v4795, %v4796
      %v4798 = vsel %vm210, %v4645, 0.0
      %v4799 = vadd.f32 %v4797, %v4798
      %v4800 = vsel %vm210, %v4650, 0.0
      %v4801 = vadd.f32 %v4799, %v4800
      %v4802 = vsel %vm210, %v4655, 0.0
      %v4803 = vadd.f32 %v4801, %v4802
      %v4804 = vsel %vm210, %v4660, 0.0
      %v4805 = vadd.f32 %v4803, %v4804
      %v4806 = vsel %vm210, %v4665, 0.0
      %v4807 = vadd.f32 %v4805, %v4806
      %v4808 = vsel %vm210, %v4670, 0.0
      %v4809 = vadd.f32 %v4807, %v4808
      %v4810 = vsel %vm210, %v4675, 0.0
      %v4811 = vadd.f32 %v4809, %v4810
      %v4812 = vsel %vm210, %v4680, 0.0
      %v4813 = vadd.f32 %v4811, %v4812
      %v4814 = vsel %vm210, %v4685, 0.0
      %v4815 = vadd.f32 %v4813, %v4814
      %v4816 = vsel %vm210, %v4690, 0.0
      %v4817 = vadd.f32 %v4815, %v4816
      %v4818 = vsel %vm210, %v4695, 0.0
      %v4819 = vadd.f32 %v4817, %v4818
      %v4820 = vsel %vm210, %v4700, 0.0
      %v4821 = vadd.f32 %v4819, %v4820
      %v4822 = vsel %vm210, %v4705, 0.0
      %v4823 = vadd.f32 %v4821, %v4822
      %v4824 = vsel %vm210, %v4710, 0.0
      %v4825 = vadd.f32 %v4823, %v4824
      %v4826 = vsel %vm210, %v4715, 0.0
      %v4827 = vadd.f32 %v4825, %v4826
      %v4828 = vsel %vm210, %v4720, 0.0
      %v4829 = vadd.f32 %v4827, %v4828
      %v4830 = vsel %vm210, %v4725, 0.0
      %v4831 = vadd.f32 %v4829, %v4830
      %v4832 = vsel %vm210, %v4730, 0.0
      %v4833 = vadd.f32 %v4831, %v4832
      %v4834 = vsel %vm210, %v4735, 0.0
      %v4835 = vadd.f32 %v4833, %v4834
      %v4836 = vsel %vm210, %v4740, 0.0
      %v4837 = vadd.f32 %v4835, %v4836
      %v4838 = vrot.slane %v4837, 4
      %v4839 = vadd.f32 %v4837, %v4838
      %v4840 = vrot.slane %v4839, 2
      %v4841 = vadd.f32 %v4839, %v4840
      %v4842 = vrot.slane %v4841, 1
      %v4843 = vadd.f32 %v4841, %v4842
      %v4844 = vmul.f32 %v4585, %v4585
      %v4845 = vmul.f32 %v4590, %v4590
      %v4846 = vmul.f32 %v4595, %v4595
      %v4847 = vmul.f32 %v4600, %v4600
      %v4848 = vmul.f32 %v4605, %v4605
      %v4849 = vmul.f32 %v4610, %v4610
      %v4850 = vmul.f32 %v4615, %v4615
      %v4851 = vmul.f32 %v4620, %v4620
      %v4852 = vmul.f32 %v4625, %v4625
      %v4853 = vmul.f32 %v4630, %v4630
      %v4854 = vmul.f32 %v4635, %v4635
      %v4855 = vmul.f32 %v4640, %v4640
      %v4856 = vmul.f32 %v4645, %v4645
      %v4857 = vmul.f32 %v4650, %v4650
      %v4858 = vmul.f32 %v4655, %v4655
      %v4859 = vmul.f32 %v4660, %v4660
      %v4860 = vmul.f32 %v4665, %v4665
      %v4861 = vmul.f32 %v4670, %v4670
      %v4862 = vmul.f32 %v4675, %v4675
      %v4863 = vmul.f32 %v4680, %v4680
      %v4864 = vmul.f32 %v4685, %v4685
      %v4865 = vmul.f32 %v4690, %v4690
      %v4866 = vmul.f32 %v4695, %v4695
      %v4867 = vmul.f32 %v4700, %v4700
      %v4868 = vmul.f32 %v4705, %v4705
      %v4869 = vmul.f32 %v4710, %v4710
      %v4870 = vmul.f32 %v4715, %v4715
      %v4871 = vmul.f32 %v4720, %v4720
      %v4872 = vmul.f32 %v4725, %v4725
      %v4873 = vmul.f32 %v4730, %v4730
      %v4874 = vmul.f32 %v4735, %v4735
      %v4875 = vmul.f32 %v4740, %v4740
      %v4876 = vsel %vm210, %v4844, 0.0
      %v4877 = vsel %vm210, %v4845, 0.0
      %v4878 = vadd.f32 %v4876, %v4877
      %v4879 = vsel %vm210, %v4846, 0.0
      %v4880 = vadd.f32 %v4878, %v4879
      %v4881 = vsel %vm210, %v4847, 0.0
      %v4882 = vadd.f32 %v4880, %v4881
      %v4883 = vsel %vm210, %v4848, 0.0
      %v4884 = vadd.f32 %v4882, %v4883
      %v4885 = vsel %vm210, %v4849, 0.0
      %v4886 = vadd.f32 %v4884, %v4885
      %v4887 = vsel %vm210, %v4850, 0.0
      %v4888 = vadd.f32 %v4886, %v4887
      %v4889 = vsel %vm210, %v4851, 0.0
      %v4890 = vadd.f32 %v4888, %v4889
      %v4891 = vsel %vm210, %v4852, 0.0
      %v4892 = vadd.f32 %v4890, %v4891
      %v4893 = vsel %vm210, %v4853, 0.0
      %v4894 = vadd.f32 %v4892, %v4893
      %v4895 = vsel %vm210, %v4854, 0.0
      %v4896 = vadd.f32 %v4894, %v4895
      %v4897 = vsel %vm210, %v4855, 0.0
      %v4898 = vadd.f32 %v4896, %v4897
      %v4899 = vsel %vm210, %v4856, 0.0
      %v4900 = vadd.f32 %v4898, %v4899
      %v4901 = vsel %vm210, %v4857, 0.0
      %v4902 = vadd.f32 %v4900, %v4901
      %v4903 = vsel %vm210, %v4858, 0.0
      %v4904 = vadd.f32 %v4902, %v4903
      %v4905 = vsel %vm210, %v4859, 0.0
      %v4906 = vadd.f32 %v4904, %v4905
      %v4907 = vsel %vm210, %v4860, 0.0
      %v4908 = vadd.f32 %v4906, %v4907
      %v4909 = vsel %vm210, %v4861, 0.0
      %v4910 = vadd.f32 %v4908, %v4909
      %v4911 = vsel %vm210, %v4862, 0.0
      %v4912 = vadd.f32 %v4910, %v4911
      %v4913 = vsel %vm210, %v4863, 0.0
      %v4914 = vadd.f32 %v4912, %v4913
      %v4915 = vsel %vm210, %v4864, 0.0
      %v4916 = vadd.f32 %v4914, %v4915
      %v4917 = vsel %vm210, %v4865, 0.0
      %v4918 = vadd.f32 %v4916, %v4917
      %v4919 = vsel %vm210, %v4866, 0.0
      %v4920 = vadd.f32 %v4918, %v4919
      %v4921 = vsel %vm210, %v4867, 0.0
      %v4922 = vadd.f32 %v4920, %v4921
      %v4923 = vsel %vm210, %v4868, 0.0
      %v4924 = vadd.f32 %v4922, %v4923
      %v4925 = vsel %vm210, %v4869, 0.0
      %v4926 = vadd.f32 %v4924, %v4925
      %v4927 = vsel %vm210, %v4870, 0.0
      %v4928 = vadd.f32 %v4926, %v4927
      %v4929 = vsel %vm210, %v4871, 0.0
      %v4930 = vadd.f32 %v4928, %v4929
      %v4931 = vsel %vm210, %v4872, 0.0
      %v4932 = vadd.f32 %v4930, %v4931
      %v4933 = vsel %vm210, %v4873, 0.0
      %v4934 = vadd.f32 %v4932, %v4933
      %v4935 = vsel %vm210, %v4874, 0.0
      %v4936 = vadd.f32 %v4934, %v4935
      %v4937 = vsel %vm210, %v4875, 0.0
      %v4938 = vadd.f32 %v4936, %v4937
      %v4939 = vrot.slane %v4938, 4
      %v4940 = vadd.f32 %v4938, %v4939
      %v4941 = vrot.slane %v4940, 2
      %v4942 = vadd.f32 %v4940, %v4941
      %v4943 = vrot.slane %v4942, 1
      %v4944 = vadd.f32 %v4942, %v4943
      %v4945 = vsel %vm963, %v4843, %v4944
      %vm4946 = vcmask 517120
      %4947 = vst.msk [vmem:[%s208] sm:$0x3] %vm4946, %v4945
      %p4948 = scmp.lt.s32.totalorder %s16, 3
      %s4949 = scalar_select %p4948, %s16, 3
      %s4950 = smul.addr %s4949, 32
      %s4951 = smul.addr %s4950, 8
      %s4952 = scalar_lea.vmem %s3, %s4951
      %p4953 = scmp.lt.s32.totalorder %s16, 3
      %s4954 = scalar_select %p4953, %s16, 3
      %s4955 = smul.addr %s4954, 2
      %s4956 = scalar_lea.vmem %s4, %s4955
      // Predicated region
      $region33: #{discriminator_forward_pallas.3} parent=31 // pred_check
        %p4957 = pneg %p102
      $region34: #{discriminator_forward_pallas.3} parent=31 // pred_check_branch
        %4959 = sbr.rel (%p4957) target = $region36
      $region35: #{discriminator_forward_pallas.3} parent=31 // pred_region
        _
      $region36: #{discriminator_forward_pallas.3} parent=31 // pred_fallthru
        _
      // Predicated region
      $region37: #{discriminator_forward_pallas.3} parent=31 // pred_check
        %p4960 = pneg %p128
      $region38: #{discriminator_forward_pallas.3} parent=31 // pred_check_branch
        %4962 = sbr.rel (%p4960) target = $region40
      $region39: #{discriminator_forward_pallas.3} parent=31 // pred_region
        _
      $region40: #{discriminator_forward_pallas.3} parent=31 // pred_fallthru
        _
    $region32: #{discriminator_forward_pallas.3} parent=5 // pred_fallthru
      _
    %p4963 = scmp.le.s32.totalorder 2, %s11
    // Predicated region
    $region41: #{discriminator_forward_pallas.3} parent=5 // pred_check
      %p4964 = pneg %p4963
    $region42: #{discriminator_forward_pallas.3} parent=5 // pred_check_branch
      %4966 = sbr.rel (%p4964) target = $region44
    $region43: #{discriminator_forward_pallas.3} parent=5 // pred_region
      %s4967 = ssub.s32 %s11, 2
      // Predicated region
      $region45: #{discriminator_forward_pallas.3} parent=43 // pred_check
        %p4968 = pneg %p108
      $region46: #{discriminator_forward_pallas.3} parent=43 // pred_check_branch
        %4970 = sbr.rel (%p4968) target = $region48
      $region47: #{discriminator_forward_pallas.3} parent=43 // pred_region
        %p4971 = scmp.lt.s32.totalorder %s17, 3
        %s4972 = scalar_select %p4971, %s17, 3
        %s4973 = smul.addr %s4972, 32
        %s4974 = smul.addr %s4973, 8
        %s4975 = scalar_lea.vmem %s3, %s4974
      $region48: #{discriminator_forward_pallas.3} parent=43 // pred_fallthru
        _
      // Predicated region
      $region49: #{discriminator_forward_pallas.3} parent=43 // pred_check
        %p4976 = pneg %p134
      $region50: #{discriminator_forward_pallas.3} parent=43 // pred_check_branch
        %4978 = sbr.rel (%p4976) target = $region52
      $region51: #{discriminator_forward_pallas.3} parent=43 // pred_region
        %p4979 = scmp.lt.s32.totalorder %s17, 3
        %s4980 = scalar_select %p4979, %s17, 3
        %s4981 = smul.addr %s4980, 2
        %s4982 = scalar_lea.vmem %s4, %s4981
      $region52: #{discriminator_forward_pallas.3} parent=43 // pred_fallthru
        _
    $region44: #{discriminator_forward_pallas.3} parent=5 // pred_fallthru
      _
  $region6: #{discriminator_forward_pallas.3} parent=0 // loop_footer
    %s15 = sadd.s32 1, %s11
  $region7: #{discriminator_forward_pallas.3} parent=0 // loop_footer_branch
    %10 = sbr.rel target = $region3
  $region8: #{discriminator_forward_pallas.3} parent=0 // loop_exit
    _

</llo_original>
